<compile_context>
chip_gen: v7x
topology: tpu7x:2x2x1
jax: 0.10.0
libtpu: 0.0.40
codegen_flags: <defaults>
</compile_context>

<pallas_src>
import functools

import jax
import jax.numpy as jnp
from jax.experimental import pallas as pl
from jax.experimental.pallas import tpu as pltpu


def _round_up(a, b):
    return (a + b - 1) // b * b


# ----------------------------- Pallas kernel --------------------------------
def _convt_fold_gemm_kernel(x_ref, w_ref, b_ref, o_ref, patch_ref, *, taps, tile_m, cin):
    """One K-folded GEMM per (batch, M-tile) grid step.

    x_ref    : (1, 1, tile_m + halo, Cin)  per-tile input window (compute dtype)
    w_ref    : (kH*kW*Cin, Coutp)          tap-folded, spatially flipped weights
    b_ref    : (1, Coutp)                  bias (f32)
    o_ref    : (1, tile_m, Coutp)          output tile (lane-dense Coutp)
    patch_ref: (tile_m, kH*kW*Cin)         on-chip im2col strip (VMEM scratch)
    """
    # on-chip im2col: tap t occupies lane columns [t*Cin, (t+1)*Cin) of the strip
    for t, shift in enumerate(taps):                       # static, fully unrolled
        patch_ref[:, t * cin:(t + 1) * cin] = x_ref[0, 0, shift:shift + tile_m, :]
    # single MXU GEMM per tile with K = kH*kW*Cin, f32 accumulate; bias added once
    acc = jnp.dot(patch_ref[...], w_ref[...], preferred_element_type=jnp.float32)
    o_ref[0] = (acc + b_ref[...]).astype(o_ref.dtype)


# ----------------------------- conv_transpose2d -----------------------------
def conv_transpose2d_pallas(x, weight, bias, *, stride=1, padding=0, dilation=1,
                            compute_dtype=jnp.bfloat16, out_dtype=None, tile_m=2048):
    """F.conv_transpose2d (groups=1, output_padding=0, zeros padding) semantics.

    x: (N, Cin, H, W), weight: (Cin, Cout, kH, kW) (PyTorch layout), bias: (Cout,).
    compute_dtype=jnp.float32 gives strict parity; bf16 keeps f32 accumulation.
    """
    N, Cin, H, W = x.shape
    Cin_w, Cout, kH, kW = weight.shape
    assert Cin == Cin_w, (Cin, Cin_w)
    s, p, d = int(stride), int(padding), int(dilation)
    compute_dtype = jnp.dtype(compute_dtype)
    out_dtype = jnp.dtype(x.dtype if out_dtype is None else out_dtype)

    Ho = (H - 1) * s - 2 * p + d * (kH - 1) + 1
    Wo = (W - 1) * s - 2 * p + d * (kW - 1) + 1
    assert Ho > 0 and Wo > 0, "empty output"

    # transposed conv == stride-1 correlation of the spatially flipped kernel over
    # the zero-inserted, edge-padded (pad = d*(k-1)-p; negative => crop) raster of
    # size (Hp, Wp).  That raster is never materialised: the halo-window gather
    # below reads straight from the compact input with a validity mask.
    ph = d * (kH - 1) - p
    pw = d * (kW - 1) - p
    Hp = Ho + d * (kH - 1)
    Wp = Wo + d * (kW - 1)
    Wp8 = _round_up(Wp, 8)                       # sublane-aligned flattened row stride
    taps = tuple((kh * Wp8 + kw) * d for kh in range(kH) for kw in range(kW))
    halo = taps[-1]
    K = kH * kW * Cin
    Coutp = _round_up(Cout, 128)                 # lane-dense output stores / MXU N

    # ---- generation-aware VMEM budget ---------------------------------------
    try:
        cap = int(pltpu.get_tpu_info().vmem_capacity_bytes)
        if cap <= 0:
            cap = 64 * 1024 * 1024
    except Exception:
        cap = 64 * 1024 * 1024                   # conservative (v7x per-TC) fallback
    usable = cap - max(8 * 1024 * 1024, cap // 8)    # leave headroom under the cap
    budget = (2 * usable) // 3                       # tile-sizing budget

    c_item = compute_dtype.itemsize
    o_item = out_dtype.itemsize
    cin_l = _round_up(Cin, 128)                  # lane-padded layouts
    k_l = _round_up(K, 128)

    def _vmem_est(tm):
        return (2 * (tm + halo) * cin_l * c_item     # input window (double buffered)
                + 2 * K * Coutp * c_item             # folded weights (2 buffers)
                + 2 * Coutp * 4                      # bias
                + 2 * tm * Coutp * o_item            # output tile (double buffered)
                + tm * k_l * c_item)                 # on-chip im2col scratch

    # ---- M tiling of the flattened (Ho, Wp8) output raster -------------------
    M_out = Ho * Wp8
    TM = max(8, _round_up(min(int(tile_m), M_out), 8))
    while TM > 64 and _vmem_est(TM) > budget:
        TM = max(64, _round_up(TM // 2, 8))
    M_pad = _round_up(M_out, TM)
    n_tiles = M_pad // TM
    W_rows = TM + halo

    # ---- per-tile halo windows gathered straight from the compact input ------
    r_abs = (jnp.arange(n_tiles, dtype=jnp.int32)[:, None] * TM
             + jnp.arange(W_rows, dtype=jnp.int32)[None, :])       # (n_tiles, W_rows)
    pi = r_abs // Wp8                      # padded-raster row
    pj = r_abs % Wp8                       # padded-raster col
    hh = pi - ph
    ww = pj - pw
    valid = ((pi < Hp) & (pj < Wp)
             & (hh >= 0) & (hh % s == 0) & (hh // s < H)
             & (ww >= 0) & (ww % s == 0) & (ww // s < W))
    src = jnp.where(valid, (hh // s) * W + (ww // s), 0)

    x_hw = jnp.transpose(x, (0, 2, 3, 1)).reshape(N, H * W, Cin).astype(compute_dtype)
    x_win = jnp.where(valid[None, :, :, None], x_hw[:, src, :],
                      jnp.zeros((), compute_dtype))                # (N, n_tiles, W_rows, Cin)

    # ---- tap-folded (spatially flipped) weights + lane-dense bias ------------
    w_corr = jnp.transpose(weight[:, :, ::-1, ::-1], (2, 3, 0, 1))  # (kH, kW, Cin, Cout)
    w_fold = w_corr.reshape(K, Cout).astype(compute_dtype)          # row (kh*kW+kw)*Cin+ci
    b_mat = bias.astype(jnp.float32).reshape(1, Cout)
    if Coutp != Cout:
        w_fold = jnp.pad(w_fold, ((0, 0), (0, Coutp - Cout)))
        b_mat = jnp.pad(b_mat, ((0, 0), (0, Coutp - Cout)))

    vmem_limit = int(min(max(2 * _vmem_est(TM), 32 * 1024 * 1024), usable))

    kernel = functools.partial(_convt_fold_gemm_kernel, taps=taps, tile_m=TM, cin=Cin)
    out_flat = pl.pallas_call(
        kernel,
        out_shape=jax.ShapeDtypeStruct((N, M_pad, Coutp), out_dtype),
        grid_spec=pltpu.PrefetchScalarGridSpec(
            num_scalar_prefetch=0,
            grid=(N, n_tiles),
            in_specs=[
                # per-tile halo window: only this tile's rows are resident
                pl.BlockSpec((1, 1, W_rows, Cin), lambda n, m: (n, m, 0, 0)),
                # grid-invariant blocks (DMA'd once, index never changes)
                pl.BlockSpec((K, Coutp), lambda n, m: (0, 0)),
                pl.BlockSpec((1, Coutp), lambda n, m: (0, 0)),
            ],
            out_specs=pl.BlockSpec((1, TM, Coutp), lambda n, m: (n, m, 0)),
            scratch_shapes=[pltpu.VMEM((TM, K), compute_dtype)],
        ),
        compiler_params=pltpu.CompilerParams(
            dimension_semantics=("parallel", "parallel"),
            vmem_limit_bytes=vmem_limit,
        ),
    )(x_win, w_fold, b_mat)

    # drop M padding, the invalid raster columns (ow >= Wo) and the Cout padding
    out = out_flat[:, :M_out, :Cout].reshape(N, Ho, Wp8, Cout)[:, :, :Wo, :]
    return jnp.transpose(out, (0, 3, 1, 2))                         # back to NCHW


# ----------------------------- ProbConvTranspose2d --------------------------
def init_prob_conv_transpose2d(key, in_channels, out_channels, kernel_size, rho_prior):
    """Deterministic synthetic stand-in for `init_layer.weight` / `init_layer.bias`."""
    kw_key, kb_key = jax.random.split(key)
    weight_mu = 0.1 * jax.random.normal(
        kw_key, (in_channels, out_channels, kernel_size, kernel_size), jnp.float32)
    bias_mu = 0.1 * jax.random.normal(kb_key, (out_channels,), jnp.float32)
    weight_rho = jnp.full(
        (in_channels, out_channels, kernel_size, kernel_size), rho_prior, jnp.float32)
    bias_rho = jnp.full((out_channels,), rho_prior, jnp.float32)
    return dict(weight_mu=weight_mu, weight_rho=weight_rho,
                bias_mu=bias_mu, bias_rho=bias_rho)


def prob_conv_transpose2d_forward(params, x, *, sample=False, key=None,
                                  stride=1, padding=0, dilation=1,
                                  compute_dtype=jnp.bfloat16, out_dtype=None):
    """Matches ProbConvTranspose2d.forward (gaussian posterior, groups=1).

    compute_dtype=jnp.float32 gives strict parity with the PyTorch module; the
    bf16 default keeps an f32 accumulate / f32 bias for full-rate MXU.
    """
    if sample:
        kw_key, kb_key = jax.random.split(key)
        w_sigma = jax.nn.softplus(params["weight_rho"])   # sigma = log(1 + exp(rho))
        b_sigma = jax.nn.softplus(params["bias_rho"])
        weight = params["weight_mu"] + w_sigma * jax.random.normal(
            kw_key, params["weight_mu"].shape, jnp.float32)
        bias = params["bias_mu"] + b_sigma * jax.random.normal(
            kb_key, params["bias_mu"].shape, jnp.float32)
    else:
        weight = params["weight_mu"]
        bias = params["bias_mu"]
    # TODO(synk): training-time `self.kl_div` bookkeeping (KL of posterior vs prior)
    # is a stateful side effect of the torch module, not part of the returned
    # tensor; the 'laplace' prior_dist variant is likewise omitted.
    return conv_transpose2d_pallas(x, weight, bias, stride=stride, padding=padding,
                                   dilation=dilation, compute_dtype=compute_dtype,
                                   out_dtype=out_dtype)


# ----------------------------- pure-JAX reference ---------------------------
def _ref_conv_transpose2d(x, weight, bias, stride, padding, dilation):
    N, Cin, H, W = x.shape
    _, Cout, kH, kW = weight.shape
    Ho = (H - 1) * stride - 2 * padding + dilation * (kH - 1) + 1
    Wo = (W - 1) * stride - 2 * padding + dilation * (kW - 1) + 1
    out = jnp.zeros((N, Cout, Ho + 2 * padding, Wo + 2 * padding), jnp.float32)
    for kh in range(kH):
        for kw in range(kW):
            contrib = jnp.einsum("nchw,cd->ndhw", x, weight[:, :, kh, kw])
            out = out.at[:, :,
                         kh * dilation: kh * dilation + (H - 1) * stride + 1: stride,
                         kw * dilation: kw * dilation + (W - 1) * stride + 1: stride
                         ].add(contrib)
    out = out[:, :, padding: padding + Ho, padding: padding + Wo]
    return out + bias[None, :, None, None]


if __name__ == "__main__":
    key = jax.random.PRNGKey(0)
    k_param, k_x, k_sample = jax.random.split(key, 3)

    in_channels, out_channels, kernel_size = 4, 8, 3
    stride, padding, dilation = 2, 1, 1
    rho_prior = -3.0

    params = init_prob_conv_transpose2d(
        k_param, in_channels, out_channels, kernel_size, rho_prior)
    x = jax.random.normal(k_x, (2, in_channels, 16, 16), jnp.float32)
    ref = _ref_conv_transpose2d(
        x, params["weight_mu"], params["bias_mu"], stride, padding, dilation)

    # (1) strict-parity eval path: posterior means, f32 compute
    out_f32 = jax.block_until_ready(prob_conv_transpose2d_forward(
        params, x, sample=False, stride=stride, padding=padding, dilation=dilation,
        compute_dtype=jnp.float32))
    assert out_f32.shape == ref.shape, (out_f32.shape, ref.shape)
    assert float(jnp.max(jnp.abs(out_f32 - ref))) < 1e-4

    # (2) multi-tile / halo-window / M-padding path (tile_m < M)
    out_tiled = jax.block_until_ready(conv_transpose2d_pallas(
        x, params["weight_mu"], params["bias_mu"], stride=stride, padding=padding,
        dilation=dilation, compute_dtype=jnp.float32, tile_m=512))
    assert float(jnp.max(jnp.abs(out_tiled - ref))) < 1e-4

    # (3) default path: bf16 compute / f32 accumulate, bf16 write-back
    out_bf16 = jax.block_until_ready(prob_conv_transpose2d_forward(
        params, x, sample=False, stride=stride, padding=padding, dilation=dilation,
        out_dtype=jnp.bfloat16))
    assert out_bf16.dtype == jnp.bfloat16
    assert float(jnp.max(jnp.abs(out_bf16.astype(jnp.float32) - ref))) < 1e-1

    # (4) extra configs: stride-1, dilated, and p > d*(k-1) (crop) paths, f32 strict
    for (s2, p2, d2, k2, cin2, cout2, hw2) in ((1, 0, 1, 2, 3, 5, 6),
                                               (2, 2, 2, 3, 4, 8, 8),
                                               (2, 3, 1, 3, 4, 8, 8)):
        kcfg = jax.random.fold_in(key, s2 * 100 + p2 * 10 + d2)
        kw2, kb2, kx2 = jax.random.split(kcfg, 3)
        w2 = 0.1 * jax.random.normal(kw2, (cin2, cout2, k2, k2), jnp.float32)
        b2 = 0.1 * jax.random.normal(kb2, (cout2,), jnp.float32)
        x2 = jax.random.normal(kx2, (1, cin2, hw2, hw2), jnp.float32)
        o2 = jax.block_until_ready(conv_transpose2d_pallas(
            x2, w2, b2, stride=s2, padding=p2, dilation=d2, compute_dtype=jnp.float32))
        r2 = _ref_conv_transpose2d(x2, w2, b2, s2, p2, d2)
        assert o2.shape == r2.shape, (o2.shape, r2.shape)
        assert float(jnp.max(jnp.abs(o2 - r2))) < 1e-4

    # (5) sampled path (reparameterised weight/bias draw), default bf16 compute
    out_s = jax.block_until_ready(prob_conv_transpose2d_forward(
        params, x, sample=True, key=k_sample,
        stride=stride, padding=padding, dilation=dilation, out_dtype=jnp.bfloat16))
    assert out_s.shape == ref.shape
    assert bool(jnp.all(jnp.isfinite(out_s.astype(jnp.float32))))

    print("KERNEL_OK")
</pallas_src>

<mosaic_0001>
module attributes {stable_mosaic.version = 11 : i64} {
  func.func @_convt_fold_gemm_kernel(%arg0: i32, %arg1: i32, %arg2: memref<1x1x1322x4xf32, #tpu.memory_space<vmem>>, %arg3: memref<36x128xf32, #tpu.memory_space<vmem>>, %arg4: memref<1x128xf32, #tpu.memory_space<vmem>>, %arg5: memref<1x1240x128xf32, #tpu.memory_space<vmem>>, %arg6: memref<1240x36xf32, #tpu.memory_space<vmem>>) attributes {dimension_semantics = [#tpu.dimension_semantics<parallel>, #tpu.dimension_semantics<parallel>], iteration_bounds = array<i64: 2, 1>, scalar_prefetch = 0 : i64, scratch_operands = 1 : i64, tpu.core_type = #tpu.core_type<tc>, window_params = [{transform_indices = @transform_0, window_bounds = array<i64: 1, 1, 1322, 4>}, {pipeline_mode = #tpu.pipeline_mode<synchronous>, transform_indices = @transform_1, window_bounds = array<i64: 36, 128>}, {pipeline_mode = #tpu.pipeline_mode<synchronous>, transform_indices = @transform_2, window_bounds = array<i64: 1, 128>}, {transform_indices = @transform_3, window_bounds = array<i64: 1, 1240, 128>}]} {
    %c0 = arith.constant 0 : index
    %c0_0 = arith.constant 0 : index
    %c0_1 = arith.constant 0 : index
    %c0_2 = arith.constant 0 : index
    %0 = vector.load %arg2[%c0, %c0_0, %c0_1, %c0_2] : memref<1x1x1322x4xf32, #tpu.memory_space<vmem>>, vector<1x1x1240x4xf32>
    %1 = vector.shape_cast %0 : vector<1x1x1240x4xf32> to vector<1240x4xf32>
    %c0_3 = arith.constant 0 : index
    %c0_4 = arith.constant 0 : index
    %2 = vector.load %arg6[%c0_3, %c0_4] : memref<1240x36xf32, #tpu.memory_space<vmem>>, vector<1240x4xf32>
    tpu.vector_store %arg6[%c0_3, %c0_4], %1 {strides = array<i32>} : memref<1240x36xf32, #tpu.memory_space<vmem>>, vector<1240x4xf32>,
    %c0_5 = arith.constant 0 : index
    %c0_6 = arith.constant 0 : index
    %c1 = arith.constant 1 : index
    %c0_7 = arith.constant 0 : index
    %3 = vector.load %arg2[%c0_5, %c0_6, %c1, %c0_7] : memref<1x1x1322x4xf32, #tpu.memory_space<vmem>>, vector<1x1x1240x4xf32>
    %4 = vector.shape_cast %3 : vector<1x1x1240x4xf32> to vector<1240x4xf32>
    %c0_8 = arith.constant 0 : index
    %c4 = arith.constant 4 : index
    %5 = vector.load %arg6[%c0_8, %c4] : memref<1240x36xf32, #tpu.memory_space<vmem>>, vector<1240x4xf32>
    tpu.vector_store %arg6[%c0_8, %c4], %4 {strides = array<i32>} : memref<1240x36xf32, #tpu.memory_space<vmem>>, vector<1240x4xf32>,
    %c0_9 = arith.constant 0 : index
    %c0_10 = arith.constant 0 : index
    %c2 = arith.constant 2 : index
    %c0_11 = arith.constant 0 : index
    %6 = vector.load %arg2[%c0_9, %c0_10, %c2, %c0_11] : memref<1x1x1322x4xf32, #tpu.memory_space<vmem>>, vector<1x1x1240x4xf32>
    %7 = vector.shape_cast %6 : vector<1x1x1240x4xf32> to vector<1240x4xf32>
    %c0_12 = arith.constant 0 : index
    %c8 = arith.constant 8 : index
    %8 = vector.load %arg6[%c0_12, %c8] : memref<1240x36xf32, #tpu.memory_space<vmem>>, vector<1240x4xf32>
    tpu.vector_store %arg6[%c0_12, %c8], %7 {strides = array<i32>} : memref<1240x36xf32, #tpu.memory_space<vmem>>, vector<1240x4xf32>,
    %c0_13 = arith.constant 0 : index
    %c0_14 = arith.constant 0 : index
    %c40 = arith.constant 40 : index
    %c0_15 = arith.constant 0 : index
    %9 = vector.load %arg2[%c0_13, %c0_14, %c40, %c0_15] : memref<1x1x1322x4xf32, #tpu.memory_space<vmem>>, vector<1x1x1240x4xf32>
    %10 = vector.shape_cast %9 : vector<1x1x1240x4xf32> to vector<1240x4xf32>
    %c0_16 = arith.constant 0 : index
    %c12 = arith.constant 12 : index
    %11 = vector.load %arg6[%c0_16, %c12] : memref<1240x36xf32, #tpu.memory_space<vmem>>, vector<1240x4xf32>
    tpu.vector_store %arg6[%c0_16, %c12], %10 {strides = array<i32>} : memref<1240x36xf32, #tpu.memory_space<vmem>>, vector<1240x4xf32>,
    %c0_17 = arith.constant 0 : index
    %c0_18 = arith.constant 0 : index
    %c41 = arith.constant 41 : index
    %c0_19 = arith.constant 0 : index
    %12 = vector.load %arg2[%c0_17, %c0_18, %c41, %c0_19] : memref<1x1x1322x4xf32, #tpu.memory_space<vmem>>, vector<1x1x1240x4xf32>
    %13 = vector.shape_cast %12 : vector<1x1x1240x4xf32> to vector<1240x4xf32>
    %c0_20 = arith.constant 0 : index
    %c16 = arith.constant 16 : index
    %14 = vector.load %arg6[%c0_20, %c16] : memref<1240x36xf32, #tpu.memory_space<vmem>>, vector<1240x4xf32>
    tpu.vector_store %arg6[%c0_20, %c16], %13 {strides = array<i32>} : memref<1240x36xf32, #tpu.memory_space<vmem>>, vector<1240x4xf32>,
    %c0_21 = arith.constant 0 : index
    %c0_22 = arith.constant 0 : index
    %c42 = arith.constant 42 : index
    %c0_23 = arith.constant 0 : index
    %15 = vector.load %arg2[%c0_21, %c0_22, %c42, %c0_23] : memref<1x1x1322x4xf32, #tpu.memory_space<vmem>>, vector<1x1x1240x4xf32>
    %16 = vector.shape_cast %15 : vector<1x1x1240x4xf32> to vector<1240x4xf32>
    %c0_24 = arith.constant 0 : index
    %c20 = arith.constant 20 : index
    %17 = vector.load %arg6[%c0_24, %c20] : memref<1240x36xf32, #tpu.memory_space<vmem>>, vector<1240x4xf32>
    tpu.vector_store %arg6[%c0_24, %c20], %16 {strides = array<i32>} : memref<1240x36xf32, #tpu.memory_space<vmem>>, vector<1240x4xf32>,
    %c0_25 = arith.constant 0 : index
    %c0_26 = arith.constant 0 : index
    %c80 = arith.constant 80 : index
    %c0_27 = arith.constant 0 : index
    %18 = vector.load %arg2[%c0_25, %c0_26, %c80, %c0_27] : memref<1x1x1322x4xf32, #tpu.memory_space<vmem>>, vector<1x1x1240x4xf32>
    %19 = vector.shape_cast %18 : vector<1x1x1240x4xf32> to vector<1240x4xf32>
    %c0_28 = arith.constant 0 : index
    %c24 = arith.constant 24 : index
    %20 = vector.load %arg6[%c0_28, %c24] : memref<1240x36xf32, #tpu.memory_space<vmem>>, vector<1240x4xf32>
    tpu.vector_store %arg6[%c0_28, %c24], %19 {strides = array<i32>} : memref<1240x36xf32, #tpu.memory_space<vmem>>, vector<1240x4xf32>,
    %c0_29 = arith.constant 0 : index
    %c0_30 = arith.constant 0 : index
    %c81 = arith.constant 81 : index
    %c0_31 = arith.constant 0 : index
    %21 = vector.load %arg2[%c0_29, %c0_30, %c81, %c0_31] : memref<1x1x1322x4xf32, #tpu.memory_space<vmem>>, vector<1x1x1240x4xf32>
    %22 = vector.shape_cast %21 : vector<1x1x1240x4xf32> to vector<1240x4xf32>
    %c0_32 = arith.constant 0 : index
    %c28 = arith.constant 28 : index
    %23 = vector.load %arg6[%c0_32, %c28] : memref<1240x36xf32, #tpu.memory_space<vmem>>, vector<1240x4xf32>
    tpu.vector_store %arg6[%c0_32, %c28], %22 {strides = array<i32>} : memref<1240x36xf32, #tpu.memory_space<vmem>>, vector<1240x4xf32>,
    %c0_33 = arith.constant 0 : index
    %c0_34 = arith.constant 0 : index
    %c82 = arith.constant 82 : index
    %c0_35 = arith.constant 0 : index
    %24 = vector.load %arg2[%c0_33, %c0_34, %c82, %c0_35] : memref<1x1x1322x4xf32, #tpu.memory_space<vmem>>, vector<1x1x1240x4xf32>
    %25 = vector.shape_cast %24 : vector<1x1x1240x4xf32> to vector<1240x4xf32>
    %c0_36 = arith.constant 0 : index
    %c32 = arith.constant 32 : index
    %26 = vector.load %arg6[%c0_36, %c32] : memref<1240x36xf32, #tpu.memory_space<vmem>>, vector<1240x4xf32>
    tpu.vector_store %arg6[%c0_36, %c32], %25 {strides = array<i32>} : memref<1240x36xf32, #tpu.memory_space<vmem>>, vector<1240x4xf32>,
    %c0_37 = arith.constant 0 : index
    %c0_38 = arith.constant 0 : index
    %27 = vector.load %arg6[%c0_37, %c0_38] : memref<1240x36xf32, #tpu.memory_space<vmem>>, vector<1240x36xf32>
    %c0_39 = arith.constant 0 : index
    %c0_40 = arith.constant 0 : index
    %28 = vector.load %arg3[%c0_39, %c0_40] : memref<36x128xf32, #tpu.memory_space<vmem>>, vector<36x128xf32>
    %cst = arith.constant dense<0.000000e+00> : vector<1240x128xf32>
    %29 = tpu.matmul %27, %28, %cst {dimension_numbers = #tpu.dot_dimension_numbers<[1], [0], [0], [1], [0, 0, 1, 1], [], []>} : vector<1240x36xf32>, vector<36x128xf32>, vector<1240x128xf32> -> vector<1240x128xf32>
    %c0_41 = arith.constant 0 : index
    %c0_42 = arith.constant 0 : index
    %30 = vector.load %arg4[%c0_41, %c0_42] : memref<1x128xf32, #tpu.memory_space<vmem>>, vector<1x128xf32>
    %31 = vector.broadcast %30 : vector<1x128xf32> to vector<1240x128xf32>
    %32 = arith.addf %29, %31 : vector<1240x128xf32>
    %c0_43 = arith.constant 0 : index
    %c0_44 = arith.constant 0 : index
    %c0_45 = arith.constant 0 : index
    %33 = vector.load %arg5[%c0_43, %c0_44, %c0_45] : memref<1x1240x128xf32, #tpu.memory_space<vmem>>, vector<1x1240x128xf32>
    %34 = vector.shape_cast %33 : vector<1x1240x128xf32> to vector<1240x128xf32>
    %35 = vector.shape_cast %32 : vector<1240x128xf32> to vector<1x1240x128xf32>
    tpu.vector_store %arg5[%c0_43, %c0_44, %c0_45], %35 {strides = array<i32>} : memref<1x1240x128xf32, #tpu.memory_space<vmem>>, vector<1x1240x128xf32>,
    return
  }
  func.func @transform_0(%arg0: i32, %arg1: i32) -> (i32, i32, i32, i32) {
    %c0_i32 = arith.constant 0 : i32
    %c0_i32_0 = arith.constant 0 : i32
    %c0_i32_1 = arith.constant 0 : i32
    return %arg0, %arg1, %c0_i32, %c0_i32_0 : i32, i32, i32, i32
  }
  func.func @transform_1(%arg0: i32, %arg1: i32) -> (i32, i32) {
    %c0_i32 = arith.constant 0 : i32
    %c0_i32_0 = arith.constant 0 : i32
    %c0_i32_1 = arith.constant 0 : i32
    return %c0_i32, %c0_i32_0 : i32, i32
  }
  func.func @transform_2(%arg0: i32, %arg1: i32) -> (i32, i32) {
    %c0_i32 = arith.constant 0 : i32
    %c0_i32_0 = arith.constant 0 : i32
    %c0_i32_1 = arith.constant 0 : i32
    return %c0_i32, %c0_i32_0 : i32, i32
  }
  func.func @transform_3(%arg0: i32, %arg1: i32) -> (i32, i32, i32) {
    %c0_i32 = arith.constant 0 : i32
    %c0_i32_0 = arith.constant 0 : i32
    return %arg0, %arg1, %c0_i32 : i32, i32, i32
  }
}

</mosaic_0001>

<llo_original>
// kernel: tpu_custom_call.1
$region0: #{tpu_custom_call.1}
  #allocation0 [shape = 'u32[]', space=smem, size = 0x4, offset = 0x4, fixed_abs, tag = 'smem constant byte address 0x4 - core index']
  #allocation1 [shape = 'u32[144,128]{1,0:T(1,128)}', space=vmem, size = 0x12000, scoped, tag = 'internal scratch']
  #allocation2 [shape = 'f32[1240,36]{1,0:T(8,128)}', space=vmem, size = 0x9b000, scoped, tag = 'scratch operand']
  %s0 = inlined_call_operand.vmem [shape: f32[2,1,1322,4], index: 0, kind: input, shape index: {}]
  %s1 = inlined_call_operand.vmem [shape: f32[36,128], index: 1, kind: input, shape index: {}]
  %s2 = inlined_call_operand.vmem [shape: f32[1,128], index: 2, kind: input, shape index: {}]
  %s3 = inlined_call_operand.hbm [shape: f32[2,1240,128], index: 3, kind: output, shape index: {}]
  %s4 = sld [smem:[#allocation0]]
  $region45: #{tpu_custom_call.1} parent=0
    _
  %s6 = ssub.s32 1, %s4
  %s7 = scalar_select 0, %s6, %s4
  $region1: #{tpu_custom_call.1} parent=0
    #allocation3 [shape = 'u8[1269760]{0}', space=vmem, size = 0x136000, scoped, tag = 'output window, operand 0']
    #allocation4 [shape = 's32[2]{0}', space=sflag, size = 0x8, scoped, tag = 'scoped memory for tpu_custom_call.1']
    %8 = vsyncpa [#allocation4], 0
    %s9 = scalar_lea.sflag [#allocation4], 1
    %10 = vsyncpa %s9, 0
    loop: start=0, step=1, limit=4
    $region2: #{tpu_custom_call.1} parent=1 // loop_pre_header
      _
    $region3: #{tpu_custom_call.1} parent=1 // loop_header
      %s12 = sphi 0, %s16
      %p13 = scmp.ge.s32.totalorder %s12, 4
      %s19 = sphi 0, %s31
      %s20 = sphi 0, %s27
      %s21 = sphi 0, %s19
      %s22 = sphi 0, %s20
      %s23 = sphi 0, %s21
      %s24 = sphi 0, %s22
      %s36 = sphi 0, %s38
      %s39 = sphi 0, %s36
      %s40 = sphi 0, %s39
      %s56 = sphi 0, %s40
      %s60 = sphi 0, %s60
      %s62 = sphi 0, %s60
      %s63 = sphi 0, %s62
      %s77 = sphi 0, %s63
      %s81 = sphi 0, %s81
      %s83 = sphi 0, %s81
      %s84 = sphi 0, %s83
      %s98 = sphi 0, %s84
      %s106 = sphi 0, %s108
      %s109 = sphi 0, %s106
      %s110 = sphi 0, %s109
      %s126 = sphi 0, %s110
    $region4: #{tpu_custom_call.1} parent=1 // loop_header_branch
      %15 = sbr.rel (%p13) target = $region8
    $region5: #{tpu_custom_call.1} parent=1 // loop_body
      %s17 = ssub.s32 %s12, 1
      %s18 = ssub.s32 %s12, 2
      %s25 = sadd.s32 1, %s20
      %p26 = scmp.ge.s32.totalorder %s25, 1
      %s27 = scalar_select %p26, 0, %s25
      %s28 = sadd.s32 1, %s19
      %s29 = scalar_select %p26, %s28, %s19
      %p30 = scmp.ge.s32.totalorder %s29, 2
      %s31 = scalar_select %p30, 0, %s29
      %s32 = ssub.s32 %s19, %s31
      %s33 = ssub.s32 %s20, %s27
      %s34 = sor.u32 %s32, %s33
      %p35 = scmp.eq.s32.totalorder %s34, 0
      %s37 = sadd.s32 %s36, 1
      %s38 = scalar_select %p35, %s36, %s37
      %p41 = pneg %p35
      %p42 = scmp.eq.s32.totalorder %s12, 1
      %p43 = por %p41, %p42
      %p44 = scmp.ne.s32.totalorder %s36, %s39
      %p45 = scmp.eq.s32.totalorder %s12, 0
      %p46 = por %p44, %p45
      %p47 = scmp.ne.s32.totalorder %s36, %s39
      %p48 = scmp.eq.s32.totalorder %s17, 1
      %p49 = por %p47, %p48
      %p50 = scmp.ne.s32.totalorder %s39, %s40
      %p51 = scmp.eq.s32.totalorder %s17, 0
      %p52 = por %p50, %p51
      %p53 = scmp.ne.s32.totalorder %s39, %s40
      %p54 = scmp.eq.s32.totalorder %s18, 1
      %p55 = por %p53, %p54
      %p57 = scmp.ne.s32.totalorder %s40, %s56
      %p58 = scmp.eq.s32.totalorder %s18, 0
      %p59 = por %p57, %p58
      %s61 = sadd.s32 %s60, 1
      %p64 = scmp.eq.s32.totalorder %s12, 1
      %p65 = scmp.ne.s32.totalorder %s60, %s62
      %p66 = scmp.eq.s32.totalorder %s12, 0
      %p67 = por %p65, %p66
      %p68 = scmp.ne.s32.totalorder %s60, %s62
      %p69 = scmp.eq.s32.totalorder %s17, 1
      %p70 = por %p68, %p69
      %p71 = scmp.ne.s32.totalorder %s62, %s63
      %p72 = scmp.eq.s32.totalorder %s17, 0
      %p73 = por %p71, %p72
      %p74 = scmp.ne.s32.totalorder %s62, %s63
      %p75 = scmp.eq.s32.totalorder %s18, 1
      %p76 = por %p74, %p75
      %p78 = scmp.ne.s32.totalorder %s63, %s77
      %p79 = scmp.eq.s32.totalorder %s18, 0
      %p80 = por %p78, %p79
      %s82 = sadd.s32 %s81, 1
      %p85 = scmp.eq.s32.totalorder %s12, 1
      %p86 = scmp.ne.s32.totalorder %s81, %s83
      %p87 = scmp.eq.s32.totalorder %s12, 0
      %p88 = por %p86, %p87
      %p89 = scmp.ne.s32.totalorder %s81, %s83
      %p90 = scmp.eq.s32.totalorder %s17, 1
      %p91 = por %p89, %p90
      %p92 = scmp.ne.s32.totalorder %s83, %s84
      %p93 = scmp.eq.s32.totalorder %s17, 0
      %p94 = por %p92, %p93
      %p95 = scmp.ne.s32.totalorder %s83, %s84
      %p96 = scmp.eq.s32.totalorder %s18, 1
      %p97 = por %p95, %p96
      %p99 = scmp.ne.s32.totalorder %s84, %s98
      %p100 = scmp.eq.s32.totalorder %s18, 0
      %p101 = por %p99, %p100
      %s102 = ssub.s32 %s19, %s31
      %s103 = ssub.s32 %s20, %s27
      %s104 = sor.u32 %s102, %s103
      %p105 = scmp.eq.s32.totalorder %s104, 0
      %s107 = sadd.s32 %s106, 1
      %s108 = scalar_select %p105, %s106, %s107
      %p111 = pneg %p105
      %p112 = scmp.eq.s32.totalorder %s12, 1
      %p113 = por %p111, %p112
      %p114 = scmp.ne.s32.totalorder %s106, %s109
      %p115 = scmp.eq.s32.totalorder %s12, 0
      %p116 = por %p114, %p115
      %p117 = scmp.ne.s32.totalorder %s106, %s109
      %p118 = scmp.eq.s32.totalorder %s17, 1
      %p119 = por %p117, %p118
      %p120 = scmp.ne.s32.totalorder %s109, %s110
      %p121 = scmp.eq.s32.totalorder %s17, 0
      %p122 = por %p120, %p121
      %p123 = scmp.ne.s32.totalorder %s109, %s110
      %p124 = scmp.eq.s32.totalorder %s18, 1
      %p125 = por %p123, %p124
      %p127 = scmp.ne.s32.totalorder %s110, %s126
      %p128 = scmp.eq.s32.totalorder %s18, 0
      %p129 = por %p127, %p128
      %p130 = scmp.le.s32.totalorder 1, %s12
      %p131 = scmp.lt.s32.totalorder %s12, 3
      %p132 = pnand %p130, %p131
      %p133 = pneg %p132
      // Predicated region
      $region9: #{tpu_custom_call.1} parent=5 // pred_check
        _
      $region10: #{tpu_custom_call.1} parent=5 // pred_check_branch
        %135 = sbr.rel (%p132) target = $region12
      $region11: #{tpu_custom_call.1} parent=5 // pred_region
        %s136 = ssub.s32 %s12, 1
        // Predicated region
        $region13: #{tpu_custom_call.1} parent=11 // pred_check
          %p137 = pneg %p73
        $region14: #{tpu_custom_call.1} parent=11 // pred_check_branch
          %139 = sbr.rel (%p137) target = $region16
        $region15: #{tpu_custom_call.1} parent=11 // pred_region
          _
        $region16: #{tpu_custom_call.1} parent=11 // pred_fallthru
          _
        // Predicated region
        $region17: #{tpu_custom_call.1} parent=11 // pred_check
          %p140 = pneg %p94
        $region18: #{tpu_custom_call.1} parent=11 // pred_check_branch
          %142 = sbr.rel (%p140) target = $region20
        $region19: #{tpu_custom_call.1} parent=11 // pred_region
          _
        $region20: #{tpu_custom_call.1} parent=11 // pred_fallthru
          _
      $region12: #{tpu_custom_call.1} parent=5 // pred_fallthru
        _
      %p143 = scmp.lt.s32.totalorder %s12, 2
      // Predicated region
      $region21: #{tpu_custom_call.1} parent=5 // pred_check
        %p144 = pneg %p143
      $region22: #{tpu_custom_call.1} parent=5 // pred_check_branch
        %146 = sbr.rel (%p144) target = $region24
      $region23: #{tpu_custom_call.1} parent=5 // pred_region
        // Predicated region
        $region25: #{tpu_custom_call.1} parent=23 // pred_check
          %p147 = pneg %p46
        $region26: #{tpu_custom_call.1} parent=23 // pred_check_branch
          %149 = sbr.rel (%p147) target = $region28
        $region27: #{tpu_custom_call.1} parent=23 // pred_region
          %p150 = scmp.lt.s32.totalorder %s19, 1
          %s151 = scalar_select %p150, %s19, 1
          %p152 = scmp.lt.s32.totalorder %s20, 0
          %s153 = scalar_select %p152, %s20, 0
          %s154 = smul.addr %s153, 166
          %s155 = smul.addr %s151, 166
          %s156 = sadd.s32 %s154, %s155
          %s157 = smul.addr %s156, 8
          %s158 = scalar_lea.vmem %s0, %s157
        $region28: #{tpu_custom_call.1} parent=23 // pred_fallthru
          _
      $region24: #{tpu_custom_call.1} parent=5 // pred_fallthru
        _
      %p159 = scmp.le.s32.totalorder 1, %s12
      %p160 = scmp.lt.s32.totalorder %s12, 3
      %p161 = pnand %p159, %p160
      %p162 = pneg %p161
      // Predicated region
      $region29: #{tpu_custom_call.1} parent=5 // pred_check
        _
      $region30: #{tpu_custom_call.1} parent=5 // pred_check_branch
        %164 = sbr.rel (%p161) target = $region32
      $region31: #{tpu_custom_call.1} parent=5 // pred_region
        %s165 = ssub.s32 %s12, 1
        %p166 = scmp.lt.s32.totalorder %s21, 1
        %s167 = scalar_select %p166, %s21, 1
        %p168 = scmp.lt.s32.totalorder %s22, 0
        %s169 = scalar_select %p168, %s22, 0
        %s170 = smul.addr %s169, 166
        %s171 = smul.addr %s167, 166
        %s172 = sadd.s32 %s170, %s171
        %s173 = smul.addr %s172, 8
        %s174 = scalar_lea.vmem %s0, %s173
        %p175 = pneg %p52
        %p176 = pneg %p49
        %p177 = pneg %p73
        %p178 = pneg %p70
        %p179 = pneg %p94
        %p180 = pneg %p91
        %p181 = pneg %p122
        %p182 = pneg %p119
        %s183 = sand.u32 %s109, 1
        %s184 = scalar_lea.sflag [#allocation4], %s183
        %s185 = sand.u32 %s109, 1
        %s186 = smul.addr %s185, 1240
        %s187 = scalar_lea.vmem [#allocation3], %s186
        %p188 = scmp.lt.s32.totalorder %s21, 1
        %s189 = scalar_select %p188, %s21, 1
        %p190 = scmp.lt.s32.totalorder %s22, 0
        %s191 = scalar_select %p190, %s22, 0
        %s192 = smul.addr %s191, 166
        %s193 = smul.addr %s189, 166
        %s194 = sadd.s32 %s192, %s193
        %s195 = smul.addr %s194, 8
        %s196 = scalar_lea.vmem %s0, %s195
        %s197 = smul.u32 155, %s22
        %v198 = vld [vmem:[%s196] sm:$0xff]
        %v199 = vld [vmem:[%s196 + $0x8] sm:$0xff]
        %v200 = vld [vmem:[%s196 + $0x10] sm:$0xff]
        %v201 = vld [vmem:[%s196 + $0x18] sm:$0xff]
        %v202 = vld [vmem:[%s196 + $0x20] sm:$0xff]
        %v203 = vld [vmem:[%s196 + $0x28] sm:$0xff]
        %v204 = vld [vmem:[%s196 + $0x30] sm:$0xff]
        %v205 = vld [vmem:[%s196 + $0x38] sm:$0xff]
        %v206 = vld [vmem:[%s196 + $0x40] sm:$0xff]
        %v207 = vld [vmem:[%s196 + $0x48] sm:$0xff]
        %v208 = vld [vmem:[%s196 + $0x50] sm:$0xff]
        %v209 = vld [vmem:[%s196 + $0x58] sm:$0xff]
        %v210 = vld [vmem:[%s196 + $0x60] sm:$0xff]
        %v211 = vld [vmem:[%s196 + $0x68] sm:$0xff]
        %v212 = vld [vmem:[%s196 + $0x70] sm:$0xff]
        %v213 = vld [vmem:[%s196 + $0x78] sm:$0xff]
        %v214 = vld [vmem:[%s196 + $0x80] sm:$0xff]
        %v215 = vld [vmem:[%s196 + $0x88] sm:$0xff]
        %v216 = vld [vmem:[%s196 + $0x90] sm:$0xff]
        %v217 = vld [vmem:[%s196 + $0x98] sm:$0xff]
        %v218 = vld [vmem:[%s196 + $0xa0] sm:$0xff]
        %v219 = vld [vmem:[%s196 + $0xa8] sm:$0xff]
        %v220 = vld [vmem:[%s196 + $0xb0] sm:$0xff]
        %v221 = vld [vmem:[%s196 + $0xb8] sm:$0xff]
        %v222 = vld [vmem:[%s196 + $0xc0] sm:$0xff]
        %v223 = vld [vmem:[%s196 + $0xc8] sm:$0xff]
        %v224 = vld [vmem:[%s196 + $0xd0] sm:$0xff]
        %v225 = vld [vmem:[%s196 + $0xd8] sm:$0xff]
        %v226 = vld [vmem:[%s196 + $0xe0] sm:$0xff]
        %v227 = vld [vmem:[%s196 + $0xe8] sm:$0xff]
        %v228 = vld [vmem:[%s196 + $0xf0] sm:$0xff]
        %v229 = vld [vmem:[%s196 + $0xf8] sm:$0xff]
        %v230 = vld [vmem:[%s196 + $0x100] sm:$0xff]
        %v231 = vld [vmem:[%s196 + $0x108] sm:$0xff]
        %v232 = vld [vmem:[%s196 + $0x110] sm:$0xff]
        %v233 = vld [vmem:[%s196 + $0x118] sm:$0xff]
        %v234 = vld [vmem:[%s196 + $0x120] sm:$0xff]
        %v235 = vld [vmem:[%s196 + $0x128] sm:$0xff]
        %v236 = vld [vmem:[%s196 + $0x130] sm:$0xff]
        %v237 = vld [vmem:[%s196 + $0x138] sm:$0xff]
        %v238 = vld [vmem:[%s196 + $0x140] sm:$0xff]
        %v239 = vld [vmem:[%s196 + $0x148] sm:$0xff]
        %v240 = vld [vmem:[%s196 + $0x150] sm:$0xff]
        %v241 = vld [vmem:[%s196 + $0x158] sm:$0xff]
        %v242 = vld [vmem:[%s196 + $0x160] sm:$0xff]
        %v243 = vld [vmem:[%s196 + $0x168] sm:$0xff]
        %v244 = vld [vmem:[%s196 + $0x170] sm:$0xff]
        %v245 = vld [vmem:[%s196 + $0x178] sm:$0xff]
        %v246 = vld [vmem:[%s196 + $0x180] sm:$0xff]
        %v247 = vld [vmem:[%s196 + $0x188] sm:$0xff]
        %v248 = vld [vmem:[%s196 + $0x190] sm:$0xff]
        %v249 = vld [vmem:[%s196 + $0x198] sm:$0xff]
        %v250 = vld [vmem:[%s196 + $0x1a0] sm:$0xff]
        %v251 = vld [vmem:[%s196 + $0x1a8] sm:$0xff]
        %v252 = vld [vmem:[%s196 + $0x1b0] sm:$0xff]
        %v253 = vld [vmem:[%s196 + $0x1b8] sm:$0xff]
        %v254 = vld [vmem:[%s196 + $0x1c0] sm:$0xff]
        %v255 = vld [vmem:[%s196 + $0x1c8] sm:$0xff]
        %v256 = vld [vmem:[%s196 + $0x1d0] sm:$0xff]
        %v257 = vld [vmem:[%s196 + $0x1d8] sm:$0xff]
        %v258 = vld [vmem:[%s196 + $0x1e0] sm:$0xff]
        %v259 = vld [vmem:[%s196 + $0x1e8] sm:$0xff]
        %v260 = vld [vmem:[%s196 + $0x1f0] sm:$0xff]
        %v261 = vld [vmem:[%s196 + $0x1f8] sm:$0xff]
        %v262 = vld [vmem:[%s196 + $0x200] sm:$0xff]
        %v263 = vld [vmem:[%s196 + $0x208] sm:$0xff]
        %v264 = vld [vmem:[%s196 + $0x210] sm:$0xff]
        %v265 = vld [vmem:[%s196 + $0x218] sm:$0xff]
        %v266 = vld [vmem:[%s196 + $0x220] sm:$0xff]
        %v267 = vld [vmem:[%s196 + $0x228] sm:$0xff]
        %v268 = vld [vmem:[%s196 + $0x230] sm:$0xff]
        %v269 = vld [vmem:[%s196 + $0x238] sm:$0xff]
        %v270 = vld [vmem:[%s196 + $0x240] sm:$0xff]
        %v271 = vld [vmem:[%s196 + $0x248] sm:$0xff]
        %v272 = vld [vmem:[%s196 + $0x250] sm:$0xff]
        %v273 = vld [vmem:[%s196 + $0x258] sm:$0xff]
        %v274 = vld [vmem:[%s196 + $0x260] sm:$0xff]
        %v275 = vld [vmem:[%s196 + $0x268] sm:$0xff]
        %v276 = vld [vmem:[%s196 + $0x270] sm:$0xff]
        %v277 = vld [vmem:[%s196 + $0x278] sm:$0xff]
        %v278 = vld [vmem:[%s196 + $0x280] sm:$0xff]
        %v279 = vld [vmem:[%s196 + $0x288] sm:$0xff]
        %v280 = vld [vmem:[%s196 + $0x290] sm:$0xff]
        %v281 = vld [vmem:[%s196 + $0x298] sm:$0xff]
        %v282 = vld [vmem:[%s196 + $0x2a0] sm:$0xff]
        %v283 = vld [vmem:[%s196 + $0x2a8] sm:$0xff]
        %v284 = vld [vmem:[%s196 + $0x2b0] sm:$0xff]
        %v285 = vld [vmem:[%s196 + $0x2b8] sm:$0xff]
        %v286 = vld [vmem:[%s196 + $0x2c0] sm:$0xff]
        %v287 = vld [vmem:[%s196 + $0x2c8] sm:$0xff]
        %v288 = vld [vmem:[%s196 + $0x2d0] sm:$0xff]
        %v289 = vld [vmem:[%s196 + $0x2d8] sm:$0xff]
        %v290 = vld [vmem:[%s196 + $0x2e0] sm:$0xff]
        %v291 = vld [vmem:[%s196 + $0x2e8] sm:$0xff]
        %v292 = vld [vmem:[%s196 + $0x2f0] sm:$0xff]
        %v293 = vld [vmem:[%s196 + $0x2f8] sm:$0xff]
        %v294 = vld [vmem:[%s196 + $0x300] sm:$0xff]
        %v295 = vld [vmem:[%s196 + $0x308] sm:$0xff]
        %v296 = vld [vmem:[%s196 + $0x310] sm:$0xff]
        %v297 = vld [vmem:[%s196 + $0x318] sm:$0xff]
        %v298 = vld [vmem:[%s196 + $0x320] sm:$0xff]
        %v299 = vld [vmem:[%s196 + $0x328] sm:$0xff]
        %v300 = vld [vmem:[%s196 + $0x330] sm:$0xff]
        %v301 = vld [vmem:[%s196 + $0x338] sm:$0xff]
        %v302 = vld [vmem:[%s196 + $0x340] sm:$0xff]
        %v303 = vld [vmem:[%s196 + $0x348] sm:$0xff]
        %v304 = vld [vmem:[%s196 + $0x350] sm:$0xff]
        %v305 = vld [vmem:[%s196 + $0x358] sm:$0xff]
        %v306 = vld [vmem:[%s196 + $0x360] sm:$0xff]
        %v307 = vld [vmem:[%s196 + $0x368] sm:$0xff]
        %v308 = vld [vmem:[%s196 + $0x370] sm:$0xff]
        %v309 = vld [vmem:[%s196 + $0x378] sm:$0xff]
        %v310 = vld [vmem:[%s196 + $0x380] sm:$0xff]
        %v311 = vld [vmem:[%s196 + $0x388] sm:$0xff]
        %v312 = vld [vmem:[%s196 + $0x390] sm:$0xff]
        %v313 = vld [vmem:[%s196 + $0x398] sm:$0xff]
        %v314 = vld [vmem:[%s196 + $0x3a0] sm:$0xff]
        %v315 = vld [vmem:[%s196 + $0x3a8] sm:$0xff]
        %v316 = vld [vmem:[%s196 + $0x3b0] sm:$0xff]
        %v317 = vld [vmem:[%s196 + $0x3b8] sm:$0xff]
        %v318 = vld [vmem:[%s196 + $0x3c0] sm:$0xff]
        %v319 = vld [vmem:[%s196 + $0x3c8] sm:$0xff]
        %v320 = vld [vmem:[%s196 + $0x3d0] sm:$0xff]
        %v321 = vld [vmem:[%s196 + $0x3d8] sm:$0xff]
        %v322 = vld [vmem:[%s196 + $0x3e0] sm:$0xff]
        %v323 = vld [vmem:[%s196 + $0x3e8] sm:$0xff]
        %v324 = vld [vmem:[%s196 + $0x3f0] sm:$0xff]
        %v325 = vld [vmem:[%s196 + $0x3f8] sm:$0xff]
        %v326 = vld [vmem:[%s196 + $0x400] sm:$0xff]
        %v327 = vld [vmem:[%s196 + $0x408] sm:$0xff]
        %v328 = vld [vmem:[%s196 + $0x410] sm:$0xff]
        %v329 = vld [vmem:[%s196 + $0x418] sm:$0xff]
        %v330 = vld [vmem:[%s196 + $0x420] sm:$0xff]
        %v331 = vld [vmem:[%s196 + $0x428] sm:$0xff]
        %v332 = vld [vmem:[%s196 + $0x430] sm:$0xff]
        %v333 = vld [vmem:[%s196 + $0x438] sm:$0xff]
        %v334 = vld [vmem:[%s196 + $0x440] sm:$0xff]
        %v335 = vld [vmem:[%s196 + $0x448] sm:$0xff]
        %v336 = vld [vmem:[%s196 + $0x450] sm:$0xff]
        %v337 = vld [vmem:[%s196 + $0x458] sm:$0xff]
        %v338 = vld [vmem:[%s196 + $0x460] sm:$0xff]
        %v339 = vld [vmem:[%s196 + $0x468] sm:$0xff]
        %v340 = vld [vmem:[%s196 + $0x470] sm:$0xff]
        %v341 = vld [vmem:[%s196 + $0x478] sm:$0xff]
        %v342 = vld [vmem:[%s196 + $0x480] sm:$0xff]
        %v343 = vld [vmem:[%s196 + $0x488] sm:$0xff]
        %v344 = vld [vmem:[%s196 + $0x490] sm:$0xff]
        %v345 = vld [vmem:[%s196 + $0x498] sm:$0xff]
        %v346 = vld [vmem:[%s196 + $0x4a0] sm:$0xff]
        %v347 = vld [vmem:[%s196 + $0x4a8] sm:$0xff]
        %v348 = vld [vmem:[%s196 + $0x4b0] sm:$0xff]
        %v349 = vld [vmem:[%s196 + $0x4b8] sm:$0xff]
        %v350 = vld [vmem:[%s196 + $0x4c0] sm:$0xff]
        %v351 = vld [vmem:[%s196 + $0x4c8] sm:$0xff]
        %v352 = vld [vmem:[%s196 + $0x4d0] sm:$0xff]
        %vm353 = vcmask 31744
        %354 = vst.msk [vmem:[#allocation2] sm:$0xff] %vm353, %v198
        %355 = vst.msk [vmem:[#allocation2 + $0x8] sm:$0xff] %vm353, %v199
        %356 = vst.msk [vmem:[#allocation2 + $0x10] sm:$0xff] %vm353, %v200
        %357 = vst.msk [vmem:[#allocation2 + $0x18] sm:$0xff] %vm353, %v201
        %358 = vst.msk [vmem:[#allocation2 + $0x20] sm:$0xff] %vm353, %v202
        %359 = vst.msk [vmem:[#allocation2 + $0x28] sm:$0xff] %vm353, %v203
        %360 = vst.msk [vmem:[#allocation2 + $0x30] sm:$0xff] %vm353, %v204
        %361 = vst.msk [vmem:[#allocation2 + $0x38] sm:$0xff] %vm353, %v205
        %362 = vst.msk [vmem:[#allocation2 + $0x40] sm:$0xff] %vm353, %v206
        %363 = vst.msk [vmem:[#allocation2 + $0x48] sm:$0xff] %vm353, %v207
        %364 = vst.msk [vmem:[#allocation2 + $0x50] sm:$0xff] %vm353, %v208
        %365 = vst.msk [vmem:[#allocation2 + $0x58] sm:$0xff] %vm353, %v209
        %366 = vst.msk [vmem:[#allocation2 + $0x60] sm:$0xff] %vm353, %v210
        %367 = vst.msk [vmem:[#allocation2 + $0x68] sm:$0xff] %vm353, %v211
        %368 = vst.msk [vmem:[#allocation2 + $0x70] sm:$0xff] %vm353, %v212
        %369 = vst.msk [vmem:[#allocation2 + $0x78] sm:$0xff] %vm353, %v213
        %370 = vst.msk [vmem:[#allocation2 + $0x80] sm:$0xff] %vm353, %v214
        %371 = vst.msk [vmem:[#allocation2 + $0x88] sm:$0xff] %vm353, %v215
        %372 = vst.msk [vmem:[#allocation2 + $0x90] sm:$0xff] %vm353, %v216
        %373 = vst.msk [vmem:[#allocation2 + $0x98] sm:$0xff] %vm353, %v217
        %374 = vst.msk [vmem:[#allocation2 + $0xa0] sm:$0xff] %vm353, %v218
        %375 = vst.msk [vmem:[#allocation2 + $0xa8] sm:$0xff] %vm353, %v219
        %376 = vst.msk [vmem:[#allocation2 + $0xb0] sm:$0xff] %vm353, %v220
        %377 = vst.msk [vmem:[#allocation2 + $0xb8] sm:$0xff] %vm353, %v221
        %378 = vst.msk [vmem:[#allocation2 + $0xc0] sm:$0xff] %vm353, %v222
        %379 = vst.msk [vmem:[#allocation2 + $0xc8] sm:$0xff] %vm353, %v223
        %380 = vst.msk [vmem:[#allocation2 + $0xd0] sm:$0xff] %vm353, %v224
        %381 = vst.msk [vmem:[#allocation2 + $0xd8] sm:$0xff] %vm353, %v225
        %382 = vst.msk [vmem:[#allocation2 + $0xe0] sm:$0xff] %vm353, %v226
        %383 = vst.msk [vmem:[#allocation2 + $0xe8] sm:$0xff] %vm353, %v227
        %384 = vst.msk [vmem:[#allocation2 + $0xf0] sm:$0xff] %vm353, %v228
        %385 = vst.msk [vmem:[#allocation2 + $0xf8] sm:$0xff] %vm353, %v229
        %386 = vst.msk [vmem:[#allocation2 + $0x100] sm:$0xff] %vm353, %v230
        %387 = vst.msk [vmem:[#allocation2 + $0x108] sm:$0xff] %vm353, %v231
        %388 = vst.msk [vmem:[#allocation2 + $0x110] sm:$0xff] %vm353, %v232
        %389 = vst.msk [vmem:[#allocation2 + $0x118] sm:$0xff] %vm353, %v233
        %390 = vst.msk [vmem:[#allocation2 + $0x120] sm:$0xff] %vm353, %v234
        %391 = vst.msk [vmem:[#allocation2 + $0x128] sm:$0xff] %vm353, %v235
        %392 = vst.msk [vmem:[#allocation2 + $0x130] sm:$0xff] %vm353, %v236
        %393 = vst.msk [vmem:[#allocation2 + $0x138] sm:$0xff] %vm353, %v237
        %394 = vst.msk [vmem:[#allocation2 + $0x140] sm:$0xff] %vm353, %v238
        %395 = vst.msk [vmem:[#allocation2 + $0x148] sm:$0xff] %vm353, %v239
        %396 = vst.msk [vmem:[#allocation2 + $0x150] sm:$0xff] %vm353, %v240
        %397 = vst.msk [vmem:[#allocation2 + $0x158] sm:$0xff] %vm353, %v241
        %398 = vst.msk [vmem:[#allocation2 + $0x160] sm:$0xff] %vm353, %v242
        %399 = vst.msk [vmem:[#allocation2 + $0x168] sm:$0xff] %vm353, %v243
        %400 = vst.msk [vmem:[#allocation2 + $0x170] sm:$0xff] %vm353, %v244
        %401 = vst.msk [vmem:[#allocation2 + $0x178] sm:$0xff] %vm353, %v245
        %402 = vst.msk [vmem:[#allocation2 + $0x180] sm:$0xff] %vm353, %v246
        %403 = vst.msk [vmem:[#allocation2 + $0x188] sm:$0xff] %vm353, %v247
        %404 = vst.msk [vmem:[#allocation2 + $0x190] sm:$0xff] %vm353, %v248
        %405 = vst.msk [vmem:[#allocation2 + $0x198] sm:$0xff] %vm353, %v249
        %406 = vst.msk [vmem:[#allocation2 + $0x1a0] sm:$0xff] %vm353, %v250
        %407 = vst.msk [vmem:[#allocation2 + $0x1a8] sm:$0xff] %vm353, %v251
        %408 = vst.msk [vmem:[#allocation2 + $0x1b0] sm:$0xff] %vm353, %v252
        %409 = vst.msk [vmem:[#allocation2 + $0x1b8] sm:$0xff] %vm353, %v253
        %410 = vst.msk [vmem:[#allocation2 + $0x1c0] sm:$0xff] %vm353, %v254
        %411 = vst.msk [vmem:[#allocation2 + $0x1c8] sm:$0xff] %vm353, %v255
        %412 = vst.msk [vmem:[#allocation2 + $0x1d0] sm:$0xff] %vm353, %v256
        %413 = vst.msk [vmem:[#allocation2 + $0x1d8] sm:$0xff] %vm353, %v257
        %414 = vst.msk [vmem:[#allocation2 + $0x1e0] sm:$0xff] %vm353, %v258
        %415 = vst.msk [vmem:[#allocation2 + $0x1e8] sm:$0xff] %vm353, %v259
        %416 = vst.msk [vmem:[#allocation2 + $0x1f0] sm:$0xff] %vm353, %v260
        %417 = vst.msk [vmem:[#allocation2 + $0x1f8] sm:$0xff] %vm353, %v261
        %418 = vst.msk [vmem:[#allocation2 + $0x200] sm:$0xff] %vm353, %v262
        %419 = vst.msk [vmem:[#allocation2 + $0x208] sm:$0xff] %vm353, %v263
        %420 = vst.msk [vmem:[#allocation2 + $0x210] sm:$0xff] %vm353, %v264
        %421 = vst.msk [vmem:[#allocation2 + $0x218] sm:$0xff] %vm353, %v265
        %422 = vst.msk [vmem:[#allocation2 + $0x220] sm:$0xff] %vm353, %v266
        %423 = vst.msk [vmem:[#allocation2 + $0x228] sm:$0xff] %vm353, %v267
        %424 = vst.msk [vmem:[#allocation2 + $0x230] sm:$0xff] %vm353, %v268
        %425 = vst.msk [vmem:[#allocation2 + $0x238] sm:$0xff] %vm353, %v269
        %426 = vst.msk [vmem:[#allocation2 + $0x240] sm:$0xff] %vm353, %v270
        %427 = vst.msk [vmem:[#allocation2 + $0x248] sm:$0xff] %vm353, %v271
        %428 = vst.msk [vmem:[#allocation2 + $0x250] sm:$0xff] %vm353, %v272
        %429 = vst.msk [vmem:[#allocation2 + $0x258] sm:$0xff] %vm353, %v273
        %430 = vst.msk [vmem:[#allocation2 + $0x260] sm:$0xff] %vm353, %v274
        %431 = vst.msk [vmem:[#allocation2 + $0x268] sm:$0xff] %vm353, %v275
        %432 = vst.msk [vmem:[#allocation2 + $0x270] sm:$0xff] %vm353, %v276
        %433 = vst.msk [vmem:[#allocation2 + $0x278] sm:$0xff] %vm353, %v277
        %434 = vst.msk [vmem:[#allocation2 + $0x280] sm:$0xff] %vm353, %v278
        %435 = vst.msk [vmem:[#allocation2 + $0x288] sm:$0xff] %vm353, %v279
        %436 = vst.msk [vmem:[#allocation2 + $0x290] sm:$0xff] %vm353, %v280
        %437 = vst.msk [vmem:[#allocation2 + $0x298] sm:$0xff] %vm353, %v281
        %438 = vst.msk [vmem:[#allocation2 + $0x2a0] sm:$0xff] %vm353, %v282
        %439 = vst.msk [vmem:[#allocation2 + $0x2a8] sm:$0xff] %vm353, %v283
        %440 = vst.msk [vmem:[#allocation2 + $0x2b0] sm:$0xff] %vm353, %v284
        %441 = vst.msk [vmem:[#allocation2 + $0x2b8] sm:$0xff] %vm353, %v285
        %442 = vst.msk [vmem:[#allocation2 + $0x2c0] sm:$0xff] %vm353, %v286
        %443 = vst.msk [vmem:[#allocation2 + $0x2c8] sm:$0xff] %vm353, %v287
        %444 = vst.msk [vmem:[#allocation2 + $0x2d0] sm:$0xff] %vm353, %v288
        %445 = vst.msk [vmem:[#allocation2 + $0x2d8] sm:$0xff] %vm353, %v289
        %446 = vst.msk [vmem:[#allocation2 + $0x2e0] sm:$0xff] %vm353, %v290
        %447 = vst.msk [vmem:[#allocation2 + $0x2e8] sm:$0xff] %vm353, %v291
        %448 = vst.msk [vmem:[#allocation2 + $0x2f0] sm:$0xff] %vm353, %v292
        %449 = vst.msk [vmem:[#allocation2 + $0x2f8] sm:$0xff] %vm353, %v293
        %450 = vst.msk [vmem:[#allocation2 + $0x300] sm:$0xff] %vm353, %v294
        %451 = vst.msk [vmem:[#allocation2 + $0x308] sm:$0xff] %vm353, %v295
        %452 = vst.msk [vmem:[#allocation2 + $0x310] sm:$0xff] %vm353, %v296
        %453 = vst.msk [vmem:[#allocation2 + $0x318] sm:$0xff] %vm353, %v297
        %454 = vst.msk [vmem:[#allocation2 + $0x320] sm:$0xff] %vm353, %v298
        %455 = vst.msk [vmem:[#allocation2 + $0x328] sm:$0xff] %vm353, %v299
        %456 = vst.msk [vmem:[#allocation2 + $0x330] sm:$0xff] %vm353, %v300
        %457 = vst.msk [vmem:[#allocation2 + $0x338] sm:$0xff] %vm353, %v301
        %458 = vst.msk [vmem:[#allocation2 + $0x340] sm:$0xff] %vm353, %v302
        %459 = vst.msk [vmem:[#allocation2 + $0x348] sm:$0xff] %vm353, %v303
        %460 = vst.msk [vmem:[#allocation2 + $0x350] sm:$0xff] %vm353, %v304
        %461 = vst.msk [vmem:[#allocation2 + $0x358] sm:$0xff] %vm353, %v305
        %462 = vst.msk [vmem:[#allocation2 + $0x360] sm:$0xff] %vm353, %v306
        %463 = vst.msk [vmem:[#allocation2 + $0x368] sm:$0xff] %vm353, %v307
        %464 = vst.msk [vmem:[#allocation2 + $0x370] sm:$0xff] %vm353, %v308
        %465 = vst.msk [vmem:[#allocation2 + $0x378] sm:$0xff] %vm353, %v309
        %466 = vst.msk [vmem:[#allocation2 + $0x380] sm:$0xff] %vm353, %v310
        %467 = vst.msk [vmem:[#allocation2 + $0x388] sm:$0xff] %vm353, %v311
        %468 = vst.msk [vmem:[#allocation2 + $0x390] sm:$0xff] %vm353, %v312
        %469 = vst.msk [vmem:[#allocation2 + $0x398] sm:$0xff] %vm353, %v313
        %470 = vst.msk [vmem:[#allocation2 + $0x3a0] sm:$0xff] %vm353, %v314
        %471 = vst.msk [vmem:[#allocation2 + $0x3a8] sm:$0xff] %vm353, %v315
        %472 = vst.msk [vmem:[#allocation2 + $0x3b0] sm:$0xff] %vm353, %v316
        %473 = vst.msk [vmem:[#allocation2 + $0x3b8] sm:$0xff] %vm353, %v317
        %474 = vst.msk [vmem:[#allocation2 + $0x3c0] sm:$0xff] %vm353, %v318
        %475 = vst.msk [vmem:[#allocation2 + $0x3c8] sm:$0xff] %vm353, %v319
        %476 = vst.msk [vmem:[#allocation2 + $0x3d0] sm:$0xff] %vm353, %v320
        %477 = vst.msk [vmem:[#allocation2 + $0x3d8] sm:$0xff] %vm353, %v321
        %478 = vst.msk [vmem:[#allocation2 + $0x3e0] sm:$0xff] %vm353, %v322
        %479 = vst.msk [vmem:[#allocation2 + $0x3e8] sm:$0xff] %vm353, %v323
        %480 = vst.msk [vmem:[#allocation2 + $0x3f0] sm:$0xff] %vm353, %v324
        %481 = vst.msk [vmem:[#allocation2 + $0x3f8] sm:$0xff] %vm353, %v325
        %482 = vst.msk [vmem:[#allocation2 + $0x400] sm:$0xff] %vm353, %v326
        %483 = vst.msk [vmem:[#allocation2 + $0x408] sm:$0xff] %vm353, %v327
        %484 = vst.msk [vmem:[#allocation2 + $0x410] sm:$0xff] %vm353, %v328
        %485 = vst.msk [vmem:[#allocation2 + $0x418] sm:$0xff] %vm353, %v329
        %486 = vst.msk [vmem:[#allocation2 + $0x420] sm:$0xff] %vm353, %v330
        %487 = vst.msk [vmem:[#allocation2 + $0x428] sm:$0xff] %vm353, %v331
        %488 = vst.msk [vmem:[#allocation2 + $0x430] sm:$0xff] %vm353, %v332
        %489 = vst.msk [vmem:[#allocation2 + $0x438] sm:$0xff] %vm353, %v333
        %490 = vst.msk [vmem:[#allocation2 + $0x440] sm:$0xff] %vm353, %v334
        %491 = vst.msk [vmem:[#allocation2 + $0x448] sm:$0xff] %vm353, %v335
        %492 = vst.msk [vmem:[#allocation2 + $0x450] sm:$0xff] %vm353, %v336
        %493 = vst.msk [vmem:[#allocation2 + $0x458] sm:$0xff] %vm353, %v337
        %494 = vst.msk [vmem:[#allocation2 + $0x460] sm:$0xff] %vm353, %v338
        %495 = vst.msk [vmem:[#allocation2 + $0x468] sm:$0xff] %vm353, %v339
        %496 = vst.msk [vmem:[#allocation2 + $0x470] sm:$0xff] %vm353, %v340
        %497 = vst.msk [vmem:[#allocation2 + $0x478] sm:$0xff] %vm353, %v341
        %498 = vst.msk [vmem:[#allocation2 + $0x480] sm:$0xff] %vm353, %v342
        %499 = vst.msk [vmem:[#allocation2 + $0x488] sm:$0xff] %vm353, %v343
        %500 = vst.msk [vmem:[#allocation2 + $0x490] sm:$0xff] %vm353, %v344
        %501 = vst.msk [vmem:[#allocation2 + $0x498] sm:$0xff] %vm353, %v345
        %502 = vst.msk [vmem:[#allocation2 + $0x4a0] sm:$0xff] %vm353, %v346
        %503 = vst.msk [vmem:[#allocation2 + $0x4a8] sm:$0xff] %vm353, %v347
        %504 = vst.msk [vmem:[#allocation2 + $0x4b0] sm:$0xff] %vm353, %v348
        %505 = vst.msk [vmem:[#allocation2 + $0x4b8] sm:$0xff] %vm353, %v349
        %506 = vst.msk [vmem:[#allocation2 + $0x4c0] sm:$0xff] %vm353, %v350
        %507 = vst.msk [vmem:[#allocation2 + $0x4c8] sm:$0xff] %vm353, %v351
        %508 = vst.msk [vmem:[#allocation2 + $0x4d0] sm:$0xff] %vm353, %v352
        %v509 = vld [vmem:[%s196 + $0x1] sm:$0xff]
        %v510 = vld [vmem:[%s196 + $0x9] sm:$0xff]
        %v511 = vld [vmem:[%s196 + $0x11] sm:$0xff]
        %v512 = vld [vmem:[%s196 + $0x19] sm:$0xff]
        %v513 = vld [vmem:[%s196 + $0x21] sm:$0xff]
        %v514 = vld [vmem:[%s196 + $0x29] sm:$0xff]
        %v515 = vld [vmem:[%s196 + $0x31] sm:$0xff]
        %v516 = vld [vmem:[%s196 + $0x39] sm:$0xff]
        %v517 = vld [vmem:[%s196 + $0x41] sm:$0xff]
        %v518 = vld [vmem:[%s196 + $0x49] sm:$0xff]
        %v519 = vld [vmem:[%s196 + $0x51] sm:$0xff]
        %v520 = vld [vmem:[%s196 + $0x59] sm:$0xff]
        %v521 = vld [vmem:[%s196 + $0x61] sm:$0xff]
        %v522 = vld [vmem:[%s196 + $0x69] sm:$0xff]
        %v523 = vld [vmem:[%s196 + $0x71] sm:$0xff]
        %v524 = vld [vmem:[%s196 + $0x79] sm:$0xff]
        %v525 = vld [vmem:[%s196 + $0x81] sm:$0xff]
        %v526 = vld [vmem:[%s196 + $0x89] sm:$0xff]
        %v527 = vld [vmem:[%s196 + $0x91] sm:$0xff]
        %v528 = vld [vmem:[%s196 + $0x99] sm:$0xff]
        %v529 = vld [vmem:[%s196 + $0xa1] sm:$0xff]
        %v530 = vld [vmem:[%s196 + $0xa9] sm:$0xff]
        %v531 = vld [vmem:[%s196 + $0xb1] sm:$0xff]
        %v532 = vld [vmem:[%s196 + $0xb9] sm:$0xff]
        %v533 = vld [vmem:[%s196 + $0xc1] sm:$0xff]
        %v534 = vld [vmem:[%s196 + $0xc9] sm:$0xff]
        %v535 = vld [vmem:[%s196 + $0xd1] sm:$0xff]
        %v536 = vld [vmem:[%s196 + $0xd9] sm:$0xff]
        %v537 = vld [vmem:[%s196 + $0xe1] sm:$0xff]
        %v538 = vld [vmem:[%s196 + $0xe9] sm:$0xff]
        %v539 = vld [vmem:[%s196 + $0xf1] sm:$0xff]
        %v540 = vld [vmem:[%s196 + $0xf9] sm:$0xff]
        %v541 = vld [vmem:[%s196 + $0x101] sm:$0xff]
        %v542 = vld [vmem:[%s196 + $0x109] sm:$0xff]
        %v543 = vld [vmem:[%s196 + $0x111] sm:$0xff]
        %v544 = vld [vmem:[%s196 + $0x119] sm:$0xff]
        %v545 = vld [vmem:[%s196 + $0x121] sm:$0xff]
        %v546 = vld [vmem:[%s196 + $0x129] sm:$0xff]
        %v547 = vld [vmem:[%s196 + $0x131] sm:$0xff]
        %v548 = vld [vmem:[%s196 + $0x139] sm:$0xff]
        %v549 = vld [vmem:[%s196 + $0x141] sm:$0xff]
        %v550 = vld [vmem:[%s196 + $0x149] sm:$0xff]
        %v551 = vld [vmem:[%s196 + $0x151] sm:$0xff]
        %v552 = vld [vmem:[%s196 + $0x159] sm:$0xff]
        %v553 = vld [vmem:[%s196 + $0x161] sm:$0xff]
        %v554 = vld [vmem:[%s196 + $0x169] sm:$0xff]
        %v555 = vld [vmem:[%s196 + $0x171] sm:$0xff]
        %v556 = vld [vmem:[%s196 + $0x179] sm:$0xff]
        %v557 = vld [vmem:[%s196 + $0x181] sm:$0xff]
        %v558 = vld [vmem:[%s196 + $0x189] sm:$0xff]
        %v559 = vld [vmem:[%s196 + $0x191] sm:$0xff]
        %v560 = vld [vmem:[%s196 + $0x199] sm:$0xff]
        %v561 = vld [vmem:[%s196 + $0x1a1] sm:$0xff]
        %v562 = vld [vmem:[%s196 + $0x1a9] sm:$0xff]
        %v563 = vld [vmem:[%s196 + $0x1b1] sm:$0xff]
        %v564 = vld [vmem:[%s196 + $0x1b9] sm:$0xff]
        %v565 = vld [vmem:[%s196 + $0x1c1] sm:$0xff]
        %v566 = vld [vmem:[%s196 + $0x1c9] sm:$0xff]
        %v567 = vld [vmem:[%s196 + $0x1d1] sm:$0xff]
        %v568 = vld [vmem:[%s196 + $0x1d9] sm:$0xff]
        %v569 = vld [vmem:[%s196 + $0x1e1] sm:$0xff]
        %v570 = vld [vmem:[%s196 + $0x1e9] sm:$0xff]
        %v571 = vld [vmem:[%s196 + $0x1f1] sm:$0xff]
        %v572 = vld [vmem:[%s196 + $0x1f9] sm:$0xff]
        %v573 = vld [vmem:[%s196 + $0x201] sm:$0xff]
        %v574 = vld [vmem:[%s196 + $0x209] sm:$0xff]
        %v575 = vld [vmem:[%s196 + $0x211] sm:$0xff]
        %v576 = vld [vmem:[%s196 + $0x219] sm:$0xff]
        %v577 = vld [vmem:[%s196 + $0x221] sm:$0xff]
        %v578 = vld [vmem:[%s196 + $0x229] sm:$0xff]
        %v579 = vld [vmem:[%s196 + $0x231] sm:$0xff]
        %v580 = vld [vmem:[%s196 + $0x239] sm:$0xff]
        %v581 = vld [vmem:[%s196 + $0x241] sm:$0xff]
        %v582 = vld [vmem:[%s196 + $0x249] sm:$0xff]
        %v583 = vld [vmem:[%s196 + $0x251] sm:$0xff]
        %v584 = vld [vmem:[%s196 + $0x259] sm:$0xff]
        %v585 = vld [vmem:[%s196 + $0x261] sm:$0xff]
        %v586 = vld [vmem:[%s196 + $0x269] sm:$0xff]
        %v587 = vld [vmem:[%s196 + $0x271] sm:$0xff]
        %v588 = vld [vmem:[%s196 + $0x279] sm:$0xff]
        %v589 = vld [vmem:[%s196 + $0x281] sm:$0xff]
        %v590 = vld [vmem:[%s196 + $0x289] sm:$0xff]
        %v591 = vld [vmem:[%s196 + $0x291] sm:$0xff]
        %v592 = vld [vmem:[%s196 + $0x299] sm:$0xff]
        %v593 = vld [vmem:[%s196 + $0x2a1] sm:$0xff]
        %v594 = vld [vmem:[%s196 + $0x2a9] sm:$0xff]
        %v595 = vld [vmem:[%s196 + $0x2b1] sm:$0xff]
        %v596 = vld [vmem:[%s196 + $0x2b9] sm:$0xff]
        %v597 = vld [vmem:[%s196 + $0x2c1] sm:$0xff]
        %v598 = vld [vmem:[%s196 + $0x2c9] sm:$0xff]
        %v599 = vld [vmem:[%s196 + $0x2d1] sm:$0xff]
        %v600 = vld [vmem:[%s196 + $0x2d9] sm:$0xff]
        %v601 = vld [vmem:[%s196 + $0x2e1] sm:$0xff]
        %v602 = vld [vmem:[%s196 + $0x2e9] sm:$0xff]
        %v603 = vld [vmem:[%s196 + $0x2f1] sm:$0xff]
        %v604 = vld [vmem:[%s196 + $0x2f9] sm:$0xff]
        %v605 = vld [vmem:[%s196 + $0x301] sm:$0xff]
        %v606 = vld [vmem:[%s196 + $0x309] sm:$0xff]
        %v607 = vld [vmem:[%s196 + $0x311] sm:$0xff]
        %v608 = vld [vmem:[%s196 + $0x319] sm:$0xff]
        %v609 = vld [vmem:[%s196 + $0x321] sm:$0xff]
        %v610 = vld [vmem:[%s196 + $0x329] sm:$0xff]
        %v611 = vld [vmem:[%s196 + $0x331] sm:$0xff]
        %v612 = vld [vmem:[%s196 + $0x339] sm:$0xff]
        %v613 = vld [vmem:[%s196 + $0x341] sm:$0xff]
        %v614 = vld [vmem:[%s196 + $0x349] sm:$0xff]
        %v615 = vld [vmem:[%s196 + $0x351] sm:$0xff]
        %v616 = vld [vmem:[%s196 + $0x359] sm:$0xff]
        %v617 = vld [vmem:[%s196 + $0x361] sm:$0xff]
        %v618 = vld [vmem:[%s196 + $0x369] sm:$0xff]
        %v619 = vld [vmem:[%s196 + $0x371] sm:$0xff]
        %v620 = vld [vmem:[%s196 + $0x379] sm:$0xff]
        %v621 = vld [vmem:[%s196 + $0x381] sm:$0xff]
        %v622 = vld [vmem:[%s196 + $0x389] sm:$0xff]
        %v623 = vld [vmem:[%s196 + $0x391] sm:$0xff]
        %v624 = vld [vmem:[%s196 + $0x399] sm:$0xff]
        %v625 = vld [vmem:[%s196 + $0x3a1] sm:$0xff]
        %v626 = vld [vmem:[%s196 + $0x3a9] sm:$0xff]
        %v627 = vld [vmem:[%s196 + $0x3b1] sm:$0xff]
        %v628 = vld [vmem:[%s196 + $0x3b9] sm:$0xff]
        %v629 = vld [vmem:[%s196 + $0x3c1] sm:$0xff]
        %v630 = vld [vmem:[%s196 + $0x3c9] sm:$0xff]
        %v631 = vld [vmem:[%s196 + $0x3d1] sm:$0xff]
        %v632 = vld [vmem:[%s196 + $0x3d9] sm:$0xff]
        %v633 = vld [vmem:[%s196 + $0x3e1] sm:$0xff]
        %v634 = vld [vmem:[%s196 + $0x3e9] sm:$0xff]
        %v635 = vld [vmem:[%s196 + $0x3f1] sm:$0xff]
        %v636 = vld [vmem:[%s196 + $0x3f9] sm:$0xff]
        %v637 = vld [vmem:[%s196 + $0x401] sm:$0xff]
        %v638 = vld [vmem:[%s196 + $0x409] sm:$0xff]
        %v639 = vld [vmem:[%s196 + $0x411] sm:$0xff]
        %v640 = vld [vmem:[%s196 + $0x419] sm:$0xff]
        %v641 = vld [vmem:[%s196 + $0x421] sm:$0xff]
        %v642 = vld [vmem:[%s196 + $0x429] sm:$0xff]
        %v643 = vld [vmem:[%s196 + $0x431] sm:$0xff]
        %v644 = vld [vmem:[%s196 + $0x439] sm:$0xff]
        %v645 = vld [vmem:[%s196 + $0x441] sm:$0xff]
        %v646 = vld [vmem:[%s196 + $0x449] sm:$0xff]
        %v647 = vld [vmem:[%s196 + $0x451] sm:$0xff]
        %v648 = vld [vmem:[%s196 + $0x459] sm:$0xff]
        %v649 = vld [vmem:[%s196 + $0x461] sm:$0xff]
        %v650 = vld [vmem:[%s196 + $0x469] sm:$0xff]
        %v651 = vld [vmem:[%s196 + $0x471] sm:$0xff]
        %v652 = vld [vmem:[%s196 + $0x479] sm:$0xff]
        %v653 = vld [vmem:[%s196 + $0x481] sm:$0xff]
        %v654 = vld [vmem:[%s196 + $0x489] sm:$0xff]
        %v655 = vld [vmem:[%s196 + $0x491] sm:$0xff]
        %v656 = vld [vmem:[%s196 + $0x499] sm:$0xff]
        %v657 = vld [vmem:[%s196 + $0x4a1] sm:$0xff]
        %v658 = vld [vmem:[%s196 + $0x4a9] sm:$0xff]
        %v659 = vld [vmem:[%s196 + $0x4b1] sm:$0xff]
        %v660 = vld [vmem:[%s196 + $0x4b9] sm:$0xff]
        %v661 = vld [vmem:[%s196 + $0x4c1] sm:$0xff]
        %v662 = vld [vmem:[%s196 + $0x4c9] sm:$0xff]
        %v663 = vld [vmem:[%s196 + $0x4d1] sm:$0xff]
        %819 = vrot.lane.b32.xlu0 %v509, 4
        %v820 = vpop.permute.xlu0 %819
        %821 = vrot.lane.b32.xlu0 %v510, 4
        %v822 = vpop.permute.xlu0 %821
        %823 = vrot.lane.b32.xlu0 %v511, 4
        %v824 = vpop.permute.xlu0 %823
        %825 = vrot.lane.b32.xlu0 %v512, 4
        %v826 = vpop.permute.xlu0 %825
        %827 = vrot.lane.b32.xlu0 %v513, 4
        %v828 = vpop.permute.xlu0 %827
        %829 = vrot.lane.b32.xlu0 %v514, 4
        %v830 = vpop.permute.xlu0 %829
        %831 = vrot.lane.b32.xlu0 %v515, 4
        %v832 = vpop.permute.xlu0 %831
        %833 = vrot.lane.b32.xlu0 %v516, 4
        %v834 = vpop.permute.xlu0 %833
        %835 = vrot.lane.b32.xlu0 %v517, 4
        %v836 = vpop.permute.xlu0 %835
        %837 = vrot.lane.b32.xlu0 %v518, 4
        %v838 = vpop.permute.xlu0 %837
        %839 = vrot.lane.b32.xlu0 %v519, 4
        %v840 = vpop.permute.xlu0 %839
        %841 = vrot.lane.b32.xlu0 %v520, 4
        %v842 = vpop.permute.xlu0 %841
        %843 = vrot.lane.b32.xlu0 %v521, 4
        %v844 = vpop.permute.xlu0 %843
        %845 = vrot.lane.b32.xlu0 %v522, 4
        %v846 = vpop.permute.xlu0 %845
        %847 = vrot.lane.b32.xlu0 %v523, 4
        %v848 = vpop.permute.xlu0 %847
        %849 = vrot.lane.b32.xlu0 %v524, 4
        %v850 = vpop.permute.xlu0 %849
        %851 = vrot.lane.b32.xlu0 %v525, 4
        %v852 = vpop.permute.xlu0 %851
        %853 = vrot.lane.b32.xlu0 %v526, 4
        %v854 = vpop.permute.xlu0 %853
        %855 = vrot.lane.b32.xlu0 %v527, 4
        %v856 = vpop.permute.xlu0 %855
        %857 = vrot.lane.b32.xlu0 %v528, 4
        %v858 = vpop.permute.xlu0 %857
        %859 = vrot.lane.b32.xlu0 %v529, 4
        %v860 = vpop.permute.xlu0 %859
        %861 = vrot.lane.b32.xlu0 %v530, 4
        %v862 = vpop.permute.xlu0 %861
        %863 = vrot.lane.b32.xlu0 %v531, 4
        %v864 = vpop.permute.xlu0 %863
        %865 = vrot.lane.b32.xlu0 %v532, 4
        %v866 = vpop.permute.xlu0 %865
        %867 = vrot.lane.b32.xlu0 %v533, 4
        %v868 = vpop.permute.xlu0 %867
        %869 = vrot.lane.b32.xlu0 %v534, 4
        %v870 = vpop.permute.xlu0 %869
        %871 = vrot.lane.b32.xlu0 %v535, 4
        %v872 = vpop.permute.xlu0 %871
        %873 = vrot.lane.b32.xlu0 %v536, 4
        %v874 = vpop.permute.xlu0 %873
        %875 = vrot.lane.b32.xlu0 %v537, 4
        %v876 = vpop.permute.xlu0 %875
        %877 = vrot.lane.b32.xlu0 %v538, 4
        %v878 = vpop.permute.xlu0 %877
        %879 = vrot.lane.b32.xlu0 %v539, 4
        %v880 = vpop.permute.xlu0 %879
        %881 = vrot.lane.b32.xlu0 %v540, 4
        %v882 = vpop.permute.xlu0 %881
        %883 = vrot.lane.b32.xlu0 %v541, 4
        %v884 = vpop.permute.xlu0 %883
        %885 = vrot.lane.b32.xlu0 %v542, 4
        %v886 = vpop.permute.xlu0 %885
        %887 = vrot.lane.b32.xlu0 %v543, 4
        %v888 = vpop.permute.xlu0 %887
        %889 = vrot.lane.b32.xlu0 %v544, 4
        %v890 = vpop.permute.xlu0 %889
        %891 = vrot.lane.b32.xlu0 %v545, 4
        %v892 = vpop.permute.xlu0 %891
        %893 = vrot.lane.b32.xlu0 %v546, 4
        %v894 = vpop.permute.xlu0 %893
        %895 = vrot.lane.b32.xlu0 %v547, 4
        %v896 = vpop.permute.xlu0 %895
        %897 = vrot.lane.b32.xlu0 %v548, 4
        %v898 = vpop.permute.xlu0 %897
        %899 = vrot.lane.b32.xlu0 %v549, 4
        %v900 = vpop.permute.xlu0 %899
        %901 = vrot.lane.b32.xlu0 %v550, 4
        %v902 = vpop.permute.xlu0 %901
        %903 = vrot.lane.b32.xlu0 %v551, 4
        %v904 = vpop.permute.xlu0 %903
        %905 = vrot.lane.b32.xlu0 %v552, 4
        %v906 = vpop.permute.xlu0 %905
        %907 = vrot.lane.b32.xlu0 %v553, 4
        %v908 = vpop.permute.xlu0 %907
        %909 = vrot.lane.b32.xlu0 %v554, 4
        %v910 = vpop.permute.xlu0 %909
        %911 = vrot.lane.b32.xlu0 %v555, 4
        %v912 = vpop.permute.xlu0 %911
        %913 = vrot.lane.b32.xlu0 %v556, 4
        %v914 = vpop.permute.xlu0 %913
        %915 = vrot.lane.b32.xlu0 %v557, 4
        %v916 = vpop.permute.xlu0 %915
        %917 = vrot.lane.b32.xlu0 %v558, 4
        %v918 = vpop.permute.xlu0 %917
        %919 = vrot.lane.b32.xlu0 %v559, 4
        %v920 = vpop.permute.xlu0 %919
        %921 = vrot.lane.b32.xlu0 %v560, 4
        %v922 = vpop.permute.xlu0 %921
        %923 = vrot.lane.b32.xlu0 %v561, 4
        %v924 = vpop.permute.xlu0 %923
        %925 = vrot.lane.b32.xlu0 %v562, 4
        %v926 = vpop.permute.xlu0 %925
        %927 = vrot.lane.b32.xlu0 %v563, 4
        %v928 = vpop.permute.xlu0 %927
        %929 = vrot.lane.b32.xlu0 %v564, 4
        %v930 = vpop.permute.xlu0 %929
        %931 = vrot.lane.b32.xlu0 %v565, 4
        %v932 = vpop.permute.xlu0 %931
        %933 = vrot.lane.b32.xlu0 %v566, 4
        %v934 = vpop.permute.xlu0 %933
        %935 = vrot.lane.b32.xlu0 %v567, 4
        %v936 = vpop.permute.xlu0 %935
        %937 = vrot.lane.b32.xlu0 %v568, 4
        %v938 = vpop.permute.xlu0 %937
        %939 = vrot.lane.b32.xlu0 %v569, 4
        %v940 = vpop.permute.xlu0 %939
        %941 = vrot.lane.b32.xlu0 %v570, 4
        %v942 = vpop.permute.xlu0 %941
        %943 = vrot.lane.b32.xlu0 %v571, 4
        %v944 = vpop.permute.xlu0 %943
        %945 = vrot.lane.b32.xlu0 %v572, 4
        %v946 = vpop.permute.xlu0 %945
        %947 = vrot.lane.b32.xlu0 %v573, 4
        %v948 = vpop.permute.xlu0 %947
        %949 = vrot.lane.b32.xlu0 %v574, 4
        %v950 = vpop.permute.xlu0 %949
        %951 = vrot.lane.b32.xlu0 %v575, 4
        %v952 = vpop.permute.xlu0 %951
        %953 = vrot.lane.b32.xlu0 %v576, 4
        %v954 = vpop.permute.xlu0 %953
        %955 = vrot.lane.b32.xlu0 %v577, 4
        %v956 = vpop.permute.xlu0 %955
        %957 = vrot.lane.b32.xlu0 %v578, 4
        %v958 = vpop.permute.xlu0 %957
        %959 = vrot.lane.b32.xlu0 %v579, 4
        %v960 = vpop.permute.xlu0 %959
        %961 = vrot.lane.b32.xlu0 %v580, 4
        %v962 = vpop.permute.xlu0 %961
        %963 = vrot.lane.b32.xlu0 %v581, 4
        %v964 = vpop.permute.xlu0 %963
        %965 = vrot.lane.b32.xlu0 %v582, 4
        %v966 = vpop.permute.xlu0 %965
        %967 = vrot.lane.b32.xlu0 %v583, 4
        %v968 = vpop.permute.xlu0 %967
        %969 = vrot.lane.b32.xlu0 %v584, 4
        %v970 = vpop.permute.xlu0 %969
        %971 = vrot.lane.b32.xlu0 %v585, 4
        %v972 = vpop.permute.xlu0 %971
        %973 = vrot.lane.b32.xlu0 %v586, 4
        %v974 = vpop.permute.xlu0 %973
        %975 = vrot.lane.b32.xlu0 %v587, 4
        %v976 = vpop.permute.xlu0 %975
        %977 = vrot.lane.b32.xlu0 %v588, 4
        %v978 = vpop.permute.xlu0 %977
        %979 = vrot.lane.b32.xlu0 %v589, 4
        %v980 = vpop.permute.xlu0 %979
        %981 = vrot.lane.b32.xlu0 %v590, 4
        %v982 = vpop.permute.xlu0 %981
        %983 = vrot.lane.b32.xlu0 %v591, 4
        %v984 = vpop.permute.xlu0 %983
        %985 = vrot.lane.b32.xlu0 %v592, 4
        %v986 = vpop.permute.xlu0 %985
        %987 = vrot.lane.b32.xlu0 %v593, 4
        %v988 = vpop.permute.xlu0 %987
        %989 = vrot.lane.b32.xlu0 %v594, 4
        %v990 = vpop.permute.xlu0 %989
        %991 = vrot.lane.b32.xlu0 %v595, 4
        %v992 = vpop.permute.xlu0 %991
        %993 = vrot.lane.b32.xlu0 %v596, 4
        %v994 = vpop.permute.xlu0 %993
        %995 = vrot.lane.b32.xlu0 %v597, 4
        %v996 = vpop.permute.xlu0 %995
        %997 = vrot.lane.b32.xlu0 %v598, 4
        %v998 = vpop.permute.xlu0 %997
        %999 = vrot.lane.b32.xlu0 %v599, 4
        %v1000 = vpop.permute.xlu0 %999
        %1001 = vrot.lane.b32.xlu0 %v600, 4
        %v1002 = vpop.permute.xlu0 %1001
        %1003 = vrot.lane.b32.xlu0 %v601, 4
        %v1004 = vpop.permute.xlu0 %1003
        %1005 = vrot.lane.b32.xlu0 %v602, 4
        %v1006 = vpop.permute.xlu0 %1005
        %1007 = vrot.lane.b32.xlu0 %v603, 4
        %v1008 = vpop.permute.xlu0 %1007
        %1009 = vrot.lane.b32.xlu0 %v604, 4
        %v1010 = vpop.permute.xlu0 %1009
        %1011 = vrot.lane.b32.xlu0 %v605, 4
        %v1012 = vpop.permute.xlu0 %1011
        %1013 = vrot.lane.b32.xlu0 %v606, 4
        %v1014 = vpop.permute.xlu0 %1013
        %1015 = vrot.lane.b32.xlu0 %v607, 4
        %v1016 = vpop.permute.xlu0 %1015
        %1017 = vrot.lane.b32.xlu0 %v608, 4
        %v1018 = vpop.permute.xlu0 %1017
        %1019 = vrot.lane.b32.xlu0 %v609, 4
        %v1020 = vpop.permute.xlu0 %1019
        %1021 = vrot.lane.b32.xlu0 %v610, 4
        %v1022 = vpop.permute.xlu0 %1021
        %1023 = vrot.lane.b32.xlu0 %v611, 4
        %v1024 = vpop.permute.xlu0 %1023
        %1025 = vrot.lane.b32.xlu0 %v612, 4
        %v1026 = vpop.permute.xlu0 %1025
        %1027 = vrot.lane.b32.xlu0 %v613, 4
        %v1028 = vpop.permute.xlu0 %1027
        %1029 = vrot.lane.b32.xlu0 %v614, 4
        %v1030 = vpop.permute.xlu0 %1029
        %1031 = vrot.lane.b32.xlu0 %v615, 4
        %v1032 = vpop.permute.xlu0 %1031
        %1033 = vrot.lane.b32.xlu0 %v616, 4
        %v1034 = vpop.permute.xlu0 %1033
        %1035 = vrot.lane.b32.xlu0 %v617, 4
        %v1036 = vpop.permute.xlu0 %1035
        %1037 = vrot.lane.b32.xlu0 %v618, 4
        %v1038 = vpop.permute.xlu0 %1037
        %1039 = vrot.lane.b32.xlu0 %v619, 4
        %v1040 = vpop.permute.xlu0 %1039
        %1041 = vrot.lane.b32.xlu0 %v620, 4
        %v1042 = vpop.permute.xlu0 %1041
        %1043 = vrot.lane.b32.xlu0 %v621, 4
        %v1044 = vpop.permute.xlu0 %1043
        %1045 = vrot.lane.b32.xlu0 %v622, 4
        %v1046 = vpop.permute.xlu0 %1045
        %1047 = vrot.lane.b32.xlu0 %v623, 4
        %v1048 = vpop.permute.xlu0 %1047
        %1049 = vrot.lane.b32.xlu0 %v624, 4
        %v1050 = vpop.permute.xlu0 %1049
        %1051 = vrot.lane.b32.xlu0 %v625, 4
        %v1052 = vpop.permute.xlu0 %1051
        %1053 = vrot.lane.b32.xlu0 %v626, 4
        %v1054 = vpop.permute.xlu0 %1053
        %1055 = vrot.lane.b32.xlu0 %v627, 4
        %v1056 = vpop.permute.xlu0 %1055
        %1057 = vrot.lane.b32.xlu0 %v628, 4
        %v1058 = vpop.permute.xlu0 %1057
        %1059 = vrot.lane.b32.xlu0 %v629, 4
        %v1060 = vpop.permute.xlu0 %1059
        %1061 = vrot.lane.b32.xlu0 %v630, 4
        %v1062 = vpop.permute.xlu0 %1061
        %1063 = vrot.lane.b32.xlu0 %v631, 4
        %v1064 = vpop.permute.xlu0 %1063
        %1065 = vrot.lane.b32.xlu0 %v632, 4
        %v1066 = vpop.permute.xlu0 %1065
        %1067 = vrot.lane.b32.xlu0 %v633, 4
        %v1068 = vpop.permute.xlu0 %1067
        %1069 = vrot.lane.b32.xlu0 %v634, 4
        %v1070 = vpop.permute.xlu0 %1069
        %1071 = vrot.lane.b32.xlu0 %v635, 4
        %v1072 = vpop.permute.xlu0 %1071
        %1073 = vrot.lane.b32.xlu0 %v636, 4
        %v1074 = vpop.permute.xlu0 %1073
        %1075 = vrot.lane.b32.xlu0 %v637, 4
        %v1076 = vpop.permute.xlu0 %1075
        %1077 = vrot.lane.b32.xlu0 %v638, 4
        %v1078 = vpop.permute.xlu0 %1077
        %1079 = vrot.lane.b32.xlu0 %v639, 4
        %v1080 = vpop.permute.xlu0 %1079
        %1081 = vrot.lane.b32.xlu0 %v640, 4
        %v1082 = vpop.permute.xlu0 %1081
        %1083 = vrot.lane.b32.xlu0 %v641, 4
        %v1084 = vpop.permute.xlu0 %1083
        %1085 = vrot.lane.b32.xlu0 %v642, 4
        %v1086 = vpop.permute.xlu0 %1085
        %1087 = vrot.lane.b32.xlu0 %v643, 4
        %v1088 = vpop.permute.xlu0 %1087
        %1089 = vrot.lane.b32.xlu0 %v644, 4
        %v1090 = vpop.permute.xlu0 %1089
        %1091 = vrot.lane.b32.xlu0 %v645, 4
        %v1092 = vpop.permute.xlu0 %1091
        %1093 = vrot.lane.b32.xlu0 %v646, 4
        %v1094 = vpop.permute.xlu0 %1093
        %1095 = vrot.lane.b32.xlu0 %v647, 4
        %v1096 = vpop.permute.xlu0 %1095
        %1097 = vrot.lane.b32.xlu0 %v648, 4
        %v1098 = vpop.permute.xlu0 %1097
        %1099 = vrot.lane.b32.xlu0 %v649, 4
        %v1100 = vpop.permute.xlu0 %1099
        %1101 = vrot.lane.b32.xlu0 %v650, 4
        %v1102 = vpop.permute.xlu0 %1101
        %1103 = vrot.lane.b32.xlu0 %v651, 4
        %v1104 = vpop.permute.xlu0 %1103
        %1105 = vrot.lane.b32.xlu0 %v652, 4
        %v1106 = vpop.permute.xlu0 %1105
        %1107 = vrot.lane.b32.xlu0 %v653, 4
        %v1108 = vpop.permute.xlu0 %1107
        %1109 = vrot.lane.b32.xlu0 %v654, 4
        %v1110 = vpop.permute.xlu0 %1109
        %1111 = vrot.lane.b32.xlu0 %v655, 4
        %v1112 = vpop.permute.xlu0 %1111
        %1113 = vrot.lane.b32.xlu0 %v656, 4
        %v1114 = vpop.permute.xlu0 %1113
        %1115 = vrot.lane.b32.xlu0 %v657, 4
        %v1116 = vpop.permute.xlu0 %1115
        %1117 = vrot.lane.b32.xlu0 %v658, 4
        %v1118 = vpop.permute.xlu0 %1117
        %1119 = vrot.lane.b32.xlu0 %v659, 4
        %v1120 = vpop.permute.xlu0 %1119
        %1121 = vrot.lane.b32.xlu0 %v660, 4
        %v1122 = vpop.permute.xlu0 %1121
        %1123 = vrot.lane.b32.xlu0 %v661, 4
        %v1124 = vpop.permute.xlu0 %1123
        %1125 = vrot.lane.b32.xlu0 %v662, 4
        %v1126 = vpop.permute.xlu0 %1125
        %1127 = vrot.lane.b32.xlu0 %v663, 4
        %v1128 = vpop.permute.xlu0 %1127
        %vm1284 = vcmask 64544
        %1285 = vst.msk [vmem:[#allocation2] sm:$0xff] %vm1284, %v820
        %1286 = vst.msk [vmem:[#allocation2 + $0x8] sm:$0xff] %vm1284, %v822
        %1287 = vst.msk [vmem:[#allocation2 + $0x10] sm:$0xff] %vm1284, %v824
        %1288 = vst.msk [vmem:[#allocation2 + $0x18] sm:$0xff] %vm1284, %v826
        %1289 = vst.msk [vmem:[#allocation2 + $0x20] sm:$0xff] %vm1284, %v828
        %1290 = vst.msk [vmem:[#allocation2 + $0x28] sm:$0xff] %vm1284, %v830
        %1291 = vst.msk [vmem:[#allocation2 + $0x30] sm:$0xff] %vm1284, %v832
        %1292 = vst.msk [vmem:[#allocation2 + $0x38] sm:$0xff] %vm1284, %v834
        %1293 = vst.msk [vmem:[#allocation2 + $0x40] sm:$0xff] %vm1284, %v836
        %1294 = vst.msk [vmem:[#allocation2 + $0x48] sm:$0xff] %vm1284, %v838
        %1295 = vst.msk [vmem:[#allocation2 + $0x50] sm:$0xff] %vm1284, %v840
        %1296 = vst.msk [vmem:[#allocation2 + $0x58] sm:$0xff] %vm1284, %v842
        %1297 = vst.msk [vmem:[#allocation2 + $0x60] sm:$0xff] %vm1284, %v844
        %1298 = vst.msk [vmem:[#allocation2 + $0x68] sm:$0xff] %vm1284, %v846
        %1299 = vst.msk [vmem:[#allocation2 + $0x70] sm:$0xff] %vm1284, %v848
        %1300 = vst.msk [vmem:[#allocation2 + $0x78] sm:$0xff] %vm1284, %v850
        %1301 = vst.msk [vmem:[#allocation2 + $0x80] sm:$0xff] %vm1284, %v852
        %1302 = vst.msk [vmem:[#allocation2 + $0x88] sm:$0xff] %vm1284, %v854
        %1303 = vst.msk [vmem:[#allocation2 + $0x90] sm:$0xff] %vm1284, %v856
        %1304 = vst.msk [vmem:[#allocation2 + $0x98] sm:$0xff] %vm1284, %v858
        %1305 = vst.msk [vmem:[#allocation2 + $0xa0] sm:$0xff] %vm1284, %v860
        %1306 = vst.msk [vmem:[#allocation2 + $0xa8] sm:$0xff] %vm1284, %v862
        %1307 = vst.msk [vmem:[#allocation2 + $0xb0] sm:$0xff] %vm1284, %v864
        %1308 = vst.msk [vmem:[#allocation2 + $0xb8] sm:$0xff] %vm1284, %v866
        %1309 = vst.msk [vmem:[#allocation2 + $0xc0] sm:$0xff] %vm1284, %v868
        %1310 = vst.msk [vmem:[#allocation2 + $0xc8] sm:$0xff] %vm1284, %v870
        %1311 = vst.msk [vmem:[#allocation2 + $0xd0] sm:$0xff] %vm1284, %v872
        %1312 = vst.msk [vmem:[#allocation2 + $0xd8] sm:$0xff] %vm1284, %v874
        %1313 = vst.msk [vmem:[#allocation2 + $0xe0] sm:$0xff] %vm1284, %v876
        %1314 = vst.msk [vmem:[#allocation2 + $0xe8] sm:$0xff] %vm1284, %v878
        %1315 = vst.msk [vmem:[#allocation2 + $0xf0] sm:$0xff] %vm1284, %v880
        %1316 = vst.msk [vmem:[#allocation2 + $0xf8] sm:$0xff] %vm1284, %v882
        %1317 = vst.msk [vmem:[#allocation2 + $0x100] sm:$0xff] %vm1284, %v884
        %1318 = vst.msk [vmem:[#allocation2 + $0x108] sm:$0xff] %vm1284, %v886
        %1319 = vst.msk [vmem:[#allocation2 + $0x110] sm:$0xff] %vm1284, %v888
        %1320 = vst.msk [vmem:[#allocation2 + $0x118] sm:$0xff] %vm1284, %v890
        %1321 = vst.msk [vmem:[#allocation2 + $0x120] sm:$0xff] %vm1284, %v892
        %1322 = vst.msk [vmem:[#allocation2 + $0x128] sm:$0xff] %vm1284, %v894
        %1323 = vst.msk [vmem:[#allocation2 + $0x130] sm:$0xff] %vm1284, %v896
        %1324 = vst.msk [vmem:[#allocation2 + $0x138] sm:$0xff] %vm1284, %v898
        %1325 = vst.msk [vmem:[#allocation2 + $0x140] sm:$0xff] %vm1284, %v900
        %1326 = vst.msk [vmem:[#allocation2 + $0x148] sm:$0xff] %vm1284, %v902
        %1327 = vst.msk [vmem:[#allocation2 + $0x150] sm:$0xff] %vm1284, %v904
        %1328 = vst.msk [vmem:[#allocation2 + $0x158] sm:$0xff] %vm1284, %v906
        %1329 = vst.msk [vmem:[#allocation2 + $0x160] sm:$0xff] %vm1284, %v908
        %1330 = vst.msk [vmem:[#allocation2 + $0x168] sm:$0xff] %vm1284, %v910
        %1331 = vst.msk [vmem:[#allocation2 + $0x170] sm:$0xff] %vm1284, %v912
        %1332 = vst.msk [vmem:[#allocation2 + $0x178] sm:$0xff] %vm1284, %v914
        %1333 = vst.msk [vmem:[#allocation2 + $0x180] sm:$0xff] %vm1284, %v916
        %1334 = vst.msk [vmem:[#allocation2 + $0x188] sm:$0xff] %vm1284, %v918
        %1335 = vst.msk [vmem:[#allocation2 + $0x190] sm:$0xff] %vm1284, %v920
        %1336 = vst.msk [vmem:[#allocation2 + $0x198] sm:$0xff] %vm1284, %v922
        %1337 = vst.msk [vmem:[#allocation2 + $0x1a0] sm:$0xff] %vm1284, %v924
        %1338 = vst.msk [vmem:[#allocation2 + $0x1a8] sm:$0xff] %vm1284, %v926
        %1339 = vst.msk [vmem:[#allocation2 + $0x1b0] sm:$0xff] %vm1284, %v928
        %1340 = vst.msk [vmem:[#allocation2 + $0x1b8] sm:$0xff] %vm1284, %v930
        %1341 = vst.msk [vmem:[#allocation2 + $0x1c0] sm:$0xff] %vm1284, %v932
        %1342 = vst.msk [vmem:[#allocation2 + $0x1c8] sm:$0xff] %vm1284, %v934
        %1343 = vst.msk [vmem:[#allocation2 + $0x1d0] sm:$0xff] %vm1284, %v936
        %1344 = vst.msk [vmem:[#allocation2 + $0x1d8] sm:$0xff] %vm1284, %v938
        %1345 = vst.msk [vmem:[#allocation2 + $0x1e0] sm:$0xff] %vm1284, %v940
        %1346 = vst.msk [vmem:[#allocation2 + $0x1e8] sm:$0xff] %vm1284, %v942
        %1347 = vst.msk [vmem:[#allocation2 + $0x1f0] sm:$0xff] %vm1284, %v944
        %1348 = vst.msk [vmem:[#allocation2 + $0x1f8] sm:$0xff] %vm1284, %v946
        %1349 = vst.msk [vmem:[#allocation2 + $0x200] sm:$0xff] %vm1284, %v948
        %1350 = vst.msk [vmem:[#allocation2 + $0x208] sm:$0xff] %vm1284, %v950
        %1351 = vst.msk [vmem:[#allocation2 + $0x210] sm:$0xff] %vm1284, %v952
        %1352 = vst.msk [vmem:[#allocation2 + $0x218] sm:$0xff] %vm1284, %v954
        %1353 = vst.msk [vmem:[#allocation2 + $0x220] sm:$0xff] %vm1284, %v956
        %1354 = vst.msk [vmem:[#allocation2 + $0x228] sm:$0xff] %vm1284, %v958
        %1355 = vst.msk [vmem:[#allocation2 + $0x230] sm:$0xff] %vm1284, %v960
        %1356 = vst.msk [vmem:[#allocation2 + $0x238] sm:$0xff] %vm1284, %v962
        %1357 = vst.msk [vmem:[#allocation2 + $0x240] sm:$0xff] %vm1284, %v964
        %1358 = vst.msk [vmem:[#allocation2 + $0x248] sm:$0xff] %vm1284, %v966
        %1359 = vst.msk [vmem:[#allocation2 + $0x250] sm:$0xff] %vm1284, %v968
        %1360 = vst.msk [vmem:[#allocation2 + $0x258] sm:$0xff] %vm1284, %v970
        %1361 = vst.msk [vmem:[#allocation2 + $0x260] sm:$0xff] %vm1284, %v972
        %1362 = vst.msk [vmem:[#allocation2 + $0x268] sm:$0xff] %vm1284, %v974
        %1363 = vst.msk [vmem:[#allocation2 + $0x270] sm:$0xff] %vm1284, %v976
        %1364 = vst.msk [vmem:[#allocation2 + $0x278] sm:$0xff] %vm1284, %v978
        %1365 = vst.msk [vmem:[#allocation2 + $0x280] sm:$0xff] %vm1284, %v980
        %1366 = vst.msk [vmem:[#allocation2 + $0x288] sm:$0xff] %vm1284, %v982
        %1367 = vst.msk [vmem:[#allocation2 + $0x290] sm:$0xff] %vm1284, %v984
        %1368 = vst.msk [vmem:[#allocation2 + $0x298] sm:$0xff] %vm1284, %v986
        %1369 = vst.msk [vmem:[#allocation2 + $0x2a0] sm:$0xff] %vm1284, %v988
        %1370 = vst.msk [vmem:[#allocation2 + $0x2a8] sm:$0xff] %vm1284, %v990
        %1371 = vst.msk [vmem:[#allocation2 + $0x2b0] sm:$0xff] %vm1284, %v992
        %1372 = vst.msk [vmem:[#allocation2 + $0x2b8] sm:$0xff] %vm1284, %v994
        %1373 = vst.msk [vmem:[#allocation2 + $0x2c0] sm:$0xff] %vm1284, %v996
        %1374 = vst.msk [vmem:[#allocation2 + $0x2c8] sm:$0xff] %vm1284, %v998
        %1375 = vst.msk [vmem:[#allocation2 + $0x2d0] sm:$0xff] %vm1284, %v1000
        %1376 = vst.msk [vmem:[#allocation2 + $0x2d8] sm:$0xff] %vm1284, %v1002
        %1377 = vst.msk [vmem:[#allocation2 + $0x2e0] sm:$0xff] %vm1284, %v1004
        %1378 = vst.msk [vmem:[#allocation2 + $0x2e8] sm:$0xff] %vm1284, %v1006
        %1379 = vst.msk [vmem:[#allocation2 + $0x2f0] sm:$0xff] %vm1284, %v1008
        %1380 = vst.msk [vmem:[#allocation2 + $0x2f8] sm:$0xff] %vm1284, %v1010
        %1381 = vst.msk [vmem:[#allocation2 + $0x300] sm:$0xff] %vm1284, %v1012
        %1382 = vst.msk [vmem:[#allocation2 + $0x308] sm:$0xff] %vm1284, %v1014
        %1383 = vst.msk [vmem:[#allocation2 + $0x310] sm:$0xff] %vm1284, %v1016
        %1384 = vst.msk [vmem:[#allocation2 + $0x318] sm:$0xff] %vm1284, %v1018
        %1385 = vst.msk [vmem:[#allocation2 + $0x320] sm:$0xff] %vm1284, %v1020
        %1386 = vst.msk [vmem:[#allocation2 + $0x328] sm:$0xff] %vm1284, %v1022
        %1387 = vst.msk [vmem:[#allocation2 + $0x330] sm:$0xff] %vm1284, %v1024
        %1388 = vst.msk [vmem:[#allocation2 + $0x338] sm:$0xff] %vm1284, %v1026
        %1389 = vst.msk [vmem:[#allocation2 + $0x340] sm:$0xff] %vm1284, %v1028
        %1390 = vst.msk [vmem:[#allocation2 + $0x348] sm:$0xff] %vm1284, %v1030
        %1391 = vst.msk [vmem:[#allocation2 + $0x350] sm:$0xff] %vm1284, %v1032
        %1392 = vst.msk [vmem:[#allocation2 + $0x358] sm:$0xff] %vm1284, %v1034
        %1393 = vst.msk [vmem:[#allocation2 + $0x360] sm:$0xff] %vm1284, %v1036
        %1394 = vst.msk [vmem:[#allocation2 + $0x368] sm:$0xff] %vm1284, %v1038
        %1395 = vst.msk [vmem:[#allocation2 + $0x370] sm:$0xff] %vm1284, %v1040
        %1396 = vst.msk [vmem:[#allocation2 + $0x378] sm:$0xff] %vm1284, %v1042
        %1397 = vst.msk [vmem:[#allocation2 + $0x380] sm:$0xff] %vm1284, %v1044
        %1398 = vst.msk [vmem:[#allocation2 + $0x388] sm:$0xff] %vm1284, %v1046
        %1399 = vst.msk [vmem:[#allocation2 + $0x390] sm:$0xff] %vm1284, %v1048
        %1400 = vst.msk [vmem:[#allocation2 + $0x398] sm:$0xff] %vm1284, %v1050
        %1401 = vst.msk [vmem:[#allocation2 + $0x3a0] sm:$0xff] %vm1284, %v1052
        %1402 = vst.msk [vmem:[#allocation2 + $0x3a8] sm:$0xff] %vm1284, %v1054
        %1403 = vst.msk [vmem:[#allocation2 + $0x3b0] sm:$0xff] %vm1284, %v1056
        %1404 = vst.msk [vmem:[#allocation2 + $0x3b8] sm:$0xff] %vm1284, %v1058
        %1405 = vst.msk [vmem:[#allocation2 + $0x3c0] sm:$0xff] %vm1284, %v1060
        %1406 = vst.msk [vmem:[#allocation2 + $0x3c8] sm:$0xff] %vm1284, %v1062
        %1407 = vst.msk [vmem:[#allocation2 + $0x3d0] sm:$0xff] %vm1284, %v1064
        %1408 = vst.msk [vmem:[#allocation2 + $0x3d8] sm:$0xff] %vm1284, %v1066
        %1409 = vst.msk [vmem:[#allocation2 + $0x3e0] sm:$0xff] %vm1284, %v1068
        %1410 = vst.msk [vmem:[#allocation2 + $0x3e8] sm:$0xff] %vm1284, %v1070
        %1411 = vst.msk [vmem:[#allocation2 + $0x3f0] sm:$0xff] %vm1284, %v1072
        %1412 = vst.msk [vmem:[#allocation2 + $0x3f8] sm:$0xff] %vm1284, %v1074
        %1413 = vst.msk [vmem:[#allocation2 + $0x400] sm:$0xff] %vm1284, %v1076
        %1414 = vst.msk [vmem:[#allocation2 + $0x408] sm:$0xff] %vm1284, %v1078
        %1415 = vst.msk [vmem:[#allocation2 + $0x410] sm:$0xff] %vm1284, %v1080
        %1416 = vst.msk [vmem:[#allocation2 + $0x418] sm:$0xff] %vm1284, %v1082
        %1417 = vst.msk [vmem:[#allocation2 + $0x420] sm:$0xff] %vm1284, %v1084
        %1418 = vst.msk [vmem:[#allocation2 + $0x428] sm:$0xff] %vm1284, %v1086
        %1419 = vst.msk [vmem:[#allocation2 + $0x430] sm:$0xff] %vm1284, %v1088
        %1420 = vst.msk [vmem:[#allocation2 + $0x438] sm:$0xff] %vm1284, %v1090
        %1421 = vst.msk [vmem:[#allocation2 + $0x440] sm:$0xff] %vm1284, %v1092
        %1422 = vst.msk [vmem:[#allocation2 + $0x448] sm:$0xff] %vm1284, %v1094
        %1423 = vst.msk [vmem:[#allocation2 + $0x450] sm:$0xff] %vm1284, %v1096
        %1424 = vst.msk [vmem:[#allocation2 + $0x458] sm:$0xff] %vm1284, %v1098
        %1425 = vst.msk [vmem:[#allocation2 + $0x460] sm:$0xff] %vm1284, %v1100
        %1426 = vst.msk [vmem:[#allocation2 + $0x468] sm:$0xff] %vm1284, %v1102
        %1427 = vst.msk [vmem:[#allocation2 + $0x470] sm:$0xff] %vm1284, %v1104
        %1428 = vst.msk [vmem:[#allocation2 + $0x478] sm:$0xff] %vm1284, %v1106
        %1429 = vst.msk [vmem:[#allocation2 + $0x480] sm:$0xff] %vm1284, %v1108
        %1430 = vst.msk [vmem:[#allocation2 + $0x488] sm:$0xff] %vm1284, %v1110
        %1431 = vst.msk [vmem:[#allocation2 + $0x490] sm:$0xff] %vm1284, %v1112
        %1432 = vst.msk [vmem:[#allocation2 + $0x498] sm:$0xff] %vm1284, %v1114
        %1433 = vst.msk [vmem:[#allocation2 + $0x4a0] sm:$0xff] %vm1284, %v1116
        %1434 = vst.msk [vmem:[#allocation2 + $0x4a8] sm:$0xff] %vm1284, %v1118
        %1435 = vst.msk [vmem:[#allocation2 + $0x4b0] sm:$0xff] %vm1284, %v1120
        %1436 = vst.msk [vmem:[#allocation2 + $0x4b8] sm:$0xff] %vm1284, %v1122
        %1437 = vst.msk [vmem:[#allocation2 + $0x4c0] sm:$0xff] %vm1284, %v1124
        %1438 = vst.msk [vmem:[#allocation2 + $0x4c8] sm:$0xff] %vm1284, %v1126
        %1439 = vst.msk [vmem:[#allocation2 + $0x4d0] sm:$0xff] %vm1284, %v1128
        %v1440 = vld [vmem:[%s196 + $0x2] sm:$0xff]
        %v1441 = vld [vmem:[%s196 + $0xa] sm:$0xff]
        %v1442 = vld [vmem:[%s196 + $0x12] sm:$0xff]
        %v1443 = vld [vmem:[%s196 + $0x1a] sm:$0xff]
        %v1444 = vld [vmem:[%s196 + $0x22] sm:$0xff]
        %v1445 = vld [vmem:[%s196 + $0x2a] sm:$0xff]
        %v1446 = vld [vmem:[%s196 + $0x32] sm:$0xff]
        %v1447 = vld [vmem:[%s196 + $0x3a] sm:$0xff]
        %v1448 = vld [vmem:[%s196 + $0x42] sm:$0xff]
        %v1449 = vld [vmem:[%s196 + $0x4a] sm:$0xff]
        %v1450 = vld [vmem:[%s196 + $0x52] sm:$0xff]
        %v1451 = vld [vmem:[%s196 + $0x5a] sm:$0xff]
        %v1452 = vld [vmem:[%s196 + $0x62] sm:$0xff]
        %v1453 = vld [vmem:[%s196 + $0x6a] sm:$0xff]
        %v1454 = vld [vmem:[%s196 + $0x72] sm:$0xff]
        %v1455 = vld [vmem:[%s196 + $0x7a] sm:$0xff]
        %v1456 = vld [vmem:[%s196 + $0x82] sm:$0xff]
        %v1457 = vld [vmem:[%s196 + $0x8a] sm:$0xff]
        %v1458 = vld [vmem:[%s196 + $0x92] sm:$0xff]
        %v1459 = vld [vmem:[%s196 + $0x9a] sm:$0xff]
        %v1460 = vld [vmem:[%s196 + $0xa2] sm:$0xff]
        %v1461 = vld [vmem:[%s196 + $0xaa] sm:$0xff]
        %v1462 = vld [vmem:[%s196 + $0xb2] sm:$0xff]
        %v1463 = vld [vmem:[%s196 + $0xba] sm:$0xff]
        %v1464 = vld [vmem:[%s196 + $0xc2] sm:$0xff]
        %v1465 = vld [vmem:[%s196 + $0xca] sm:$0xff]
        %v1466 = vld [vmem:[%s196 + $0xd2] sm:$0xff]
        %v1467 = vld [vmem:[%s196 + $0xda] sm:$0xff]
        %v1468 = vld [vmem:[%s196 + $0xe2] sm:$0xff]
        %v1469 = vld [vmem:[%s196 + $0xea] sm:$0xff]
        %v1470 = vld [vmem:[%s196 + $0xf2] sm:$0xff]
        %v1471 = vld [vmem:[%s196 + $0xfa] sm:$0xff]
        %v1472 = vld [vmem:[%s196 + $0x102] sm:$0xff]
        %v1473 = vld [vmem:[%s196 + $0x10a] sm:$0xff]
        %v1474 = vld [vmem:[%s196 + $0x112] sm:$0xff]
        %v1475 = vld [vmem:[%s196 + $0x11a] sm:$0xff]
        %v1476 = vld [vmem:[%s196 + $0x122] sm:$0xff]
        %v1477 = vld [vmem:[%s196 + $0x12a] sm:$0xff]
        %v1478 = vld [vmem:[%s196 + $0x132] sm:$0xff]
        %v1479 = vld [vmem:[%s196 + $0x13a] sm:$0xff]
        %v1480 = vld [vmem:[%s196 + $0x142] sm:$0xff]
        %v1481 = vld [vmem:[%s196 + $0x14a] sm:$0xff]
        %v1482 = vld [vmem:[%s196 + $0x152] sm:$0xff]
        %v1483 = vld [vmem:[%s196 + $0x15a] sm:$0xff]
        %v1484 = vld [vmem:[%s196 + $0x162] sm:$0xff]
        %v1485 = vld [vmem:[%s196 + $0x16a] sm:$0xff]
        %v1486 = vld [vmem:[%s196 + $0x172] sm:$0xff]
        %v1487 = vld [vmem:[%s196 + $0x17a] sm:$0xff]
        %v1488 = vld [vmem:[%s196 + $0x182] sm:$0xff]
        %v1489 = vld [vmem:[%s196 + $0x18a] sm:$0xff]
        %v1490 = vld [vmem:[%s196 + $0x192] sm:$0xff]
        %v1491 = vld [vmem:[%s196 + $0x19a] sm:$0xff]
        %v1492 = vld [vmem:[%s196 + $0x1a2] sm:$0xff]
        %v1493 = vld [vmem:[%s196 + $0x1aa] sm:$0xff]
        %v1494 = vld [vmem:[%s196 + $0x1b2] sm:$0xff]
        %v1495 = vld [vmem:[%s196 + $0x1ba] sm:$0xff]
        %v1496 = vld [vmem:[%s196 + $0x1c2] sm:$0xff]
        %v1497 = vld [vmem:[%s196 + $0x1ca] sm:$0xff]
        %v1498 = vld [vmem:[%s196 + $0x1d2] sm:$0xff]
        %v1499 = vld [vmem:[%s196 + $0x1da] sm:$0xff]
        %v1500 = vld [vmem:[%s196 + $0x1e2] sm:$0xff]
        %v1501 = vld [vmem:[%s196 + $0x1ea] sm:$0xff]
        %v1502 = vld [vmem:[%s196 + $0x1f2] sm:$0xff]
        %v1503 = vld [vmem:[%s196 + $0x1fa] sm:$0xff]
        %v1504 = vld [vmem:[%s196 + $0x202] sm:$0xff]
        %v1505 = vld [vmem:[%s196 + $0x20a] sm:$0xff]
        %v1506 = vld [vmem:[%s196 + $0x212] sm:$0xff]
        %v1507 = vld [vmem:[%s196 + $0x21a] sm:$0xff]
        %v1508 = vld [vmem:[%s196 + $0x222] sm:$0xff]
        %v1509 = vld [vmem:[%s196 + $0x22a] sm:$0xff]
        %v1510 = vld [vmem:[%s196 + $0x232] sm:$0xff]
        %v1511 = vld [vmem:[%s196 + $0x23a] sm:$0xff]
        %v1512 = vld [vmem:[%s196 + $0x242] sm:$0xff]
        %v1513 = vld [vmem:[%s196 + $0x24a] sm:$0xff]
        %v1514 = vld [vmem:[%s196 + $0x252] sm:$0xff]
        %v1515 = vld [vmem:[%s196 + $0x25a] sm:$0xff]
        %v1516 = vld [vmem:[%s196 + $0x262] sm:$0xff]
        %v1517 = vld [vmem:[%s196 + $0x26a] sm:$0xff]
        %v1518 = vld [vmem:[%s196 + $0x272] sm:$0xff]
        %v1519 = vld [vmem:[%s196 + $0x27a] sm:$0xff]
        %v1520 = vld [vmem:[%s196 + $0x282] sm:$0xff]
        %v1521 = vld [vmem:[%s196 + $0x28a] sm:$0xff]
        %v1522 = vld [vmem:[%s196 + $0x292] sm:$0xff]
        %v1523 = vld [vmem:[%s196 + $0x29a] sm:$0xff]
        %v1524 = vld [vmem:[%s196 + $0x2a2] sm:$0xff]
        %v1525 = vld [vmem:[%s196 + $0x2aa] sm:$0xff]
        %v1526 = vld [vmem:[%s196 + $0x2b2] sm:$0xff]
        %v1527 = vld [vmem:[%s196 + $0x2ba] sm:$0xff]
        %v1528 = vld [vmem:[%s196 + $0x2c2] sm:$0xff]
        %v1529 = vld [vmem:[%s196 + $0x2ca] sm:$0xff]
        %v1530 = vld [vmem:[%s196 + $0x2d2] sm:$0xff]
        %v1531 = vld [vmem:[%s196 + $0x2da] sm:$0xff]
        %v1532 = vld [vmem:[%s196 + $0x2e2] sm:$0xff]
        %v1533 = vld [vmem:[%s196 + $0x2ea] sm:$0xff]
        %v1534 = vld [vmem:[%s196 + $0x2f2] sm:$0xff]
        %v1535 = vld [vmem:[%s196 + $0x2fa] sm:$0xff]
        %v1536 = vld [vmem:[%s196 + $0x302] sm:$0xff]
        %v1537 = vld [vmem:[%s196 + $0x30a] sm:$0xff]
        %v1538 = vld [vmem:[%s196 + $0x312] sm:$0xff]
        %v1539 = vld [vmem:[%s196 + $0x31a] sm:$0xff]
        %v1540 = vld [vmem:[%s196 + $0x322] sm:$0xff]
        %v1541 = vld [vmem:[%s196 + $0x32a] sm:$0xff]
        %v1542 = vld [vmem:[%s196 + $0x332] sm:$0xff]
        %v1543 = vld [vmem:[%s196 + $0x33a] sm:$0xff]
        %v1544 = vld [vmem:[%s196 + $0x342] sm:$0xff]
        %v1545 = vld [vmem:[%s196 + $0x34a] sm:$0xff]
        %v1546 = vld [vmem:[%s196 + $0x352] sm:$0xff]
        %v1547 = vld [vmem:[%s196 + $0x35a] sm:$0xff]
        %v1548 = vld [vmem:[%s196 + $0x362] sm:$0xff]
        %v1549 = vld [vmem:[%s196 + $0x36a] sm:$0xff]
        %v1550 = vld [vmem:[%s196 + $0x372] sm:$0xff]
        %v1551 = vld [vmem:[%s196 + $0x37a] sm:$0xff]
        %v1552 = vld [vmem:[%s196 + $0x382] sm:$0xff]
        %v1553 = vld [vmem:[%s196 + $0x38a] sm:$0xff]
        %v1554 = vld [vmem:[%s196 + $0x392] sm:$0xff]
        %v1555 = vld [vmem:[%s196 + $0x39a] sm:$0xff]
        %v1556 = vld [vmem:[%s196 + $0x3a2] sm:$0xff]
        %v1557 = vld [vmem:[%s196 + $0x3aa] sm:$0xff]
        %v1558 = vld [vmem:[%s196 + $0x3b2] sm:$0xff]
        %v1559 = vld [vmem:[%s196 + $0x3ba] sm:$0xff]
        %v1560 = vld [vmem:[%s196 + $0x3c2] sm:$0xff]
        %v1561 = vld [vmem:[%s196 + $0x3ca] sm:$0xff]
        %v1562 = vld [vmem:[%s196 + $0x3d2] sm:$0xff]
        %v1563 = vld [vmem:[%s196 + $0x3da] sm:$0xff]
        %v1564 = vld [vmem:[%s196 + $0x3e2] sm:$0xff]
        %v1565 = vld [vmem:[%s196 + $0x3ea] sm:$0xff]
        %v1566 = vld [vmem:[%s196 + $0x3f2] sm:$0xff]
        %v1567 = vld [vmem:[%s196 + $0x3fa] sm:$0xff]
        %v1568 = vld [vmem:[%s196 + $0x402] sm:$0xff]
        %v1569 = vld [vmem:[%s196 + $0x40a] sm:$0xff]
        %v1570 = vld [vmem:[%s196 + $0x412] sm:$0xff]
        %v1571 = vld [vmem:[%s196 + $0x41a] sm:$0xff]
        %v1572 = vld [vmem:[%s196 + $0x422] sm:$0xff]
        %v1573 = vld [vmem:[%s196 + $0x42a] sm:$0xff]
        %v1574 = vld [vmem:[%s196 + $0x432] sm:$0xff]
        %v1575 = vld [vmem:[%s196 + $0x43a] sm:$0xff]
        %v1576 = vld [vmem:[%s196 + $0x442] sm:$0xff]
        %v1577 = vld [vmem:[%s196 + $0x44a] sm:$0xff]
        %v1578 = vld [vmem:[%s196 + $0x452] sm:$0xff]
        %v1579 = vld [vmem:[%s196 + $0x45a] sm:$0xff]
        %v1580 = vld [vmem:[%s196 + $0x462] sm:$0xff]
        %v1581 = vld [vmem:[%s196 + $0x46a] sm:$0xff]
        %v1582 = vld [vmem:[%s196 + $0x472] sm:$0xff]
        %v1583 = vld [vmem:[%s196 + $0x47a] sm:$0xff]
        %v1584 = vld [vmem:[%s196 + $0x482] sm:$0xff]
        %v1585 = vld [vmem:[%s196 + $0x48a] sm:$0xff]
        %v1586 = vld [vmem:[%s196 + $0x492] sm:$0xff]
        %v1587 = vld [vmem:[%s196 + $0x49a] sm:$0xff]
        %v1588 = vld [vmem:[%s196 + $0x4a2] sm:$0xff]
        %v1589 = vld [vmem:[%s196 + $0x4aa] sm:$0xff]
        %v1590 = vld [vmem:[%s196 + $0x4b2] sm:$0xff]
        %v1591 = vld [vmem:[%s196 + $0x4ba] sm:$0xff]
        %v1592 = vld [vmem:[%s196 + $0x4c2] sm:$0xff]
        %v1593 = vld [vmem:[%s196 + $0x4ca] sm:$0xff]
        %v1594 = vld [vmem:[%s196 + $0x4d2] sm:$0xff]
        %1750 = vrot.lane.b32.xlu0 %v1440, 8
        %v1751 = vpop.permute.xlu0 %1750
        %1752 = vrot.lane.b32.xlu0 %v1441, 8
        %v1753 = vpop.permute.xlu0 %1752
        %1754 = vrot.lane.b32.xlu0 %v1442, 8
        %v1755 = vpop.permute.xlu0 %1754
        %1756 = vrot.lane.b32.xlu0 %v1443, 8
        %v1757 = vpop.permute.xlu0 %1756
        %1758 = vrot.lane.b32.xlu0 %v1444, 8
        %v1759 = vpop.permute.xlu0 %1758
        %1760 = vrot.lane.b32.xlu0 %v1445, 8
        %v1761 = vpop.permute.xlu0 %1760
        %1762 = vrot.lane.b32.xlu0 %v1446, 8
        %v1763 = vpop.permute.xlu0 %1762
        %1764 = vrot.lane.b32.xlu0 %v1447, 8
        %v1765 = vpop.permute.xlu0 %1764
        %1766 = vrot.lane.b32.xlu0 %v1448, 8
        %v1767 = vpop.permute.xlu0 %1766
        %1768 = vrot.lane.b32.xlu0 %v1449, 8
        %v1769 = vpop.permute.xlu0 %1768
        %1770 = vrot.lane.b32.xlu0 %v1450, 8
        %v1771 = vpop.permute.xlu0 %1770
        %1772 = vrot.lane.b32.xlu0 %v1451, 8
        %v1773 = vpop.permute.xlu0 %1772
        %1774 = vrot.lane.b32.xlu0 %v1452, 8
        %v1775 = vpop.permute.xlu0 %1774
        %1776 = vrot.lane.b32.xlu0 %v1453, 8
        %v1777 = vpop.permute.xlu0 %1776
        %1778 = vrot.lane.b32.xlu0 %v1454, 8
        %v1779 = vpop.permute.xlu0 %1778
        %1780 = vrot.lane.b32.xlu0 %v1455, 8
        %v1781 = vpop.permute.xlu0 %1780
        %1782 = vrot.lane.b32.xlu0 %v1456, 8
        %v1783 = vpop.permute.xlu0 %1782
        %1784 = vrot.lane.b32.xlu0 %v1457, 8
        %v1785 = vpop.permute.xlu0 %1784
        %1786 = vrot.lane.b32.xlu0 %v1458, 8
        %v1787 = vpop.permute.xlu0 %1786
        %1788 = vrot.lane.b32.xlu0 %v1459, 8
        %v1789 = vpop.permute.xlu0 %1788
        %1790 = vrot.lane.b32.xlu0 %v1460, 8
        %v1791 = vpop.permute.xlu0 %1790
        %1792 = vrot.lane.b32.xlu0 %v1461, 8
        %v1793 = vpop.permute.xlu0 %1792
        %1794 = vrot.lane.b32.xlu0 %v1462, 8
        %v1795 = vpop.permute.xlu0 %1794
        %1796 = vrot.lane.b32.xlu0 %v1463, 8
        %v1797 = vpop.permute.xlu0 %1796
        %1798 = vrot.lane.b32.xlu0 %v1464, 8
        %v1799 = vpop.permute.xlu0 %1798
        %1800 = vrot.lane.b32.xlu0 %v1465, 8
        %v1801 = vpop.permute.xlu0 %1800
        %1802 = vrot.lane.b32.xlu0 %v1466, 8
        %v1803 = vpop.permute.xlu0 %1802
        %1804 = vrot.lane.b32.xlu0 %v1467, 8
        %v1805 = vpop.permute.xlu0 %1804
        %1806 = vrot.lane.b32.xlu0 %v1468, 8
        %v1807 = vpop.permute.xlu0 %1806
        %1808 = vrot.lane.b32.xlu0 %v1469, 8
        %v1809 = vpop.permute.xlu0 %1808
        %1810 = vrot.lane.b32.xlu0 %v1470, 8
        %v1811 = vpop.permute.xlu0 %1810
        %1812 = vrot.lane.b32.xlu0 %v1471, 8
        %v1813 = vpop.permute.xlu0 %1812
        %1814 = vrot.lane.b32.xlu0 %v1472, 8
        %v1815 = vpop.permute.xlu0 %1814
        %1816 = vrot.lane.b32.xlu0 %v1473, 8
        %v1817 = vpop.permute.xlu0 %1816
        %1818 = vrot.lane.b32.xlu0 %v1474, 8
        %v1819 = vpop.permute.xlu0 %1818
        %1820 = vrot.lane.b32.xlu0 %v1475, 8
        %v1821 = vpop.permute.xlu0 %1820
        %1822 = vrot.lane.b32.xlu0 %v1476, 8
        %v1823 = vpop.permute.xlu0 %1822
        %1824 = vrot.lane.b32.xlu0 %v1477, 8
        %v1825 = vpop.permute.xlu0 %1824
        %1826 = vrot.lane.b32.xlu0 %v1478, 8
        %v1827 = vpop.permute.xlu0 %1826
        %1828 = vrot.lane.b32.xlu0 %v1479, 8
        %v1829 = vpop.permute.xlu0 %1828
        %1830 = vrot.lane.b32.xlu0 %v1480, 8
        %v1831 = vpop.permute.xlu0 %1830
        %1832 = vrot.lane.b32.xlu0 %v1481, 8
        %v1833 = vpop.permute.xlu0 %1832
        %1834 = vrot.lane.b32.xlu0 %v1482, 8
        %v1835 = vpop.permute.xlu0 %1834
        %1836 = vrot.lane.b32.xlu0 %v1483, 8
        %v1837 = vpop.permute.xlu0 %1836
        %1838 = vrot.lane.b32.xlu0 %v1484, 8
        %v1839 = vpop.permute.xlu0 %1838
        %1840 = vrot.lane.b32.xlu0 %v1485, 8
        %v1841 = vpop.permute.xlu0 %1840
        %1842 = vrot.lane.b32.xlu0 %v1486, 8
        %v1843 = vpop.permute.xlu0 %1842
        %1844 = vrot.lane.b32.xlu0 %v1487, 8
        %v1845 = vpop.permute.xlu0 %1844
        %1846 = vrot.lane.b32.xlu0 %v1488, 8
        %v1847 = vpop.permute.xlu0 %1846
        %1848 = vrot.lane.b32.xlu0 %v1489, 8
        %v1849 = vpop.permute.xlu0 %1848
        %1850 = vrot.lane.b32.xlu0 %v1490, 8
        %v1851 = vpop.permute.xlu0 %1850
        %1852 = vrot.lane.b32.xlu0 %v1491, 8
        %v1853 = vpop.permute.xlu0 %1852
        %1854 = vrot.lane.b32.xlu0 %v1492, 8
        %v1855 = vpop.permute.xlu0 %1854
        %1856 = vrot.lane.b32.xlu0 %v1493, 8
        %v1857 = vpop.permute.xlu0 %1856
        %1858 = vrot.lane.b32.xlu0 %v1494, 8
        %v1859 = vpop.permute.xlu0 %1858
        %1860 = vrot.lane.b32.xlu0 %v1495, 8
        %v1861 = vpop.permute.xlu0 %1860
        %1862 = vrot.lane.b32.xlu0 %v1496, 8
        %v1863 = vpop.permute.xlu0 %1862
        %1864 = vrot.lane.b32.xlu0 %v1497, 8
        %v1865 = vpop.permute.xlu0 %1864
        %1866 = vrot.lane.b32.xlu0 %v1498, 8
        %v1867 = vpop.permute.xlu0 %1866
        %1868 = vrot.lane.b32.xlu0 %v1499, 8
        %v1869 = vpop.permute.xlu0 %1868
        %1870 = vrot.lane.b32.xlu0 %v1500, 8
        %v1871 = vpop.permute.xlu0 %1870
        %1872 = vrot.lane.b32.xlu0 %v1501, 8
        %v1873 = vpop.permute.xlu0 %1872
        %1874 = vrot.lane.b32.xlu0 %v1502, 8
        %v1875 = vpop.permute.xlu0 %1874
        %1876 = vrot.lane.b32.xlu0 %v1503, 8
        %v1877 = vpop.permute.xlu0 %1876
        %1878 = vrot.lane.b32.xlu0 %v1504, 8
        %v1879 = vpop.permute.xlu0 %1878
        %1880 = vrot.lane.b32.xlu0 %v1505, 8
        %v1881 = vpop.permute.xlu0 %1880
        %1882 = vrot.lane.b32.xlu0 %v1506, 8
        %v1883 = vpop.permute.xlu0 %1882
        %1884 = vrot.lane.b32.xlu0 %v1507, 8
        %v1885 = vpop.permute.xlu0 %1884
        %1886 = vrot.lane.b32.xlu0 %v1508, 8
        %v1887 = vpop.permute.xlu0 %1886
        %1888 = vrot.lane.b32.xlu0 %v1509, 8
        %v1889 = vpop.permute.xlu0 %1888
        %1890 = vrot.lane.b32.xlu0 %v1510, 8
        %v1891 = vpop.permute.xlu0 %1890
        %1892 = vrot.lane.b32.xlu0 %v1511, 8
        %v1893 = vpop.permute.xlu0 %1892
        %1894 = vrot.lane.b32.xlu0 %v1512, 8
        %v1895 = vpop.permute.xlu0 %1894
        %1896 = vrot.lane.b32.xlu0 %v1513, 8
        %v1897 = vpop.permute.xlu0 %1896
        %1898 = vrot.lane.b32.xlu0 %v1514, 8
        %v1899 = vpop.permute.xlu0 %1898
        %1900 = vrot.lane.b32.xlu0 %v1515, 8
        %v1901 = vpop.permute.xlu0 %1900
        %1902 = vrot.lane.b32.xlu0 %v1516, 8
        %v1903 = vpop.permute.xlu0 %1902
        %1904 = vrot.lane.b32.xlu0 %v1517, 8
        %v1905 = vpop.permute.xlu0 %1904
        %1906 = vrot.lane.b32.xlu0 %v1518, 8
        %v1907 = vpop.permute.xlu0 %1906
        %1908 = vrot.lane.b32.xlu0 %v1519, 8
        %v1909 = vpop.permute.xlu0 %1908
        %1910 = vrot.lane.b32.xlu0 %v1520, 8
        %v1911 = vpop.permute.xlu0 %1910
        %1912 = vrot.lane.b32.xlu0 %v1521, 8
        %v1913 = vpop.permute.xlu0 %1912
        %1914 = vrot.lane.b32.xlu0 %v1522, 8
        %v1915 = vpop.permute.xlu0 %1914
        %1916 = vrot.lane.b32.xlu0 %v1523, 8
        %v1917 = vpop.permute.xlu0 %1916
        %1918 = vrot.lane.b32.xlu0 %v1524, 8
        %v1919 = vpop.permute.xlu0 %1918
        %1920 = vrot.lane.b32.xlu0 %v1525, 8
        %v1921 = vpop.permute.xlu0 %1920
        %1922 = vrot.lane.b32.xlu0 %v1526, 8
        %v1923 = vpop.permute.xlu0 %1922
        %1924 = vrot.lane.b32.xlu0 %v1527, 8
        %v1925 = vpop.permute.xlu0 %1924
        %1926 = vrot.lane.b32.xlu0 %v1528, 8
        %v1927 = vpop.permute.xlu0 %1926
        %1928 = vrot.lane.b32.xlu0 %v1529, 8
        %v1929 = vpop.permute.xlu0 %1928
        %1930 = vrot.lane.b32.xlu0 %v1530, 8
        %v1931 = vpop.permute.xlu0 %1930
        %1932 = vrot.lane.b32.xlu0 %v1531, 8
        %v1933 = vpop.permute.xlu0 %1932
        %1934 = vrot.lane.b32.xlu0 %v1532, 8
        %v1935 = vpop.permute.xlu0 %1934
        %1936 = vrot.lane.b32.xlu0 %v1533, 8
        %v1937 = vpop.permute.xlu0 %1936
        %1938 = vrot.lane.b32.xlu0 %v1534, 8
        %v1939 = vpop.permute.xlu0 %1938
        %1940 = vrot.lane.b32.xlu0 %v1535, 8
        %v1941 = vpop.permute.xlu0 %1940
        %1942 = vrot.lane.b32.xlu0 %v1536, 8
        %v1943 = vpop.permute.xlu0 %1942
        %1944 = vrot.lane.b32.xlu0 %v1537, 8
        %v1945 = vpop.permute.xlu0 %1944
        %1946 = vrot.lane.b32.xlu0 %v1538, 8
        %v1947 = vpop.permute.xlu0 %1946
        %1948 = vrot.lane.b32.xlu0 %v1539, 8
        %v1949 = vpop.permute.xlu0 %1948
        %1950 = vrot.lane.b32.xlu0 %v1540, 8
        %v1951 = vpop.permute.xlu0 %1950
        %1952 = vrot.lane.b32.xlu0 %v1541, 8
        %v1953 = vpop.permute.xlu0 %1952
        %1954 = vrot.lane.b32.xlu0 %v1542, 8
        %v1955 = vpop.permute.xlu0 %1954
        %1956 = vrot.lane.b32.xlu0 %v1543, 8
        %v1957 = vpop.permute.xlu0 %1956
        %1958 = vrot.lane.b32.xlu0 %v1544, 8
        %v1959 = vpop.permute.xlu0 %1958
        %1960 = vrot.lane.b32.xlu0 %v1545, 8
        %v1961 = vpop.permute.xlu0 %1960
        %1962 = vrot.lane.b32.xlu0 %v1546, 8
        %v1963 = vpop.permute.xlu0 %1962
        %1964 = vrot.lane.b32.xlu0 %v1547, 8
        %v1965 = vpop.permute.xlu0 %1964
        %1966 = vrot.lane.b32.xlu0 %v1548, 8
        %v1967 = vpop.permute.xlu0 %1966
        %1968 = vrot.lane.b32.xlu0 %v1549, 8
        %v1969 = vpop.permute.xlu0 %1968
        %1970 = vrot.lane.b32.xlu0 %v1550, 8
        %v1971 = vpop.permute.xlu0 %1970
        %1972 = vrot.lane.b32.xlu0 %v1551, 8
        %v1973 = vpop.permute.xlu0 %1972
        %1974 = vrot.lane.b32.xlu0 %v1552, 8
        %v1975 = vpop.permute.xlu0 %1974
        %1976 = vrot.lane.b32.xlu0 %v1553, 8
        %v1977 = vpop.permute.xlu0 %1976
        %1978 = vrot.lane.b32.xlu0 %v1554, 8
        %v1979 = vpop.permute.xlu0 %1978
        %1980 = vrot.lane.b32.xlu0 %v1555, 8
        %v1981 = vpop.permute.xlu0 %1980
        %1982 = vrot.lane.b32.xlu0 %v1556, 8
        %v1983 = vpop.permute.xlu0 %1982
        %1984 = vrot.lane.b32.xlu0 %v1557, 8
        %v1985 = vpop.permute.xlu0 %1984
        %1986 = vrot.lane.b32.xlu0 %v1558, 8
        %v1987 = vpop.permute.xlu0 %1986
        %1988 = vrot.lane.b32.xlu0 %v1559, 8
        %v1989 = vpop.permute.xlu0 %1988
        %1990 = vrot.lane.b32.xlu0 %v1560, 8
        %v1991 = vpop.permute.xlu0 %1990
        %1992 = vrot.lane.b32.xlu0 %v1561, 8
        %v1993 = vpop.permute.xlu0 %1992
        %1994 = vrot.lane.b32.xlu0 %v1562, 8
        %v1995 = vpop.permute.xlu0 %1994
        %1996 = vrot.lane.b32.xlu0 %v1563, 8
        %v1997 = vpop.permute.xlu0 %1996
        %1998 = vrot.lane.b32.xlu0 %v1564, 8
        %v1999 = vpop.permute.xlu0 %1998
        %2000 = vrot.lane.b32.xlu0 %v1565, 8
        %v2001 = vpop.permute.xlu0 %2000
        %2002 = vrot.lane.b32.xlu0 %v1566, 8
        %v2003 = vpop.permute.xlu0 %2002
        %2004 = vrot.lane.b32.xlu0 %v1567, 8
        %v2005 = vpop.permute.xlu0 %2004
        %2006 = vrot.lane.b32.xlu0 %v1568, 8
        %v2007 = vpop.permute.xlu0 %2006
        %2008 = vrot.lane.b32.xlu0 %v1569, 8
        %v2009 = vpop.permute.xlu0 %2008
        %2010 = vrot.lane.b32.xlu0 %v1570, 8
        %v2011 = vpop.permute.xlu0 %2010
        %2012 = vrot.lane.b32.xlu0 %v1571, 8
        %v2013 = vpop.permute.xlu0 %2012
        %2014 = vrot.lane.b32.xlu0 %v1572, 8
        %v2015 = vpop.permute.xlu0 %2014
        %2016 = vrot.lane.b32.xlu0 %v1573, 8
        %v2017 = vpop.permute.xlu0 %2016
        %2018 = vrot.lane.b32.xlu0 %v1574, 8
        %v2019 = vpop.permute.xlu0 %2018
        %2020 = vrot.lane.b32.xlu0 %v1575, 8
        %v2021 = vpop.permute.xlu0 %2020
        %2022 = vrot.lane.b32.xlu0 %v1576, 8
        %v2023 = vpop.permute.xlu0 %2022
        %2024 = vrot.lane.b32.xlu0 %v1577, 8
        %v2025 = vpop.permute.xlu0 %2024
        %2026 = vrot.lane.b32.xlu0 %v1578, 8
        %v2027 = vpop.permute.xlu0 %2026
        %2028 = vrot.lane.b32.xlu0 %v1579, 8
        %v2029 = vpop.permute.xlu0 %2028
        %2030 = vrot.lane.b32.xlu0 %v1580, 8
        %v2031 = vpop.permute.xlu0 %2030
        %2032 = vrot.lane.b32.xlu0 %v1581, 8
        %v2033 = vpop.permute.xlu0 %2032
        %2034 = vrot.lane.b32.xlu0 %v1582, 8
        %v2035 = vpop.permute.xlu0 %2034
        %2036 = vrot.lane.b32.xlu0 %v1583, 8
        %v2037 = vpop.permute.xlu0 %2036
        %2038 = vrot.lane.b32.xlu0 %v1584, 8
        %v2039 = vpop.permute.xlu0 %2038
        %2040 = vrot.lane.b32.xlu0 %v1585, 8
        %v2041 = vpop.permute.xlu0 %2040
        %2042 = vrot.lane.b32.xlu0 %v1586, 8
        %v2043 = vpop.permute.xlu0 %2042
        %2044 = vrot.lane.b32.xlu0 %v1587, 8
        %v2045 = vpop.permute.xlu0 %2044
        %2046 = vrot.lane.b32.xlu0 %v1588, 8
        %v2047 = vpop.permute.xlu0 %2046
        %2048 = vrot.lane.b32.xlu0 %v1589, 8
        %v2049 = vpop.permute.xlu0 %2048
        %2050 = vrot.lane.b32.xlu0 %v1590, 8
        %v2051 = vpop.permute.xlu0 %2050
        %2052 = vrot.lane.b32.xlu0 %v1591, 8
        %v2053 = vpop.permute.xlu0 %2052
        %2054 = vrot.lane.b32.xlu0 %v1592, 8
        %v2055 = vpop.permute.xlu0 %2054
        %2056 = vrot.lane.b32.xlu0 %v1593, 8
        %v2057 = vpop.permute.xlu0 %2056
        %2058 = vrot.lane.b32.xlu0 %v1594, 8
        %v2059 = vpop.permute.xlu0 %2058
        %vm2215 = vcmask 97344
        %2216 = vst.msk [vmem:[#allocation2] sm:$0xff] %vm2215, %v1751
        %2217 = vst.msk [vmem:[#allocation2 + $0x8] sm:$0xff] %vm2215, %v1753
        %2218 = vst.msk [vmem:[#allocation2 + $0x10] sm:$0xff] %vm2215, %v1755
        %2219 = vst.msk [vmem:[#allocation2 + $0x18] sm:$0xff] %vm2215, %v1757
        %2220 = vst.msk [vmem:[#allocation2 + $0x20] sm:$0xff] %vm2215, %v1759
        %2221 = vst.msk [vmem:[#allocation2 + $0x28] sm:$0xff] %vm2215, %v1761
        %2222 = vst.msk [vmem:[#allocation2 + $0x30] sm:$0xff] %vm2215, %v1763
        %2223 = vst.msk [vmem:[#allocation2 + $0x38] sm:$0xff] %vm2215, %v1765
        %2224 = vst.msk [vmem:[#allocation2 + $0x40] sm:$0xff] %vm2215, %v1767
        %2225 = vst.msk [vmem:[#allocation2 + $0x48] sm:$0xff] %vm2215, %v1769
        %2226 = vst.msk [vmem:[#allocation2 + $0x50] sm:$0xff] %vm2215, %v1771
        %2227 = vst.msk [vmem:[#allocation2 + $0x58] sm:$0xff] %vm2215, %v1773
        %2228 = vst.msk [vmem:[#allocation2 + $0x60] sm:$0xff] %vm2215, %v1775
        %2229 = vst.msk [vmem:[#allocation2 + $0x68] sm:$0xff] %vm2215, %v1777
        %2230 = vst.msk [vmem:[#allocation2 + $0x70] sm:$0xff] %vm2215, %v1779
        %2231 = vst.msk [vmem:[#allocation2 + $0x78] sm:$0xff] %vm2215, %v1781
        %2232 = vst.msk [vmem:[#allocation2 + $0x80] sm:$0xff] %vm2215, %v1783
        %2233 = vst.msk [vmem:[#allocation2 + $0x88] sm:$0xff] %vm2215, %v1785
        %2234 = vst.msk [vmem:[#allocation2 + $0x90] sm:$0xff] %vm2215, %v1787
        %2235 = vst.msk [vmem:[#allocation2 + $0x98] sm:$0xff] %vm2215, %v1789
        %2236 = vst.msk [vmem:[#allocation2 + $0xa0] sm:$0xff] %vm2215, %v1791
        %2237 = vst.msk [vmem:[#allocation2 + $0xa8] sm:$0xff] %vm2215, %v1793
        %2238 = vst.msk [vmem:[#allocation2 + $0xb0] sm:$0xff] %vm2215, %v1795
        %2239 = vst.msk [vmem:[#allocation2 + $0xb8] sm:$0xff] %vm2215, %v1797
        %2240 = vst.msk [vmem:[#allocation2 + $0xc0] sm:$0xff] %vm2215, %v1799
        %2241 = vst.msk [vmem:[#allocation2 + $0xc8] sm:$0xff] %vm2215, %v1801
        %2242 = vst.msk [vmem:[#allocation2 + $0xd0] sm:$0xff] %vm2215, %v1803
        %2243 = vst.msk [vmem:[#allocation2 + $0xd8] sm:$0xff] %vm2215, %v1805
        %2244 = vst.msk [vmem:[#allocation2 + $0xe0] sm:$0xff] %vm2215, %v1807
        %2245 = vst.msk [vmem:[#allocation2 + $0xe8] sm:$0xff] %vm2215, %v1809
        %2246 = vst.msk [vmem:[#allocation2 + $0xf0] sm:$0xff] %vm2215, %v1811
        %2247 = vst.msk [vmem:[#allocation2 + $0xf8] sm:$0xff] %vm2215, %v1813
        %2248 = vst.msk [vmem:[#allocation2 + $0x100] sm:$0xff] %vm2215, %v1815
        %2249 = vst.msk [vmem:[#allocation2 + $0x108] sm:$0xff] %vm2215, %v1817
        %2250 = vst.msk [vmem:[#allocation2 + $0x110] sm:$0xff] %vm2215, %v1819
        %2251 = vst.msk [vmem:[#allocation2 + $0x118] sm:$0xff] %vm2215, %v1821
        %2252 = vst.msk [vmem:[#allocation2 + $0x120] sm:$0xff] %vm2215, %v1823
        %2253 = vst.msk [vmem:[#allocation2 + $0x128] sm:$0xff] %vm2215, %v1825
        %2254 = vst.msk [vmem:[#allocation2 + $0x130] sm:$0xff] %vm2215, %v1827
        %2255 = vst.msk [vmem:[#allocation2 + $0x138] sm:$0xff] %vm2215, %v1829
        %2256 = vst.msk [vmem:[#allocation2 + $0x140] sm:$0xff] %vm2215, %v1831
        %2257 = vst.msk [vmem:[#allocation2 + $0x148] sm:$0xff] %vm2215, %v1833
        %2258 = vst.msk [vmem:[#allocation2 + $0x150] sm:$0xff] %vm2215, %v1835
        %2259 = vst.msk [vmem:[#allocation2 + $0x158] sm:$0xff] %vm2215, %v1837
        %2260 = vst.msk [vmem:[#allocation2 + $0x160] sm:$0xff] %vm2215, %v1839
        %2261 = vst.msk [vmem:[#allocation2 + $0x168] sm:$0xff] %vm2215, %v1841
        %2262 = vst.msk [vmem:[#allocation2 + $0x170] sm:$0xff] %vm2215, %v1843
        %2263 = vst.msk [vmem:[#allocation2 + $0x178] sm:$0xff] %vm2215, %v1845
        %2264 = vst.msk [vmem:[#allocation2 + $0x180] sm:$0xff] %vm2215, %v1847
        %2265 = vst.msk [vmem:[#allocation2 + $0x188] sm:$0xff] %vm2215, %v1849
        %2266 = vst.msk [vmem:[#allocation2 + $0x190] sm:$0xff] %vm2215, %v1851
        %2267 = vst.msk [vmem:[#allocation2 + $0x198] sm:$0xff] %vm2215, %v1853
        %2268 = vst.msk [vmem:[#allocation2 + $0x1a0] sm:$0xff] %vm2215, %v1855
        %2269 = vst.msk [vmem:[#allocation2 + $0x1a8] sm:$0xff] %vm2215, %v1857
        %2270 = vst.msk [vmem:[#allocation2 + $0x1b0] sm:$0xff] %vm2215, %v1859
        %2271 = vst.msk [vmem:[#allocation2 + $0x1b8] sm:$0xff] %vm2215, %v1861
        %2272 = vst.msk [vmem:[#allocation2 + $0x1c0] sm:$0xff] %vm2215, %v1863
        %2273 = vst.msk [vmem:[#allocation2 + $0x1c8] sm:$0xff] %vm2215, %v1865
        %2274 = vst.msk [vmem:[#allocation2 + $0x1d0] sm:$0xff] %vm2215, %v1867
        %2275 = vst.msk [vmem:[#allocation2 + $0x1d8] sm:$0xff] %vm2215, %v1869
        %2276 = vst.msk [vmem:[#allocation2 + $0x1e0] sm:$0xff] %vm2215, %v1871
        %2277 = vst.msk [vmem:[#allocation2 + $0x1e8] sm:$0xff] %vm2215, %v1873
        %2278 = vst.msk [vmem:[#allocation2 + $0x1f0] sm:$0xff] %vm2215, %v1875
        %2279 = vst.msk [vmem:[#allocation2 + $0x1f8] sm:$0xff] %vm2215, %v1877
        %2280 = vst.msk [vmem:[#allocation2 + $0x200] sm:$0xff] %vm2215, %v1879
        %2281 = vst.msk [vmem:[#allocation2 + $0x208] sm:$0xff] %vm2215, %v1881
        %2282 = vst.msk [vmem:[#allocation2 + $0x210] sm:$0xff] %vm2215, %v1883
        %2283 = vst.msk [vmem:[#allocation2 + $0x218] sm:$0xff] %vm2215, %v1885
        %2284 = vst.msk [vmem:[#allocation2 + $0x220] sm:$0xff] %vm2215, %v1887
        %2285 = vst.msk [vmem:[#allocation2 + $0x228] sm:$0xff] %vm2215, %v1889
        %2286 = vst.msk [vmem:[#allocation2 + $0x230] sm:$0xff] %vm2215, %v1891
        %2287 = vst.msk [vmem:[#allocation2 + $0x238] sm:$0xff] %vm2215, %v1893
        %2288 = vst.msk [vmem:[#allocation2 + $0x240] sm:$0xff] %vm2215, %v1895
        %2289 = vst.msk [vmem:[#allocation2 + $0x248] sm:$0xff] %vm2215, %v1897
        %2290 = vst.msk [vmem:[#allocation2 + $0x250] sm:$0xff] %vm2215, %v1899
        %2291 = vst.msk [vmem:[#allocation2 + $0x258] sm:$0xff] %vm2215, %v1901
        %2292 = vst.msk [vmem:[#allocation2 + $0x260] sm:$0xff] %vm2215, %v1903
        %2293 = vst.msk [vmem:[#allocation2 + $0x268] sm:$0xff] %vm2215, %v1905
        %2294 = vst.msk [vmem:[#allocation2 + $0x270] sm:$0xff] %vm2215, %v1907
        %2295 = vst.msk [vmem:[#allocation2 + $0x278] sm:$0xff] %vm2215, %v1909
        %2296 = vst.msk [vmem:[#allocation2 + $0x280] sm:$0xff] %vm2215, %v1911
        %2297 = vst.msk [vmem:[#allocation2 + $0x288] sm:$0xff] %vm2215, %v1913
        %2298 = vst.msk [vmem:[#allocation2 + $0x290] sm:$0xff] %vm2215, %v1915
        %2299 = vst.msk [vmem:[#allocation2 + $0x298] sm:$0xff] %vm2215, %v1917
        %2300 = vst.msk [vmem:[#allocation2 + $0x2a0] sm:$0xff] %vm2215, %v1919
        %2301 = vst.msk [vmem:[#allocation2 + $0x2a8] sm:$0xff] %vm2215, %v1921
        %2302 = vst.msk [vmem:[#allocation2 + $0x2b0] sm:$0xff] %vm2215, %v1923
        %2303 = vst.msk [vmem:[#allocation2 + $0x2b8] sm:$0xff] %vm2215, %v1925
        %2304 = vst.msk [vmem:[#allocation2 + $0x2c0] sm:$0xff] %vm2215, %v1927
        %2305 = vst.msk [vmem:[#allocation2 + $0x2c8] sm:$0xff] %vm2215, %v1929
        %2306 = vst.msk [vmem:[#allocation2 + $0x2d0] sm:$0xff] %vm2215, %v1931
        %2307 = vst.msk [vmem:[#allocation2 + $0x2d8] sm:$0xff] %vm2215, %v1933
        %2308 = vst.msk [vmem:[#allocation2 + $0x2e0] sm:$0xff] %vm2215, %v1935
        %2309 = vst.msk [vmem:[#allocation2 + $0x2e8] sm:$0xff] %vm2215, %v1937
        %2310 = vst.msk [vmem:[#allocation2 + $0x2f0] sm:$0xff] %vm2215, %v1939
        %2311 = vst.msk [vmem:[#allocation2 + $0x2f8] sm:$0xff] %vm2215, %v1941
        %2312 = vst.msk [vmem:[#allocation2 + $0x300] sm:$0xff] %vm2215, %v1943
        %2313 = vst.msk [vmem:[#allocation2 + $0x308] sm:$0xff] %vm2215, %v1945
        %2314 = vst.msk [vmem:[#allocation2 + $0x310] sm:$0xff] %vm2215, %v1947
        %2315 = vst.msk [vmem:[#allocation2 + $0x318] sm:$0xff] %vm2215, %v1949
        %2316 = vst.msk [vmem:[#allocation2 + $0x320] sm:$0xff] %vm2215, %v1951
        %2317 = vst.msk [vmem:[#allocation2 + $0x328] sm:$0xff] %vm2215, %v1953
        %2318 = vst.msk [vmem:[#allocation2 + $0x330] sm:$0xff] %vm2215, %v1955
        %2319 = vst.msk [vmem:[#allocation2 + $0x338] sm:$0xff] %vm2215, %v1957
        %2320 = vst.msk [vmem:[#allocation2 + $0x340] sm:$0xff] %vm2215, %v1959
        %2321 = vst.msk [vmem:[#allocation2 + $0x348] sm:$0xff] %vm2215, %v1961
        %2322 = vst.msk [vmem:[#allocation2 + $0x350] sm:$0xff] %vm2215, %v1963
        %2323 = vst.msk [vmem:[#allocation2 + $0x358] sm:$0xff] %vm2215, %v1965
        %2324 = vst.msk [vmem:[#allocation2 + $0x360] sm:$0xff] %vm2215, %v1967
        %2325 = vst.msk [vmem:[#allocation2 + $0x368] sm:$0xff] %vm2215, %v1969
        %2326 = vst.msk [vmem:[#allocation2 + $0x370] sm:$0xff] %vm2215, %v1971
        %2327 = vst.msk [vmem:[#allocation2 + $0x378] sm:$0xff] %vm2215, %v1973
        %2328 = vst.msk [vmem:[#allocation2 + $0x380] sm:$0xff] %vm2215, %v1975
        %2329 = vst.msk [vmem:[#allocation2 + $0x388] sm:$0xff] %vm2215, %v1977
        %2330 = vst.msk [vmem:[#allocation2 + $0x390] sm:$0xff] %vm2215, %v1979
        %2331 = vst.msk [vmem:[#allocation2 + $0x398] sm:$0xff] %vm2215, %v1981
        %2332 = vst.msk [vmem:[#allocation2 + $0x3a0] sm:$0xff] %vm2215, %v1983
        %2333 = vst.msk [vmem:[#allocation2 + $0x3a8] sm:$0xff] %vm2215, %v1985
        %2334 = vst.msk [vmem:[#allocation2 + $0x3b0] sm:$0xff] %vm2215, %v1987
        %2335 = vst.msk [vmem:[#allocation2 + $0x3b8] sm:$0xff] %vm2215, %v1989
        %2336 = vst.msk [vmem:[#allocation2 + $0x3c0] sm:$0xff] %vm2215, %v1991
        %2337 = vst.msk [vmem:[#allocation2 + $0x3c8] sm:$0xff] %vm2215, %v1993
        %2338 = vst.msk [vmem:[#allocation2 + $0x3d0] sm:$0xff] %vm2215, %v1995
        %2339 = vst.msk [vmem:[#allocation2 + $0x3d8] sm:$0xff] %vm2215, %v1997
        %2340 = vst.msk [vmem:[#allocation2 + $0x3e0] sm:$0xff] %vm2215, %v1999
        %2341 = vst.msk [vmem:[#allocation2 + $0x3e8] sm:$0xff] %vm2215, %v2001
        %2342 = vst.msk [vmem:[#allocation2 + $0x3f0] sm:$0xff] %vm2215, %v2003
        %2343 = vst.msk [vmem:[#allocation2 + $0x3f8] sm:$0xff] %vm2215, %v2005
        %2344 = vst.msk [vmem:[#allocation2 + $0x400] sm:$0xff] %vm2215, %v2007
        %2345 = vst.msk [vmem:[#allocation2 + $0x408] sm:$0xff] %vm2215, %v2009
        %2346 = vst.msk [vmem:[#allocation2 + $0x410] sm:$0xff] %vm2215, %v2011
        %2347 = vst.msk [vmem:[#allocation2 + $0x418] sm:$0xff] %vm2215, %v2013
        %2348 = vst.msk [vmem:[#allocation2 + $0x420] sm:$0xff] %vm2215, %v2015
        %2349 = vst.msk [vmem:[#allocation2 + $0x428] sm:$0xff] %vm2215, %v2017
        %2350 = vst.msk [vmem:[#allocation2 + $0x430] sm:$0xff] %vm2215, %v2019
        %2351 = vst.msk [vmem:[#allocation2 + $0x438] sm:$0xff] %vm2215, %v2021
        %2352 = vst.msk [vmem:[#allocation2 + $0x440] sm:$0xff] %vm2215, %v2023
        %2353 = vst.msk [vmem:[#allocation2 + $0x448] sm:$0xff] %vm2215, %v2025
        %2354 = vst.msk [vmem:[#allocation2 + $0x450] sm:$0xff] %vm2215, %v2027
        %2355 = vst.msk [vmem:[#allocation2 + $0x458] sm:$0xff] %vm2215, %v2029
        %2356 = vst.msk [vmem:[#allocation2 + $0x460] sm:$0xff] %vm2215, %v2031
        %2357 = vst.msk [vmem:[#allocation2 + $0x468] sm:$0xff] %vm2215, %v2033
        %2358 = vst.msk [vmem:[#allocation2 + $0x470] sm:$0xff] %vm2215, %v2035
        %2359 = vst.msk [vmem:[#allocation2 + $0x478] sm:$0xff] %vm2215, %v2037
        %2360 = vst.msk [vmem:[#allocation2 + $0x480] sm:$0xff] %vm2215, %v2039
        %2361 = vst.msk [vmem:[#allocation2 + $0x488] sm:$0xff] %vm2215, %v2041
        %2362 = vst.msk [vmem:[#allocation2 + $0x490] sm:$0xff] %vm2215, %v2043
        %2363 = vst.msk [vmem:[#allocation2 + $0x498] sm:$0xff] %vm2215, %v2045
        %2364 = vst.msk [vmem:[#allocation2 + $0x4a0] sm:$0xff] %vm2215, %v2047
        %2365 = vst.msk [vmem:[#allocation2 + $0x4a8] sm:$0xff] %vm2215, %v2049
        %2366 = vst.msk [vmem:[#allocation2 + $0x4b0] sm:$0xff] %vm2215, %v2051
        %2367 = vst.msk [vmem:[#allocation2 + $0x4b8] sm:$0xff] %vm2215, %v2053
        %2368 = vst.msk [vmem:[#allocation2 + $0x4c0] sm:$0xff] %vm2215, %v2055
        %2369 = vst.msk [vmem:[#allocation2 + $0x4c8] sm:$0xff] %vm2215, %v2057
        %2370 = vst.msk [vmem:[#allocation2 + $0x4d0] sm:$0xff] %vm2215, %v2059
        %v2371 = vld [vmem:[%s196 + $0x28] sm:$0xff]
        %v2372 = vld [vmem:[%s196 + $0x30] sm:$0xff]
        %v2373 = vld [vmem:[%s196 + $0x38] sm:$0xff]
        %v2374 = vld [vmem:[%s196 + $0x40] sm:$0xff]
        %v2375 = vld [vmem:[%s196 + $0x48] sm:$0xff]
        %v2376 = vld [vmem:[%s196 + $0x50] sm:$0xff]
        %v2377 = vld [vmem:[%s196 + $0x58] sm:$0xff]
        %v2378 = vld [vmem:[%s196 + $0x60] sm:$0xff]
        %v2379 = vld [vmem:[%s196 + $0x68] sm:$0xff]
        %v2380 = vld [vmem:[%s196 + $0x70] sm:$0xff]
        %v2381 = vld [vmem:[%s196 + $0x78] sm:$0xff]
        %v2382 = vld [vmem:[%s196 + $0x80] sm:$0xff]
        %v2383 = vld [vmem:[%s196 + $0x88] sm:$0xff]
        %v2384 = vld [vmem:[%s196 + $0x90] sm:$0xff]
        %v2385 = vld [vmem:[%s196 + $0x98] sm:$0xff]
        %v2386 = vld [vmem:[%s196 + $0xa0] sm:$0xff]
        %v2387 = vld [vmem:[%s196 + $0xa8] sm:$0xff]
        %v2388 = vld [vmem:[%s196 + $0xb0] sm:$0xff]
        %v2389 = vld [vmem:[%s196 + $0xb8] sm:$0xff]
        %v2390 = vld [vmem:[%s196 + $0xc0] sm:$0xff]
        %v2391 = vld [vmem:[%s196 + $0xc8] sm:$0xff]
        %v2392 = vld [vmem:[%s196 + $0xd0] sm:$0xff]
        %v2393 = vld [vmem:[%s196 + $0xd8] sm:$0xff]
        %v2394 = vld [vmem:[%s196 + $0xe0] sm:$0xff]
        %v2395 = vld [vmem:[%s196 + $0xe8] sm:$0xff]
        %v2396 = vld [vmem:[%s196 + $0xf0] sm:$0xff]
        %v2397 = vld [vmem:[%s196 + $0xf8] sm:$0xff]
        %v2398 = vld [vmem:[%s196 + $0x100] sm:$0xff]
        %v2399 = vld [vmem:[%s196 + $0x108] sm:$0xff]
        %v2400 = vld [vmem:[%s196 + $0x110] sm:$0xff]
        %v2401 = vld [vmem:[%s196 + $0x118] sm:$0xff]
        %v2402 = vld [vmem:[%s196 + $0x120] sm:$0xff]
        %v2403 = vld [vmem:[%s196 + $0x128] sm:$0xff]
        %v2404 = vld [vmem:[%s196 + $0x130] sm:$0xff]
        %v2405 = vld [vmem:[%s196 + $0x138] sm:$0xff]
        %v2406 = vld [vmem:[%s196 + $0x140] sm:$0xff]
        %v2407 = vld [vmem:[%s196 + $0x148] sm:$0xff]
        %v2408 = vld [vmem:[%s196 + $0x150] sm:$0xff]
        %v2409 = vld [vmem:[%s196 + $0x158] sm:$0xff]
        %v2410 = vld [vmem:[%s196 + $0x160] sm:$0xff]
        %v2411 = vld [vmem:[%s196 + $0x168] sm:$0xff]
        %v2412 = vld [vmem:[%s196 + $0x170] sm:$0xff]
        %v2413 = vld [vmem:[%s196 + $0x178] sm:$0xff]
        %v2414 = vld [vmem:[%s196 + $0x180] sm:$0xff]
        %v2415 = vld [vmem:[%s196 + $0x188] sm:$0xff]
        %v2416 = vld [vmem:[%s196 + $0x190] sm:$0xff]
        %v2417 = vld [vmem:[%s196 + $0x198] sm:$0xff]
        %v2418 = vld [vmem:[%s196 + $0x1a0] sm:$0xff]
        %v2419 = vld [vmem:[%s196 + $0x1a8] sm:$0xff]
        %v2420 = vld [vmem:[%s196 + $0x1b0] sm:$0xff]
        %v2421 = vld [vmem:[%s196 + $0x1b8] sm:$0xff]
        %v2422 = vld [vmem:[%s196 + $0x1c0] sm:$0xff]
        %v2423 = vld [vmem:[%s196 + $0x1c8] sm:$0xff]
        %v2424 = vld [vmem:[%s196 + $0x1d0] sm:$0xff]
        %v2425 = vld [vmem:[%s196 + $0x1d8] sm:$0xff]
        %v2426 = vld [vmem:[%s196 + $0x1e0] sm:$0xff]
        %v2427 = vld [vmem:[%s196 + $0x1e8] sm:$0xff]
        %v2428 = vld [vmem:[%s196 + $0x1f0] sm:$0xff]
        %v2429 = vld [vmem:[%s196 + $0x1f8] sm:$0xff]
        %v2430 = vld [vmem:[%s196 + $0x200] sm:$0xff]
        %v2431 = vld [vmem:[%s196 + $0x208] sm:$0xff]
        %v2432 = vld [vmem:[%s196 + $0x210] sm:$0xff]
        %v2433 = vld [vmem:[%s196 + $0x218] sm:$0xff]
        %v2434 = vld [vmem:[%s196 + $0x220] sm:$0xff]
        %v2435 = vld [vmem:[%s196 + $0x228] sm:$0xff]
        %v2436 = vld [vmem:[%s196 + $0x230] sm:$0xff]
        %v2437 = vld [vmem:[%s196 + $0x238] sm:$0xff]
        %v2438 = vld [vmem:[%s196 + $0x240] sm:$0xff]
        %v2439 = vld [vmem:[%s196 + $0x248] sm:$0xff]
        %v2440 = vld [vmem:[%s196 + $0x250] sm:$0xff]
        %v2441 = vld [vmem:[%s196 + $0x258] sm:$0xff]
        %v2442 = vld [vmem:[%s196 + $0x260] sm:$0xff]
        %v2443 = vld [vmem:[%s196 + $0x268] sm:$0xff]
        %v2444 = vld [vmem:[%s196 + $0x270] sm:$0xff]
        %v2445 = vld [vmem:[%s196 + $0x278] sm:$0xff]
        %v2446 = vld [vmem:[%s196 + $0x280] sm:$0xff]
        %v2447 = vld [vmem:[%s196 + $0x288] sm:$0xff]
        %v2448 = vld [vmem:[%s196 + $0x290] sm:$0xff]
        %v2449 = vld [vmem:[%s196 + $0x298] sm:$0xff]
        %v2450 = vld [vmem:[%s196 + $0x2a0] sm:$0xff]
        %v2451 = vld [vmem:[%s196 + $0x2a8] sm:$0xff]
        %v2452 = vld [vmem:[%s196 + $0x2b0] sm:$0xff]
        %v2453 = vld [vmem:[%s196 + $0x2b8] sm:$0xff]
        %v2454 = vld [vmem:[%s196 + $0x2c0] sm:$0xff]
        %v2455 = vld [vmem:[%s196 + $0x2c8] sm:$0xff]
        %v2456 = vld [vmem:[%s196 + $0x2d0] sm:$0xff]
        %v2457 = vld [vmem:[%s196 + $0x2d8] sm:$0xff]
        %v2458 = vld [vmem:[%s196 + $0x2e0] sm:$0xff]
        %v2459 = vld [vmem:[%s196 + $0x2e8] sm:$0xff]
        %v2460 = vld [vmem:[%s196 + $0x2f0] sm:$0xff]
        %v2461 = vld [vmem:[%s196 + $0x2f8] sm:$0xff]
        %v2462 = vld [vmem:[%s196 + $0x300] sm:$0xff]
        %v2463 = vld [vmem:[%s196 + $0x308] sm:$0xff]
        %v2464 = vld [vmem:[%s196 + $0x310] sm:$0xff]
        %v2465 = vld [vmem:[%s196 + $0x318] sm:$0xff]
        %v2466 = vld [vmem:[%s196 + $0x320] sm:$0xff]
        %v2467 = vld [vmem:[%s196 + $0x328] sm:$0xff]
        %v2468 = vld [vmem:[%s196 + $0x330] sm:$0xff]
        %v2469 = vld [vmem:[%s196 + $0x338] sm:$0xff]
        %v2470 = vld [vmem:[%s196 + $0x340] sm:$0xff]
        %v2471 = vld [vmem:[%s196 + $0x348] sm:$0xff]
        %v2472 = vld [vmem:[%s196 + $0x350] sm:$0xff]
        %v2473 = vld [vmem:[%s196 + $0x358] sm:$0xff]
        %v2474 = vld [vmem:[%s196 + $0x360] sm:$0xff]
        %v2475 = vld [vmem:[%s196 + $0x368] sm:$0xff]
        %v2476 = vld [vmem:[%s196 + $0x370] sm:$0xff]
        %v2477 = vld [vmem:[%s196 + $0x378] sm:$0xff]
        %v2478 = vld [vmem:[%s196 + $0x380] sm:$0xff]
        %v2479 = vld [vmem:[%s196 + $0x388] sm:$0xff]
        %v2480 = vld [vmem:[%s196 + $0x390] sm:$0xff]
        %v2481 = vld [vmem:[%s196 + $0x398] sm:$0xff]
        %v2482 = vld [vmem:[%s196 + $0x3a0] sm:$0xff]
        %v2483 = vld [vmem:[%s196 + $0x3a8] sm:$0xff]
        %v2484 = vld [vmem:[%s196 + $0x3b0] sm:$0xff]
        %v2485 = vld [vmem:[%s196 + $0x3b8] sm:$0xff]
        %v2486 = vld [vmem:[%s196 + $0x3c0] sm:$0xff]
        %v2487 = vld [vmem:[%s196 + $0x3c8] sm:$0xff]
        %v2488 = vld [vmem:[%s196 + $0x3d0] sm:$0xff]
        %v2489 = vld [vmem:[%s196 + $0x3d8] sm:$0xff]
        %v2490 = vld [vmem:[%s196 + $0x3e0] sm:$0xff]
        %v2491 = vld [vmem:[%s196 + $0x3e8] sm:$0xff]
        %v2492 = vld [vmem:[%s196 + $0x3f0] sm:$0xff]
        %v2493 = vld [vmem:[%s196 + $0x3f8] sm:$0xff]
        %v2494 = vld [vmem:[%s196 + $0x400] sm:$0xff]
        %v2495 = vld [vmem:[%s196 + $0x408] sm:$0xff]
        %v2496 = vld [vmem:[%s196 + $0x410] sm:$0xff]
        %v2497 = vld [vmem:[%s196 + $0x418] sm:$0xff]
        %v2498 = vld [vmem:[%s196 + $0x420] sm:$0xff]
        %v2499 = vld [vmem:[%s196 + $0x428] sm:$0xff]
        %v2500 = vld [vmem:[%s196 + $0x430] sm:$0xff]
        %v2501 = vld [vmem:[%s196 + $0x438] sm:$0xff]
        %v2502 = vld [vmem:[%s196 + $0x440] sm:$0xff]
        %v2503 = vld [vmem:[%s196 + $0x448] sm:$0xff]
        %v2504 = vld [vmem:[%s196 + $0x450] sm:$0xff]
        %v2505 = vld [vmem:[%s196 + $0x458] sm:$0xff]
        %v2506 = vld [vmem:[%s196 + $0x460] sm:$0xff]
        %v2507 = vld [vmem:[%s196 + $0x468] sm:$0xff]
        %v2508 = vld [vmem:[%s196 + $0x470] sm:$0xff]
        %v2509 = vld [vmem:[%s196 + $0x478] sm:$0xff]
        %v2510 = vld [vmem:[%s196 + $0x480] sm:$0xff]
        %v2511 = vld [vmem:[%s196 + $0x488] sm:$0xff]
        %v2512 = vld [vmem:[%s196 + $0x490] sm:$0xff]
        %v2513 = vld [vmem:[%s196 + $0x498] sm:$0xff]
        %v2514 = vld [vmem:[%s196 + $0x4a0] sm:$0xff]
        %v2515 = vld [vmem:[%s196 + $0x4a8] sm:$0xff]
        %v2516 = vld [vmem:[%s196 + $0x4b0] sm:$0xff]
        %v2517 = vld [vmem:[%s196 + $0x4b8] sm:$0xff]
        %v2518 = vld [vmem:[%s196 + $0x4c0] sm:$0xff]
        %v2519 = vld [vmem:[%s196 + $0x4c8] sm:$0xff]
        %v2520 = vld [vmem:[%s196 + $0x4d0] sm:$0xff]
        %v2521 = vld [vmem:[%s196 + $0x4d8] sm:$0xff]
        %v2522 = vld [vmem:[%s196 + $0x4e0] sm:$0xff]
        %v2523 = vld [vmem:[%s196 + $0x4e8] sm:$0xff]
        %v2524 = vld [vmem:[%s196 + $0x4f0] sm:$0xff]
        %v2525 = vld [vmem:[%s196 + $0x4f8] sm:$0xff]
        %2681 = vrot.lane.b32.xlu0 %v2371, 12
        %v2682 = vpop.permute.xlu0 %2681
        %2683 = vrot.lane.b32.xlu0 %v2372, 12
        %v2684 = vpop.permute.xlu0 %2683
        %2685 = vrot.lane.b32.xlu0 %v2373, 12
        %v2686 = vpop.permute.xlu0 %2685
        %2687 = vrot.lane.b32.xlu0 %v2374, 12
        %v2688 = vpop.permute.xlu0 %2687
        %2689 = vrot.lane.b32.xlu0 %v2375, 12
        %v2690 = vpop.permute.xlu0 %2689
        %2691 = vrot.lane.b32.xlu0 %v2376, 12
        %v2692 = vpop.permute.xlu0 %2691
        %2693 = vrot.lane.b32.xlu0 %v2377, 12
        %v2694 = vpop.permute.xlu0 %2693
        %2695 = vrot.lane.b32.xlu0 %v2378, 12
        %v2696 = vpop.permute.xlu0 %2695
        %2697 = vrot.lane.b32.xlu0 %v2379, 12
        %v2698 = vpop.permute.xlu0 %2697
        %2699 = vrot.lane.b32.xlu0 %v2380, 12
        %v2700 = vpop.permute.xlu0 %2699
        %2701 = vrot.lane.b32.xlu0 %v2381, 12
        %v2702 = vpop.permute.xlu0 %2701
        %2703 = vrot.lane.b32.xlu0 %v2382, 12
        %v2704 = vpop.permute.xlu0 %2703
        %2705 = vrot.lane.b32.xlu0 %v2383, 12
        %v2706 = vpop.permute.xlu0 %2705
        %2707 = vrot.lane.b32.xlu0 %v2384, 12
        %v2708 = vpop.permute.xlu0 %2707
        %2709 = vrot.lane.b32.xlu0 %v2385, 12
        %v2710 = vpop.permute.xlu0 %2709
        %2711 = vrot.lane.b32.xlu0 %v2386, 12
        %v2712 = vpop.permute.xlu0 %2711
        %2713 = vrot.lane.b32.xlu0 %v2387, 12
        %v2714 = vpop.permute.xlu0 %2713
        %2715 = vrot.lane.b32.xlu0 %v2388, 12
        %v2716 = vpop.permute.xlu0 %2715
        %2717 = vrot.lane.b32.xlu0 %v2389, 12
        %v2718 = vpop.permute.xlu0 %2717
        %2719 = vrot.lane.b32.xlu0 %v2390, 12
        %v2720 = vpop.permute.xlu0 %2719
        %2721 = vrot.lane.b32.xlu0 %v2391, 12
        %v2722 = vpop.permute.xlu0 %2721
        %2723 = vrot.lane.b32.xlu0 %v2392, 12
        %v2724 = vpop.permute.xlu0 %2723
        %2725 = vrot.lane.b32.xlu0 %v2393, 12
        %v2726 = vpop.permute.xlu0 %2725
        %2727 = vrot.lane.b32.xlu0 %v2394, 12
        %v2728 = vpop.permute.xlu0 %2727
        %2729 = vrot.lane.b32.xlu0 %v2395, 12
        %v2730 = vpop.permute.xlu0 %2729
        %2731 = vrot.lane.b32.xlu0 %v2396, 12
        %v2732 = vpop.permute.xlu0 %2731
        %2733 = vrot.lane.b32.xlu0 %v2397, 12
        %v2734 = vpop.permute.xlu0 %2733
        %2735 = vrot.lane.b32.xlu0 %v2398, 12
        %v2736 = vpop.permute.xlu0 %2735
        %2737 = vrot.lane.b32.xlu0 %v2399, 12
        %v2738 = vpop.permute.xlu0 %2737
        %2739 = vrot.lane.b32.xlu0 %v2400, 12
        %v2740 = vpop.permute.xlu0 %2739
        %2741 = vrot.lane.b32.xlu0 %v2401, 12
        %v2742 = vpop.permute.xlu0 %2741
        %2743 = vrot.lane.b32.xlu0 %v2402, 12
        %v2744 = vpop.permute.xlu0 %2743
        %2745 = vrot.lane.b32.xlu0 %v2403, 12
        %v2746 = vpop.permute.xlu0 %2745
        %2747 = vrot.lane.b32.xlu0 %v2404, 12
        %v2748 = vpop.permute.xlu0 %2747
        %2749 = vrot.lane.b32.xlu0 %v2405, 12
        %v2750 = vpop.permute.xlu0 %2749
        %2751 = vrot.lane.b32.xlu0 %v2406, 12
        %v2752 = vpop.permute.xlu0 %2751
        %2753 = vrot.lane.b32.xlu0 %v2407, 12
        %v2754 = vpop.permute.xlu0 %2753
        %2755 = vrot.lane.b32.xlu0 %v2408, 12
        %v2756 = vpop.permute.xlu0 %2755
        %2757 = vrot.lane.b32.xlu0 %v2409, 12
        %v2758 = vpop.permute.xlu0 %2757
        %2759 = vrot.lane.b32.xlu0 %v2410, 12
        %v2760 = vpop.permute.xlu0 %2759
        %2761 = vrot.lane.b32.xlu0 %v2411, 12
        %v2762 = vpop.permute.xlu0 %2761
        %2763 = vrot.lane.b32.xlu0 %v2412, 12
        %v2764 = vpop.permute.xlu0 %2763
        %2765 = vrot.lane.b32.xlu0 %v2413, 12
        %v2766 = vpop.permute.xlu0 %2765
        %2767 = vrot.lane.b32.xlu0 %v2414, 12
        %v2768 = vpop.permute.xlu0 %2767
        %2769 = vrot.lane.b32.xlu0 %v2415, 12
        %v2770 = vpop.permute.xlu0 %2769
        %2771 = vrot.lane.b32.xlu0 %v2416, 12
        %v2772 = vpop.permute.xlu0 %2771
        %2773 = vrot.lane.b32.xlu0 %v2417, 12
        %v2774 = vpop.permute.xlu0 %2773
        %2775 = vrot.lane.b32.xlu0 %v2418, 12
        %v2776 = vpop.permute.xlu0 %2775
        %2777 = vrot.lane.b32.xlu0 %v2419, 12
        %v2778 = vpop.permute.xlu0 %2777
        %2779 = vrot.lane.b32.xlu0 %v2420, 12
        %v2780 = vpop.permute.xlu0 %2779
        %2781 = vrot.lane.b32.xlu0 %v2421, 12
        %v2782 = vpop.permute.xlu0 %2781
        %2783 = vrot.lane.b32.xlu0 %v2422, 12
        %v2784 = vpop.permute.xlu0 %2783
        %2785 = vrot.lane.b32.xlu0 %v2423, 12
        %v2786 = vpop.permute.xlu0 %2785
        %2787 = vrot.lane.b32.xlu0 %v2424, 12
        %v2788 = vpop.permute.xlu0 %2787
        %2789 = vrot.lane.b32.xlu0 %v2425, 12
        %v2790 = vpop.permute.xlu0 %2789
        %2791 = vrot.lane.b32.xlu0 %v2426, 12
        %v2792 = vpop.permute.xlu0 %2791
        %2793 = vrot.lane.b32.xlu0 %v2427, 12
        %v2794 = vpop.permute.xlu0 %2793
        %2795 = vrot.lane.b32.xlu0 %v2428, 12
        %v2796 = vpop.permute.xlu0 %2795
        %2797 = vrot.lane.b32.xlu0 %v2429, 12
        %v2798 = vpop.permute.xlu0 %2797
        %2799 = vrot.lane.b32.xlu0 %v2430, 12
        %v2800 = vpop.permute.xlu0 %2799
        %2801 = vrot.lane.b32.xlu0 %v2431, 12
        %v2802 = vpop.permute.xlu0 %2801
        %2803 = vrot.lane.b32.xlu0 %v2432, 12
        %v2804 = vpop.permute.xlu0 %2803
        %2805 = vrot.lane.b32.xlu0 %v2433, 12
        %v2806 = vpop.permute.xlu0 %2805
        %2807 = vrot.lane.b32.xlu0 %v2434, 12
        %v2808 = vpop.permute.xlu0 %2807
        %2809 = vrot.lane.b32.xlu0 %v2435, 12
        %v2810 = vpop.permute.xlu0 %2809
        %2811 = vrot.lane.b32.xlu0 %v2436, 12
        %v2812 = vpop.permute.xlu0 %2811
        %2813 = vrot.lane.b32.xlu0 %v2437, 12
        %v2814 = vpop.permute.xlu0 %2813
        %2815 = vrot.lane.b32.xlu0 %v2438, 12
        %v2816 = vpop.permute.xlu0 %2815
        %2817 = vrot.lane.b32.xlu0 %v2439, 12
        %v2818 = vpop.permute.xlu0 %2817
        %2819 = vrot.lane.b32.xlu0 %v2440, 12
        %v2820 = vpop.permute.xlu0 %2819
        %2821 = vrot.lane.b32.xlu0 %v2441, 12
        %v2822 = vpop.permute.xlu0 %2821
        %2823 = vrot.lane.b32.xlu0 %v2442, 12
        %v2824 = vpop.permute.xlu0 %2823
        %2825 = vrot.lane.b32.xlu0 %v2443, 12
        %v2826 = vpop.permute.xlu0 %2825
        %2827 = vrot.lane.b32.xlu0 %v2444, 12
        %v2828 = vpop.permute.xlu0 %2827
        %2829 = vrot.lane.b32.xlu0 %v2445, 12
        %v2830 = vpop.permute.xlu0 %2829
        %2831 = vrot.lane.b32.xlu0 %v2446, 12
        %v2832 = vpop.permute.xlu0 %2831
        %2833 = vrot.lane.b32.xlu0 %v2447, 12
        %v2834 = vpop.permute.xlu0 %2833
        %2835 = vrot.lane.b32.xlu0 %v2448, 12
        %v2836 = vpop.permute.xlu0 %2835
        %2837 = vrot.lane.b32.xlu0 %v2449, 12
        %v2838 = vpop.permute.xlu0 %2837
        %2839 = vrot.lane.b32.xlu0 %v2450, 12
        %v2840 = vpop.permute.xlu0 %2839
        %2841 = vrot.lane.b32.xlu0 %v2451, 12
        %v2842 = vpop.permute.xlu0 %2841
        %2843 = vrot.lane.b32.xlu0 %v2452, 12
        %v2844 = vpop.permute.xlu0 %2843
        %2845 = vrot.lane.b32.xlu0 %v2453, 12
        %v2846 = vpop.permute.xlu0 %2845
        %2847 = vrot.lane.b32.xlu0 %v2454, 12
        %v2848 = vpop.permute.xlu0 %2847
        %2849 = vrot.lane.b32.xlu0 %v2455, 12
        %v2850 = vpop.permute.xlu0 %2849
        %2851 = vrot.lane.b32.xlu0 %v2456, 12
        %v2852 = vpop.permute.xlu0 %2851
        %2853 = vrot.lane.b32.xlu0 %v2457, 12
        %v2854 = vpop.permute.xlu0 %2853
        %2855 = vrot.lane.b32.xlu0 %v2458, 12
        %v2856 = vpop.permute.xlu0 %2855
        %2857 = vrot.lane.b32.xlu0 %v2459, 12
        %v2858 = vpop.permute.xlu0 %2857
        %2859 = vrot.lane.b32.xlu0 %v2460, 12
        %v2860 = vpop.permute.xlu0 %2859
        %2861 = vrot.lane.b32.xlu0 %v2461, 12
        %v2862 = vpop.permute.xlu0 %2861
        %2863 = vrot.lane.b32.xlu0 %v2462, 12
        %v2864 = vpop.permute.xlu0 %2863
        %2865 = vrot.lane.b32.xlu0 %v2463, 12
        %v2866 = vpop.permute.xlu0 %2865
        %2867 = vrot.lane.b32.xlu0 %v2464, 12
        %v2868 = vpop.permute.xlu0 %2867
        %2869 = vrot.lane.b32.xlu0 %v2465, 12
        %v2870 = vpop.permute.xlu0 %2869
        %2871 = vrot.lane.b32.xlu0 %v2466, 12
        %v2872 = vpop.permute.xlu0 %2871
        %2873 = vrot.lane.b32.xlu0 %v2467, 12
        %v2874 = vpop.permute.xlu0 %2873
        %2875 = vrot.lane.b32.xlu0 %v2468, 12
        %v2876 = vpop.permute.xlu0 %2875
        %2877 = vrot.lane.b32.xlu0 %v2469, 12
        %v2878 = vpop.permute.xlu0 %2877
        %2879 = vrot.lane.b32.xlu0 %v2470, 12
        %v2880 = vpop.permute.xlu0 %2879
        %2881 = vrot.lane.b32.xlu0 %v2471, 12
        %v2882 = vpop.permute.xlu0 %2881
        %2883 = vrot.lane.b32.xlu0 %v2472, 12
        %v2884 = vpop.permute.xlu0 %2883
        %2885 = vrot.lane.b32.xlu0 %v2473, 12
        %v2886 = vpop.permute.xlu0 %2885
        %2887 = vrot.lane.b32.xlu0 %v2474, 12
        %v2888 = vpop.permute.xlu0 %2887
        %2889 = vrot.lane.b32.xlu0 %v2475, 12
        %v2890 = vpop.permute.xlu0 %2889
        %2891 = vrot.lane.b32.xlu0 %v2476, 12
        %v2892 = vpop.permute.xlu0 %2891
        %2893 = vrot.lane.b32.xlu0 %v2477, 12
        %v2894 = vpop.permute.xlu0 %2893
        %2895 = vrot.lane.b32.xlu0 %v2478, 12
        %v2896 = vpop.permute.xlu0 %2895
        %2897 = vrot.lane.b32.xlu0 %v2479, 12
        %v2898 = vpop.permute.xlu0 %2897
        %2899 = vrot.lane.b32.xlu0 %v2480, 12
        %v2900 = vpop.permute.xlu0 %2899
        %2901 = vrot.lane.b32.xlu0 %v2481, 12
        %v2902 = vpop.permute.xlu0 %2901
        %2903 = vrot.lane.b32.xlu0 %v2482, 12
        %v2904 = vpop.permute.xlu0 %2903
        %2905 = vrot.lane.b32.xlu0 %v2483, 12
        %v2906 = vpop.permute.xlu0 %2905
        %2907 = vrot.lane.b32.xlu0 %v2484, 12
        %v2908 = vpop.permute.xlu0 %2907
        %2909 = vrot.lane.b32.xlu0 %v2485, 12
        %v2910 = vpop.permute.xlu0 %2909
        %2911 = vrot.lane.b32.xlu0 %v2486, 12
        %v2912 = vpop.permute.xlu0 %2911
        %2913 = vrot.lane.b32.xlu0 %v2487, 12
        %v2914 = vpop.permute.xlu0 %2913
        %2915 = vrot.lane.b32.xlu0 %v2488, 12
        %v2916 = vpop.permute.xlu0 %2915
        %2917 = vrot.lane.b32.xlu0 %v2489, 12
        %v2918 = vpop.permute.xlu0 %2917
        %2919 = vrot.lane.b32.xlu0 %v2490, 12
        %v2920 = vpop.permute.xlu0 %2919
        %2921 = vrot.lane.b32.xlu0 %v2491, 12
        %v2922 = vpop.permute.xlu0 %2921
        %2923 = vrot.lane.b32.xlu0 %v2492, 12
        %v2924 = vpop.permute.xlu0 %2923
        %2925 = vrot.lane.b32.xlu0 %v2493, 12
        %v2926 = vpop.permute.xlu0 %2925
        %2927 = vrot.lane.b32.xlu0 %v2494, 12
        %v2928 = vpop.permute.xlu0 %2927
        %2929 = vrot.lane.b32.xlu0 %v2495, 12
        %v2930 = vpop.permute.xlu0 %2929
        %2931 = vrot.lane.b32.xlu0 %v2496, 12
        %v2932 = vpop.permute.xlu0 %2931
        %2933 = vrot.lane.b32.xlu0 %v2497, 12
        %v2934 = vpop.permute.xlu0 %2933
        %2935 = vrot.lane.b32.xlu0 %v2498, 12
        %v2936 = vpop.permute.xlu0 %2935
        %2937 = vrot.lane.b32.xlu0 %v2499, 12
        %v2938 = vpop.permute.xlu0 %2937
        %2939 = vrot.lane.b32.xlu0 %v2500, 12
        %v2940 = vpop.permute.xlu0 %2939
        %2941 = vrot.lane.b32.xlu0 %v2501, 12
        %v2942 = vpop.permute.xlu0 %2941
        %2943 = vrot.lane.b32.xlu0 %v2502, 12
        %v2944 = vpop.permute.xlu0 %2943
        %2945 = vrot.lane.b32.xlu0 %v2503, 12
        %v2946 = vpop.permute.xlu0 %2945
        %2947 = vrot.lane.b32.xlu0 %v2504, 12
        %v2948 = vpop.permute.xlu0 %2947
        %2949 = vrot.lane.b32.xlu0 %v2505, 12
        %v2950 = vpop.permute.xlu0 %2949
        %2951 = vrot.lane.b32.xlu0 %v2506, 12
        %v2952 = vpop.permute.xlu0 %2951
        %2953 = vrot.lane.b32.xlu0 %v2507, 12
        %v2954 = vpop.permute.xlu0 %2953
        %2955 = vrot.lane.b32.xlu0 %v2508, 12
        %v2956 = vpop.permute.xlu0 %2955
        %2957 = vrot.lane.b32.xlu0 %v2509, 12
        %v2958 = vpop.permute.xlu0 %2957
        %2959 = vrot.lane.b32.xlu0 %v2510, 12
        %v2960 = vpop.permute.xlu0 %2959
        %2961 = vrot.lane.b32.xlu0 %v2511, 12
        %v2962 = vpop.permute.xlu0 %2961
        %2963 = vrot.lane.b32.xlu0 %v2512, 12
        %v2964 = vpop.permute.xlu0 %2963
        %2965 = vrot.lane.b32.xlu0 %v2513, 12
        %v2966 = vpop.permute.xlu0 %2965
        %2967 = vrot.lane.b32.xlu0 %v2514, 12
        %v2968 = vpop.permute.xlu0 %2967
        %2969 = vrot.lane.b32.xlu0 %v2515, 12
        %v2970 = vpop.permute.xlu0 %2969
        %2971 = vrot.lane.b32.xlu0 %v2516, 12
        %v2972 = vpop.permute.xlu0 %2971
        %2973 = vrot.lane.b32.xlu0 %v2517, 12
        %v2974 = vpop.permute.xlu0 %2973
        %2975 = vrot.lane.b32.xlu0 %v2518, 12
        %v2976 = vpop.permute.xlu0 %2975
        %2977 = vrot.lane.b32.xlu0 %v2519, 12
        %v2978 = vpop.permute.xlu0 %2977
        %2979 = vrot.lane.b32.xlu0 %v2520, 12
        %v2980 = vpop.permute.xlu0 %2979
        %2981 = vrot.lane.b32.xlu0 %v2521, 12
        %v2982 = vpop.permute.xlu0 %2981
        %2983 = vrot.lane.b32.xlu0 %v2522, 12
        %v2984 = vpop.permute.xlu0 %2983
        %2985 = vrot.lane.b32.xlu0 %v2523, 12
        %v2986 = vpop.permute.xlu0 %2985
        %2987 = vrot.lane.b32.xlu0 %v2524, 12
        %v2988 = vpop.permute.xlu0 %2987
        %2989 = vrot.lane.b32.xlu0 %v2525, 12
        %v2990 = vpop.permute.xlu0 %2989
        %vm3146 = vcmask 130144
        %3147 = vst.msk [vmem:[#allocation2] sm:$0xff] %vm3146, %v2682
        %3148 = vst.msk [vmem:[#allocation2 + $0x8] sm:$0xff] %vm3146, %v2684
        %3149 = vst.msk [vmem:[#allocation2 + $0x10] sm:$0xff] %vm3146, %v2686
        %3150 = vst.msk [vmem:[#allocation2 + $0x18] sm:$0xff] %vm3146, %v2688
        %3151 = vst.msk [vmem:[#allocation2 + $0x20] sm:$0xff] %vm3146, %v2690
        %3152 = vst.msk [vmem:[#allocation2 + $0x28] sm:$0xff] %vm3146, %v2692
        %3153 = vst.msk [vmem:[#allocation2 + $0x30] sm:$0xff] %vm3146, %v2694
        %3154 = vst.msk [vmem:[#allocation2 + $0x38] sm:$0xff] %vm3146, %v2696
        %3155 = vst.msk [vmem:[#allocation2 + $0x40] sm:$0xff] %vm3146, %v2698
        %3156 = vst.msk [vmem:[#allocation2 + $0x48] sm:$0xff] %vm3146, %v2700
        %3157 = vst.msk [vmem:[#allocation2 + $0x50] sm:$0xff] %vm3146, %v2702
        %3158 = vst.msk [vmem:[#allocation2 + $0x58] sm:$0xff] %vm3146, %v2704
        %3159 = vst.msk [vmem:[#allocation2 + $0x60] sm:$0xff] %vm3146, %v2706
        %3160 = vst.msk [vmem:[#allocation2 + $0x68] sm:$0xff] %vm3146, %v2708
        %3161 = vst.msk [vmem:[#allocation2 + $0x70] sm:$0xff] %vm3146, %v2710
        %3162 = vst.msk [vmem:[#allocation2 + $0x78] sm:$0xff] %vm3146, %v2712
        %3163 = vst.msk [vmem:[#allocation2 + $0x80] sm:$0xff] %vm3146, %v2714
        %3164 = vst.msk [vmem:[#allocation2 + $0x88] sm:$0xff] %vm3146, %v2716
        %3165 = vst.msk [vmem:[#allocation2 + $0x90] sm:$0xff] %vm3146, %v2718
        %3166 = vst.msk [vmem:[#allocation2 + $0x98] sm:$0xff] %vm3146, %v2720
        %3167 = vst.msk [vmem:[#allocation2 + $0xa0] sm:$0xff] %vm3146, %v2722
        %3168 = vst.msk [vmem:[#allocation2 + $0xa8] sm:$0xff] %vm3146, %v2724
        %3169 = vst.msk [vmem:[#allocation2 + $0xb0] sm:$0xff] %vm3146, %v2726
        %3170 = vst.msk [vmem:[#allocation2 + $0xb8] sm:$0xff] %vm3146, %v2728
        %3171 = vst.msk [vmem:[#allocation2 + $0xc0] sm:$0xff] %vm3146, %v2730
        %3172 = vst.msk [vmem:[#allocation2 + $0xc8] sm:$0xff] %vm3146, %v2732
        %3173 = vst.msk [vmem:[#allocation2 + $0xd0] sm:$0xff] %vm3146, %v2734
        %3174 = vst.msk [vmem:[#allocation2 + $0xd8] sm:$0xff] %vm3146, %v2736
        %3175 = vst.msk [vmem:[#allocation2 + $0xe0] sm:$0xff] %vm3146, %v2738
        %3176 = vst.msk [vmem:[#allocation2 + $0xe8] sm:$0xff] %vm3146, %v2740
        %3177 = vst.msk [vmem:[#allocation2 + $0xf0] sm:$0xff] %vm3146, %v2742
        %3178 = vst.msk [vmem:[#allocation2 + $0xf8] sm:$0xff] %vm3146, %v2744
        %3179 = vst.msk [vmem:[#allocation2 + $0x100] sm:$0xff] %vm3146, %v2746
        %3180 = vst.msk [vmem:[#allocation2 + $0x108] sm:$0xff] %vm3146, %v2748
        %3181 = vst.msk [vmem:[#allocation2 + $0x110] sm:$0xff] %vm3146, %v2750
        %3182 = vst.msk [vmem:[#allocation2 + $0x118] sm:$0xff] %vm3146, %v2752
        %3183 = vst.msk [vmem:[#allocation2 + $0x120] sm:$0xff] %vm3146, %v2754
        %3184 = vst.msk [vmem:[#allocation2 + $0x128] sm:$0xff] %vm3146, %v2756
        %3185 = vst.msk [vmem:[#allocation2 + $0x130] sm:$0xff] %vm3146, %v2758
        %3186 = vst.msk [vmem:[#allocation2 + $0x138] sm:$0xff] %vm3146, %v2760
        %3187 = vst.msk [vmem:[#allocation2 + $0x140] sm:$0xff] %vm3146, %v2762
        %3188 = vst.msk [vmem:[#allocation2 + $0x148] sm:$0xff] %vm3146, %v2764
        %3189 = vst.msk [vmem:[#allocation2 + $0x150] sm:$0xff] %vm3146, %v2766
        %3190 = vst.msk [vmem:[#allocation2 + $0x158] sm:$0xff] %vm3146, %v2768
        %3191 = vst.msk [vmem:[#allocation2 + $0x160] sm:$0xff] %vm3146, %v2770
        %3192 = vst.msk [vmem:[#allocation2 + $0x168] sm:$0xff] %vm3146, %v2772
        %3193 = vst.msk [vmem:[#allocation2 + $0x170] sm:$0xff] %vm3146, %v2774
        %3194 = vst.msk [vmem:[#allocation2 + $0x178] sm:$0xff] %vm3146, %v2776
        %3195 = vst.msk [vmem:[#allocation2 + $0x180] sm:$0xff] %vm3146, %v2778
        %3196 = vst.msk [vmem:[#allocation2 + $0x188] sm:$0xff] %vm3146, %v2780
        %3197 = vst.msk [vmem:[#allocation2 + $0x190] sm:$0xff] %vm3146, %v2782
        %3198 = vst.msk [vmem:[#allocation2 + $0x198] sm:$0xff] %vm3146, %v2784
        %3199 = vst.msk [vmem:[#allocation2 + $0x1a0] sm:$0xff] %vm3146, %v2786
        %3200 = vst.msk [vmem:[#allocation2 + $0x1a8] sm:$0xff] %vm3146, %v2788
        %3201 = vst.msk [vmem:[#allocation2 + $0x1b0] sm:$0xff] %vm3146, %v2790
        %3202 = vst.msk [vmem:[#allocation2 + $0x1b8] sm:$0xff] %vm3146, %v2792
        %3203 = vst.msk [vmem:[#allocation2 + $0x1c0] sm:$0xff] %vm3146, %v2794
        %3204 = vst.msk [vmem:[#allocation2 + $0x1c8] sm:$0xff] %vm3146, %v2796
        %3205 = vst.msk [vmem:[#allocation2 + $0x1d0] sm:$0xff] %vm3146, %v2798
        %3206 = vst.msk [vmem:[#allocation2 + $0x1d8] sm:$0xff] %vm3146, %v2800
        %3207 = vst.msk [vmem:[#allocation2 + $0x1e0] sm:$0xff] %vm3146, %v2802
        %3208 = vst.msk [vmem:[#allocation2 + $0x1e8] sm:$0xff] %vm3146, %v2804
        %3209 = vst.msk [vmem:[#allocation2 + $0x1f0] sm:$0xff] %vm3146, %v2806
        %3210 = vst.msk [vmem:[#allocation2 + $0x1f8] sm:$0xff] %vm3146, %v2808
        %3211 = vst.msk [vmem:[#allocation2 + $0x200] sm:$0xff] %vm3146, %v2810
        %3212 = vst.msk [vmem:[#allocation2 + $0x208] sm:$0xff] %vm3146, %v2812
        %3213 = vst.msk [vmem:[#allocation2 + $0x210] sm:$0xff] %vm3146, %v2814
        %3214 = vst.msk [vmem:[#allocation2 + $0x218] sm:$0xff] %vm3146, %v2816
        %3215 = vst.msk [vmem:[#allocation2 + $0x220] sm:$0xff] %vm3146, %v2818
        %3216 = vst.msk [vmem:[#allocation2 + $0x228] sm:$0xff] %vm3146, %v2820
        %3217 = vst.msk [vmem:[#allocation2 + $0x230] sm:$0xff] %vm3146, %v2822
        %3218 = vst.msk [vmem:[#allocation2 + $0x238] sm:$0xff] %vm3146, %v2824
        %3219 = vst.msk [vmem:[#allocation2 + $0x240] sm:$0xff] %vm3146, %v2826
        %3220 = vst.msk [vmem:[#allocation2 + $0x248] sm:$0xff] %vm3146, %v2828
        %3221 = vst.msk [vmem:[#allocation2 + $0x250] sm:$0xff] %vm3146, %v2830
        %3222 = vst.msk [vmem:[#allocation2 + $0x258] sm:$0xff] %vm3146, %v2832
        %3223 = vst.msk [vmem:[#allocation2 + $0x260] sm:$0xff] %vm3146, %v2834
        %3224 = vst.msk [vmem:[#allocation2 + $0x268] sm:$0xff] %vm3146, %v2836
        %3225 = vst.msk [vmem:[#allocation2 + $0x270] sm:$0xff] %vm3146, %v2838
        %3226 = vst.msk [vmem:[#allocation2 + $0x278] sm:$0xff] %vm3146, %v2840
        %3227 = vst.msk [vmem:[#allocation2 + $0x280] sm:$0xff] %vm3146, %v2842
        %3228 = vst.msk [vmem:[#allocation2 + $0x288] sm:$0xff] %vm3146, %v2844
        %3229 = vst.msk [vmem:[#allocation2 + $0x290] sm:$0xff] %vm3146, %v2846
        %3230 = vst.msk [vmem:[#allocation2 + $0x298] sm:$0xff] %vm3146, %v2848
        %3231 = vst.msk [vmem:[#allocation2 + $0x2a0] sm:$0xff] %vm3146, %v2850
        %3232 = vst.msk [vmem:[#allocation2 + $0x2a8] sm:$0xff] %vm3146, %v2852
        %3233 = vst.msk [vmem:[#allocation2 + $0x2b0] sm:$0xff] %vm3146, %v2854
        %3234 = vst.msk [vmem:[#allocation2 + $0x2b8] sm:$0xff] %vm3146, %v2856
        %3235 = vst.msk [vmem:[#allocation2 + $0x2c0] sm:$0xff] %vm3146, %v2858
        %3236 = vst.msk [vmem:[#allocation2 + $0x2c8] sm:$0xff] %vm3146, %v2860
        %3237 = vst.msk [vmem:[#allocation2 + $0x2d0] sm:$0xff] %vm3146, %v2862
        %3238 = vst.msk [vmem:[#allocation2 + $0x2d8] sm:$0xff] %vm3146, %v2864
        %3239 = vst.msk [vmem:[#allocation2 + $0x2e0] sm:$0xff] %vm3146, %v2866
        %3240 = vst.msk [vmem:[#allocation2 + $0x2e8] sm:$0xff] %vm3146, %v2868
        %3241 = vst.msk [vmem:[#allocation2 + $0x2f0] sm:$0xff] %vm3146, %v2870
        %3242 = vst.msk [vmem:[#allocation2 + $0x2f8] sm:$0xff] %vm3146, %v2872
        %3243 = vst.msk [vmem:[#allocation2 + $0x300] sm:$0xff] %vm3146, %v2874
        %3244 = vst.msk [vmem:[#allocation2 + $0x308] sm:$0xff] %vm3146, %v2876
        %3245 = vst.msk [vmem:[#allocation2 + $0x310] sm:$0xff] %vm3146, %v2878
        %3246 = vst.msk [vmem:[#allocation2 + $0x318] sm:$0xff] %vm3146, %v2880
        %3247 = vst.msk [vmem:[#allocation2 + $0x320] sm:$0xff] %vm3146, %v2882
        %3248 = vst.msk [vmem:[#allocation2 + $0x328] sm:$0xff] %vm3146, %v2884
        %3249 = vst.msk [vmem:[#allocation2 + $0x330] sm:$0xff] %vm3146, %v2886
        %3250 = vst.msk [vmem:[#allocation2 + $0x338] sm:$0xff] %vm3146, %v2888
        %3251 = vst.msk [vmem:[#allocation2 + $0x340] sm:$0xff] %vm3146, %v2890
        %3252 = vst.msk [vmem:[#allocation2 + $0x348] sm:$0xff] %vm3146, %v2892
        %3253 = vst.msk [vmem:[#allocation2 + $0x350] sm:$0xff] %vm3146, %v2894
        %3254 = vst.msk [vmem:[#allocation2 + $0x358] sm:$0xff] %vm3146, %v2896
        %3255 = vst.msk [vmem:[#allocation2 + $0x360] sm:$0xff] %vm3146, %v2898
        %3256 = vst.msk [vmem:[#allocation2 + $0x368] sm:$0xff] %vm3146, %v2900
        %3257 = vst.msk [vmem:[#allocation2 + $0x370] sm:$0xff] %vm3146, %v2902
        %3258 = vst.msk [vmem:[#allocation2 + $0x378] sm:$0xff] %vm3146, %v2904
        %3259 = vst.msk [vmem:[#allocation2 + $0x380] sm:$0xff] %vm3146, %v2906
        %3260 = vst.msk [vmem:[#allocation2 + $0x388] sm:$0xff] %vm3146, %v2908
        %3261 = vst.msk [vmem:[#allocation2 + $0x390] sm:$0xff] %vm3146, %v2910
        %3262 = vst.msk [vmem:[#allocation2 + $0x398] sm:$0xff] %vm3146, %v2912
        %3263 = vst.msk [vmem:[#allocation2 + $0x3a0] sm:$0xff] %vm3146, %v2914
        %3264 = vst.msk [vmem:[#allocation2 + $0x3a8] sm:$0xff] %vm3146, %v2916
        %3265 = vst.msk [vmem:[#allocation2 + $0x3b0] sm:$0xff] %vm3146, %v2918
        %3266 = vst.msk [vmem:[#allocation2 + $0x3b8] sm:$0xff] %vm3146, %v2920
        %3267 = vst.msk [vmem:[#allocation2 + $0x3c0] sm:$0xff] %vm3146, %v2922
        %3268 = vst.msk [vmem:[#allocation2 + $0x3c8] sm:$0xff] %vm3146, %v2924
        %3269 = vst.msk [vmem:[#allocation2 + $0x3d0] sm:$0xff] %vm3146, %v2926
        %3270 = vst.msk [vmem:[#allocation2 + $0x3d8] sm:$0xff] %vm3146, %v2928
        %3271 = vst.msk [vmem:[#allocation2 + $0x3e0] sm:$0xff] %vm3146, %v2930
        %3272 = vst.msk [vmem:[#allocation2 + $0x3e8] sm:$0xff] %vm3146, %v2932
        %3273 = vst.msk [vmem:[#allocation2 + $0x3f0] sm:$0xff] %vm3146, %v2934
        %3274 = vst.msk [vmem:[#allocation2 + $0x3f8] sm:$0xff] %vm3146, %v2936
        %3275 = vst.msk [vmem:[#allocation2 + $0x400] sm:$0xff] %vm3146, %v2938
        %3276 = vst.msk [vmem:[#allocation2 + $0x408] sm:$0xff] %vm3146, %v2940
        %3277 = vst.msk [vmem:[#allocation2 + $0x410] sm:$0xff] %vm3146, %v2942
        %3278 = vst.msk [vmem:[#allocation2 + $0x418] sm:$0xff] %vm3146, %v2944
        %3279 = vst.msk [vmem:[#allocation2 + $0x420] sm:$0xff] %vm3146, %v2946
        %3280 = vst.msk [vmem:[#allocation2 + $0x428] sm:$0xff] %vm3146, %v2948
        %3281 = vst.msk [vmem:[#allocation2 + $0x430] sm:$0xff] %vm3146, %v2950
        %3282 = vst.msk [vmem:[#allocation2 + $0x438] sm:$0xff] %vm3146, %v2952
        %3283 = vst.msk [vmem:[#allocation2 + $0x440] sm:$0xff] %vm3146, %v2954
        %3284 = vst.msk [vmem:[#allocation2 + $0x448] sm:$0xff] %vm3146, %v2956
        %3285 = vst.msk [vmem:[#allocation2 + $0x450] sm:$0xff] %vm3146, %v2958
        %3286 = vst.msk [vmem:[#allocation2 + $0x458] sm:$0xff] %vm3146, %v2960
        %3287 = vst.msk [vmem:[#allocation2 + $0x460] sm:$0xff] %vm3146, %v2962
        %3288 = vst.msk [vmem:[#allocation2 + $0x468] sm:$0xff] %vm3146, %v2964
        %3289 = vst.msk [vmem:[#allocation2 + $0x470] sm:$0xff] %vm3146, %v2966
        %3290 = vst.msk [vmem:[#allocation2 + $0x478] sm:$0xff] %vm3146, %v2968
        %3291 = vst.msk [vmem:[#allocation2 + $0x480] sm:$0xff] %vm3146, %v2970
        %3292 = vst.msk [vmem:[#allocation2 + $0x488] sm:$0xff] %vm3146, %v2972
        %3293 = vst.msk [vmem:[#allocation2 + $0x490] sm:$0xff] %vm3146, %v2974
        %3294 = vst.msk [vmem:[#allocation2 + $0x498] sm:$0xff] %vm3146, %v2976
        %3295 = vst.msk [vmem:[#allocation2 + $0x4a0] sm:$0xff] %vm3146, %v2978
        %3296 = vst.msk [vmem:[#allocation2 + $0x4a8] sm:$0xff] %vm3146, %v2980
        %3297 = vst.msk [vmem:[#allocation2 + $0x4b0] sm:$0xff] %vm3146, %v2982
        %3298 = vst.msk [vmem:[#allocation2 + $0x4b8] sm:$0xff] %vm3146, %v2984
        %3299 = vst.msk [vmem:[#allocation2 + $0x4c0] sm:$0xff] %vm3146, %v2986
        %3300 = vst.msk [vmem:[#allocation2 + $0x4c8] sm:$0xff] %vm3146, %v2988
        %3301 = vst.msk [vmem:[#allocation2 + $0x4d0] sm:$0xff] %vm3146, %v2990
        %v3302 = vld [vmem:[%s196 + $0x29] sm:$0xff]
        %v3303 = vld [vmem:[%s196 + $0x31] sm:$0xff]
        %v3304 = vld [vmem:[%s196 + $0x39] sm:$0xff]
        %v3305 = vld [vmem:[%s196 + $0x41] sm:$0xff]
        %v3306 = vld [vmem:[%s196 + $0x49] sm:$0xff]
        %v3307 = vld [vmem:[%s196 + $0x51] sm:$0xff]
        %v3308 = vld [vmem:[%s196 + $0x59] sm:$0xff]
        %v3309 = vld [vmem:[%s196 + $0x61] sm:$0xff]
        %v3310 = vld [vmem:[%s196 + $0x69] sm:$0xff]
        %v3311 = vld [vmem:[%s196 + $0x71] sm:$0xff]
        %v3312 = vld [vmem:[%s196 + $0x79] sm:$0xff]
        %v3313 = vld [vmem:[%s196 + $0x81] sm:$0xff]
        %v3314 = vld [vmem:[%s196 + $0x89] sm:$0xff]
        %v3315 = vld [vmem:[%s196 + $0x91] sm:$0xff]
        %v3316 = vld [vmem:[%s196 + $0x99] sm:$0xff]
        %v3317 = vld [vmem:[%s196 + $0xa1] sm:$0xff]
        %v3318 = vld [vmem:[%s196 + $0xa9] sm:$0xff]
        %v3319 = vld [vmem:[%s196 + $0xb1] sm:$0xff]
        %v3320 = vld [vmem:[%s196 + $0xb9] sm:$0xff]
        %v3321 = vld [vmem:[%s196 + $0xc1] sm:$0xff]
        %v3322 = vld [vmem:[%s196 + $0xc9] sm:$0xff]
        %v3323 = vld [vmem:[%s196 + $0xd1] sm:$0xff]
        %v3324 = vld [vmem:[%s196 + $0xd9] sm:$0xff]
        %v3325 = vld [vmem:[%s196 + $0xe1] sm:$0xff]
        %v3326 = vld [vmem:[%s196 + $0xe9] sm:$0xff]
        %v3327 = vld [vmem:[%s196 + $0xf1] sm:$0xff]
        %v3328 = vld [vmem:[%s196 + $0xf9] sm:$0xff]
        %v3329 = vld [vmem:[%s196 + $0x101] sm:$0xff]
        %v3330 = vld [vmem:[%s196 + $0x109] sm:$0xff]
        %v3331 = vld [vmem:[%s196 + $0x111] sm:$0xff]
        %v3332 = vld [vmem:[%s196 + $0x119] sm:$0xff]
        %v3333 = vld [vmem:[%s196 + $0x121] sm:$0xff]
        %v3334 = vld [vmem:[%s196 + $0x129] sm:$0xff]
        %v3335 = vld [vmem:[%s196 + $0x131] sm:$0xff]
        %v3336 = vld [vmem:[%s196 + $0x139] sm:$0xff]
        %v3337 = vld [vmem:[%s196 + $0x141] sm:$0xff]
        %v3338 = vld [vmem:[%s196 + $0x149] sm:$0xff]
        %v3339 = vld [vmem:[%s196 + $0x151] sm:$0xff]
        %v3340 = vld [vmem:[%s196 + $0x159] sm:$0xff]
        %v3341 = vld [vmem:[%s196 + $0x161] sm:$0xff]
        %v3342 = vld [vmem:[%s196 + $0x169] sm:$0xff]
        %v3343 = vld [vmem:[%s196 + $0x171] sm:$0xff]
        %v3344 = vld [vmem:[%s196 + $0x179] sm:$0xff]
        %v3345 = vld [vmem:[%s196 + $0x181] sm:$0xff]
        %v3346 = vld [vmem:[%s196 + $0x189] sm:$0xff]
        %v3347 = vld [vmem:[%s196 + $0x191] sm:$0xff]
        %v3348 = vld [vmem:[%s196 + $0x199] sm:$0xff]
        %v3349 = vld [vmem:[%s196 + $0x1a1] sm:$0xff]
        %v3350 = vld [vmem:[%s196 + $0x1a9] sm:$0xff]
        %v3351 = vld [vmem:[%s196 + $0x1b1] sm:$0xff]
        %v3352 = vld [vmem:[%s196 + $0x1b9] sm:$0xff]
        %v3353 = vld [vmem:[%s196 + $0x1c1] sm:$0xff]
        %v3354 = vld [vmem:[%s196 + $0x1c9] sm:$0xff]
        %v3355 = vld [vmem:[%s196 + $0x1d1] sm:$0xff]
        %v3356 = vld [vmem:[%s196 + $0x1d9] sm:$0xff]
        %v3357 = vld [vmem:[%s196 + $0x1e1] sm:$0xff]
        %v3358 = vld [vmem:[%s196 + $0x1e9] sm:$0xff]
        %v3359 = vld [vmem:[%s196 + $0x1f1] sm:$0xff]
        %v3360 = vld [vmem:[%s196 + $0x1f9] sm:$0xff]
        %v3361 = vld [vmem:[%s196 + $0x201] sm:$0xff]
        %v3362 = vld [vmem:[%s196 + $0x209] sm:$0xff]
        %v3363 = vld [vmem:[%s196 + $0x211] sm:$0xff]
        %v3364 = vld [vmem:[%s196 + $0x219] sm:$0xff]
        %v3365 = vld [vmem:[%s196 + $0x221] sm:$0xff]
        %v3366 = vld [vmem:[%s196 + $0x229] sm:$0xff]
        %v3367 = vld [vmem:[%s196 + $0x231] sm:$0xff]
        %v3368 = vld [vmem:[%s196 + $0x239] sm:$0xff]
        %v3369 = vld [vmem:[%s196 + $0x241] sm:$0xff]
        %v3370 = vld [vmem:[%s196 + $0x249] sm:$0xff]
        %v3371 = vld [vmem:[%s196 + $0x251] sm:$0xff]
        %v3372 = vld [vmem:[%s196 + $0x259] sm:$0xff]
        %v3373 = vld [vmem:[%s196 + $0x261] sm:$0xff]
        %v3374 = vld [vmem:[%s196 + $0x269] sm:$0xff]
        %v3375 = vld [vmem:[%s196 + $0x271] sm:$0xff]
        %v3376 = vld [vmem:[%s196 + $0x279] sm:$0xff]
        %v3377 = vld [vmem:[%s196 + $0x281] sm:$0xff]
        %v3378 = vld [vmem:[%s196 + $0x289] sm:$0xff]
        %v3379 = vld [vmem:[%s196 + $0x291] sm:$0xff]
        %v3380 = vld [vmem:[%s196 + $0x299] sm:$0xff]
        %v3381 = vld [vmem:[%s196 + $0x2a1] sm:$0xff]
        %v3382 = vld [vmem:[%s196 + $0x2a9] sm:$0xff]
        %v3383 = vld [vmem:[%s196 + $0x2b1] sm:$0xff]
        %v3384 = vld [vmem:[%s196 + $0x2b9] sm:$0xff]
        %v3385 = vld [vmem:[%s196 + $0x2c1] sm:$0xff]
        %v3386 = vld [vmem:[%s196 + $0x2c9] sm:$0xff]
        %v3387 = vld [vmem:[%s196 + $0x2d1] sm:$0xff]
        %v3388 = vld [vmem:[%s196 + $0x2d9] sm:$0xff]
        %v3389 = vld [vmem:[%s196 + $0x2e1] sm:$0xff]
        %v3390 = vld [vmem:[%s196 + $0x2e9] sm:$0xff]
        %v3391 = vld [vmem:[%s196 + $0x2f1] sm:$0xff]
        %v3392 = vld [vmem:[%s196 + $0x2f9] sm:$0xff]
        %v3393 = vld [vmem:[%s196 + $0x301] sm:$0xff]
        %v3394 = vld [vmem:[%s196 + $0x309] sm:$0xff]
        %v3395 = vld [vmem:[%s196 + $0x311] sm:$0xff]
        %v3396 = vld [vmem:[%s196 + $0x319] sm:$0xff]
        %v3397 = vld [vmem:[%s196 + $0x321] sm:$0xff]
        %v3398 = vld [vmem:[%s196 + $0x329] sm:$0xff]
        %v3399 = vld [vmem:[%s196 + $0x331] sm:$0xff]
        %v3400 = vld [vmem:[%s196 + $0x339] sm:$0xff]
        %v3401 = vld [vmem:[%s196 + $0x341] sm:$0xff]
        %v3402 = vld [vmem:[%s196 + $0x349] sm:$0xff]
        %v3403 = vld [vmem:[%s196 + $0x351] sm:$0xff]
        %v3404 = vld [vmem:[%s196 + $0x359] sm:$0xff]
        %v3405 = vld [vmem:[%s196 + $0x361] sm:$0xff]
        %v3406 = vld [vmem:[%s196 + $0x369] sm:$0xff]
        %v3407 = vld [vmem:[%s196 + $0x371] sm:$0xff]
        %v3408 = vld [vmem:[%s196 + $0x379] sm:$0xff]
        %v3409 = vld [vmem:[%s196 + $0x381] sm:$0xff]
        %v3410 = vld [vmem:[%s196 + $0x389] sm:$0xff]
        %v3411 = vld [vmem:[%s196 + $0x391] sm:$0xff]
        %v3412 = vld [vmem:[%s196 + $0x399] sm:$0xff]
        %v3413 = vld [vmem:[%s196 + $0x3a1] sm:$0xff]
        %v3414 = vld [vmem:[%s196 + $0x3a9] sm:$0xff]
        %v3415 = vld [vmem:[%s196 + $0x3b1] sm:$0xff]
        %v3416 = vld [vmem:[%s196 + $0x3b9] sm:$0xff]
        %v3417 = vld [vmem:[%s196 + $0x3c1] sm:$0xff]
        %v3418 = vld [vmem:[%s196 + $0x3c9] sm:$0xff]
        %v3419 = vld [vmem:[%s196 + $0x3d1] sm:$0xff]
        %v3420 = vld [vmem:[%s196 + $0x3d9] sm:$0xff]
        %v3421 = vld [vmem:[%s196 + $0x3e1] sm:$0xff]
        %v3422 = vld [vmem:[%s196 + $0x3e9] sm:$0xff]
        %v3423 = vld [vmem:[%s196 + $0x3f1] sm:$0xff]
        %v3424 = vld [vmem:[%s196 + $0x3f9] sm:$0xff]
        %v3425 = vld [vmem:[%s196 + $0x401] sm:$0xff]
        %v3426 = vld [vmem:[%s196 + $0x409] sm:$0xff]
        %v3427 = vld [vmem:[%s196 + $0x411] sm:$0xff]
        %v3428 = vld [vmem:[%s196 + $0x419] sm:$0xff]
        %v3429 = vld [vmem:[%s196 + $0x421] sm:$0xff]
        %v3430 = vld [vmem:[%s196 + $0x429] sm:$0xff]
        %v3431 = vld [vmem:[%s196 + $0x431] sm:$0xff]
        %v3432 = vld [vmem:[%s196 + $0x439] sm:$0xff]
        %v3433 = vld [vmem:[%s196 + $0x441] sm:$0xff]
        %v3434 = vld [vmem:[%s196 + $0x449] sm:$0xff]
        %v3435 = vld [vmem:[%s196 + $0x451] sm:$0xff]
        %v3436 = vld [vmem:[%s196 + $0x459] sm:$0xff]
        %v3437 = vld [vmem:[%s196 + $0x461] sm:$0xff]
        %v3438 = vld [vmem:[%s196 + $0x469] sm:$0xff]
        %v3439 = vld [vmem:[%s196 + $0x471] sm:$0xff]
        %v3440 = vld [vmem:[%s196 + $0x479] sm:$0xff]
        %v3441 = vld [vmem:[%s196 + $0x481] sm:$0xff]
        %v3442 = vld [vmem:[%s196 + $0x489] sm:$0xff]
        %v3443 = vld [vmem:[%s196 + $0x491] sm:$0xff]
        %v3444 = vld [vmem:[%s196 + $0x499] sm:$0xff]
        %v3445 = vld [vmem:[%s196 + $0x4a1] sm:$0xff]
        %v3446 = vld [vmem:[%s196 + $0x4a9] sm:$0xff]
        %v3447 = vld [vmem:[%s196 + $0x4b1] sm:$0xff]
        %v3448 = vld [vmem:[%s196 + $0x4b9] sm:$0xff]
        %v3449 = vld [vmem:[%s196 + $0x4c1] sm:$0xff]
        %v3450 = vld [vmem:[%s196 + $0x4c9] sm:$0xff]
        %v3451 = vld [vmem:[%s196 + $0x4d1] sm:$0xff]
        %v3452 = vld [vmem:[%s196 + $0x4d9] sm:$0xff]
        %v3453 = vld [vmem:[%s196 + $0x4e1] sm:$0xff]
        %v3454 = vld [vmem:[%s196 + $0x4e9] sm:$0xff]
        %v3455 = vld [vmem:[%s196 + $0x4f1] sm:$0xff]
        %v3456 = vld [vmem:[%s196 + $0x4f9] sm:$0xff]
        %3612 = vrot.lane.b32.xlu0 %v3302, 16
        %v3613 = vpop.permute.xlu0 %3612
        %3614 = vrot.lane.b32.xlu0 %v3303, 16
        %v3615 = vpop.permute.xlu0 %3614
        %3616 = vrot.lane.b32.xlu0 %v3304, 16
        %v3617 = vpop.permute.xlu0 %3616
        %3618 = vrot.lane.b32.xlu0 %v3305, 16
        %v3619 = vpop.permute.xlu0 %3618
        %3620 = vrot.lane.b32.xlu0 %v3306, 16
        %v3621 = vpop.permute.xlu0 %3620
        %3622 = vrot.lane.b32.xlu0 %v3307, 16
        %v3623 = vpop.permute.xlu0 %3622
        %3624 = vrot.lane.b32.xlu0 %v3308, 16
        %v3625 = vpop.permute.xlu0 %3624
        %3626 = vrot.lane.b32.xlu0 %v3309, 16
        %v3627 = vpop.permute.xlu0 %3626
        %3628 = vrot.lane.b32.xlu0 %v3310, 16
        %v3629 = vpop.permute.xlu0 %3628
        %3630 = vrot.lane.b32.xlu0 %v3311, 16
        %v3631 = vpop.permute.xlu0 %3630
        %3632 = vrot.lane.b32.xlu0 %v3312, 16
        %v3633 = vpop.permute.xlu0 %3632
        %3634 = vrot.lane.b32.xlu0 %v3313, 16
        %v3635 = vpop.permute.xlu0 %3634
        %3636 = vrot.lane.b32.xlu0 %v3314, 16
        %v3637 = vpop.permute.xlu0 %3636
        %3638 = vrot.lane.b32.xlu0 %v3315, 16
        %v3639 = vpop.permute.xlu0 %3638
        %3640 = vrot.lane.b32.xlu0 %v3316, 16
        %v3641 = vpop.permute.xlu0 %3640
        %3642 = vrot.lane.b32.xlu0 %v3317, 16
        %v3643 = vpop.permute.xlu0 %3642
        %3644 = vrot.lane.b32.xlu0 %v3318, 16
        %v3645 = vpop.permute.xlu0 %3644
        %3646 = vrot.lane.b32.xlu0 %v3319, 16
        %v3647 = vpop.permute.xlu0 %3646
        %3648 = vrot.lane.b32.xlu0 %v3320, 16
        %v3649 = vpop.permute.xlu0 %3648
        %3650 = vrot.lane.b32.xlu0 %v3321, 16
        %v3651 = vpop.permute.xlu0 %3650
        %3652 = vrot.lane.b32.xlu0 %v3322, 16
        %v3653 = vpop.permute.xlu0 %3652
        %3654 = vrot.lane.b32.xlu0 %v3323, 16
        %v3655 = vpop.permute.xlu0 %3654
        %3656 = vrot.lane.b32.xlu0 %v3324, 16
        %v3657 = vpop.permute.xlu0 %3656
        %3658 = vrot.lane.b32.xlu0 %v3325, 16
        %v3659 = vpop.permute.xlu0 %3658
        %3660 = vrot.lane.b32.xlu0 %v3326, 16
        %v3661 = vpop.permute.xlu0 %3660
        %3662 = vrot.lane.b32.xlu0 %v3327, 16
        %v3663 = vpop.permute.xlu0 %3662
        %3664 = vrot.lane.b32.xlu0 %v3328, 16
        %v3665 = vpop.permute.xlu0 %3664
        %3666 = vrot.lane.b32.xlu0 %v3329, 16
        %v3667 = vpop.permute.xlu0 %3666
        %3668 = vrot.lane.b32.xlu0 %v3330, 16
        %v3669 = vpop.permute.xlu0 %3668
        %3670 = vrot.lane.b32.xlu0 %v3331, 16
        %v3671 = vpop.permute.xlu0 %3670
        %3672 = vrot.lane.b32.xlu0 %v3332, 16
        %v3673 = vpop.permute.xlu0 %3672
        %3674 = vrot.lane.b32.xlu0 %v3333, 16
        %v3675 = vpop.permute.xlu0 %3674
        %3676 = vrot.lane.b32.xlu0 %v3334, 16
        %v3677 = vpop.permute.xlu0 %3676
        %3678 = vrot.lane.b32.xlu0 %v3335, 16
        %v3679 = vpop.permute.xlu0 %3678
        %3680 = vrot.lane.b32.xlu0 %v3336, 16
        %v3681 = vpop.permute.xlu0 %3680
        %3682 = vrot.lane.b32.xlu0 %v3337, 16
        %v3683 = vpop.permute.xlu0 %3682
        %3684 = vrot.lane.b32.xlu0 %v3338, 16
        %v3685 = vpop.permute.xlu0 %3684
        %3686 = vrot.lane.b32.xlu0 %v3339, 16
        %v3687 = vpop.permute.xlu0 %3686
        %3688 = vrot.lane.b32.xlu0 %v3340, 16
        %v3689 = vpop.permute.xlu0 %3688
        %3690 = vrot.lane.b32.xlu0 %v3341, 16
        %v3691 = vpop.permute.xlu0 %3690
        %3692 = vrot.lane.b32.xlu0 %v3342, 16
        %v3693 = vpop.permute.xlu0 %3692
        %3694 = vrot.lane.b32.xlu0 %v3343, 16
        %v3695 = vpop.permute.xlu0 %3694
        %3696 = vrot.lane.b32.xlu0 %v3344, 16
        %v3697 = vpop.permute.xlu0 %3696
        %3698 = vrot.lane.b32.xlu0 %v3345, 16
        %v3699 = vpop.permute.xlu0 %3698
        %3700 = vrot.lane.b32.xlu0 %v3346, 16
        %v3701 = vpop.permute.xlu0 %3700
        %3702 = vrot.lane.b32.xlu0 %v3347, 16
        %v3703 = vpop.permute.xlu0 %3702
        %3704 = vrot.lane.b32.xlu0 %v3348, 16
        %v3705 = vpop.permute.xlu0 %3704
        %3706 = vrot.lane.b32.xlu0 %v3349, 16
        %v3707 = vpop.permute.xlu0 %3706
        %3708 = vrot.lane.b32.xlu0 %v3350, 16
        %v3709 = vpop.permute.xlu0 %3708
        %3710 = vrot.lane.b32.xlu0 %v3351, 16
        %v3711 = vpop.permute.xlu0 %3710
        %3712 = vrot.lane.b32.xlu0 %v3352, 16
        %v3713 = vpop.permute.xlu0 %3712
        %3714 = vrot.lane.b32.xlu0 %v3353, 16
        %v3715 = vpop.permute.xlu0 %3714
        %3716 = vrot.lane.b32.xlu0 %v3354, 16
        %v3717 = vpop.permute.xlu0 %3716
        %3718 = vrot.lane.b32.xlu0 %v3355, 16
        %v3719 = vpop.permute.xlu0 %3718
        %3720 = vrot.lane.b32.xlu0 %v3356, 16
        %v3721 = vpop.permute.xlu0 %3720
        %3722 = vrot.lane.b32.xlu0 %v3357, 16
        %v3723 = vpop.permute.xlu0 %3722
        %3724 = vrot.lane.b32.xlu0 %v3358, 16
        %v3725 = vpop.permute.xlu0 %3724
        %3726 = vrot.lane.b32.xlu0 %v3359, 16
        %v3727 = vpop.permute.xlu0 %3726
        %3728 = vrot.lane.b32.xlu0 %v3360, 16
        %v3729 = vpop.permute.xlu0 %3728
        %3730 = vrot.lane.b32.xlu0 %v3361, 16
        %v3731 = vpop.permute.xlu0 %3730
        %3732 = vrot.lane.b32.xlu0 %v3362, 16
        %v3733 = vpop.permute.xlu0 %3732
        %3734 = vrot.lane.b32.xlu0 %v3363, 16
        %v3735 = vpop.permute.xlu0 %3734
        %3736 = vrot.lane.b32.xlu0 %v3364, 16
        %v3737 = vpop.permute.xlu0 %3736
        %3738 = vrot.lane.b32.xlu0 %v3365, 16
        %v3739 = vpop.permute.xlu0 %3738
        %3740 = vrot.lane.b32.xlu0 %v3366, 16
        %v3741 = vpop.permute.xlu0 %3740
        %3742 = vrot.lane.b32.xlu0 %v3367, 16
        %v3743 = vpop.permute.xlu0 %3742
        %3744 = vrot.lane.b32.xlu0 %v3368, 16
        %v3745 = vpop.permute.xlu0 %3744
        %3746 = vrot.lane.b32.xlu0 %v3369, 16
        %v3747 = vpop.permute.xlu0 %3746
        %3748 = vrot.lane.b32.xlu0 %v3370, 16
        %v3749 = vpop.permute.xlu0 %3748
        %3750 = vrot.lane.b32.xlu0 %v3371, 16
        %v3751 = vpop.permute.xlu0 %3750
        %3752 = vrot.lane.b32.xlu0 %v3372, 16
        %v3753 = vpop.permute.xlu0 %3752
        %3754 = vrot.lane.b32.xlu0 %v3373, 16
        %v3755 = vpop.permute.xlu0 %3754
        %3756 = vrot.lane.b32.xlu0 %v3374, 16
        %v3757 = vpop.permute.xlu0 %3756
        %3758 = vrot.lane.b32.xlu0 %v3375, 16
        %v3759 = vpop.permute.xlu0 %3758
        %3760 = vrot.lane.b32.xlu0 %v3376, 16
        %v3761 = vpop.permute.xlu0 %3760
        %3762 = vrot.lane.b32.xlu0 %v3377, 16
        %v3763 = vpop.permute.xlu0 %3762
        %3764 = vrot.lane.b32.xlu0 %v3378, 16
        %v3765 = vpop.permute.xlu0 %3764
        %3766 = vrot.lane.b32.xlu0 %v3379, 16
        %v3767 = vpop.permute.xlu0 %3766
        %3768 = vrot.lane.b32.xlu0 %v3380, 16
        %v3769 = vpop.permute.xlu0 %3768
        %3770 = vrot.lane.b32.xlu0 %v3381, 16
        %v3771 = vpop.permute.xlu0 %3770
        %3772 = vrot.lane.b32.xlu0 %v3382, 16
        %v3773 = vpop.permute.xlu0 %3772
        %3774 = vrot.lane.b32.xlu0 %v3383, 16
        %v3775 = vpop.permute.xlu0 %3774
        %3776 = vrot.lane.b32.xlu0 %v3384, 16
        %v3777 = vpop.permute.xlu0 %3776
        %3778 = vrot.lane.b32.xlu0 %v3385, 16
        %v3779 = vpop.permute.xlu0 %3778
        %3780 = vrot.lane.b32.xlu0 %v3386, 16
        %v3781 = vpop.permute.xlu0 %3780
        %3782 = vrot.lane.b32.xlu0 %v3387, 16
        %v3783 = vpop.permute.xlu0 %3782
        %3784 = vrot.lane.b32.xlu0 %v3388, 16
        %v3785 = vpop.permute.xlu0 %3784
        %3786 = vrot.lane.b32.xlu0 %v3389, 16
        %v3787 = vpop.permute.xlu0 %3786
        %3788 = vrot.lane.b32.xlu0 %v3390, 16
        %v3789 = vpop.permute.xlu0 %3788
        %3790 = vrot.lane.b32.xlu0 %v3391, 16
        %v3791 = vpop.permute.xlu0 %3790
        %3792 = vrot.lane.b32.xlu0 %v3392, 16
        %v3793 = vpop.permute.xlu0 %3792
        %3794 = vrot.lane.b32.xlu0 %v3393, 16
        %v3795 = vpop.permute.xlu0 %3794
        %3796 = vrot.lane.b32.xlu0 %v3394, 16
        %v3797 = vpop.permute.xlu0 %3796
        %3798 = vrot.lane.b32.xlu0 %v3395, 16
        %v3799 = vpop.permute.xlu0 %3798
        %3800 = vrot.lane.b32.xlu0 %v3396, 16
        %v3801 = vpop.permute.xlu0 %3800
        %3802 = vrot.lane.b32.xlu0 %v3397, 16
        %v3803 = vpop.permute.xlu0 %3802
        %3804 = vrot.lane.b32.xlu0 %v3398, 16
        %v3805 = vpop.permute.xlu0 %3804
        %3806 = vrot.lane.b32.xlu0 %v3399, 16
        %v3807 = vpop.permute.xlu0 %3806
        %3808 = vrot.lane.b32.xlu0 %v3400, 16
        %v3809 = vpop.permute.xlu0 %3808
        %3810 = vrot.lane.b32.xlu0 %v3401, 16
        %v3811 = vpop.permute.xlu0 %3810
        %3812 = vrot.lane.b32.xlu0 %v3402, 16
        %v3813 = vpop.permute.xlu0 %3812
        %3814 = vrot.lane.b32.xlu0 %v3403, 16
        %v3815 = vpop.permute.xlu0 %3814
        %3816 = vrot.lane.b32.xlu0 %v3404, 16
        %v3817 = vpop.permute.xlu0 %3816
        %3818 = vrot.lane.b32.xlu0 %v3405, 16
        %v3819 = vpop.permute.xlu0 %3818
        %3820 = vrot.lane.b32.xlu0 %v3406, 16
        %v3821 = vpop.permute.xlu0 %3820
        %3822 = vrot.lane.b32.xlu0 %v3407, 16
        %v3823 = vpop.permute.xlu0 %3822
        %3824 = vrot.lane.b32.xlu0 %v3408, 16
        %v3825 = vpop.permute.xlu0 %3824
        %3826 = vrot.lane.b32.xlu0 %v3409, 16
        %v3827 = vpop.permute.xlu0 %3826
        %3828 = vrot.lane.b32.xlu0 %v3410, 16
        %v3829 = vpop.permute.xlu0 %3828
        %3830 = vrot.lane.b32.xlu0 %v3411, 16
        %v3831 = vpop.permute.xlu0 %3830
        %3832 = vrot.lane.b32.xlu0 %v3412, 16
        %v3833 = vpop.permute.xlu0 %3832
        %3834 = vrot.lane.b32.xlu0 %v3413, 16
        %v3835 = vpop.permute.xlu0 %3834
        %3836 = vrot.lane.b32.xlu0 %v3414, 16
        %v3837 = vpop.permute.xlu0 %3836
        %3838 = vrot.lane.b32.xlu0 %v3415, 16
        %v3839 = vpop.permute.xlu0 %3838
        %3840 = vrot.lane.b32.xlu0 %v3416, 16
        %v3841 = vpop.permute.xlu0 %3840
        %3842 = vrot.lane.b32.xlu0 %v3417, 16
        %v3843 = vpop.permute.xlu0 %3842
        %3844 = vrot.lane.b32.xlu0 %v3418, 16
        %v3845 = vpop.permute.xlu0 %3844
        %3846 = vrot.lane.b32.xlu0 %v3419, 16
        %v3847 = vpop.permute.xlu0 %3846
        %3848 = vrot.lane.b32.xlu0 %v3420, 16
        %v3849 = vpop.permute.xlu0 %3848
        %3850 = vrot.lane.b32.xlu0 %v3421, 16
        %v3851 = vpop.permute.xlu0 %3850
        %3852 = vrot.lane.b32.xlu0 %v3422, 16
        %v3853 = vpop.permute.xlu0 %3852
        %3854 = vrot.lane.b32.xlu0 %v3423, 16
        %v3855 = vpop.permute.xlu0 %3854
        %3856 = vrot.lane.b32.xlu0 %v3424, 16
        %v3857 = vpop.permute.xlu0 %3856
        %3858 = vrot.lane.b32.xlu0 %v3425, 16
        %v3859 = vpop.permute.xlu0 %3858
        %3860 = vrot.lane.b32.xlu0 %v3426, 16
        %v3861 = vpop.permute.xlu0 %3860
        %3862 = vrot.lane.b32.xlu0 %v3427, 16
        %v3863 = vpop.permute.xlu0 %3862
        %3864 = vrot.lane.b32.xlu0 %v3428, 16
        %v3865 = vpop.permute.xlu0 %3864
        %3866 = vrot.lane.b32.xlu0 %v3429, 16
        %v3867 = vpop.permute.xlu0 %3866
        %3868 = vrot.lane.b32.xlu0 %v3430, 16
        %v3869 = vpop.permute.xlu0 %3868
        %3870 = vrot.lane.b32.xlu0 %v3431, 16
        %v3871 = vpop.permute.xlu0 %3870
        %3872 = vrot.lane.b32.xlu0 %v3432, 16
        %v3873 = vpop.permute.xlu0 %3872
        %3874 = vrot.lane.b32.xlu0 %v3433, 16
        %v3875 = vpop.permute.xlu0 %3874
        %3876 = vrot.lane.b32.xlu0 %v3434, 16
        %v3877 = vpop.permute.xlu0 %3876
        %3878 = vrot.lane.b32.xlu0 %v3435, 16
        %v3879 = vpop.permute.xlu0 %3878
        %3880 = vrot.lane.b32.xlu0 %v3436, 16
        %v3881 = vpop.permute.xlu0 %3880
        %3882 = vrot.lane.b32.xlu0 %v3437, 16
        %v3883 = vpop.permute.xlu0 %3882
        %3884 = vrot.lane.b32.xlu0 %v3438, 16
        %v3885 = vpop.permute.xlu0 %3884
        %3886 = vrot.lane.b32.xlu0 %v3439, 16
        %v3887 = vpop.permute.xlu0 %3886
        %3888 = vrot.lane.b32.xlu0 %v3440, 16
        %v3889 = vpop.permute.xlu0 %3888
        %3890 = vrot.lane.b32.xlu0 %v3441, 16
        %v3891 = vpop.permute.xlu0 %3890
        %3892 = vrot.lane.b32.xlu0 %v3442, 16
        %v3893 = vpop.permute.xlu0 %3892
        %3894 = vrot.lane.b32.xlu0 %v3443, 16
        %v3895 = vpop.permute.xlu0 %3894
        %3896 = vrot.lane.b32.xlu0 %v3444, 16
        %v3897 = vpop.permute.xlu0 %3896
        %3898 = vrot.lane.b32.xlu0 %v3445, 16
        %v3899 = vpop.permute.xlu0 %3898
        %3900 = vrot.lane.b32.xlu0 %v3446, 16
        %v3901 = vpop.permute.xlu0 %3900
        %3902 = vrot.lane.b32.xlu0 %v3447, 16
        %v3903 = vpop.permute.xlu0 %3902
        %3904 = vrot.lane.b32.xlu0 %v3448, 16
        %v3905 = vpop.permute.xlu0 %3904
        %3906 = vrot.lane.b32.xlu0 %v3449, 16
        %v3907 = vpop.permute.xlu0 %3906
        %3908 = vrot.lane.b32.xlu0 %v3450, 16
        %v3909 = vpop.permute.xlu0 %3908
        %3910 = vrot.lane.b32.xlu0 %v3451, 16
        %v3911 = vpop.permute.xlu0 %3910
        %3912 = vrot.lane.b32.xlu0 %v3452, 16
        %v3913 = vpop.permute.xlu0 %3912
        %3914 = vrot.lane.b32.xlu0 %v3453, 16
        %v3915 = vpop.permute.xlu0 %3914
        %3916 = vrot.lane.b32.xlu0 %v3454, 16
        %v3917 = vpop.permute.xlu0 %3916
        %3918 = vrot.lane.b32.xlu0 %v3455, 16
        %v3919 = vpop.permute.xlu0 %3918
        %3920 = vrot.lane.b32.xlu0 %v3456, 16
        %v3921 = vpop.permute.xlu0 %3920
        %vm4077 = vcmask 162944
        %4078 = vst.msk [vmem:[#allocation2] sm:$0xff] %vm4077, %v3613
        %4079 = vst.msk [vmem:[#allocation2 + $0x8] sm:$0xff] %vm4077, %v3615
        %4080 = vst.msk [vmem:[#allocation2 + $0x10] sm:$0xff] %vm4077, %v3617
        %4081 = vst.msk [vmem:[#allocation2 + $0x18] sm:$0xff] %vm4077, %v3619
        %4082 = vst.msk [vmem:[#allocation2 + $0x20] sm:$0xff] %vm4077, %v3621
        %4083 = vst.msk [vmem:[#allocation2 + $0x28] sm:$0xff] %vm4077, %v3623
        %4084 = vst.msk [vmem:[#allocation2 + $0x30] sm:$0xff] %vm4077, %v3625
        %4085 = vst.msk [vmem:[#allocation2 + $0x38] sm:$0xff] %vm4077, %v3627
        %4086 = vst.msk [vmem:[#allocation2 + $0x40] sm:$0xff] %vm4077, %v3629
        %4087 = vst.msk [vmem:[#allocation2 + $0x48] sm:$0xff] %vm4077, %v3631
        %4088 = vst.msk [vmem:[#allocation2 + $0x50] sm:$0xff] %vm4077, %v3633
        %4089 = vst.msk [vmem:[#allocation2 + $0x58] sm:$0xff] %vm4077, %v3635
        %4090 = vst.msk [vmem:[#allocation2 + $0x60] sm:$0xff] %vm4077, %v3637
        %4091 = vst.msk [vmem:[#allocation2 + $0x68] sm:$0xff] %vm4077, %v3639
        %4092 = vst.msk [vmem:[#allocation2 + $0x70] sm:$0xff] %vm4077, %v3641
        %4093 = vst.msk [vmem:[#allocation2 + $0x78] sm:$0xff] %vm4077, %v3643
        %4094 = vst.msk [vmem:[#allocation2 + $0x80] sm:$0xff] %vm4077, %v3645
        %4095 = vst.msk [vmem:[#allocation2 + $0x88] sm:$0xff] %vm4077, %v3647
        %4096 = vst.msk [vmem:[#allocation2 + $0x90] sm:$0xff] %vm4077, %v3649
        %4097 = vst.msk [vmem:[#allocation2 + $0x98] sm:$0xff] %vm4077, %v3651
        %4098 = vst.msk [vmem:[#allocation2 + $0xa0] sm:$0xff] %vm4077, %v3653
        %4099 = vst.msk [vmem:[#allocation2 + $0xa8] sm:$0xff] %vm4077, %v3655
        %4100 = vst.msk [vmem:[#allocation2 + $0xb0] sm:$0xff] %vm4077, %v3657
        %4101 = vst.msk [vmem:[#allocation2 + $0xb8] sm:$0xff] %vm4077, %v3659
        %4102 = vst.msk [vmem:[#allocation2 + $0xc0] sm:$0xff] %vm4077, %v3661
        %4103 = vst.msk [vmem:[#allocation2 + $0xc8] sm:$0xff] %vm4077, %v3663
        %4104 = vst.msk [vmem:[#allocation2 + $0xd0] sm:$0xff] %vm4077, %v3665
        %4105 = vst.msk [vmem:[#allocation2 + $0xd8] sm:$0xff] %vm4077, %v3667
        %4106 = vst.msk [vmem:[#allocation2 + $0xe0] sm:$0xff] %vm4077, %v3669
        %4107 = vst.msk [vmem:[#allocation2 + $0xe8] sm:$0xff] %vm4077, %v3671
        %4108 = vst.msk [vmem:[#allocation2 + $0xf0] sm:$0xff] %vm4077, %v3673
        %4109 = vst.msk [vmem:[#allocation2 + $0xf8] sm:$0xff] %vm4077, %v3675
        %4110 = vst.msk [vmem:[#allocation2 + $0x100] sm:$0xff] %vm4077, %v3677
        %4111 = vst.msk [vmem:[#allocation2 + $0x108] sm:$0xff] %vm4077, %v3679
        %4112 = vst.msk [vmem:[#allocation2 + $0x110] sm:$0xff] %vm4077, %v3681
        %4113 = vst.msk [vmem:[#allocation2 + $0x118] sm:$0xff] %vm4077, %v3683
        %4114 = vst.msk [vmem:[#allocation2 + $0x120] sm:$0xff] %vm4077, %v3685
        %4115 = vst.msk [vmem:[#allocation2 + $0x128] sm:$0xff] %vm4077, %v3687
        %4116 = vst.msk [vmem:[#allocation2 + $0x130] sm:$0xff] %vm4077, %v3689
        %4117 = vst.msk [vmem:[#allocation2 + $0x138] sm:$0xff] %vm4077, %v3691
        %4118 = vst.msk [vmem:[#allocation2 + $0x140] sm:$0xff] %vm4077, %v3693
        %4119 = vst.msk [vmem:[#allocation2 + $0x148] sm:$0xff] %vm4077, %v3695
        %4120 = vst.msk [vmem:[#allocation2 + $0x150] sm:$0xff] %vm4077, %v3697
        %4121 = vst.msk [vmem:[#allocation2 + $0x158] sm:$0xff] %vm4077, %v3699
        %4122 = vst.msk [vmem:[#allocation2 + $0x160] sm:$0xff] %vm4077, %v3701
        %4123 = vst.msk [vmem:[#allocation2 + $0x168] sm:$0xff] %vm4077, %v3703
        %4124 = vst.msk [vmem:[#allocation2 + $0x170] sm:$0xff] %vm4077, %v3705
        %4125 = vst.msk [vmem:[#allocation2 + $0x178] sm:$0xff] %vm4077, %v3707
        %4126 = vst.msk [vmem:[#allocation2 + $0x180] sm:$0xff] %vm4077, %v3709
        %4127 = vst.msk [vmem:[#allocation2 + $0x188] sm:$0xff] %vm4077, %v3711
        %4128 = vst.msk [vmem:[#allocation2 + $0x190] sm:$0xff] %vm4077, %v3713
        %4129 = vst.msk [vmem:[#allocation2 + $0x198] sm:$0xff] %vm4077, %v3715
        %4130 = vst.msk [vmem:[#allocation2 + $0x1a0] sm:$0xff] %vm4077, %v3717
        %4131 = vst.msk [vmem:[#allocation2 + $0x1a8] sm:$0xff] %vm4077, %v3719
        %4132 = vst.msk [vmem:[#allocation2 + $0x1b0] sm:$0xff] %vm4077, %v3721
        %4133 = vst.msk [vmem:[#allocation2 + $0x1b8] sm:$0xff] %vm4077, %v3723
        %4134 = vst.msk [vmem:[#allocation2 + $0x1c0] sm:$0xff] %vm4077, %v3725
        %4135 = vst.msk [vmem:[#allocation2 + $0x1c8] sm:$0xff] %vm4077, %v3727
        %4136 = vst.msk [vmem:[#allocation2 + $0x1d0] sm:$0xff] %vm4077, %v3729
        %4137 = vst.msk [vmem:[#allocation2 + $0x1d8] sm:$0xff] %vm4077, %v3731
        %4138 = vst.msk [vmem:[#allocation2 + $0x1e0] sm:$0xff] %vm4077, %v3733
        %4139 = vst.msk [vmem:[#allocation2 + $0x1e8] sm:$0xff] %vm4077, %v3735
        %4140 = vst.msk [vmem:[#allocation2 + $0x1f0] sm:$0xff] %vm4077, %v3737
        %4141 = vst.msk [vmem:[#allocation2 + $0x1f8] sm:$0xff] %vm4077, %v3739
        %4142 = vst.msk [vmem:[#allocation2 + $0x200] sm:$0xff] %vm4077, %v3741
        %4143 = vst.msk [vmem:[#allocation2 + $0x208] sm:$0xff] %vm4077, %v3743
        %4144 = vst.msk [vmem:[#allocation2 + $0x210] sm:$0xff] %vm4077, %v3745
        %4145 = vst.msk [vmem:[#allocation2 + $0x218] sm:$0xff] %vm4077, %v3747
        %4146 = vst.msk [vmem:[#allocation2 + $0x220] sm:$0xff] %vm4077, %v3749
        %4147 = vst.msk [vmem:[#allocation2 + $0x228] sm:$0xff] %vm4077, %v3751
        %4148 = vst.msk [vmem:[#allocation2 + $0x230] sm:$0xff] %vm4077, %v3753
        %4149 = vst.msk [vmem:[#allocation2 + $0x238] sm:$0xff] %vm4077, %v3755
        %4150 = vst.msk [vmem:[#allocation2 + $0x240] sm:$0xff] %vm4077, %v3757
        %4151 = vst.msk [vmem:[#allocation2 + $0x248] sm:$0xff] %vm4077, %v3759
        %4152 = vst.msk [vmem:[#allocation2 + $0x250] sm:$0xff] %vm4077, %v3761
        %4153 = vst.msk [vmem:[#allocation2 + $0x258] sm:$0xff] %vm4077, %v3763
        %4154 = vst.msk [vmem:[#allocation2 + $0x260] sm:$0xff] %vm4077, %v3765
        %4155 = vst.msk [vmem:[#allocation2 + $0x268] sm:$0xff] %vm4077, %v3767
        %4156 = vst.msk [vmem:[#allocation2 + $0x270] sm:$0xff] %vm4077, %v3769
        %4157 = vst.msk [vmem:[#allocation2 + $0x278] sm:$0xff] %vm4077, %v3771
        %4158 = vst.msk [vmem:[#allocation2 + $0x280] sm:$0xff] %vm4077, %v3773
        %4159 = vst.msk [vmem:[#allocation2 + $0x288] sm:$0xff] %vm4077, %v3775
        %4160 = vst.msk [vmem:[#allocation2 + $0x290] sm:$0xff] %vm4077, %v3777
        %4161 = vst.msk [vmem:[#allocation2 + $0x298] sm:$0xff] %vm4077, %v3779
        %4162 = vst.msk [vmem:[#allocation2 + $0x2a0] sm:$0xff] %vm4077, %v3781
        %4163 = vst.msk [vmem:[#allocation2 + $0x2a8] sm:$0xff] %vm4077, %v3783
        %4164 = vst.msk [vmem:[#allocation2 + $0x2b0] sm:$0xff] %vm4077, %v3785
        %4165 = vst.msk [vmem:[#allocation2 + $0x2b8] sm:$0xff] %vm4077, %v3787
        %4166 = vst.msk [vmem:[#allocation2 + $0x2c0] sm:$0xff] %vm4077, %v3789
        %4167 = vst.msk [vmem:[#allocation2 + $0x2c8] sm:$0xff] %vm4077, %v3791
        %4168 = vst.msk [vmem:[#allocation2 + $0x2d0] sm:$0xff] %vm4077, %v3793
        %4169 = vst.msk [vmem:[#allocation2 + $0x2d8] sm:$0xff] %vm4077, %v3795
        %4170 = vst.msk [vmem:[#allocation2 + $0x2e0] sm:$0xff] %vm4077, %v3797
        %4171 = vst.msk [vmem:[#allocation2 + $0x2e8] sm:$0xff] %vm4077, %v3799
        %4172 = vst.msk [vmem:[#allocation2 + $0x2f0] sm:$0xff] %vm4077, %v3801
        %4173 = vst.msk [vmem:[#allocation2 + $0x2f8] sm:$0xff] %vm4077, %v3803
        %4174 = vst.msk [vmem:[#allocation2 + $0x300] sm:$0xff] %vm4077, %v3805
        %4175 = vst.msk [vmem:[#allocation2 + $0x308] sm:$0xff] %vm4077, %v3807
        %4176 = vst.msk [vmem:[#allocation2 + $0x310] sm:$0xff] %vm4077, %v3809
        %4177 = vst.msk [vmem:[#allocation2 + $0x318] sm:$0xff] %vm4077, %v3811
        %4178 = vst.msk [vmem:[#allocation2 + $0x320] sm:$0xff] %vm4077, %v3813
        %4179 = vst.msk [vmem:[#allocation2 + $0x328] sm:$0xff] %vm4077, %v3815
        %4180 = vst.msk [vmem:[#allocation2 + $0x330] sm:$0xff] %vm4077, %v3817
        %4181 = vst.msk [vmem:[#allocation2 + $0x338] sm:$0xff] %vm4077, %v3819
        %4182 = vst.msk [vmem:[#allocation2 + $0x340] sm:$0xff] %vm4077, %v3821
        %4183 = vst.msk [vmem:[#allocation2 + $0x348] sm:$0xff] %vm4077, %v3823
        %4184 = vst.msk [vmem:[#allocation2 + $0x350] sm:$0xff] %vm4077, %v3825
        %4185 = vst.msk [vmem:[#allocation2 + $0x358] sm:$0xff] %vm4077, %v3827
        %4186 = vst.msk [vmem:[#allocation2 + $0x360] sm:$0xff] %vm4077, %v3829
        %4187 = vst.msk [vmem:[#allocation2 + $0x368] sm:$0xff] %vm4077, %v3831
        %4188 = vst.msk [vmem:[#allocation2 + $0x370] sm:$0xff] %vm4077, %v3833
        %4189 = vst.msk [vmem:[#allocation2 + $0x378] sm:$0xff] %vm4077, %v3835
        %4190 = vst.msk [vmem:[#allocation2 + $0x380] sm:$0xff] %vm4077, %v3837
        %4191 = vst.msk [vmem:[#allocation2 + $0x388] sm:$0xff] %vm4077, %v3839
        %4192 = vst.msk [vmem:[#allocation2 + $0x390] sm:$0xff] %vm4077, %v3841
        %4193 = vst.msk [vmem:[#allocation2 + $0x398] sm:$0xff] %vm4077, %v3843
        %4194 = vst.msk [vmem:[#allocation2 + $0x3a0] sm:$0xff] %vm4077, %v3845
        %4195 = vst.msk [vmem:[#allocation2 + $0x3a8] sm:$0xff] %vm4077, %v3847
        %4196 = vst.msk [vmem:[#allocation2 + $0x3b0] sm:$0xff] %vm4077, %v3849
        %4197 = vst.msk [vmem:[#allocation2 + $0x3b8] sm:$0xff] %vm4077, %v3851
        %4198 = vst.msk [vmem:[#allocation2 + $0x3c0] sm:$0xff] %vm4077, %v3853
        %4199 = vst.msk [vmem:[#allocation2 + $0x3c8] sm:$0xff] %vm4077, %v3855
        %4200 = vst.msk [vmem:[#allocation2 + $0x3d0] sm:$0xff] %vm4077, %v3857
        %4201 = vst.msk [vmem:[#allocation2 + $0x3d8] sm:$0xff] %vm4077, %v3859
        %4202 = vst.msk [vmem:[#allocation2 + $0x3e0] sm:$0xff] %vm4077, %v3861
        %4203 = vst.msk [vmem:[#allocation2 + $0x3e8] sm:$0xff] %vm4077, %v3863
        %4204 = vst.msk [vmem:[#allocation2 + $0x3f0] sm:$0xff] %vm4077, %v3865
        %4205 = vst.msk [vmem:[#allocation2 + $0x3f8] sm:$0xff] %vm4077, %v3867
        %4206 = vst.msk [vmem:[#allocation2 + $0x400] sm:$0xff] %vm4077, %v3869
        %4207 = vst.msk [vmem:[#allocation2 + $0x408] sm:$0xff] %vm4077, %v3871
        %4208 = vst.msk [vmem:[#allocation2 + $0x410] sm:$0xff] %vm4077, %v3873
        %4209 = vst.msk [vmem:[#allocation2 + $0x418] sm:$0xff] %vm4077, %v3875
        %4210 = vst.msk [vmem:[#allocation2 + $0x420] sm:$0xff] %vm4077, %v3877
        %4211 = vst.msk [vmem:[#allocation2 + $0x428] sm:$0xff] %vm4077, %v3879
        %4212 = vst.msk [vmem:[#allocation2 + $0x430] sm:$0xff] %vm4077, %v3881
        %4213 = vst.msk [vmem:[#allocation2 + $0x438] sm:$0xff] %vm4077, %v3883
        %4214 = vst.msk [vmem:[#allocation2 + $0x440] sm:$0xff] %vm4077, %v3885
        %4215 = vst.msk [vmem:[#allocation2 + $0x448] sm:$0xff] %vm4077, %v3887
        %4216 = vst.msk [vmem:[#allocation2 + $0x450] sm:$0xff] %vm4077, %v3889
        %4217 = vst.msk [vmem:[#allocation2 + $0x458] sm:$0xff] %vm4077, %v3891
        %4218 = vst.msk [vmem:[#allocation2 + $0x460] sm:$0xff] %vm4077, %v3893
        %4219 = vst.msk [vmem:[#allocation2 + $0x468] sm:$0xff] %vm4077, %v3895
        %4220 = vst.msk [vmem:[#allocation2 + $0x470] sm:$0xff] %vm4077, %v3897
        %4221 = vst.msk [vmem:[#allocation2 + $0x478] sm:$0xff] %vm4077, %v3899
        %4222 = vst.msk [vmem:[#allocation2 + $0x480] sm:$0xff] %vm4077, %v3901
        %4223 = vst.msk [vmem:[#allocation2 + $0x488] sm:$0xff] %vm4077, %v3903
        %4224 = vst.msk [vmem:[#allocation2 + $0x490] sm:$0xff] %vm4077, %v3905
        %4225 = vst.msk [vmem:[#allocation2 + $0x498] sm:$0xff] %vm4077, %v3907
        %4226 = vst.msk [vmem:[#allocation2 + $0x4a0] sm:$0xff] %vm4077, %v3909
        %4227 = vst.msk [vmem:[#allocation2 + $0x4a8] sm:$0xff] %vm4077, %v3911
        %4228 = vst.msk [vmem:[#allocation2 + $0x4b0] sm:$0xff] %vm4077, %v3913
        %4229 = vst.msk [vmem:[#allocation2 + $0x4b8] sm:$0xff] %vm4077, %v3915
        %4230 = vst.msk [vmem:[#allocation2 + $0x4c0] sm:$0xff] %vm4077, %v3917
        %4231 = vst.msk [vmem:[#allocation2 + $0x4c8] sm:$0xff] %vm4077, %v3919
        %4232 = vst.msk [vmem:[#allocation2 + $0x4d0] sm:$0xff] %vm4077, %v3921
        %v4233 = vld [vmem:[%s196 + $0x2a] sm:$0xff]
        %v4234 = vld [vmem:[%s196 + $0x32] sm:$0xff]
        %v4235 = vld [vmem:[%s196 + $0x3a] sm:$0xff]
        %v4236 = vld [vmem:[%s196 + $0x42] sm:$0xff]
        %v4237 = vld [vmem:[%s196 + $0x4a] sm:$0xff]
        %v4238 = vld [vmem:[%s196 + $0x52] sm:$0xff]
        %v4239 = vld [vmem:[%s196 + $0x5a] sm:$0xff]
        %v4240 = vld [vmem:[%s196 + $0x62] sm:$0xff]
        %v4241 = vld [vmem:[%s196 + $0x6a] sm:$0xff]
        %v4242 = vld [vmem:[%s196 + $0x72] sm:$0xff]
        %v4243 = vld [vmem:[%s196 + $0x7a] sm:$0xff]
        %v4244 = vld [vmem:[%s196 + $0x82] sm:$0xff]
        %v4245 = vld [vmem:[%s196 + $0x8a] sm:$0xff]
        %v4246 = vld [vmem:[%s196 + $0x92] sm:$0xff]
        %v4247 = vld [vmem:[%s196 + $0x9a] sm:$0xff]
        %v4248 = vld [vmem:[%s196 + $0xa2] sm:$0xff]
        %v4249 = vld [vmem:[%s196 + $0xaa] sm:$0xff]
        %v4250 = vld [vmem:[%s196 + $0xb2] sm:$0xff]
        %v4251 = vld [vmem:[%s196 + $0xba] sm:$0xff]
        %v4252 = vld [vmem:[%s196 + $0xc2] sm:$0xff]
        %v4253 = vld [vmem:[%s196 + $0xca] sm:$0xff]
        %v4254 = vld [vmem:[%s196 + $0xd2] sm:$0xff]
        %v4255 = vld [vmem:[%s196 + $0xda] sm:$0xff]
        %v4256 = vld [vmem:[%s196 + $0xe2] sm:$0xff]
        %v4257 = vld [vmem:[%s196 + $0xea] sm:$0xff]
        %v4258 = vld [vmem:[%s196 + $0xf2] sm:$0xff]
        %v4259 = vld [vmem:[%s196 + $0xfa] sm:$0xff]
        %v4260 = vld [vmem:[%s196 + $0x102] sm:$0xff]
        %v4261 = vld [vmem:[%s196 + $0x10a] sm:$0xff]
        %v4262 = vld [vmem:[%s196 + $0x112] sm:$0xff]
        %v4263 = vld [vmem:[%s196 + $0x11a] sm:$0xff]
        %v4264 = vld [vmem:[%s196 + $0x122] sm:$0xff]
        %v4265 = vld [vmem:[%s196 + $0x12a] sm:$0xff]
        %v4266 = vld [vmem:[%s196 + $0x132] sm:$0xff]
        %v4267 = vld [vmem:[%s196 + $0x13a] sm:$0xff]
        %v4268 = vld [vmem:[%s196 + $0x142] sm:$0xff]
        %v4269 = vld [vmem:[%s196 + $0x14a] sm:$0xff]
        %v4270 = vld [vmem:[%s196 + $0x152] sm:$0xff]
        %v4271 = vld [vmem:[%s196 + $0x15a] sm:$0xff]
        %v4272 = vld [vmem:[%s196 + $0x162] sm:$0xff]
        %v4273 = vld [vmem:[%s196 + $0x16a] sm:$0xff]
        %v4274 = vld [vmem:[%s196 + $0x172] sm:$0xff]
        %v4275 = vld [vmem:[%s196 + $0x17a] sm:$0xff]
        %v4276 = vld [vmem:[%s196 + $0x182] sm:$0xff]
        %v4277 = vld [vmem:[%s196 + $0x18a] sm:$0xff]
        %v4278 = vld [vmem:[%s196 + $0x192] sm:$0xff]
        %v4279 = vld [vmem:[%s196 + $0x19a] sm:$0xff]
        %v4280 = vld [vmem:[%s196 + $0x1a2] sm:$0xff]
        %v4281 = vld [vmem:[%s196 + $0x1aa] sm:$0xff]
        %v4282 = vld [vmem:[%s196 + $0x1b2] sm:$0xff]
        %v4283 = vld [vmem:[%s196 + $0x1ba] sm:$0xff]
        %v4284 = vld [vmem:[%s196 + $0x1c2] sm:$0xff]
        %v4285 = vld [vmem:[%s196 + $0x1ca] sm:$0xff]
        %v4286 = vld [vmem:[%s196 + $0x1d2] sm:$0xff]
        %v4287 = vld [vmem:[%s196 + $0x1da] sm:$0xff]
        %v4288 = vld [vmem:[%s196 + $0x1e2] sm:$0xff]
        %v4289 = vld [vmem:[%s196 + $0x1ea] sm:$0xff]
        %v4290 = vld [vmem:[%s196 + $0x1f2] sm:$0xff]
        %v4291 = vld [vmem:[%s196 + $0x1fa] sm:$0xff]
        %v4292 = vld [vmem:[%s196 + $0x202] sm:$0xff]
        %v4293 = vld [vmem:[%s196 + $0x20a] sm:$0xff]
        %v4294 = vld [vmem:[%s196 + $0x212] sm:$0xff]
        %v4295 = vld [vmem:[%s196 + $0x21a] sm:$0xff]
        %v4296 = vld [vmem:[%s196 + $0x222] sm:$0xff]
        %v4297 = vld [vmem:[%s196 + $0x22a] sm:$0xff]
        %v4298 = vld [vmem:[%s196 + $0x232] sm:$0xff]
        %v4299 = vld [vmem:[%s196 + $0x23a] sm:$0xff]
        %v4300 = vld [vmem:[%s196 + $0x242] sm:$0xff]
        %v4301 = vld [vmem:[%s196 + $0x24a] sm:$0xff]
        %v4302 = vld [vmem:[%s196 + $0x252] sm:$0xff]
        %v4303 = vld [vmem:[%s196 + $0x25a] sm:$0xff]
        %v4304 = vld [vmem:[%s196 + $0x262] sm:$0xff]
        %v4305 = vld [vmem:[%s196 + $0x26a] sm:$0xff]
        %v4306 = vld [vmem:[%s196 + $0x272] sm:$0xff]
        %v4307 = vld [vmem:[%s196 + $0x27a] sm:$0xff]
        %v4308 = vld [vmem:[%s196 + $0x282] sm:$0xff]
        %v4309 = vld [vmem:[%s196 + $0x28a] sm:$0xff]
        %v4310 = vld [vmem:[%s196 + $0x292] sm:$0xff]
        %v4311 = vld [vmem:[%s196 + $0x29a] sm:$0xff]
        %v4312 = vld [vmem:[%s196 + $0x2a2] sm:$0xff]
        %v4313 = vld [vmem:[%s196 + $0x2aa] sm:$0xff]
        %v4314 = vld [vmem:[%s196 + $0x2b2] sm:$0xff]
        %v4315 = vld [vmem:[%s196 + $0x2ba] sm:$0xff]
        %v4316 = vld [vmem:[%s196 + $0x2c2] sm:$0xff]
        %v4317 = vld [vmem:[%s196 + $0x2ca] sm:$0xff]
        %v4318 = vld [vmem:[%s196 + $0x2d2] sm:$0xff]
        %v4319 = vld [vmem:[%s196 + $0x2da] sm:$0xff]
        %v4320 = vld [vmem:[%s196 + $0x2e2] sm:$0xff]
        %v4321 = vld [vmem:[%s196 + $0x2ea] sm:$0xff]
        %v4322 = vld [vmem:[%s196 + $0x2f2] sm:$0xff]
        %v4323 = vld [vmem:[%s196 + $0x2fa] sm:$0xff]
        %v4324 = vld [vmem:[%s196 + $0x302] sm:$0xff]
        %v4325 = vld [vmem:[%s196 + $0x30a] sm:$0xff]
        %v4326 = vld [vmem:[%s196 + $0x312] sm:$0xff]
        %v4327 = vld [vmem:[%s196 + $0x31a] sm:$0xff]
        %v4328 = vld [vmem:[%s196 + $0x322] sm:$0xff]
        %v4329 = vld [vmem:[%s196 + $0x32a] sm:$0xff]
        %v4330 = vld [vmem:[%s196 + $0x332] sm:$0xff]
        %v4331 = vld [vmem:[%s196 + $0x33a] sm:$0xff]
        %v4332 = vld [vmem:[%s196 + $0x342] sm:$0xff]
        %v4333 = vld [vmem:[%s196 + $0x34a] sm:$0xff]
        %v4334 = vld [vmem:[%s196 + $0x352] sm:$0xff]
        %v4335 = vld [vmem:[%s196 + $0x35a] sm:$0xff]
        %v4336 = vld [vmem:[%s196 + $0x362] sm:$0xff]
        %v4337 = vld [vmem:[%s196 + $0x36a] sm:$0xff]
        %v4338 = vld [vmem:[%s196 + $0x372] sm:$0xff]
        %v4339 = vld [vmem:[%s196 + $0x37a] sm:$0xff]
        %v4340 = vld [vmem:[%s196 + $0x382] sm:$0xff]
        %v4341 = vld [vmem:[%s196 + $0x38a] sm:$0xff]
        %v4342 = vld [vmem:[%s196 + $0x392] sm:$0xff]
        %v4343 = vld [vmem:[%s196 + $0x39a] sm:$0xff]
        %v4344 = vld [vmem:[%s196 + $0x3a2] sm:$0xff]
        %v4345 = vld [vmem:[%s196 + $0x3aa] sm:$0xff]
        %v4346 = vld [vmem:[%s196 + $0x3b2] sm:$0xff]
        %v4347 = vld [vmem:[%s196 + $0x3ba] sm:$0xff]
        %v4348 = vld [vmem:[%s196 + $0x3c2] sm:$0xff]
        %v4349 = vld [vmem:[%s196 + $0x3ca] sm:$0xff]
        %v4350 = vld [vmem:[%s196 + $0x3d2] sm:$0xff]
        %v4351 = vld [vmem:[%s196 + $0x3da] sm:$0xff]
        %v4352 = vld [vmem:[%s196 + $0x3e2] sm:$0xff]
        %v4353 = vld [vmem:[%s196 + $0x3ea] sm:$0xff]
        %v4354 = vld [vmem:[%s196 + $0x3f2] sm:$0xff]
        %v4355 = vld [vmem:[%s196 + $0x3fa] sm:$0xff]
        %v4356 = vld [vmem:[%s196 + $0x402] sm:$0xff]
        %v4357 = vld [vmem:[%s196 + $0x40a] sm:$0xff]
        %v4358 = vld [vmem:[%s196 + $0x412] sm:$0xff]
        %v4359 = vld [vmem:[%s196 + $0x41a] sm:$0xff]
        %v4360 = vld [vmem:[%s196 + $0x422] sm:$0xff]
        %v4361 = vld [vmem:[%s196 + $0x42a] sm:$0xff]
        %v4362 = vld [vmem:[%s196 + $0x432] sm:$0xff]
        %v4363 = vld [vmem:[%s196 + $0x43a] sm:$0xff]
        %v4364 = vld [vmem:[%s196 + $0x442] sm:$0xff]
        %v4365 = vld [vmem:[%s196 + $0x44a] sm:$0xff]
        %v4366 = vld [vmem:[%s196 + $0x452] sm:$0xff]
        %v4367 = vld [vmem:[%s196 + $0x45a] sm:$0xff]
        %v4368 = vld [vmem:[%s196 + $0x462] sm:$0xff]
        %v4369 = vld [vmem:[%s196 + $0x46a] sm:$0xff]
        %v4370 = vld [vmem:[%s196 + $0x472] sm:$0xff]
        %v4371 = vld [vmem:[%s196 + $0x47a] sm:$0xff]
        %v4372 = vld [vmem:[%s196 + $0x482] sm:$0xff]
        %v4373 = vld [vmem:[%s196 + $0x48a] sm:$0xff]
        %v4374 = vld [vmem:[%s196 + $0x492] sm:$0xff]
        %v4375 = vld [vmem:[%s196 + $0x49a] sm:$0xff]
        %v4376 = vld [vmem:[%s196 + $0x4a2] sm:$0xff]
        %v4377 = vld [vmem:[%s196 + $0x4aa] sm:$0xff]
        %v4378 = vld [vmem:[%s196 + $0x4b2] sm:$0xff]
        %v4379 = vld [vmem:[%s196 + $0x4ba] sm:$0xff]
        %v4380 = vld [vmem:[%s196 + $0x4c2] sm:$0xff]
        %v4381 = vld [vmem:[%s196 + $0x4ca] sm:$0xff]
        %v4382 = vld [vmem:[%s196 + $0x4d2] sm:$0xff]
        %v4383 = vld [vmem:[%s196 + $0x4da] sm:$0xff]
        %v4384 = vld [vmem:[%s196 + $0x4e2] sm:$0xff]
        %v4385 = vld [vmem:[%s196 + $0x4ea] sm:$0xff]
        %v4386 = vld [vmem:[%s196 + $0x4f2] sm:$0xff]
        %v4387 = vld [vmem:[%s196 + $0x4fa] sm:$0xff]
        %4543 = vrot.lane.b32.xlu0 %v4233, 20
        %v4544 = vpop.permute.xlu0 %4543
        %4545 = vrot.lane.b32.xlu0 %v4234, 20
        %v4546 = vpop.permute.xlu0 %4545
        %4547 = vrot.lane.b32.xlu0 %v4235, 20
        %v4548 = vpop.permute.xlu0 %4547
        %4549 = vrot.lane.b32.xlu0 %v4236, 20
        %v4550 = vpop.permute.xlu0 %4549
        %4551 = vrot.lane.b32.xlu0 %v4237, 20
        %v4552 = vpop.permute.xlu0 %4551
        %4553 = vrot.lane.b32.xlu0 %v4238, 20
        %v4554 = vpop.permute.xlu0 %4553
        %4555 = vrot.lane.b32.xlu0 %v4239, 20
        %v4556 = vpop.permute.xlu0 %4555
        %4557 = vrot.lane.b32.xlu0 %v4240, 20
        %v4558 = vpop.permute.xlu0 %4557
        %4559 = vrot.lane.b32.xlu0 %v4241, 20
        %v4560 = vpop.permute.xlu0 %4559
        %4561 = vrot.lane.b32.xlu0 %v4242, 20
        %v4562 = vpop.permute.xlu0 %4561
        %4563 = vrot.lane.b32.xlu0 %v4243, 20
        %v4564 = vpop.permute.xlu0 %4563
        %4565 = vrot.lane.b32.xlu0 %v4244, 20
        %v4566 = vpop.permute.xlu0 %4565
        %4567 = vrot.lane.b32.xlu0 %v4245, 20
        %v4568 = vpop.permute.xlu0 %4567
        %4569 = vrot.lane.b32.xlu0 %v4246, 20
        %v4570 = vpop.permute.xlu0 %4569
        %4571 = vrot.lane.b32.xlu0 %v4247, 20
        %v4572 = vpop.permute.xlu0 %4571
        %4573 = vrot.lane.b32.xlu0 %v4248, 20
        %v4574 = vpop.permute.xlu0 %4573
        %4575 = vrot.lane.b32.xlu0 %v4249, 20
        %v4576 = vpop.permute.xlu0 %4575
        %4577 = vrot.lane.b32.xlu0 %v4250, 20
        %v4578 = vpop.permute.xlu0 %4577
        %4579 = vrot.lane.b32.xlu0 %v4251, 20
        %v4580 = vpop.permute.xlu0 %4579
        %4581 = vrot.lane.b32.xlu0 %v4252, 20
        %v4582 = vpop.permute.xlu0 %4581
        %4583 = vrot.lane.b32.xlu0 %v4253, 20
        %v4584 = vpop.permute.xlu0 %4583
        %4585 = vrot.lane.b32.xlu0 %v4254, 20
        %v4586 = vpop.permute.xlu0 %4585
        %4587 = vrot.lane.b32.xlu0 %v4255, 20
        %v4588 = vpop.permute.xlu0 %4587
        %4589 = vrot.lane.b32.xlu0 %v4256, 20
        %v4590 = vpop.permute.xlu0 %4589
        %4591 = vrot.lane.b32.xlu0 %v4257, 20
        %v4592 = vpop.permute.xlu0 %4591
        %4593 = vrot.lane.b32.xlu0 %v4258, 20
        %v4594 = vpop.permute.xlu0 %4593
        %4595 = vrot.lane.b32.xlu0 %v4259, 20
        %v4596 = vpop.permute.xlu0 %4595
        %4597 = vrot.lane.b32.xlu0 %v4260, 20
        %v4598 = vpop.permute.xlu0 %4597
        %4599 = vrot.lane.b32.xlu0 %v4261, 20
        %v4600 = vpop.permute.xlu0 %4599
        %4601 = vrot.lane.b32.xlu0 %v4262, 20
        %v4602 = vpop.permute.xlu0 %4601
        %4603 = vrot.lane.b32.xlu0 %v4263, 20
        %v4604 = vpop.permute.xlu0 %4603
        %4605 = vrot.lane.b32.xlu0 %v4264, 20
        %v4606 = vpop.permute.xlu0 %4605
        %4607 = vrot.lane.b32.xlu0 %v4265, 20
        %v4608 = vpop.permute.xlu0 %4607
        %4609 = vrot.lane.b32.xlu0 %v4266, 20
        %v4610 = vpop.permute.xlu0 %4609
        %4611 = vrot.lane.b32.xlu0 %v4267, 20
        %v4612 = vpop.permute.xlu0 %4611
        %4613 = vrot.lane.b32.xlu0 %v4268, 20
        %v4614 = vpop.permute.xlu0 %4613
        %4615 = vrot.lane.b32.xlu0 %v4269, 20
        %v4616 = vpop.permute.xlu0 %4615
        %4617 = vrot.lane.b32.xlu0 %v4270, 20
        %v4618 = vpop.permute.xlu0 %4617
        %4619 = vrot.lane.b32.xlu0 %v4271, 20
        %v4620 = vpop.permute.xlu0 %4619
        %4621 = vrot.lane.b32.xlu0 %v4272, 20
        %v4622 = vpop.permute.xlu0 %4621
        %4623 = vrot.lane.b32.xlu0 %v4273, 20
        %v4624 = vpop.permute.xlu0 %4623
        %4625 = vrot.lane.b32.xlu0 %v4274, 20
        %v4626 = vpop.permute.xlu0 %4625
        %4627 = vrot.lane.b32.xlu0 %v4275, 20
        %v4628 = vpop.permute.xlu0 %4627
        %4629 = vrot.lane.b32.xlu0 %v4276, 20
        %v4630 = vpop.permute.xlu0 %4629
        %4631 = vrot.lane.b32.xlu0 %v4277, 20
        %v4632 = vpop.permute.xlu0 %4631
        %4633 = vrot.lane.b32.xlu0 %v4278, 20
        %v4634 = vpop.permute.xlu0 %4633
        %4635 = vrot.lane.b32.xlu0 %v4279, 20
        %v4636 = vpop.permute.xlu0 %4635
        %4637 = vrot.lane.b32.xlu0 %v4280, 20
        %v4638 = vpop.permute.xlu0 %4637
        %4639 = vrot.lane.b32.xlu0 %v4281, 20
        %v4640 = vpop.permute.xlu0 %4639
        %4641 = vrot.lane.b32.xlu0 %v4282, 20
        %v4642 = vpop.permute.xlu0 %4641
        %4643 = vrot.lane.b32.xlu0 %v4283, 20
        %v4644 = vpop.permute.xlu0 %4643
        %4645 = vrot.lane.b32.xlu0 %v4284, 20
        %v4646 = vpop.permute.xlu0 %4645
        %4647 = vrot.lane.b32.xlu0 %v4285, 20
        %v4648 = vpop.permute.xlu0 %4647
        %4649 = vrot.lane.b32.xlu0 %v4286, 20
        %v4650 = vpop.permute.xlu0 %4649
        %4651 = vrot.lane.b32.xlu0 %v4287, 20
        %v4652 = vpop.permute.xlu0 %4651
        %4653 = vrot.lane.b32.xlu0 %v4288, 20
        %v4654 = vpop.permute.xlu0 %4653
        %4655 = vrot.lane.b32.xlu0 %v4289, 20
        %v4656 = vpop.permute.xlu0 %4655
        %4657 = vrot.lane.b32.xlu0 %v4290, 20
        %v4658 = vpop.permute.xlu0 %4657
        %4659 = vrot.lane.b32.xlu0 %v4291, 20
        %v4660 = vpop.permute.xlu0 %4659
        %4661 = vrot.lane.b32.xlu0 %v4292, 20
        %v4662 = vpop.permute.xlu0 %4661
        %4663 = vrot.lane.b32.xlu0 %v4293, 20
        %v4664 = vpop.permute.xlu0 %4663
        %4665 = vrot.lane.b32.xlu0 %v4294, 20
        %v4666 = vpop.permute.xlu0 %4665
        %4667 = vrot.lane.b32.xlu0 %v4295, 20
        %v4668 = vpop.permute.xlu0 %4667
        %4669 = vrot.lane.b32.xlu0 %v4296, 20
        %v4670 = vpop.permute.xlu0 %4669
        %4671 = vrot.lane.b32.xlu0 %v4297, 20
        %v4672 = vpop.permute.xlu0 %4671
        %4673 = vrot.lane.b32.xlu0 %v4298, 20
        %v4674 = vpop.permute.xlu0 %4673
        %4675 = vrot.lane.b32.xlu0 %v4299, 20
        %v4676 = vpop.permute.xlu0 %4675
        %4677 = vrot.lane.b32.xlu0 %v4300, 20
        %v4678 = vpop.permute.xlu0 %4677
        %4679 = vrot.lane.b32.xlu0 %v4301, 20
        %v4680 = vpop.permute.xlu0 %4679
        %4681 = vrot.lane.b32.xlu0 %v4302, 20
        %v4682 = vpop.permute.xlu0 %4681
        %4683 = vrot.lane.b32.xlu0 %v4303, 20
        %v4684 = vpop.permute.xlu0 %4683
        %4685 = vrot.lane.b32.xlu0 %v4304, 20
        %v4686 = vpop.permute.xlu0 %4685
        %4687 = vrot.lane.b32.xlu0 %v4305, 20
        %v4688 = vpop.permute.xlu0 %4687
        %4689 = vrot.lane.b32.xlu0 %v4306, 20
        %v4690 = vpop.permute.xlu0 %4689
        %4691 = vrot.lane.b32.xlu0 %v4307, 20
        %v4692 = vpop.permute.xlu0 %4691
        %4693 = vrot.lane.b32.xlu0 %v4308, 20
        %v4694 = vpop.permute.xlu0 %4693
        %4695 = vrot.lane.b32.xlu0 %v4309, 20
        %v4696 = vpop.permute.xlu0 %4695
        %4697 = vrot.lane.b32.xlu0 %v4310, 20
        %v4698 = vpop.permute.xlu0 %4697
        %4699 = vrot.lane.b32.xlu0 %v4311, 20
        %v4700 = vpop.permute.xlu0 %4699
        %4701 = vrot.lane.b32.xlu0 %v4312, 20
        %v4702 = vpop.permute.xlu0 %4701
        %4703 = vrot.lane.b32.xlu0 %v4313, 20
        %v4704 = vpop.permute.xlu0 %4703
        %4705 = vrot.lane.b32.xlu0 %v4314, 20
        %v4706 = vpop.permute.xlu0 %4705
        %4707 = vrot.lane.b32.xlu0 %v4315, 20
        %v4708 = vpop.permute.xlu0 %4707
        %4709 = vrot.lane.b32.xlu0 %v4316, 20
        %v4710 = vpop.permute.xlu0 %4709
        %4711 = vrot.lane.b32.xlu0 %v4317, 20
        %v4712 = vpop.permute.xlu0 %4711
        %4713 = vrot.lane.b32.xlu0 %v4318, 20
        %v4714 = vpop.permute.xlu0 %4713
        %4715 = vrot.lane.b32.xlu0 %v4319, 20
        %v4716 = vpop.permute.xlu0 %4715
        %4717 = vrot.lane.b32.xlu0 %v4320, 20
        %v4718 = vpop.permute.xlu0 %4717
        %4719 = vrot.lane.b32.xlu0 %v4321, 20
        %v4720 = vpop.permute.xlu0 %4719
        %4721 = vrot.lane.b32.xlu0 %v4322, 20
        %v4722 = vpop.permute.xlu0 %4721
        %4723 = vrot.lane.b32.xlu0 %v4323, 20
        %v4724 = vpop.permute.xlu0 %4723
        %4725 = vrot.lane.b32.xlu0 %v4324, 20
        %v4726 = vpop.permute.xlu0 %4725
        %4727 = vrot.lane.b32.xlu0 %v4325, 20
        %v4728 = vpop.permute.xlu0 %4727
        %4729 = vrot.lane.b32.xlu0 %v4326, 20
        %v4730 = vpop.permute.xlu0 %4729
        %4731 = vrot.lane.b32.xlu0 %v4327, 20
        %v4732 = vpop.permute.xlu0 %4731
        %4733 = vrot.lane.b32.xlu0 %v4328, 20
        %v4734 = vpop.permute.xlu0 %4733
        %4735 = vrot.lane.b32.xlu0 %v4329, 20
        %v4736 = vpop.permute.xlu0 %4735
        %4737 = vrot.lane.b32.xlu0 %v4330, 20
        %v4738 = vpop.permute.xlu0 %4737
        %4739 = vrot.lane.b32.xlu0 %v4331, 20
        %v4740 = vpop.permute.xlu0 %4739
        %4741 = vrot.lane.b32.xlu0 %v4332, 20
        %v4742 = vpop.permute.xlu0 %4741
        %4743 = vrot.lane.b32.xlu0 %v4333, 20
        %v4744 = vpop.permute.xlu0 %4743
        %4745 = vrot.lane.b32.xlu0 %v4334, 20
        %v4746 = vpop.permute.xlu0 %4745
        %4747 = vrot.lane.b32.xlu0 %v4335, 20
        %v4748 = vpop.permute.xlu0 %4747
        %4749 = vrot.lane.b32.xlu0 %v4336, 20
        %v4750 = vpop.permute.xlu0 %4749
        %4751 = vrot.lane.b32.xlu0 %v4337, 20
        %v4752 = vpop.permute.xlu0 %4751
        %4753 = vrot.lane.b32.xlu0 %v4338, 20
        %v4754 = vpop.permute.xlu0 %4753
        %4755 = vrot.lane.b32.xlu0 %v4339, 20
        %v4756 = vpop.permute.xlu0 %4755
        %4757 = vrot.lane.b32.xlu0 %v4340, 20
        %v4758 = vpop.permute.xlu0 %4757
        %4759 = vrot.lane.b32.xlu0 %v4341, 20
        %v4760 = vpop.permute.xlu0 %4759
        %4761 = vrot.lane.b32.xlu0 %v4342, 20
        %v4762 = vpop.permute.xlu0 %4761
        %4763 = vrot.lane.b32.xlu0 %v4343, 20
        %v4764 = vpop.permute.xlu0 %4763
        %4765 = vrot.lane.b32.xlu0 %v4344, 20
        %v4766 = vpop.permute.xlu0 %4765
        %4767 = vrot.lane.b32.xlu0 %v4345, 20
        %v4768 = vpop.permute.xlu0 %4767
        %4769 = vrot.lane.b32.xlu0 %v4346, 20
        %v4770 = vpop.permute.xlu0 %4769
        %4771 = vrot.lane.b32.xlu0 %v4347, 20
        %v4772 = vpop.permute.xlu0 %4771
        %4773 = vrot.lane.b32.xlu0 %v4348, 20
        %v4774 = vpop.permute.xlu0 %4773
        %4775 = vrot.lane.b32.xlu0 %v4349, 20
        %v4776 = vpop.permute.xlu0 %4775
        %4777 = vrot.lane.b32.xlu0 %v4350, 20
        %v4778 = vpop.permute.xlu0 %4777
        %4779 = vrot.lane.b32.xlu0 %v4351, 20
        %v4780 = vpop.permute.xlu0 %4779
        %4781 = vrot.lane.b32.xlu0 %v4352, 20
        %v4782 = vpop.permute.xlu0 %4781
        %4783 = vrot.lane.b32.xlu0 %v4353, 20
        %v4784 = vpop.permute.xlu0 %4783
        %4785 = vrot.lane.b32.xlu0 %v4354, 20
        %v4786 = vpop.permute.xlu0 %4785
        %4787 = vrot.lane.b32.xlu0 %v4355, 20
        %v4788 = vpop.permute.xlu0 %4787
        %4789 = vrot.lane.b32.xlu0 %v4356, 20
        %v4790 = vpop.permute.xlu0 %4789
        %4791 = vrot.lane.b32.xlu0 %v4357, 20
        %v4792 = vpop.permute.xlu0 %4791
        %4793 = vrot.lane.b32.xlu0 %v4358, 20
        %v4794 = vpop.permute.xlu0 %4793
        %4795 = vrot.lane.b32.xlu0 %v4359, 20
        %v4796 = vpop.permute.xlu0 %4795
        %4797 = vrot.lane.b32.xlu0 %v4360, 20
        %v4798 = vpop.permute.xlu0 %4797
        %4799 = vrot.lane.b32.xlu0 %v4361, 20
        %v4800 = vpop.permute.xlu0 %4799
        %4801 = vrot.lane.b32.xlu0 %v4362, 20
        %v4802 = vpop.permute.xlu0 %4801
        %4803 = vrot.lane.b32.xlu0 %v4363, 20
        %v4804 = vpop.permute.xlu0 %4803
        %4805 = vrot.lane.b32.xlu0 %v4364, 20
        %v4806 = vpop.permute.xlu0 %4805
        %4807 = vrot.lane.b32.xlu0 %v4365, 20
        %v4808 = vpop.permute.xlu0 %4807
        %4809 = vrot.lane.b32.xlu0 %v4366, 20
        %v4810 = vpop.permute.xlu0 %4809
        %4811 = vrot.lane.b32.xlu0 %v4367, 20
        %v4812 = vpop.permute.xlu0 %4811
        %4813 = vrot.lane.b32.xlu0 %v4368, 20
        %v4814 = vpop.permute.xlu0 %4813
        %4815 = vrot.lane.b32.xlu0 %v4369, 20
        %v4816 = vpop.permute.xlu0 %4815
        %4817 = vrot.lane.b32.xlu0 %v4370, 20
        %v4818 = vpop.permute.xlu0 %4817
        %4819 = vrot.lane.b32.xlu0 %v4371, 20
        %v4820 = vpop.permute.xlu0 %4819
        %4821 = vrot.lane.b32.xlu0 %v4372, 20
        %v4822 = vpop.permute.xlu0 %4821
        %4823 = vrot.lane.b32.xlu0 %v4373, 20
        %v4824 = vpop.permute.xlu0 %4823
        %4825 = vrot.lane.b32.xlu0 %v4374, 20
        %v4826 = vpop.permute.xlu0 %4825
        %4827 = vrot.lane.b32.xlu0 %v4375, 20
        %v4828 = vpop.permute.xlu0 %4827
        %4829 = vrot.lane.b32.xlu0 %v4376, 20
        %v4830 = vpop.permute.xlu0 %4829
        %4831 = vrot.lane.b32.xlu0 %v4377, 20
        %v4832 = vpop.permute.xlu0 %4831
        %4833 = vrot.lane.b32.xlu0 %v4378, 20
        %v4834 = vpop.permute.xlu0 %4833
        %4835 = vrot.lane.b32.xlu0 %v4379, 20
        %v4836 = vpop.permute.xlu0 %4835
        %4837 = vrot.lane.b32.xlu0 %v4380, 20
        %v4838 = vpop.permute.xlu0 %4837
        %4839 = vrot.lane.b32.xlu0 %v4381, 20
        %v4840 = vpop.permute.xlu0 %4839
        %4841 = vrot.lane.b32.xlu0 %v4382, 20
        %v4842 = vpop.permute.xlu0 %4841
        %4843 = vrot.lane.b32.xlu0 %v4383, 20
        %v4844 = vpop.permute.xlu0 %4843
        %4845 = vrot.lane.b32.xlu0 %v4384, 20
        %v4846 = vpop.permute.xlu0 %4845
        %4847 = vrot.lane.b32.xlu0 %v4385, 20
        %v4848 = vpop.permute.xlu0 %4847
        %4849 = vrot.lane.b32.xlu0 %v4386, 20
        %v4850 = vpop.permute.xlu0 %4849
        %4851 = vrot.lane.b32.xlu0 %v4387, 20
        %v4852 = vpop.permute.xlu0 %4851
        %vm5008 = vcmask 195744
        %5009 = vst.msk [vmem:[#allocation2] sm:$0xff] %vm5008, %v4544
        %5010 = vst.msk [vmem:[#allocation2 + $0x8] sm:$0xff] %vm5008, %v4546
        %5011 = vst.msk [vmem:[#allocation2 + $0x10] sm:$0xff] %vm5008, %v4548
        %5012 = vst.msk [vmem:[#allocation2 + $0x18] sm:$0xff] %vm5008, %v4550
        %5013 = vst.msk [vmem:[#allocation2 + $0x20] sm:$0xff] %vm5008, %v4552
        %5014 = vst.msk [vmem:[#allocation2 + $0x28] sm:$0xff] %vm5008, %v4554
        %5015 = vst.msk [vmem:[#allocation2 + $0x30] sm:$0xff] %vm5008, %v4556
        %5016 = vst.msk [vmem:[#allocation2 + $0x38] sm:$0xff] %vm5008, %v4558
        %5017 = vst.msk [vmem:[#allocation2 + $0x40] sm:$0xff] %vm5008, %v4560
        %5018 = vst.msk [vmem:[#allocation2 + $0x48] sm:$0xff] %vm5008, %v4562
        %5019 = vst.msk [vmem:[#allocation2 + $0x50] sm:$0xff] %vm5008, %v4564
        %5020 = vst.msk [vmem:[#allocation2 + $0x58] sm:$0xff] %vm5008, %v4566
        %5021 = vst.msk [vmem:[#allocation2 + $0x60] sm:$0xff] %vm5008, %v4568
        %5022 = vst.msk [vmem:[#allocation2 + $0x68] sm:$0xff] %vm5008, %v4570
        %5023 = vst.msk [vmem:[#allocation2 + $0x70] sm:$0xff] %vm5008, %v4572
        %5024 = vst.msk [vmem:[#allocation2 + $0x78] sm:$0xff] %vm5008, %v4574
        %5025 = vst.msk [vmem:[#allocation2 + $0x80] sm:$0xff] %vm5008, %v4576
        %5026 = vst.msk [vmem:[#allocation2 + $0x88] sm:$0xff] %vm5008, %v4578
        %5027 = vst.msk [vmem:[#allocation2 + $0x90] sm:$0xff] %vm5008, %v4580
        %5028 = vst.msk [vmem:[#allocation2 + $0x98] sm:$0xff] %vm5008, %v4582
        %5029 = vst.msk [vmem:[#allocation2 + $0xa0] sm:$0xff] %vm5008, %v4584
        %5030 = vst.msk [vmem:[#allocation2 + $0xa8] sm:$0xff] %vm5008, %v4586
        %5031 = vst.msk [vmem:[#allocation2 + $0xb0] sm:$0xff] %vm5008, %v4588
        %5032 = vst.msk [vmem:[#allocation2 + $0xb8] sm:$0xff] %vm5008, %v4590
        %5033 = vst.msk [vmem:[#allocation2 + $0xc0] sm:$0xff] %vm5008, %v4592
        %5034 = vst.msk [vmem:[#allocation2 + $0xc8] sm:$0xff] %vm5008, %v4594
        %5035 = vst.msk [vmem:[#allocation2 + $0xd0] sm:$0xff] %vm5008, %v4596
        %5036 = vst.msk [vmem:[#allocation2 + $0xd8] sm:$0xff] %vm5008, %v4598
        %5037 = vst.msk [vmem:[#allocation2 + $0xe0] sm:$0xff] %vm5008, %v4600
        %5038 = vst.msk [vmem:[#allocation2 + $0xe8] sm:$0xff] %vm5008, %v4602
        %5039 = vst.msk [vmem:[#allocation2 + $0xf0] sm:$0xff] %vm5008, %v4604
        %5040 = vst.msk [vmem:[#allocation2 + $0xf8] sm:$0xff] %vm5008, %v4606
        %5041 = vst.msk [vmem:[#allocation2 + $0x100] sm:$0xff] %vm5008, %v4608
        %5042 = vst.msk [vmem:[#allocation2 + $0x108] sm:$0xff] %vm5008, %v4610
        %5043 = vst.msk [vmem:[#allocation2 + $0x110] sm:$0xff] %vm5008, %v4612
        %5044 = vst.msk [vmem:[#allocation2 + $0x118] sm:$0xff] %vm5008, %v4614
        %5045 = vst.msk [vmem:[#allocation2 + $0x120] sm:$0xff] %vm5008, %v4616
        %5046 = vst.msk [vmem:[#allocation2 + $0x128] sm:$0xff] %vm5008, %v4618
        %5047 = vst.msk [vmem:[#allocation2 + $0x130] sm:$0xff] %vm5008, %v4620
        %5048 = vst.msk [vmem:[#allocation2 + $0x138] sm:$0xff] %vm5008, %v4622
        %5049 = vst.msk [vmem:[#allocation2 + $0x140] sm:$0xff] %vm5008, %v4624
        %5050 = vst.msk [vmem:[#allocation2 + $0x148] sm:$0xff] %vm5008, %v4626
        %5051 = vst.msk [vmem:[#allocation2 + $0x150] sm:$0xff] %vm5008, %v4628
        %5052 = vst.msk [vmem:[#allocation2 + $0x158] sm:$0xff] %vm5008, %v4630
        %5053 = vst.msk [vmem:[#allocation2 + $0x160] sm:$0xff] %vm5008, %v4632
        %5054 = vst.msk [vmem:[#allocation2 + $0x168] sm:$0xff] %vm5008, %v4634
        %5055 = vst.msk [vmem:[#allocation2 + $0x170] sm:$0xff] %vm5008, %v4636
        %5056 = vst.msk [vmem:[#allocation2 + $0x178] sm:$0xff] %vm5008, %v4638
        %5057 = vst.msk [vmem:[#allocation2 + $0x180] sm:$0xff] %vm5008, %v4640
        %5058 = vst.msk [vmem:[#allocation2 + $0x188] sm:$0xff] %vm5008, %v4642
        %5059 = vst.msk [vmem:[#allocation2 + $0x190] sm:$0xff] %vm5008, %v4644
        %5060 = vst.msk [vmem:[#allocation2 + $0x198] sm:$0xff] %vm5008, %v4646
        %5061 = vst.msk [vmem:[#allocation2 + $0x1a0] sm:$0xff] %vm5008, %v4648
        %5062 = vst.msk [vmem:[#allocation2 + $0x1a8] sm:$0xff] %vm5008, %v4650
        %5063 = vst.msk [vmem:[#allocation2 + $0x1b0] sm:$0xff] %vm5008, %v4652
        %5064 = vst.msk [vmem:[#allocation2 + $0x1b8] sm:$0xff] %vm5008, %v4654
        %5065 = vst.msk [vmem:[#allocation2 + $0x1c0] sm:$0xff] %vm5008, %v4656
        %5066 = vst.msk [vmem:[#allocation2 + $0x1c8] sm:$0xff] %vm5008, %v4658
        %5067 = vst.msk [vmem:[#allocation2 + $0x1d0] sm:$0xff] %vm5008, %v4660
        %5068 = vst.msk [vmem:[#allocation2 + $0x1d8] sm:$0xff] %vm5008, %v4662
        %5069 = vst.msk [vmem:[#allocation2 + $0x1e0] sm:$0xff] %vm5008, %v4664
        %5070 = vst.msk [vmem:[#allocation2 + $0x1e8] sm:$0xff] %vm5008, %v4666
        %5071 = vst.msk [vmem:[#allocation2 + $0x1f0] sm:$0xff] %vm5008, %v4668
        %5072 = vst.msk [vmem:[#allocation2 + $0x1f8] sm:$0xff] %vm5008, %v4670
        %5073 = vst.msk [vmem:[#allocation2 + $0x200] sm:$0xff] %vm5008, %v4672
        %5074 = vst.msk [vmem:[#allocation2 + $0x208] sm:$0xff] %vm5008, %v4674
        %5075 = vst.msk [vmem:[#allocation2 + $0x210] sm:$0xff] %vm5008, %v4676
        %5076 = vst.msk [vmem:[#allocation2 + $0x218] sm:$0xff] %vm5008, %v4678
        %5077 = vst.msk [vmem:[#allocation2 + $0x220] sm:$0xff] %vm5008, %v4680
        %5078 = vst.msk [vmem:[#allocation2 + $0x228] sm:$0xff] %vm5008, %v4682
        %5079 = vst.msk [vmem:[#allocation2 + $0x230] sm:$0xff] %vm5008, %v4684
        %5080 = vst.msk [vmem:[#allocation2 + $0x238] sm:$0xff] %vm5008, %v4686
        %5081 = vst.msk [vmem:[#allocation2 + $0x240] sm:$0xff] %vm5008, %v4688
        %5082 = vst.msk [vmem:[#allocation2 + $0x248] sm:$0xff] %vm5008, %v4690
        %5083 = vst.msk [vmem:[#allocation2 + $0x250] sm:$0xff] %vm5008, %v4692
        %5084 = vst.msk [vmem:[#allocation2 + $0x258] sm:$0xff] %vm5008, %v4694
        %5085 = vst.msk [vmem:[#allocation2 + $0x260] sm:$0xff] %vm5008, %v4696
        %5086 = vst.msk [vmem:[#allocation2 + $0x268] sm:$0xff] %vm5008, %v4698
        %5087 = vst.msk [vmem:[#allocation2 + $0x270] sm:$0xff] %vm5008, %v4700
        %5088 = vst.msk [vmem:[#allocation2 + $0x278] sm:$0xff] %vm5008, %v4702
        %5089 = vst.msk [vmem:[#allocation2 + $0x280] sm:$0xff] %vm5008, %v4704
        %5090 = vst.msk [vmem:[#allocation2 + $0x288] sm:$0xff] %vm5008, %v4706
        %5091 = vst.msk [vmem:[#allocation2 + $0x290] sm:$0xff] %vm5008, %v4708
        %5092 = vst.msk [vmem:[#allocation2 + $0x298] sm:$0xff] %vm5008, %v4710
        %5093 = vst.msk [vmem:[#allocation2 + $0x2a0] sm:$0xff] %vm5008, %v4712
        %5094 = vst.msk [vmem:[#allocation2 + $0x2a8] sm:$0xff] %vm5008, %v4714
        %5095 = vst.msk [vmem:[#allocation2 + $0x2b0] sm:$0xff] %vm5008, %v4716
        %5096 = vst.msk [vmem:[#allocation2 + $0x2b8] sm:$0xff] %vm5008, %v4718
        %5097 = vst.msk [vmem:[#allocation2 + $0x2c0] sm:$0xff] %vm5008, %v4720
        %5098 = vst.msk [vmem:[#allocation2 + $0x2c8] sm:$0xff] %vm5008, %v4722
        %5099 = vst.msk [vmem:[#allocation2 + $0x2d0] sm:$0xff] %vm5008, %v4724
        %5100 = vst.msk [vmem:[#allocation2 + $0x2d8] sm:$0xff] %vm5008, %v4726
        %5101 = vst.msk [vmem:[#allocation2 + $0x2e0] sm:$0xff] %vm5008, %v4728
        %5102 = vst.msk [vmem:[#allocation2 + $0x2e8] sm:$0xff] %vm5008, %v4730
        %5103 = vst.msk [vmem:[#allocation2 + $0x2f0] sm:$0xff] %vm5008, %v4732
        %5104 = vst.msk [vmem:[#allocation2 + $0x2f8] sm:$0xff] %vm5008, %v4734
        %5105 = vst.msk [vmem:[#allocation2 + $0x300] sm:$0xff] %vm5008, %v4736
        %5106 = vst.msk [vmem:[#allocation2 + $0x308] sm:$0xff] %vm5008, %v4738
        %5107 = vst.msk [vmem:[#allocation2 + $0x310] sm:$0xff] %vm5008, %v4740
        %5108 = vst.msk [vmem:[#allocation2 + $0x318] sm:$0xff] %vm5008, %v4742
        %5109 = vst.msk [vmem:[#allocation2 + $0x320] sm:$0xff] %vm5008, %v4744
        %5110 = vst.msk [vmem:[#allocation2 + $0x328] sm:$0xff] %vm5008, %v4746
        %5111 = vst.msk [vmem:[#allocation2 + $0x330] sm:$0xff] %vm5008, %v4748
        %5112 = vst.msk [vmem:[#allocation2 + $0x338] sm:$0xff] %vm5008, %v4750
        %5113 = vst.msk [vmem:[#allocation2 + $0x340] sm:$0xff] %vm5008, %v4752
        %5114 = vst.msk [vmem:[#allocation2 + $0x348] sm:$0xff] %vm5008, %v4754
        %5115 = vst.msk [vmem:[#allocation2 + $0x350] sm:$0xff] %vm5008, %v4756
        %5116 = vst.msk [vmem:[#allocation2 + $0x358] sm:$0xff] %vm5008, %v4758
        %5117 = vst.msk [vmem:[#allocation2 + $0x360] sm:$0xff] %vm5008, %v4760
        %5118 = vst.msk [vmem:[#allocation2 + $0x368] sm:$0xff] %vm5008, %v4762
        %5119 = vst.msk [vmem:[#allocation2 + $0x370] sm:$0xff] %vm5008, %v4764
        %5120 = vst.msk [vmem:[#allocation2 + $0x378] sm:$0xff] %vm5008, %v4766
        %5121 = vst.msk [vmem:[#allocation2 + $0x380] sm:$0xff] %vm5008, %v4768
        %5122 = vst.msk [vmem:[#allocation2 + $0x388] sm:$0xff] %vm5008, %v4770
        %5123 = vst.msk [vmem:[#allocation2 + $0x390] sm:$0xff] %vm5008, %v4772
        %5124 = vst.msk [vmem:[#allocation2 + $0x398] sm:$0xff] %vm5008, %v4774
        %5125 = vst.msk [vmem:[#allocation2 + $0x3a0] sm:$0xff] %vm5008, %v4776
        %5126 = vst.msk [vmem:[#allocation2 + $0x3a8] sm:$0xff] %vm5008, %v4778
        %5127 = vst.msk [vmem:[#allocation2 + $0x3b0] sm:$0xff] %vm5008, %v4780
        %5128 = vst.msk [vmem:[#allocation2 + $0x3b8] sm:$0xff] %vm5008, %v4782
        %5129 = vst.msk [vmem:[#allocation2 + $0x3c0] sm:$0xff] %vm5008, %v4784
        %5130 = vst.msk [vmem:[#allocation2 + $0x3c8] sm:$0xff] %vm5008, %v4786
        %5131 = vst.msk [vmem:[#allocation2 + $0x3d0] sm:$0xff] %vm5008, %v4788
        %5132 = vst.msk [vmem:[#allocation2 + $0x3d8] sm:$0xff] %vm5008, %v4790
        %5133 = vst.msk [vmem:[#allocation2 + $0x3e0] sm:$0xff] %vm5008, %v4792
        %5134 = vst.msk [vmem:[#allocation2 + $0x3e8] sm:$0xff] %vm5008, %v4794
        %5135 = vst.msk [vmem:[#allocation2 + $0x3f0] sm:$0xff] %vm5008, %v4796
        %5136 = vst.msk [vmem:[#allocation2 + $0x3f8] sm:$0xff] %vm5008, %v4798
        %5137 = vst.msk [vmem:[#allocation2 + $0x400] sm:$0xff] %vm5008, %v4800
        %5138 = vst.msk [vmem:[#allocation2 + $0x408] sm:$0xff] %vm5008, %v4802
        %5139 = vst.msk [vmem:[#allocation2 + $0x410] sm:$0xff] %vm5008, %v4804
        %5140 = vst.msk [vmem:[#allocation2 + $0x418] sm:$0xff] %vm5008, %v4806
        %5141 = vst.msk [vmem:[#allocation2 + $0x420] sm:$0xff] %vm5008, %v4808
        %5142 = vst.msk [vmem:[#allocation2 + $0x428] sm:$0xff] %vm5008, %v4810
        %5143 = vst.msk [vmem:[#allocation2 + $0x430] sm:$0xff] %vm5008, %v4812
        %5144 = vst.msk [vmem:[#allocation2 + $0x438] sm:$0xff] %vm5008, %v4814
        %5145 = vst.msk [vmem:[#allocation2 + $0x440] sm:$0xff] %vm5008, %v4816
        %5146 = vst.msk [vmem:[#allocation2 + $0x448] sm:$0xff] %vm5008, %v4818
        %5147 = vst.msk [vmem:[#allocation2 + $0x450] sm:$0xff] %vm5008, %v4820
        %5148 = vst.msk [vmem:[#allocation2 + $0x458] sm:$0xff] %vm5008, %v4822
        %5149 = vst.msk [vmem:[#allocation2 + $0x460] sm:$0xff] %vm5008, %v4824
        %5150 = vst.msk [vmem:[#allocation2 + $0x468] sm:$0xff] %vm5008, %v4826
        %5151 = vst.msk [vmem:[#allocation2 + $0x470] sm:$0xff] %vm5008, %v4828
        %5152 = vst.msk [vmem:[#allocation2 + $0x478] sm:$0xff] %vm5008, %v4830
        %5153 = vst.msk [vmem:[#allocation2 + $0x480] sm:$0xff] %vm5008, %v4832
        %5154 = vst.msk [vmem:[#allocation2 + $0x488] sm:$0xff] %vm5008, %v4834
        %5155 = vst.msk [vmem:[#allocation2 + $0x490] sm:$0xff] %vm5008, %v4836
        %5156 = vst.msk [vmem:[#allocation2 + $0x498] sm:$0xff] %vm5008, %v4838
        %5157 = vst.msk [vmem:[#allocation2 + $0x4a0] sm:$0xff] %vm5008, %v4840
        %5158 = vst.msk [vmem:[#allocation2 + $0x4a8] sm:$0xff] %vm5008, %v4842
        %5159 = vst.msk [vmem:[#allocation2 + $0x4b0] sm:$0xff] %vm5008, %v4844
        %5160 = vst.msk [vmem:[#allocation2 + $0x4b8] sm:$0xff] %vm5008, %v4846
        %5161 = vst.msk [vmem:[#allocation2 + $0x4c0] sm:$0xff] %vm5008, %v4848
        %5162 = vst.msk [vmem:[#allocation2 + $0x4c8] sm:$0xff] %vm5008, %v4850
        %5163 = vst.msk [vmem:[#allocation2 + $0x4d0] sm:$0xff] %vm5008, %v4852
        %v5164 = vld [vmem:[%s196 + $0x50] sm:$0xff]
        %v5165 = vld [vmem:[%s196 + $0x58] sm:$0xff]
        %v5166 = vld [vmem:[%s196 + $0x60] sm:$0xff]
        %v5167 = vld [vmem:[%s196 + $0x68] sm:$0xff]
        %v5168 = vld [vmem:[%s196 + $0x70] sm:$0xff]
        %v5169 = vld [vmem:[%s196 + $0x78] sm:$0xff]
        %v5170 = vld [vmem:[%s196 + $0x80] sm:$0xff]
        %v5171 = vld [vmem:[%s196 + $0x88] sm:$0xff]
        %v5172 = vld [vmem:[%s196 + $0x90] sm:$0xff]
        %v5173 = vld [vmem:[%s196 + $0x98] sm:$0xff]
        %v5174 = vld [vmem:[%s196 + $0xa0] sm:$0xff]
        %v5175 = vld [vmem:[%s196 + $0xa8] sm:$0xff]
        %v5176 = vld [vmem:[%s196 + $0xb0] sm:$0xff]
        %v5177 = vld [vmem:[%s196 + $0xb8] sm:$0xff]
        %v5178 = vld [vmem:[%s196 + $0xc0] sm:$0xff]
        %v5179 = vld [vmem:[%s196 + $0xc8] sm:$0xff]
        %v5180 = vld [vmem:[%s196 + $0xd0] sm:$0xff]
        %v5181 = vld [vmem:[%s196 + $0xd8] sm:$0xff]
        %v5182 = vld [vmem:[%s196 + $0xe0] sm:$0xff]
        %v5183 = vld [vmem:[%s196 + $0xe8] sm:$0xff]
        %v5184 = vld [vmem:[%s196 + $0xf0] sm:$0xff]
        %v5185 = vld [vmem:[%s196 + $0xf8] sm:$0xff]
        %v5186 = vld [vmem:[%s196 + $0x100] sm:$0xff]
        %v5187 = vld [vmem:[%s196 + $0x108] sm:$0xff]
        %v5188 = vld [vmem:[%s196 + $0x110] sm:$0xff]
        %v5189 = vld [vmem:[%s196 + $0x118] sm:$0xff]
        %v5190 = vld [vmem:[%s196 + $0x120] sm:$0xff]
        %v5191 = vld [vmem:[%s196 + $0x128] sm:$0xff]
        %v5192 = vld [vmem:[%s196 + $0x130] sm:$0xff]
        %v5193 = vld [vmem:[%s196 + $0x138] sm:$0xff]
        %v5194 = vld [vmem:[%s196 + $0x140] sm:$0xff]
        %v5195 = vld [vmem:[%s196 + $0x148] sm:$0xff]
        %v5196 = vld [vmem:[%s196 + $0x150] sm:$0xff]
        %v5197 = vld [vmem:[%s196 + $0x158] sm:$0xff]
        %v5198 = vld [vmem:[%s196 + $0x160] sm:$0xff]
        %v5199 = vld [vmem:[%s196 + $0x168] sm:$0xff]
        %v5200 = vld [vmem:[%s196 + $0x170] sm:$0xff]
        %v5201 = vld [vmem:[%s196 + $0x178] sm:$0xff]
        %v5202 = vld [vmem:[%s196 + $0x180] sm:$0xff]
        %v5203 = vld [vmem:[%s196 + $0x188] sm:$0xff]
        %v5204 = vld [vmem:[%s196 + $0x190] sm:$0xff]
        %v5205 = vld [vmem:[%s196 + $0x198] sm:$0xff]
        %v5206 = vld [vmem:[%s196 + $0x1a0] sm:$0xff]
        %v5207 = vld [vmem:[%s196 + $0x1a8] sm:$0xff]
        %v5208 = vld [vmem:[%s196 + $0x1b0] sm:$0xff]
        %v5209 = vld [vmem:[%s196 + $0x1b8] sm:$0xff]
        %v5210 = vld [vmem:[%s196 + $0x1c0] sm:$0xff]
        %v5211 = vld [vmem:[%s196 + $0x1c8] sm:$0xff]
        %v5212 = vld [vmem:[%s196 + $0x1d0] sm:$0xff]
        %v5213 = vld [vmem:[%s196 + $0x1d8] sm:$0xff]
        %v5214 = vld [vmem:[%s196 + $0x1e0] sm:$0xff]
        %v5215 = vld [vmem:[%s196 + $0x1e8] sm:$0xff]
        %v5216 = vld [vmem:[%s196 + $0x1f0] sm:$0xff]
        %v5217 = vld [vmem:[%s196 + $0x1f8] sm:$0xff]
        %v5218 = vld [vmem:[%s196 + $0x200] sm:$0xff]
        %v5219 = vld [vmem:[%s196 + $0x208] sm:$0xff]
        %v5220 = vld [vmem:[%s196 + $0x210] sm:$0xff]
        %v5221 = vld [vmem:[%s196 + $0x218] sm:$0xff]
        %v5222 = vld [vmem:[%s196 + $0x220] sm:$0xff]
        %v5223 = vld [vmem:[%s196 + $0x228] sm:$0xff]
        %v5224 = vld [vmem:[%s196 + $0x230] sm:$0xff]
        %v5225 = vld [vmem:[%s196 + $0x238] sm:$0xff]
        %v5226 = vld [vmem:[%s196 + $0x240] sm:$0xff]
        %v5227 = vld [vmem:[%s196 + $0x248] sm:$0xff]
        %v5228 = vld [vmem:[%s196 + $0x250] sm:$0xff]
        %v5229 = vld [vmem:[%s196 + $0x258] sm:$0xff]
        %v5230 = vld [vmem:[%s196 + $0x260] sm:$0xff]
        %v5231 = vld [vmem:[%s196 + $0x268] sm:$0xff]
        %v5232 = vld [vmem:[%s196 + $0x270] sm:$0xff]
        %v5233 = vld [vmem:[%s196 + $0x278] sm:$0xff]
        %v5234 = vld [vmem:[%s196 + $0x280] sm:$0xff]
        %v5235 = vld [vmem:[%s196 + $0x288] sm:$0xff]
        %v5236 = vld [vmem:[%s196 + $0x290] sm:$0xff]
        %v5237 = vld [vmem:[%s196 + $0x298] sm:$0xff]
        %v5238 = vld [vmem:[%s196 + $0x2a0] sm:$0xff]
        %v5239 = vld [vmem:[%s196 + $0x2a8] sm:$0xff]
        %v5240 = vld [vmem:[%s196 + $0x2b0] sm:$0xff]
        %v5241 = vld [vmem:[%s196 + $0x2b8] sm:$0xff]
        %v5242 = vld [vmem:[%s196 + $0x2c0] sm:$0xff]
        %v5243 = vld [vmem:[%s196 + $0x2c8] sm:$0xff]
        %v5244 = vld [vmem:[%s196 + $0x2d0] sm:$0xff]
        %v5245 = vld [vmem:[%s196 + $0x2d8] sm:$0xff]
        %v5246 = vld [vmem:[%s196 + $0x2e0] sm:$0xff]
        %v5247 = vld [vmem:[%s196 + $0x2e8] sm:$0xff]
        %v5248 = vld [vmem:[%s196 + $0x2f0] sm:$0xff]
        %v5249 = vld [vmem:[%s196 + $0x2f8] sm:$0xff]
        %v5250 = vld [vmem:[%s196 + $0x300] sm:$0xff]
        %v5251 = vld [vmem:[%s196 + $0x308] sm:$0xff]
        %v5252 = vld [vmem:[%s196 + $0x310] sm:$0xff]
        %v5253 = vld [vmem:[%s196 + $0x318] sm:$0xff]
        %v5254 = vld [vmem:[%s196 + $0x320] sm:$0xff]
        %v5255 = vld [vmem:[%s196 + $0x328] sm:$0xff]
        %v5256 = vld [vmem:[%s196 + $0x330] sm:$0xff]
        %v5257 = vld [vmem:[%s196 + $0x338] sm:$0xff]
        %v5258 = vld [vmem:[%s196 + $0x340] sm:$0xff]
        %v5259 = vld [vmem:[%s196 + $0x348] sm:$0xff]
        %v5260 = vld [vmem:[%s196 + $0x350] sm:$0xff]
        %v5261 = vld [vmem:[%s196 + $0x358] sm:$0xff]
        %v5262 = vld [vmem:[%s196 + $0x360] sm:$0xff]
        %v5263 = vld [vmem:[%s196 + $0x368] sm:$0xff]
        %v5264 = vld [vmem:[%s196 + $0x370] sm:$0xff]
        %v5265 = vld [vmem:[%s196 + $0x378] sm:$0xff]
        %v5266 = vld [vmem:[%s196 + $0x380] sm:$0xff]
        %v5267 = vld [vmem:[%s196 + $0x388] sm:$0xff]
        %v5268 = vld [vmem:[%s196 + $0x390] sm:$0xff]
        %v5269 = vld [vmem:[%s196 + $0x398] sm:$0xff]
        %v5270 = vld [vmem:[%s196 + $0x3a0] sm:$0xff]
        %v5271 = vld [vmem:[%s196 + $0x3a8] sm:$0xff]
        %v5272 = vld [vmem:[%s196 + $0x3b0] sm:$0xff]
        %v5273 = vld [vmem:[%s196 + $0x3b8] sm:$0xff]
        %v5274 = vld [vmem:[%s196 + $0x3c0] sm:$0xff]
        %v5275 = vld [vmem:[%s196 + $0x3c8] sm:$0xff]
        %v5276 = vld [vmem:[%s196 + $0x3d0] sm:$0xff]
        %v5277 = vld [vmem:[%s196 + $0x3d8] sm:$0xff]
        %v5278 = vld [vmem:[%s196 + $0x3e0] sm:$0xff]
        %v5279 = vld [vmem:[%s196 + $0x3e8] sm:$0xff]
        %v5280 = vld [vmem:[%s196 + $0x3f0] sm:$0xff]
        %v5281 = vld [vmem:[%s196 + $0x3f8] sm:$0xff]
        %v5282 = vld [vmem:[%s196 + $0x400] sm:$0xff]
        %v5283 = vld [vmem:[%s196 + $0x408] sm:$0xff]
        %v5284 = vld [vmem:[%s196 + $0x410] sm:$0xff]
        %v5285 = vld [vmem:[%s196 + $0x418] sm:$0xff]
        %v5286 = vld [vmem:[%s196 + $0x420] sm:$0xff]
        %v5287 = vld [vmem:[%s196 + $0x428] sm:$0xff]
        %v5288 = vld [vmem:[%s196 + $0x430] sm:$0xff]
        %v5289 = vld [vmem:[%s196 + $0x438] sm:$0xff]
        %v5290 = vld [vmem:[%s196 + $0x440] sm:$0xff]
        %v5291 = vld [vmem:[%s196 + $0x448] sm:$0xff]
        %v5292 = vld [vmem:[%s196 + $0x450] sm:$0xff]
        %v5293 = vld [vmem:[%s196 + $0x458] sm:$0xff]
        %v5294 = vld [vmem:[%s196 + $0x460] sm:$0xff]
        %v5295 = vld [vmem:[%s196 + $0x468] sm:$0xff]
        %v5296 = vld [vmem:[%s196 + $0x470] sm:$0xff]
        %v5297 = vld [vmem:[%s196 + $0x478] sm:$0xff]
        %v5298 = vld [vmem:[%s196 + $0x480] sm:$0xff]
        %v5299 = vld [vmem:[%s196 + $0x488] sm:$0xff]
        %v5300 = vld [vmem:[%s196 + $0x490] sm:$0xff]
        %v5301 = vld [vmem:[%s196 + $0x498] sm:$0xff]
        %v5302 = vld [vmem:[%s196 + $0x4a0] sm:$0xff]
        %v5303 = vld [vmem:[%s196 + $0x4a8] sm:$0xff]
        %v5304 = vld [vmem:[%s196 + $0x4b0] sm:$0xff]
        %v5305 = vld [vmem:[%s196 + $0x4b8] sm:$0xff]
        %v5306 = vld [vmem:[%s196 + $0x4c0] sm:$0xff]
        %v5307 = vld [vmem:[%s196 + $0x4c8] sm:$0xff]
        %v5308 = vld [vmem:[%s196 + $0x4d0] sm:$0xff]
        %v5309 = vld [vmem:[%s196 + $0x4d8] sm:$0xff]
        %v5310 = vld [vmem:[%s196 + $0x4e0] sm:$0xff]
        %v5311 = vld [vmem:[%s196 + $0x4e8] sm:$0xff]
        %v5312 = vld [vmem:[%s196 + $0x4f0] sm:$0xff]
        %v5313 = vld [vmem:[%s196 + $0x4f8] sm:$0xff]
        %v5314 = vld [vmem:[%s196 + $0x500] sm:$0xff]
        %v5315 = vld [vmem:[%s196 + $0x508] sm:$0xff]
        %v5316 = vld [vmem:[%s196 + $0x510] sm:$0xff]
        %v5317 = vld [vmem:[%s196 + $0x518] sm:$0xff]
        %v5318 = vld [vmem:[%s196 + $0x520] sm:$0xff]
        %5474 = vrot.lane.b32.xlu0 %v5164, 24
        %v5475 = vpop.permute.xlu0 %5474
        %5476 = vrot.lane.b32.xlu0 %v5165, 24
        %v5477 = vpop.permute.xlu0 %5476
        %5478 = vrot.lane.b32.xlu0 %v5166, 24
        %v5479 = vpop.permute.xlu0 %5478
        %5480 = vrot.lane.b32.xlu0 %v5167, 24
        %v5481 = vpop.permute.xlu0 %5480
        %5482 = vrot.lane.b32.xlu0 %v5168, 24
        %v5483 = vpop.permute.xlu0 %5482
        %5484 = vrot.lane.b32.xlu0 %v5169, 24
        %v5485 = vpop.permute.xlu0 %5484
        %5486 = vrot.lane.b32.xlu0 %v5170, 24
        %v5487 = vpop.permute.xlu0 %5486
        %5488 = vrot.lane.b32.xlu0 %v5171, 24
        %v5489 = vpop.permute.xlu0 %5488
        %5490 = vrot.lane.b32.xlu0 %v5172, 24
        %v5491 = vpop.permute.xlu0 %5490
        %5492 = vrot.lane.b32.xlu0 %v5173, 24
        %v5493 = vpop.permute.xlu0 %5492
        %5494 = vrot.lane.b32.xlu0 %v5174, 24
        %v5495 = vpop.permute.xlu0 %5494
        %5496 = vrot.lane.b32.xlu0 %v5175, 24
        %v5497 = vpop.permute.xlu0 %5496
        %5498 = vrot.lane.b32.xlu0 %v5176, 24
        %v5499 = vpop.permute.xlu0 %5498
        %5500 = vrot.lane.b32.xlu0 %v5177, 24
        %v5501 = vpop.permute.xlu0 %5500
        %5502 = vrot.lane.b32.xlu0 %v5178, 24
        %v5503 = vpop.permute.xlu0 %5502
        %5504 = vrot.lane.b32.xlu0 %v5179, 24
        %v5505 = vpop.permute.xlu0 %5504
        %5506 = vrot.lane.b32.xlu0 %v5180, 24
        %v5507 = vpop.permute.xlu0 %5506
        %5508 = vrot.lane.b32.xlu0 %v5181, 24
        %v5509 = vpop.permute.xlu0 %5508
        %5510 = vrot.lane.b32.xlu0 %v5182, 24
        %v5511 = vpop.permute.xlu0 %5510
        %5512 = vrot.lane.b32.xlu0 %v5183, 24
        %v5513 = vpop.permute.xlu0 %5512
        %5514 = vrot.lane.b32.xlu0 %v5184, 24
        %v5515 = vpop.permute.xlu0 %5514
        %5516 = vrot.lane.b32.xlu0 %v5185, 24
        %v5517 = vpop.permute.xlu0 %5516
        %5518 = vrot.lane.b32.xlu0 %v5186, 24
        %v5519 = vpop.permute.xlu0 %5518
        %5520 = vrot.lane.b32.xlu0 %v5187, 24
        %v5521 = vpop.permute.xlu0 %5520
        %5522 = vrot.lane.b32.xlu0 %v5188, 24
        %v5523 = vpop.permute.xlu0 %5522
        %5524 = vrot.lane.b32.xlu0 %v5189, 24
        %v5525 = vpop.permute.xlu0 %5524
        %5526 = vrot.lane.b32.xlu0 %v5190, 24
        %v5527 = vpop.permute.xlu0 %5526
        %5528 = vrot.lane.b32.xlu0 %v5191, 24
        %v5529 = vpop.permute.xlu0 %5528
        %5530 = vrot.lane.b32.xlu0 %v5192, 24
        %v5531 = vpop.permute.xlu0 %5530
        %5532 = vrot.lane.b32.xlu0 %v5193, 24
        %v5533 = vpop.permute.xlu0 %5532
        %5534 = vrot.lane.b32.xlu0 %v5194, 24
        %v5535 = vpop.permute.xlu0 %5534
        %5536 = vrot.lane.b32.xlu0 %v5195, 24
        %v5537 = vpop.permute.xlu0 %5536
        %5538 = vrot.lane.b32.xlu0 %v5196, 24
        %v5539 = vpop.permute.xlu0 %5538
        %5540 = vrot.lane.b32.xlu0 %v5197, 24
        %v5541 = vpop.permute.xlu0 %5540
        %5542 = vrot.lane.b32.xlu0 %v5198, 24
        %v5543 = vpop.permute.xlu0 %5542
        %5544 = vrot.lane.b32.xlu0 %v5199, 24
        %v5545 = vpop.permute.xlu0 %5544
        %5546 = vrot.lane.b32.xlu0 %v5200, 24
        %v5547 = vpop.permute.xlu0 %5546
        %5548 = vrot.lane.b32.xlu0 %v5201, 24
        %v5549 = vpop.permute.xlu0 %5548
        %5550 = vrot.lane.b32.xlu0 %v5202, 24
        %v5551 = vpop.permute.xlu0 %5550
        %5552 = vrot.lane.b32.xlu0 %v5203, 24
        %v5553 = vpop.permute.xlu0 %5552
        %5554 = vrot.lane.b32.xlu0 %v5204, 24
        %v5555 = vpop.permute.xlu0 %5554
        %5556 = vrot.lane.b32.xlu0 %v5205, 24
        %v5557 = vpop.permute.xlu0 %5556
        %5558 = vrot.lane.b32.xlu0 %v5206, 24
        %v5559 = vpop.permute.xlu0 %5558
        %5560 = vrot.lane.b32.xlu0 %v5207, 24
        %v5561 = vpop.permute.xlu0 %5560
        %5562 = vrot.lane.b32.xlu0 %v5208, 24
        %v5563 = vpop.permute.xlu0 %5562
        %5564 = vrot.lane.b32.xlu0 %v5209, 24
        %v5565 = vpop.permute.xlu0 %5564
        %5566 = vrot.lane.b32.xlu0 %v5210, 24
        %v5567 = vpop.permute.xlu0 %5566
        %5568 = vrot.lane.b32.xlu0 %v5211, 24
        %v5569 = vpop.permute.xlu0 %5568
        %5570 = vrot.lane.b32.xlu0 %v5212, 24
        %v5571 = vpop.permute.xlu0 %5570
        %5572 = vrot.lane.b32.xlu0 %v5213, 24
        %v5573 = vpop.permute.xlu0 %5572
        %5574 = vrot.lane.b32.xlu0 %v5214, 24
        %v5575 = vpop.permute.xlu0 %5574
        %5576 = vrot.lane.b32.xlu0 %v5215, 24
        %v5577 = vpop.permute.xlu0 %5576
        %5578 = vrot.lane.b32.xlu0 %v5216, 24
        %v5579 = vpop.permute.xlu0 %5578
        %5580 = vrot.lane.b32.xlu0 %v5217, 24
        %v5581 = vpop.permute.xlu0 %5580
        %5582 = vrot.lane.b32.xlu0 %v5218, 24
        %v5583 = vpop.permute.xlu0 %5582
        %5584 = vrot.lane.b32.xlu0 %v5219, 24
        %v5585 = vpop.permute.xlu0 %5584
        %5586 = vrot.lane.b32.xlu0 %v5220, 24
        %v5587 = vpop.permute.xlu0 %5586
        %5588 = vrot.lane.b32.xlu0 %v5221, 24
        %v5589 = vpop.permute.xlu0 %5588
        %5590 = vrot.lane.b32.xlu0 %v5222, 24
        %v5591 = vpop.permute.xlu0 %5590
        %5592 = vrot.lane.b32.xlu0 %v5223, 24
        %v5593 = vpop.permute.xlu0 %5592
        %5594 = vrot.lane.b32.xlu0 %v5224, 24
        %v5595 = vpop.permute.xlu0 %5594
        %5596 = vrot.lane.b32.xlu0 %v5225, 24
        %v5597 = vpop.permute.xlu0 %5596
        %5598 = vrot.lane.b32.xlu0 %v5226, 24
        %v5599 = vpop.permute.xlu0 %5598
        %5600 = vrot.lane.b32.xlu0 %v5227, 24
        %v5601 = vpop.permute.xlu0 %5600
        %5602 = vrot.lane.b32.xlu0 %v5228, 24
        %v5603 = vpop.permute.xlu0 %5602
        %5604 = vrot.lane.b32.xlu0 %v5229, 24
        %v5605 = vpop.permute.xlu0 %5604
        %5606 = vrot.lane.b32.xlu0 %v5230, 24
        %v5607 = vpop.permute.xlu0 %5606
        %5608 = vrot.lane.b32.xlu0 %v5231, 24
        %v5609 = vpop.permute.xlu0 %5608
        %5610 = vrot.lane.b32.xlu0 %v5232, 24
        %v5611 = vpop.permute.xlu0 %5610
        %5612 = vrot.lane.b32.xlu0 %v5233, 24
        %v5613 = vpop.permute.xlu0 %5612
        %5614 = vrot.lane.b32.xlu0 %v5234, 24
        %v5615 = vpop.permute.xlu0 %5614
        %5616 = vrot.lane.b32.xlu0 %v5235, 24
        %v5617 = vpop.permute.xlu0 %5616
        %5618 = vrot.lane.b32.xlu0 %v5236, 24
        %v5619 = vpop.permute.xlu0 %5618
        %5620 = vrot.lane.b32.xlu0 %v5237, 24
        %v5621 = vpop.permute.xlu0 %5620
        %5622 = vrot.lane.b32.xlu0 %v5238, 24
        %v5623 = vpop.permute.xlu0 %5622
        %5624 = vrot.lane.b32.xlu0 %v5239, 24
        %v5625 = vpop.permute.xlu0 %5624
        %5626 = vrot.lane.b32.xlu0 %v5240, 24
        %v5627 = vpop.permute.xlu0 %5626
        %5628 = vrot.lane.b32.xlu0 %v5241, 24
        %v5629 = vpop.permute.xlu0 %5628
        %5630 = vrot.lane.b32.xlu0 %v5242, 24
        %v5631 = vpop.permute.xlu0 %5630
        %5632 = vrot.lane.b32.xlu0 %v5243, 24
        %v5633 = vpop.permute.xlu0 %5632
        %5634 = vrot.lane.b32.xlu0 %v5244, 24
        %v5635 = vpop.permute.xlu0 %5634
        %5636 = vrot.lane.b32.xlu0 %v5245, 24
        %v5637 = vpop.permute.xlu0 %5636
        %5638 = vrot.lane.b32.xlu0 %v5246, 24
        %v5639 = vpop.permute.xlu0 %5638
        %5640 = vrot.lane.b32.xlu0 %v5247, 24
        %v5641 = vpop.permute.xlu0 %5640
        %5642 = vrot.lane.b32.xlu0 %v5248, 24
        %v5643 = vpop.permute.xlu0 %5642
        %5644 = vrot.lane.b32.xlu0 %v5249, 24
        %v5645 = vpop.permute.xlu0 %5644
        %5646 = vrot.lane.b32.xlu0 %v5250, 24
        %v5647 = vpop.permute.xlu0 %5646
        %5648 = vrot.lane.b32.xlu0 %v5251, 24
        %v5649 = vpop.permute.xlu0 %5648
        %5650 = vrot.lane.b32.xlu0 %v5252, 24
        %v5651 = vpop.permute.xlu0 %5650
        %5652 = vrot.lane.b32.xlu0 %v5253, 24
        %v5653 = vpop.permute.xlu0 %5652
        %5654 = vrot.lane.b32.xlu0 %v5254, 24
        %v5655 = vpop.permute.xlu0 %5654
        %5656 = vrot.lane.b32.xlu0 %v5255, 24
        %v5657 = vpop.permute.xlu0 %5656
        %5658 = vrot.lane.b32.xlu0 %v5256, 24
        %v5659 = vpop.permute.xlu0 %5658
        %5660 = vrot.lane.b32.xlu0 %v5257, 24
        %v5661 = vpop.permute.xlu0 %5660
        %5662 = vrot.lane.b32.xlu0 %v5258, 24
        %v5663 = vpop.permute.xlu0 %5662
        %5664 = vrot.lane.b32.xlu0 %v5259, 24
        %v5665 = vpop.permute.xlu0 %5664
        %5666 = vrot.lane.b32.xlu0 %v5260, 24
        %v5667 = vpop.permute.xlu0 %5666
        %5668 = vrot.lane.b32.xlu0 %v5261, 24
        %v5669 = vpop.permute.xlu0 %5668
        %5670 = vrot.lane.b32.xlu0 %v5262, 24
        %v5671 = vpop.permute.xlu0 %5670
        %5672 = vrot.lane.b32.xlu0 %v5263, 24
        %v5673 = vpop.permute.xlu0 %5672
        %5674 = vrot.lane.b32.xlu0 %v5264, 24
        %v5675 = vpop.permute.xlu0 %5674
        %5676 = vrot.lane.b32.xlu0 %v5265, 24
        %v5677 = vpop.permute.xlu0 %5676
        %5678 = vrot.lane.b32.xlu0 %v5266, 24
        %v5679 = vpop.permute.xlu0 %5678
        %5680 = vrot.lane.b32.xlu0 %v5267, 24
        %v5681 = vpop.permute.xlu0 %5680
        %5682 = vrot.lane.b32.xlu0 %v5268, 24
        %v5683 = vpop.permute.xlu0 %5682
        %5684 = vrot.lane.b32.xlu0 %v5269, 24
        %v5685 = vpop.permute.xlu0 %5684
        %5686 = vrot.lane.b32.xlu0 %v5270, 24
        %v5687 = vpop.permute.xlu0 %5686
        %5688 = vrot.lane.b32.xlu0 %v5271, 24
        %v5689 = vpop.permute.xlu0 %5688
        %5690 = vrot.lane.b32.xlu0 %v5272, 24
        %v5691 = vpop.permute.xlu0 %5690
        %5692 = vrot.lane.b32.xlu0 %v5273, 24
        %v5693 = vpop.permute.xlu0 %5692
        %5694 = vrot.lane.b32.xlu0 %v5274, 24
        %v5695 = vpop.permute.xlu0 %5694
        %5696 = vrot.lane.b32.xlu0 %v5275, 24
        %v5697 = vpop.permute.xlu0 %5696
        %5698 = vrot.lane.b32.xlu0 %v5276, 24
        %v5699 = vpop.permute.xlu0 %5698
        %5700 = vrot.lane.b32.xlu0 %v5277, 24
        %v5701 = vpop.permute.xlu0 %5700
        %5702 = vrot.lane.b32.xlu0 %v5278, 24
        %v5703 = vpop.permute.xlu0 %5702
        %5704 = vrot.lane.b32.xlu0 %v5279, 24
        %v5705 = vpop.permute.xlu0 %5704
        %5706 = vrot.lane.b32.xlu0 %v5280, 24
        %v5707 = vpop.permute.xlu0 %5706
        %5708 = vrot.lane.b32.xlu0 %v5281, 24
        %v5709 = vpop.permute.xlu0 %5708
        %5710 = vrot.lane.b32.xlu0 %v5282, 24
        %v5711 = vpop.permute.xlu0 %5710
        %5712 = vrot.lane.b32.xlu0 %v5283, 24
        %v5713 = vpop.permute.xlu0 %5712
        %5714 = vrot.lane.b32.xlu0 %v5284, 24
        %v5715 = vpop.permute.xlu0 %5714
        %5716 = vrot.lane.b32.xlu0 %v5285, 24
        %v5717 = vpop.permute.xlu0 %5716
        %5718 = vrot.lane.b32.xlu0 %v5286, 24
        %v5719 = vpop.permute.xlu0 %5718
        %5720 = vrot.lane.b32.xlu0 %v5287, 24
        %v5721 = vpop.permute.xlu0 %5720
        %5722 = vrot.lane.b32.xlu0 %v5288, 24
        %v5723 = vpop.permute.xlu0 %5722
        %5724 = vrot.lane.b32.xlu0 %v5289, 24
        %v5725 = vpop.permute.xlu0 %5724
        %5726 = vrot.lane.b32.xlu0 %v5290, 24
        %v5727 = vpop.permute.xlu0 %5726
        %5728 = vrot.lane.b32.xlu0 %v5291, 24
        %v5729 = vpop.permute.xlu0 %5728
        %5730 = vrot.lane.b32.xlu0 %v5292, 24
        %v5731 = vpop.permute.xlu0 %5730
        %5732 = vrot.lane.b32.xlu0 %v5293, 24
        %v5733 = vpop.permute.xlu0 %5732
        %5734 = vrot.lane.b32.xlu0 %v5294, 24
        %v5735 = vpop.permute.xlu0 %5734
        %5736 = vrot.lane.b32.xlu0 %v5295, 24
        %v5737 = vpop.permute.xlu0 %5736
        %5738 = vrot.lane.b32.xlu0 %v5296, 24
        %v5739 = vpop.permute.xlu0 %5738
        %5740 = vrot.lane.b32.xlu0 %v5297, 24
        %v5741 = vpop.permute.xlu0 %5740
        %5742 = vrot.lane.b32.xlu0 %v5298, 24
        %v5743 = vpop.permute.xlu0 %5742
        %5744 = vrot.lane.b32.xlu0 %v5299, 24
        %v5745 = vpop.permute.xlu0 %5744
        %5746 = vrot.lane.b32.xlu0 %v5300, 24
        %v5747 = vpop.permute.xlu0 %5746
        %5748 = vrot.lane.b32.xlu0 %v5301, 24
        %v5749 = vpop.permute.xlu0 %5748
        %5750 = vrot.lane.b32.xlu0 %v5302, 24
        %v5751 = vpop.permute.xlu0 %5750
        %5752 = vrot.lane.b32.xlu0 %v5303, 24
        %v5753 = vpop.permute.xlu0 %5752
        %5754 = vrot.lane.b32.xlu0 %v5304, 24
        %v5755 = vpop.permute.xlu0 %5754
        %5756 = vrot.lane.b32.xlu0 %v5305, 24
        %v5757 = vpop.permute.xlu0 %5756
        %5758 = vrot.lane.b32.xlu0 %v5306, 24
        %v5759 = vpop.permute.xlu0 %5758
        %5760 = vrot.lane.b32.xlu0 %v5307, 24
        %v5761 = vpop.permute.xlu0 %5760
        %5762 = vrot.lane.b32.xlu0 %v5308, 24
        %v5763 = vpop.permute.xlu0 %5762
        %5764 = vrot.lane.b32.xlu0 %v5309, 24
        %v5765 = vpop.permute.xlu0 %5764
        %5766 = vrot.lane.b32.xlu0 %v5310, 24
        %v5767 = vpop.permute.xlu0 %5766
        %5768 = vrot.lane.b32.xlu0 %v5311, 24
        %v5769 = vpop.permute.xlu0 %5768
        %5770 = vrot.lane.b32.xlu0 %v5312, 24
        %v5771 = vpop.permute.xlu0 %5770
        %5772 = vrot.lane.b32.xlu0 %v5313, 24
        %v5773 = vpop.permute.xlu0 %5772
        %5774 = vrot.lane.b32.xlu0 %v5314, 24
        %v5775 = vpop.permute.xlu0 %5774
        %5776 = vrot.lane.b32.xlu0 %v5315, 24
        %v5777 = vpop.permute.xlu0 %5776
        %5778 = vrot.lane.b32.xlu0 %v5316, 24
        %v5779 = vpop.permute.xlu0 %5778
        %5780 = vrot.lane.b32.xlu0 %v5317, 24
        %v5781 = vpop.permute.xlu0 %5780
        %5782 = vrot.lane.b32.xlu0 %v5318, 24
        %v5783 = vpop.permute.xlu0 %5782
        %vm5939 = vcmask 228544
        %5940 = vst.msk [vmem:[#allocation2] sm:$0xff] %vm5939, %v5475
        %5941 = vst.msk [vmem:[#allocation2 + $0x8] sm:$0xff] %vm5939, %v5477
        %5942 = vst.msk [vmem:[#allocation2 + $0x10] sm:$0xff] %vm5939, %v5479
        %5943 = vst.msk [vmem:[#allocation2 + $0x18] sm:$0xff] %vm5939, %v5481
        %5944 = vst.msk [vmem:[#allocation2 + $0x20] sm:$0xff] %vm5939, %v5483
        %5945 = vst.msk [vmem:[#allocation2 + $0x28] sm:$0xff] %vm5939, %v5485
        %5946 = vst.msk [vmem:[#allocation2 + $0x30] sm:$0xff] %vm5939, %v5487
        %5947 = vst.msk [vmem:[#allocation2 + $0x38] sm:$0xff] %vm5939, %v5489
        %5948 = vst.msk [vmem:[#allocation2 + $0x40] sm:$0xff] %vm5939, %v5491
        %5949 = vst.msk [vmem:[#allocation2 + $0x48] sm:$0xff] %vm5939, %v5493
        %5950 = vst.msk [vmem:[#allocation2 + $0x50] sm:$0xff] %vm5939, %v5495
        %5951 = vst.msk [vmem:[#allocation2 + $0x58] sm:$0xff] %vm5939, %v5497
        %5952 = vst.msk [vmem:[#allocation2 + $0x60] sm:$0xff] %vm5939, %v5499
        %5953 = vst.msk [vmem:[#allocation2 + $0x68] sm:$0xff] %vm5939, %v5501
        %5954 = vst.msk [vmem:[#allocation2 + $0x70] sm:$0xff] %vm5939, %v5503
        %5955 = vst.msk [vmem:[#allocation2 + $0x78] sm:$0xff] %vm5939, %v5505
        %5956 = vst.msk [vmem:[#allocation2 + $0x80] sm:$0xff] %vm5939, %v5507
        %5957 = vst.msk [vmem:[#allocation2 + $0x88] sm:$0xff] %vm5939, %v5509
        %5958 = vst.msk [vmem:[#allocation2 + $0x90] sm:$0xff] %vm5939, %v5511
        %5959 = vst.msk [vmem:[#allocation2 + $0x98] sm:$0xff] %vm5939, %v5513
        %5960 = vst.msk [vmem:[#allocation2 + $0xa0] sm:$0xff] %vm5939, %v5515
        %5961 = vst.msk [vmem:[#allocation2 + $0xa8] sm:$0xff] %vm5939, %v5517
        %5962 = vst.msk [vmem:[#allocation2 + $0xb0] sm:$0xff] %vm5939, %v5519
        %5963 = vst.msk [vmem:[#allocation2 + $0xb8] sm:$0xff] %vm5939, %v5521
        %5964 = vst.msk [vmem:[#allocation2 + $0xc0] sm:$0xff] %vm5939, %v5523
        %5965 = vst.msk [vmem:[#allocation2 + $0xc8] sm:$0xff] %vm5939, %v5525
        %5966 = vst.msk [vmem:[#allocation2 + $0xd0] sm:$0xff] %vm5939, %v5527
        %5967 = vst.msk [vmem:[#allocation2 + $0xd8] sm:$0xff] %vm5939, %v5529
        %5968 = vst.msk [vmem:[#allocation2 + $0xe0] sm:$0xff] %vm5939, %v5531
        %5969 = vst.msk [vmem:[#allocation2 + $0xe8] sm:$0xff] %vm5939, %v5533
        %5970 = vst.msk [vmem:[#allocation2 + $0xf0] sm:$0xff] %vm5939, %v5535
        %5971 = vst.msk [vmem:[#allocation2 + $0xf8] sm:$0xff] %vm5939, %v5537
        %5972 = vst.msk [vmem:[#allocation2 + $0x100] sm:$0xff] %vm5939, %v5539
        %5973 = vst.msk [vmem:[#allocation2 + $0x108] sm:$0xff] %vm5939, %v5541
        %5974 = vst.msk [vmem:[#allocation2 + $0x110] sm:$0xff] %vm5939, %v5543
        %5975 = vst.msk [vmem:[#allocation2 + $0x118] sm:$0xff] %vm5939, %v5545
        %5976 = vst.msk [vmem:[#allocation2 + $0x120] sm:$0xff] %vm5939, %v5547
        %5977 = vst.msk [vmem:[#allocation2 + $0x128] sm:$0xff] %vm5939, %v5549
        %5978 = vst.msk [vmem:[#allocation2 + $0x130] sm:$0xff] %vm5939, %v5551
        %5979 = vst.msk [vmem:[#allocation2 + $0x138] sm:$0xff] %vm5939, %v5553
        %5980 = vst.msk [vmem:[#allocation2 + $0x140] sm:$0xff] %vm5939, %v5555
        %5981 = vst.msk [vmem:[#allocation2 + $0x148] sm:$0xff] %vm5939, %v5557
        %5982 = vst.msk [vmem:[#allocation2 + $0x150] sm:$0xff] %vm5939, %v5559
        %5983 = vst.msk [vmem:[#allocation2 + $0x158] sm:$0xff] %vm5939, %v5561
        %5984 = vst.msk [vmem:[#allocation2 + $0x160] sm:$0xff] %vm5939, %v5563
        %5985 = vst.msk [vmem:[#allocation2 + $0x168] sm:$0xff] %vm5939, %v5565
        %5986 = vst.msk [vmem:[#allocation2 + $0x170] sm:$0xff] %vm5939, %v5567
        %5987 = vst.msk [vmem:[#allocation2 + $0x178] sm:$0xff] %vm5939, %v5569
        %5988 = vst.msk [vmem:[#allocation2 + $0x180] sm:$0xff] %vm5939, %v5571
        %5989 = vst.msk [vmem:[#allocation2 + $0x188] sm:$0xff] %vm5939, %v5573
        %5990 = vst.msk [vmem:[#allocation2 + $0x190] sm:$0xff] %vm5939, %v5575
        %5991 = vst.msk [vmem:[#allocation2 + $0x198] sm:$0xff] %vm5939, %v5577
        %5992 = vst.msk [vmem:[#allocation2 + $0x1a0] sm:$0xff] %vm5939, %v5579
        %5993 = vst.msk [vmem:[#allocation2 + $0x1a8] sm:$0xff] %vm5939, %v5581
        %5994 = vst.msk [vmem:[#allocation2 + $0x1b0] sm:$0xff] %vm5939, %v5583
        %5995 = vst.msk [vmem:[#allocation2 + $0x1b8] sm:$0xff] %vm5939, %v5585
        %5996 = vst.msk [vmem:[#allocation2 + $0x1c0] sm:$0xff] %vm5939, %v5587
        %5997 = vst.msk [vmem:[#allocation2 + $0x1c8] sm:$0xff] %vm5939, %v5589
        %5998 = vst.msk [vmem:[#allocation2 + $0x1d0] sm:$0xff] %vm5939, %v5591
        %5999 = vst.msk [vmem:[#allocation2 + $0x1d8] sm:$0xff] %vm5939, %v5593
        %6000 = vst.msk [vmem:[#allocation2 + $0x1e0] sm:$0xff] %vm5939, %v5595
        %6001 = vst.msk [vmem:[#allocation2 + $0x1e8] sm:$0xff] %vm5939, %v5597
        %6002 = vst.msk [vmem:[#allocation2 + $0x1f0] sm:$0xff] %vm5939, %v5599
        %6003 = vst.msk [vmem:[#allocation2 + $0x1f8] sm:$0xff] %vm5939, %v5601
        %6004 = vst.msk [vmem:[#allocation2 + $0x200] sm:$0xff] %vm5939, %v5603
        %6005 = vst.msk [vmem:[#allocation2 + $0x208] sm:$0xff] %vm5939, %v5605
        %6006 = vst.msk [vmem:[#allocation2 + $0x210] sm:$0xff] %vm5939, %v5607
        %6007 = vst.msk [vmem:[#allocation2 + $0x218] sm:$0xff] %vm5939, %v5609
        %6008 = vst.msk [vmem:[#allocation2 + $0x220] sm:$0xff] %vm5939, %v5611
        %6009 = vst.msk [vmem:[#allocation2 + $0x228] sm:$0xff] %vm5939, %v5613
        %6010 = vst.msk [vmem:[#allocation2 + $0x230] sm:$0xff] %vm5939, %v5615
        %6011 = vst.msk [vmem:[#allocation2 + $0x238] sm:$0xff] %vm5939, %v5617
        %6012 = vst.msk [vmem:[#allocation2 + $0x240] sm:$0xff] %vm5939, %v5619
        %6013 = vst.msk [vmem:[#allocation2 + $0x248] sm:$0xff] %vm5939, %v5621
        %6014 = vst.msk [vmem:[#allocation2 + $0x250] sm:$0xff] %vm5939, %v5623
        %6015 = vst.msk [vmem:[#allocation2 + $0x258] sm:$0xff] %vm5939, %v5625
        %6016 = vst.msk [vmem:[#allocation2 + $0x260] sm:$0xff] %vm5939, %v5627
        %6017 = vst.msk [vmem:[#allocation2 + $0x268] sm:$0xff] %vm5939, %v5629
        %6018 = vst.msk [vmem:[#allocation2 + $0x270] sm:$0xff] %vm5939, %v5631
        %6019 = vst.msk [vmem:[#allocation2 + $0x278] sm:$0xff] %vm5939, %v5633
        %6020 = vst.msk [vmem:[#allocation2 + $0x280] sm:$0xff] %vm5939, %v5635
        %6021 = vst.msk [vmem:[#allocation2 + $0x288] sm:$0xff] %vm5939, %v5637
        %6022 = vst.msk [vmem:[#allocation2 + $0x290] sm:$0xff] %vm5939, %v5639
        %6023 = vst.msk [vmem:[#allocation2 + $0x298] sm:$0xff] %vm5939, %v5641
        %6024 = vst.msk [vmem:[#allocation2 + $0x2a0] sm:$0xff] %vm5939, %v5643
        %6025 = vst.msk [vmem:[#allocation2 + $0x2a8] sm:$0xff] %vm5939, %v5645
        %6026 = vst.msk [vmem:[#allocation2 + $0x2b0] sm:$0xff] %vm5939, %v5647
        %6027 = vst.msk [vmem:[#allocation2 + $0x2b8] sm:$0xff] %vm5939, %v5649
        %6028 = vst.msk [vmem:[#allocation2 + $0x2c0] sm:$0xff] %vm5939, %v5651
        %6029 = vst.msk [vmem:[#allocation2 + $0x2c8] sm:$0xff] %vm5939, %v5653
        %6030 = vst.msk [vmem:[#allocation2 + $0x2d0] sm:$0xff] %vm5939, %v5655
        %6031 = vst.msk [vmem:[#allocation2 + $0x2d8] sm:$0xff] %vm5939, %v5657
        %6032 = vst.msk [vmem:[#allocation2 + $0x2e0] sm:$0xff] %vm5939, %v5659
        %6033 = vst.msk [vmem:[#allocation2 + $0x2e8] sm:$0xff] %vm5939, %v5661
        %6034 = vst.msk [vmem:[#allocation2 + $0x2f0] sm:$0xff] %vm5939, %v5663
        %6035 = vst.msk [vmem:[#allocation2 + $0x2f8] sm:$0xff] %vm5939, %v5665
        %6036 = vst.msk [vmem:[#allocation2 + $0x300] sm:$0xff] %vm5939, %v5667
        %6037 = vst.msk [vmem:[#allocation2 + $0x308] sm:$0xff] %vm5939, %v5669
        %6038 = vst.msk [vmem:[#allocation2 + $0x310] sm:$0xff] %vm5939, %v5671
        %6039 = vst.msk [vmem:[#allocation2 + $0x318] sm:$0xff] %vm5939, %v5673
        %6040 = vst.msk [vmem:[#allocation2 + $0x320] sm:$0xff] %vm5939, %v5675
        %6041 = vst.msk [vmem:[#allocation2 + $0x328] sm:$0xff] %vm5939, %v5677
        %6042 = vst.msk [vmem:[#allocation2 + $0x330] sm:$0xff] %vm5939, %v5679
        %6043 = vst.msk [vmem:[#allocation2 + $0x338] sm:$0xff] %vm5939, %v5681
        %6044 = vst.msk [vmem:[#allocation2 + $0x340] sm:$0xff] %vm5939, %v5683
        %6045 = vst.msk [vmem:[#allocation2 + $0x348] sm:$0xff] %vm5939, %v5685
        %6046 = vst.msk [vmem:[#allocation2 + $0x350] sm:$0xff] %vm5939, %v5687
        %6047 = vst.msk [vmem:[#allocation2 + $0x358] sm:$0xff] %vm5939, %v5689
        %6048 = vst.msk [vmem:[#allocation2 + $0x360] sm:$0xff] %vm5939, %v5691
        %6049 = vst.msk [vmem:[#allocation2 + $0x368] sm:$0xff] %vm5939, %v5693
        %6050 = vst.msk [vmem:[#allocation2 + $0x370] sm:$0xff] %vm5939, %v5695
        %6051 = vst.msk [vmem:[#allocation2 + $0x378] sm:$0xff] %vm5939, %v5697
        %6052 = vst.msk [vmem:[#allocation2 + $0x380] sm:$0xff] %vm5939, %v5699
        %6053 = vst.msk [vmem:[#allocation2 + $0x388] sm:$0xff] %vm5939, %v5701
        %6054 = vst.msk [vmem:[#allocation2 + $0x390] sm:$0xff] %vm5939, %v5703
        %6055 = vst.msk [vmem:[#allocation2 + $0x398] sm:$0xff] %vm5939, %v5705
        %6056 = vst.msk [vmem:[#allocation2 + $0x3a0] sm:$0xff] %vm5939, %v5707
        %6057 = vst.msk [vmem:[#allocation2 + $0x3a8] sm:$0xff] %vm5939, %v5709
        %6058 = vst.msk [vmem:[#allocation2 + $0x3b0] sm:$0xff] %vm5939, %v5711
        %6059 = vst.msk [vmem:[#allocation2 + $0x3b8] sm:$0xff] %vm5939, %v5713
        %6060 = vst.msk [vmem:[#allocation2 + $0x3c0] sm:$0xff] %vm5939, %v5715
        %6061 = vst.msk [vmem:[#allocation2 + $0x3c8] sm:$0xff] %vm5939, %v5717
        %6062 = vst.msk [vmem:[#allocation2 + $0x3d0] sm:$0xff] %vm5939, %v5719
        %6063 = vst.msk [vmem:[#allocation2 + $0x3d8] sm:$0xff] %vm5939, %v5721
        %6064 = vst.msk [vmem:[#allocation2 + $0x3e0] sm:$0xff] %vm5939, %v5723
        %6065 = vst.msk [vmem:[#allocation2 + $0x3e8] sm:$0xff] %vm5939, %v5725
        %6066 = vst.msk [vmem:[#allocation2 + $0x3f0] sm:$0xff] %vm5939, %v5727
        %6067 = vst.msk [vmem:[#allocation2 + $0x3f8] sm:$0xff] %vm5939, %v5729
        %6068 = vst.msk [vmem:[#allocation2 + $0x400] sm:$0xff] %vm5939, %v5731
        %6069 = vst.msk [vmem:[#allocation2 + $0x408] sm:$0xff] %vm5939, %v5733
        %6070 = vst.msk [vmem:[#allocation2 + $0x410] sm:$0xff] %vm5939, %v5735
        %6071 = vst.msk [vmem:[#allocation2 + $0x418] sm:$0xff] %vm5939, %v5737
        %6072 = vst.msk [vmem:[#allocation2 + $0x420] sm:$0xff] %vm5939, %v5739
        %6073 = vst.msk [vmem:[#allocation2 + $0x428] sm:$0xff] %vm5939, %v5741
        %6074 = vst.msk [vmem:[#allocation2 + $0x430] sm:$0xff] %vm5939, %v5743
        %6075 = vst.msk [vmem:[#allocation2 + $0x438] sm:$0xff] %vm5939, %v5745
        %6076 = vst.msk [vmem:[#allocation2 + $0x440] sm:$0xff] %vm5939, %v5747
        %6077 = vst.msk [vmem:[#allocation2 + $0x448] sm:$0xff] %vm5939, %v5749
        %6078 = vst.msk [vmem:[#allocation2 + $0x450] sm:$0xff] %vm5939, %v5751
        %6079 = vst.msk [vmem:[#allocation2 + $0x458] sm:$0xff] %vm5939, %v5753
        %6080 = vst.msk [vmem:[#allocation2 + $0x460] sm:$0xff] %vm5939, %v5755
        %6081 = vst.msk [vmem:[#allocation2 + $0x468] sm:$0xff] %vm5939, %v5757
        %6082 = vst.msk [vmem:[#allocation2 + $0x470] sm:$0xff] %vm5939, %v5759
        %6083 = vst.msk [vmem:[#allocation2 + $0x478] sm:$0xff] %vm5939, %v5761
        %6084 = vst.msk [vmem:[#allocation2 + $0x480] sm:$0xff] %vm5939, %v5763
        %6085 = vst.msk [vmem:[#allocation2 + $0x488] sm:$0xff] %vm5939, %v5765
        %6086 = vst.msk [vmem:[#allocation2 + $0x490] sm:$0xff] %vm5939, %v5767
        %6087 = vst.msk [vmem:[#allocation2 + $0x498] sm:$0xff] %vm5939, %v5769
        %6088 = vst.msk [vmem:[#allocation2 + $0x4a0] sm:$0xff] %vm5939, %v5771
        %6089 = vst.msk [vmem:[#allocation2 + $0x4a8] sm:$0xff] %vm5939, %v5773
        %6090 = vst.msk [vmem:[#allocation2 + $0x4b0] sm:$0xff] %vm5939, %v5775
        %6091 = vst.msk [vmem:[#allocation2 + $0x4b8] sm:$0xff] %vm5939, %v5777
        %6092 = vst.msk [vmem:[#allocation2 + $0x4c0] sm:$0xff] %vm5939, %v5779
        %6093 = vst.msk [vmem:[#allocation2 + $0x4c8] sm:$0xff] %vm5939, %v5781
        %6094 = vst.msk [vmem:[#allocation2 + $0x4d0] sm:$0xff] %vm5939, %v5783
        %v6095 = vld [vmem:[%s196 + $0x51] sm:$0xff]
        %v6096 = vld [vmem:[%s196 + $0x59] sm:$0xff]
        %v6097 = vld [vmem:[%s196 + $0x61] sm:$0xff]
        %v6098 = vld [vmem:[%s196 + $0x69] sm:$0xff]
        %v6099 = vld [vmem:[%s196 + $0x71] sm:$0xff]
        %v6100 = vld [vmem:[%s196 + $0x79] sm:$0xff]
        %v6101 = vld [vmem:[%s196 + $0x81] sm:$0xff]
        %v6102 = vld [vmem:[%s196 + $0x89] sm:$0xff]
        %v6103 = vld [vmem:[%s196 + $0x91] sm:$0xff]
        %v6104 = vld [vmem:[%s196 + $0x99] sm:$0xff]
        %v6105 = vld [vmem:[%s196 + $0xa1] sm:$0xff]
        %v6106 = vld [vmem:[%s196 + $0xa9] sm:$0xff]
        %v6107 = vld [vmem:[%s196 + $0xb1] sm:$0xff]
        %v6108 = vld [vmem:[%s196 + $0xb9] sm:$0xff]
        %v6109 = vld [vmem:[%s196 + $0xc1] sm:$0xff]
        %v6110 = vld [vmem:[%s196 + $0xc9] sm:$0xff]
        %v6111 = vld [vmem:[%s196 + $0xd1] sm:$0xff]
        %v6112 = vld [vmem:[%s196 + $0xd9] sm:$0xff]
        %v6113 = vld [vmem:[%s196 + $0xe1] sm:$0xff]
        %v6114 = vld [vmem:[%s196 + $0xe9] sm:$0xff]
        %v6115 = vld [vmem:[%s196 + $0xf1] sm:$0xff]
        %v6116 = vld [vmem:[%s196 + $0xf9] sm:$0xff]
        %v6117 = vld [vmem:[%s196 + $0x101] sm:$0xff]
        %v6118 = vld [vmem:[%s196 + $0x109] sm:$0xff]
        %v6119 = vld [vmem:[%s196 + $0x111] sm:$0xff]
        %v6120 = vld [vmem:[%s196 + $0x119] sm:$0xff]
        %v6121 = vld [vmem:[%s196 + $0x121] sm:$0xff]
        %v6122 = vld [vmem:[%s196 + $0x129] sm:$0xff]
        %v6123 = vld [vmem:[%s196 + $0x131] sm:$0xff]
        %v6124 = vld [vmem:[%s196 + $0x139] sm:$0xff]
        %v6125 = vld [vmem:[%s196 + $0x141] sm:$0xff]
        %v6126 = vld [vmem:[%s196 + $0x149] sm:$0xff]
        %v6127 = vld [vmem:[%s196 + $0x151] sm:$0xff]
        %v6128 = vld [vmem:[%s196 + $0x159] sm:$0xff]
        %v6129 = vld [vmem:[%s196 + $0x161] sm:$0xff]
        %v6130 = vld [vmem:[%s196 + $0x169] sm:$0xff]
        %v6131 = vld [vmem:[%s196 + $0x171] sm:$0xff]
        %v6132 = vld [vmem:[%s196 + $0x179] sm:$0xff]
        %v6133 = vld [vmem:[%s196 + $0x181] sm:$0xff]
        %v6134 = vld [vmem:[%s196 + $0x189] sm:$0xff]
        %v6135 = vld [vmem:[%s196 + $0x191] sm:$0xff]
        %v6136 = vld [vmem:[%s196 + $0x199] sm:$0xff]
        %v6137 = vld [vmem:[%s196 + $0x1a1] sm:$0xff]
        %v6138 = vld [vmem:[%s196 + $0x1a9] sm:$0xff]
        %v6139 = vld [vmem:[%s196 + $0x1b1] sm:$0xff]
        %v6140 = vld [vmem:[%s196 + $0x1b9] sm:$0xff]
        %v6141 = vld [vmem:[%s196 + $0x1c1] sm:$0xff]
        %v6142 = vld [vmem:[%s196 + $0x1c9] sm:$0xff]
        %v6143 = vld [vmem:[%s196 + $0x1d1] sm:$0xff]
        %v6144 = vld [vmem:[%s196 + $0x1d9] sm:$0xff]
        %v6145 = vld [vmem:[%s196 + $0x1e1] sm:$0xff]
        %v6146 = vld [vmem:[%s196 + $0x1e9] sm:$0xff]
        %v6147 = vld [vmem:[%s196 + $0x1f1] sm:$0xff]
        %v6148 = vld [vmem:[%s196 + $0x1f9] sm:$0xff]
        %v6149 = vld [vmem:[%s196 + $0x201] sm:$0xff]
        %v6150 = vld [vmem:[%s196 + $0x209] sm:$0xff]
        %v6151 = vld [vmem:[%s196 + $0x211] sm:$0xff]
        %v6152 = vld [vmem:[%s196 + $0x219] sm:$0xff]
        %v6153 = vld [vmem:[%s196 + $0x221] sm:$0xff]
        %v6154 = vld [vmem:[%s196 + $0x229] sm:$0xff]
        %v6155 = vld [vmem:[%s196 + $0x231] sm:$0xff]
        %v6156 = vld [vmem:[%s196 + $0x239] sm:$0xff]
        %v6157 = vld [vmem:[%s196 + $0x241] sm:$0xff]
        %v6158 = vld [vmem:[%s196 + $0x249] sm:$0xff]
        %v6159 = vld [vmem:[%s196 + $0x251] sm:$0xff]
        %v6160 = vld [vmem:[%s196 + $0x259] sm:$0xff]
        %v6161 = vld [vmem:[%s196 + $0x261] sm:$0xff]
        %v6162 = vld [vmem:[%s196 + $0x269] sm:$0xff]
        %v6163 = vld [vmem:[%s196 + $0x271] sm:$0xff]
        %v6164 = vld [vmem:[%s196 + $0x279] sm:$0xff]
        %v6165 = vld [vmem:[%s196 + $0x281] sm:$0xff]
        %v6166 = vld [vmem:[%s196 + $0x289] sm:$0xff]
        %v6167 = vld [vmem:[%s196 + $0x291] sm:$0xff]
        %v6168 = vld [vmem:[%s196 + $0x299] sm:$0xff]
        %v6169 = vld [vmem:[%s196 + $0x2a1] sm:$0xff]
        %v6170 = vld [vmem:[%s196 + $0x2a9] sm:$0xff]
        %v6171 = vld [vmem:[%s196 + $0x2b1] sm:$0xff]
        %v6172 = vld [vmem:[%s196 + $0x2b9] sm:$0xff]
        %v6173 = vld [vmem:[%s196 + $0x2c1] sm:$0xff]
        %v6174 = vld [vmem:[%s196 + $0x2c9] sm:$0xff]
        %v6175 = vld [vmem:[%s196 + $0x2d1] sm:$0xff]
        %v6176 = vld [vmem:[%s196 + $0x2d9] sm:$0xff]
        %v6177 = vld [vmem:[%s196 + $0x2e1] sm:$0xff]
        %v6178 = vld [vmem:[%s196 + $0x2e9] sm:$0xff]
        %v6179 = vld [vmem:[%s196 + $0x2f1] sm:$0xff]
        %v6180 = vld [vmem:[%s196 + $0x2f9] sm:$0xff]
        %v6181 = vld [vmem:[%s196 + $0x301] sm:$0xff]
        %v6182 = vld [vmem:[%s196 + $0x309] sm:$0xff]
        %v6183 = vld [vmem:[%s196 + $0x311] sm:$0xff]
        %v6184 = vld [vmem:[%s196 + $0x319] sm:$0xff]
        %v6185 = vld [vmem:[%s196 + $0x321] sm:$0xff]
        %v6186 = vld [vmem:[%s196 + $0x329] sm:$0xff]
        %v6187 = vld [vmem:[%s196 + $0x331] sm:$0xff]
        %v6188 = vld [vmem:[%s196 + $0x339] sm:$0xff]
        %v6189 = vld [vmem:[%s196 + $0x341] sm:$0xff]
        %v6190 = vld [vmem:[%s196 + $0x349] sm:$0xff]
        %v6191 = vld [vmem:[%s196 + $0x351] sm:$0xff]
        %v6192 = vld [vmem:[%s196 + $0x359] sm:$0xff]
        %v6193 = vld [vmem:[%s196 + $0x361] sm:$0xff]
        %v6194 = vld [vmem:[%s196 + $0x369] sm:$0xff]
        %v6195 = vld [vmem:[%s196 + $0x371] sm:$0xff]
        %v6196 = vld [vmem:[%s196 + $0x379] sm:$0xff]
        %v6197 = vld [vmem:[%s196 + $0x381] sm:$0xff]
        %v6198 = vld [vmem:[%s196 + $0x389] sm:$0xff]
        %v6199 = vld [vmem:[%s196 + $0x391] sm:$0xff]
        %v6200 = vld [vmem:[%s196 + $0x399] sm:$0xff]
        %v6201 = vld [vmem:[%s196 + $0x3a1] sm:$0xff]
        %v6202 = vld [vmem:[%s196 + $0x3a9] sm:$0xff]
        %v6203 = vld [vmem:[%s196 + $0x3b1] sm:$0xff]
        %v6204 = vld [vmem:[%s196 + $0x3b9] sm:$0xff]
        %v6205 = vld [vmem:[%s196 + $0x3c1] sm:$0xff]
        %v6206 = vld [vmem:[%s196 + $0x3c9] sm:$0xff]
        %v6207 = vld [vmem:[%s196 + $0x3d1] sm:$0xff]
        %v6208 = vld [vmem:[%s196 + $0x3d9] sm:$0xff]
        %v6209 = vld [vmem:[%s196 + $0x3e1] sm:$0xff]
        %v6210 = vld [vmem:[%s196 + $0x3e9] sm:$0xff]
        %v6211 = vld [vmem:[%s196 + $0x3f1] sm:$0xff]
        %v6212 = vld [vmem:[%s196 + $0x3f9] sm:$0xff]
        %v6213 = vld [vmem:[%s196 + $0x401] sm:$0xff]
        %v6214 = vld [vmem:[%s196 + $0x409] sm:$0xff]
        %v6215 = vld [vmem:[%s196 + $0x411] sm:$0xff]
        %v6216 = vld [vmem:[%s196 + $0x419] sm:$0xff]
        %v6217 = vld [vmem:[%s196 + $0x421] sm:$0xff]
        %v6218 = vld [vmem:[%s196 + $0x429] sm:$0xff]
        %v6219 = vld [vmem:[%s196 + $0x431] sm:$0xff]
        %v6220 = vld [vmem:[%s196 + $0x439] sm:$0xff]
        %v6221 = vld [vmem:[%s196 + $0x441] sm:$0xff]
        %v6222 = vld [vmem:[%s196 + $0x449] sm:$0xff]
        %v6223 = vld [vmem:[%s196 + $0x451] sm:$0xff]
        %v6224 = vld [vmem:[%s196 + $0x459] sm:$0xff]
        %v6225 = vld [vmem:[%s196 + $0x461] sm:$0xff]
        %v6226 = vld [vmem:[%s196 + $0x469] sm:$0xff]
        %v6227 = vld [vmem:[%s196 + $0x471] sm:$0xff]
        %v6228 = vld [vmem:[%s196 + $0x479] sm:$0xff]
        %v6229 = vld [vmem:[%s196 + $0x481] sm:$0xff]
        %v6230 = vld [vmem:[%s196 + $0x489] sm:$0xff]
        %v6231 = vld [vmem:[%s196 + $0x491] sm:$0xff]
        %v6232 = vld [vmem:[%s196 + $0x499] sm:$0xff]
        %v6233 = vld [vmem:[%s196 + $0x4a1] sm:$0xff]
        %v6234 = vld [vmem:[%s196 + $0x4a9] sm:$0xff]
        %v6235 = vld [vmem:[%s196 + $0x4b1] sm:$0xff]
        %v6236 = vld [vmem:[%s196 + $0x4b9] sm:$0xff]
        %v6237 = vld [vmem:[%s196 + $0x4c1] sm:$0xff]
        %v6238 = vld [vmem:[%s196 + $0x4c9] sm:$0xff]
        %v6239 = vld [vmem:[%s196 + $0x4d1] sm:$0xff]
        %v6240 = vld [vmem:[%s196 + $0x4d9] sm:$0xff]
        %v6241 = vld [vmem:[%s196 + $0x4e1] sm:$0xff]
        %v6242 = vld [vmem:[%s196 + $0x4e9] sm:$0xff]
        %v6243 = vld [vmem:[%s196 + $0x4f1] sm:$0xff]
        %v6244 = vld [vmem:[%s196 + $0x4f9] sm:$0xff]
        %v6245 = vld [vmem:[%s196 + $0x501] sm:$0xff]
        %v6246 = vld [vmem:[%s196 + $0x509] sm:$0xff]
        %v6247 = vld [vmem:[%s196 + $0x511] sm:$0xff]
        %v6248 = vld [vmem:[%s196 + $0x519] sm:$0xff]
        %v6249 = vld [vmem:[%s196 + $0x521] sm:$0xff]
        %6405 = vrot.lane.b32.xlu0 %v6095, 28
        %v6406 = vpop.permute.xlu0 %6405
        %6407 = vrot.lane.b32.xlu0 %v6096, 28
        %v6408 = vpop.permute.xlu0 %6407
        %6409 = vrot.lane.b32.xlu0 %v6097, 28
        %v6410 = vpop.permute.xlu0 %6409
        %6411 = vrot.lane.b32.xlu0 %v6098, 28
        %v6412 = vpop.permute.xlu0 %6411
        %6413 = vrot.lane.b32.xlu0 %v6099, 28
        %v6414 = vpop.permute.xlu0 %6413
        %6415 = vrot.lane.b32.xlu0 %v6100, 28
        %v6416 = vpop.permute.xlu0 %6415
        %6417 = vrot.lane.b32.xlu0 %v6101, 28
        %v6418 = vpop.permute.xlu0 %6417
        %6419 = vrot.lane.b32.xlu0 %v6102, 28
        %v6420 = vpop.permute.xlu0 %6419
        %6421 = vrot.lane.b32.xlu0 %v6103, 28
        %v6422 = vpop.permute.xlu0 %6421
        %6423 = vrot.lane.b32.xlu0 %v6104, 28
        %v6424 = vpop.permute.xlu0 %6423
        %6425 = vrot.lane.b32.xlu0 %v6105, 28
        %v6426 = vpop.permute.xlu0 %6425
        %6427 = vrot.lane.b32.xlu0 %v6106, 28
        %v6428 = vpop.permute.xlu0 %6427
        %6429 = vrot.lane.b32.xlu0 %v6107, 28
        %v6430 = vpop.permute.xlu0 %6429
        %6431 = vrot.lane.b32.xlu0 %v6108, 28
        %v6432 = vpop.permute.xlu0 %6431
        %6433 = vrot.lane.b32.xlu0 %v6109, 28
        %v6434 = vpop.permute.xlu0 %6433
        %6435 = vrot.lane.b32.xlu0 %v6110, 28
        %v6436 = vpop.permute.xlu0 %6435
        %6437 = vrot.lane.b32.xlu0 %v6111, 28
        %v6438 = vpop.permute.xlu0 %6437
        %6439 = vrot.lane.b32.xlu0 %v6112, 28
        %v6440 = vpop.permute.xlu0 %6439
        %6441 = vrot.lane.b32.xlu0 %v6113, 28
        %v6442 = vpop.permute.xlu0 %6441
        %6443 = vrot.lane.b32.xlu0 %v6114, 28
        %v6444 = vpop.permute.xlu0 %6443
        %6445 = vrot.lane.b32.xlu0 %v6115, 28
        %v6446 = vpop.permute.xlu0 %6445
        %6447 = vrot.lane.b32.xlu0 %v6116, 28
        %v6448 = vpop.permute.xlu0 %6447
        %6449 = vrot.lane.b32.xlu0 %v6117, 28
        %v6450 = vpop.permute.xlu0 %6449
        %6451 = vrot.lane.b32.xlu0 %v6118, 28
        %v6452 = vpop.permute.xlu0 %6451
        %6453 = vrot.lane.b32.xlu0 %v6119, 28
        %v6454 = vpop.permute.xlu0 %6453
        %6455 = vrot.lane.b32.xlu0 %v6120, 28
        %v6456 = vpop.permute.xlu0 %6455
        %6457 = vrot.lane.b32.xlu0 %v6121, 28
        %v6458 = vpop.permute.xlu0 %6457
        %6459 = vrot.lane.b32.xlu0 %v6122, 28
        %v6460 = vpop.permute.xlu0 %6459
        %6461 = vrot.lane.b32.xlu0 %v6123, 28
        %v6462 = vpop.permute.xlu0 %6461
        %6463 = vrot.lane.b32.xlu0 %v6124, 28
        %v6464 = vpop.permute.xlu0 %6463
        %6465 = vrot.lane.b32.xlu0 %v6125, 28
        %v6466 = vpop.permute.xlu0 %6465
        %6467 = vrot.lane.b32.xlu0 %v6126, 28
        %v6468 = vpop.permute.xlu0 %6467
        %6469 = vrot.lane.b32.xlu0 %v6127, 28
        %v6470 = vpop.permute.xlu0 %6469
        %6471 = vrot.lane.b32.xlu0 %v6128, 28
        %v6472 = vpop.permute.xlu0 %6471
        %6473 = vrot.lane.b32.xlu0 %v6129, 28
        %v6474 = vpop.permute.xlu0 %6473
        %6475 = vrot.lane.b32.xlu0 %v6130, 28
        %v6476 = vpop.permute.xlu0 %6475
        %6477 = vrot.lane.b32.xlu0 %v6131, 28
        %v6478 = vpop.permute.xlu0 %6477
        %6479 = vrot.lane.b32.xlu0 %v6132, 28
        %v6480 = vpop.permute.xlu0 %6479
        %6481 = vrot.lane.b32.xlu0 %v6133, 28
        %v6482 = vpop.permute.xlu0 %6481
        %6483 = vrot.lane.b32.xlu0 %v6134, 28
        %v6484 = vpop.permute.xlu0 %6483
        %6485 = vrot.lane.b32.xlu0 %v6135, 28
        %v6486 = vpop.permute.xlu0 %6485
        %6487 = vrot.lane.b32.xlu0 %v6136, 28
        %v6488 = vpop.permute.xlu0 %6487
        %6489 = vrot.lane.b32.xlu0 %v6137, 28
        %v6490 = vpop.permute.xlu0 %6489
        %6491 = vrot.lane.b32.xlu0 %v6138, 28
        %v6492 = vpop.permute.xlu0 %6491
        %6493 = vrot.lane.b32.xlu0 %v6139, 28
        %v6494 = vpop.permute.xlu0 %6493
        %6495 = vrot.lane.b32.xlu0 %v6140, 28
        %v6496 = vpop.permute.xlu0 %6495
        %6497 = vrot.lane.b32.xlu0 %v6141, 28
        %v6498 = vpop.permute.xlu0 %6497
        %6499 = vrot.lane.b32.xlu0 %v6142, 28
        %v6500 = vpop.permute.xlu0 %6499
        %6501 = vrot.lane.b32.xlu0 %v6143, 28
        %v6502 = vpop.permute.xlu0 %6501
        %6503 = vrot.lane.b32.xlu0 %v6144, 28
        %v6504 = vpop.permute.xlu0 %6503
        %6505 = vrot.lane.b32.xlu0 %v6145, 28
        %v6506 = vpop.permute.xlu0 %6505
        %6507 = vrot.lane.b32.xlu0 %v6146, 28
        %v6508 = vpop.permute.xlu0 %6507
        %6509 = vrot.lane.b32.xlu0 %v6147, 28
        %v6510 = vpop.permute.xlu0 %6509
        %6511 = vrot.lane.b32.xlu0 %v6148, 28
        %v6512 = vpop.permute.xlu0 %6511
        %6513 = vrot.lane.b32.xlu0 %v6149, 28
        %v6514 = vpop.permute.xlu0 %6513
        %6515 = vrot.lane.b32.xlu0 %v6150, 28
        %v6516 = vpop.permute.xlu0 %6515
        %6517 = vrot.lane.b32.xlu0 %v6151, 28
        %v6518 = vpop.permute.xlu0 %6517
        %6519 = vrot.lane.b32.xlu0 %v6152, 28
        %v6520 = vpop.permute.xlu0 %6519
        %6521 = vrot.lane.b32.xlu0 %v6153, 28
        %v6522 = vpop.permute.xlu0 %6521
        %6523 = vrot.lane.b32.xlu0 %v6154, 28
        %v6524 = vpop.permute.xlu0 %6523
        %6525 = vrot.lane.b32.xlu0 %v6155, 28
        %v6526 = vpop.permute.xlu0 %6525
        %6527 = vrot.lane.b32.xlu0 %v6156, 28
        %v6528 = vpop.permute.xlu0 %6527
        %6529 = vrot.lane.b32.xlu0 %v6157, 28
        %v6530 = vpop.permute.xlu0 %6529
        %6531 = vrot.lane.b32.xlu0 %v6158, 28
        %v6532 = vpop.permute.xlu0 %6531
        %6533 = vrot.lane.b32.xlu0 %v6159, 28
        %v6534 = vpop.permute.xlu0 %6533
        %6535 = vrot.lane.b32.xlu0 %v6160, 28
        %v6536 = vpop.permute.xlu0 %6535
        %6537 = vrot.lane.b32.xlu0 %v6161, 28
        %v6538 = vpop.permute.xlu0 %6537
        %6539 = vrot.lane.b32.xlu0 %v6162, 28
        %v6540 = vpop.permute.xlu0 %6539
        %6541 = vrot.lane.b32.xlu0 %v6163, 28
        %v6542 = vpop.permute.xlu0 %6541
        %6543 = vrot.lane.b32.xlu0 %v6164, 28
        %v6544 = vpop.permute.xlu0 %6543
        %6545 = vrot.lane.b32.xlu0 %v6165, 28
        %v6546 = vpop.permute.xlu0 %6545
        %6547 = vrot.lane.b32.xlu0 %v6166, 28
        %v6548 = vpop.permute.xlu0 %6547
        %6549 = vrot.lane.b32.xlu0 %v6167, 28
        %v6550 = vpop.permute.xlu0 %6549
        %6551 = vrot.lane.b32.xlu0 %v6168, 28
        %v6552 = vpop.permute.xlu0 %6551
        %6553 = vrot.lane.b32.xlu0 %v6169, 28
        %v6554 = vpop.permute.xlu0 %6553
        %6555 = vrot.lane.b32.xlu0 %v6170, 28
        %v6556 = vpop.permute.xlu0 %6555
        %6557 = vrot.lane.b32.xlu0 %v6171, 28
        %v6558 = vpop.permute.xlu0 %6557
        %6559 = vrot.lane.b32.xlu0 %v6172, 28
        %v6560 = vpop.permute.xlu0 %6559
        %6561 = vrot.lane.b32.xlu0 %v6173, 28
        %v6562 = vpop.permute.xlu0 %6561
        %6563 = vrot.lane.b32.xlu0 %v6174, 28
        %v6564 = vpop.permute.xlu0 %6563
        %6565 = vrot.lane.b32.xlu0 %v6175, 28
        %v6566 = vpop.permute.xlu0 %6565
        %6567 = vrot.lane.b32.xlu0 %v6176, 28
        %v6568 = vpop.permute.xlu0 %6567
        %6569 = vrot.lane.b32.xlu0 %v6177, 28
        %v6570 = vpop.permute.xlu0 %6569
        %6571 = vrot.lane.b32.xlu0 %v6178, 28
        %v6572 = vpop.permute.xlu0 %6571
        %6573 = vrot.lane.b32.xlu0 %v6179, 28
        %v6574 = vpop.permute.xlu0 %6573
        %6575 = vrot.lane.b32.xlu0 %v6180, 28
        %v6576 = vpop.permute.xlu0 %6575
        %6577 = vrot.lane.b32.xlu0 %v6181, 28
        %v6578 = vpop.permute.xlu0 %6577
        %6579 = vrot.lane.b32.xlu0 %v6182, 28
        %v6580 = vpop.permute.xlu0 %6579
        %6581 = vrot.lane.b32.xlu0 %v6183, 28
        %v6582 = vpop.permute.xlu0 %6581
        %6583 = vrot.lane.b32.xlu0 %v6184, 28
        %v6584 = vpop.permute.xlu0 %6583
        %6585 = vrot.lane.b32.xlu0 %v6185, 28
        %v6586 = vpop.permute.xlu0 %6585
        %6587 = vrot.lane.b32.xlu0 %v6186, 28
        %v6588 = vpop.permute.xlu0 %6587
        %6589 = vrot.lane.b32.xlu0 %v6187, 28
        %v6590 = vpop.permute.xlu0 %6589
        %6591 = vrot.lane.b32.xlu0 %v6188, 28
        %v6592 = vpop.permute.xlu0 %6591
        %6593 = vrot.lane.b32.xlu0 %v6189, 28
        %v6594 = vpop.permute.xlu0 %6593
        %6595 = vrot.lane.b32.xlu0 %v6190, 28
        %v6596 = vpop.permute.xlu0 %6595
        %6597 = vrot.lane.b32.xlu0 %v6191, 28
        %v6598 = vpop.permute.xlu0 %6597
        %6599 = vrot.lane.b32.xlu0 %v6192, 28
        %v6600 = vpop.permute.xlu0 %6599
        %6601 = vrot.lane.b32.xlu0 %v6193, 28
        %v6602 = vpop.permute.xlu0 %6601
        %6603 = vrot.lane.b32.xlu0 %v6194, 28
        %v6604 = vpop.permute.xlu0 %6603
        %6605 = vrot.lane.b32.xlu0 %v6195, 28
        %v6606 = vpop.permute.xlu0 %6605
        %6607 = vrot.lane.b32.xlu0 %v6196, 28
        %v6608 = vpop.permute.xlu0 %6607
        %6609 = vrot.lane.b32.xlu0 %v6197, 28
        %v6610 = vpop.permute.xlu0 %6609
        %6611 = vrot.lane.b32.xlu0 %v6198, 28
        %v6612 = vpop.permute.xlu0 %6611
        %6613 = vrot.lane.b32.xlu0 %v6199, 28
        %v6614 = vpop.permute.xlu0 %6613
        %6615 = vrot.lane.b32.xlu0 %v6200, 28
        %v6616 = vpop.permute.xlu0 %6615
        %6617 = vrot.lane.b32.xlu0 %v6201, 28
        %v6618 = vpop.permute.xlu0 %6617
        %6619 = vrot.lane.b32.xlu0 %v6202, 28
        %v6620 = vpop.permute.xlu0 %6619
        %6621 = vrot.lane.b32.xlu0 %v6203, 28
        %v6622 = vpop.permute.xlu0 %6621
        %6623 = vrot.lane.b32.xlu0 %v6204, 28
        %v6624 = vpop.permute.xlu0 %6623
        %6625 = vrot.lane.b32.xlu0 %v6205, 28
        %v6626 = vpop.permute.xlu0 %6625
        %6627 = vrot.lane.b32.xlu0 %v6206, 28
        %v6628 = vpop.permute.xlu0 %6627
        %6629 = vrot.lane.b32.xlu0 %v6207, 28
        %v6630 = vpop.permute.xlu0 %6629
        %6631 = vrot.lane.b32.xlu0 %v6208, 28
        %v6632 = vpop.permute.xlu0 %6631
        %6633 = vrot.lane.b32.xlu0 %v6209, 28
        %v6634 = vpop.permute.xlu0 %6633
        %6635 = vrot.lane.b32.xlu0 %v6210, 28
        %v6636 = vpop.permute.xlu0 %6635
        %6637 = vrot.lane.b32.xlu0 %v6211, 28
        %v6638 = vpop.permute.xlu0 %6637
        %6639 = vrot.lane.b32.xlu0 %v6212, 28
        %v6640 = vpop.permute.xlu0 %6639
        %6641 = vrot.lane.b32.xlu0 %v6213, 28
        %v6642 = vpop.permute.xlu0 %6641
        %6643 = vrot.lane.b32.xlu0 %v6214, 28
        %v6644 = vpop.permute.xlu0 %6643
        %6645 = vrot.lane.b32.xlu0 %v6215, 28
        %v6646 = vpop.permute.xlu0 %6645
        %6647 = vrot.lane.b32.xlu0 %v6216, 28
        %v6648 = vpop.permute.xlu0 %6647
        %6649 = vrot.lane.b32.xlu0 %v6217, 28
        %v6650 = vpop.permute.xlu0 %6649
        %6651 = vrot.lane.b32.xlu0 %v6218, 28
        %v6652 = vpop.permute.xlu0 %6651
        %6653 = vrot.lane.b32.xlu0 %v6219, 28
        %v6654 = vpop.permute.xlu0 %6653
        %6655 = vrot.lane.b32.xlu0 %v6220, 28
        %v6656 = vpop.permute.xlu0 %6655
        %6657 = vrot.lane.b32.xlu0 %v6221, 28
        %v6658 = vpop.permute.xlu0 %6657
        %6659 = vrot.lane.b32.xlu0 %v6222, 28
        %v6660 = vpop.permute.xlu0 %6659
        %6661 = vrot.lane.b32.xlu0 %v6223, 28
        %v6662 = vpop.permute.xlu0 %6661
        %6663 = vrot.lane.b32.xlu0 %v6224, 28
        %v6664 = vpop.permute.xlu0 %6663
        %6665 = vrot.lane.b32.xlu0 %v6225, 28
        %v6666 = vpop.permute.xlu0 %6665
        %6667 = vrot.lane.b32.xlu0 %v6226, 28
        %v6668 = vpop.permute.xlu0 %6667
        %6669 = vrot.lane.b32.xlu0 %v6227, 28
        %v6670 = vpop.permute.xlu0 %6669
        %6671 = vrot.lane.b32.xlu0 %v6228, 28
        %v6672 = vpop.permute.xlu0 %6671
        %6673 = vrot.lane.b32.xlu0 %v6229, 28
        %v6674 = vpop.permute.xlu0 %6673
        %6675 = vrot.lane.b32.xlu0 %v6230, 28
        %v6676 = vpop.permute.xlu0 %6675
        %6677 = vrot.lane.b32.xlu0 %v6231, 28
        %v6678 = vpop.permute.xlu0 %6677
        %6679 = vrot.lane.b32.xlu0 %v6232, 28
        %v6680 = vpop.permute.xlu0 %6679
        %6681 = vrot.lane.b32.xlu0 %v6233, 28
        %v6682 = vpop.permute.xlu0 %6681
        %6683 = vrot.lane.b32.xlu0 %v6234, 28
        %v6684 = vpop.permute.xlu0 %6683
        %6685 = vrot.lane.b32.xlu0 %v6235, 28
        %v6686 = vpop.permute.xlu0 %6685
        %6687 = vrot.lane.b32.xlu0 %v6236, 28
        %v6688 = vpop.permute.xlu0 %6687
        %6689 = vrot.lane.b32.xlu0 %v6237, 28
        %v6690 = vpop.permute.xlu0 %6689
        %6691 = vrot.lane.b32.xlu0 %v6238, 28
        %v6692 = vpop.permute.xlu0 %6691
        %6693 = vrot.lane.b32.xlu0 %v6239, 28
        %v6694 = vpop.permute.xlu0 %6693
        %6695 = vrot.lane.b32.xlu0 %v6240, 28
        %v6696 = vpop.permute.xlu0 %6695
        %6697 = vrot.lane.b32.xlu0 %v6241, 28
        %v6698 = vpop.permute.xlu0 %6697
        %6699 = vrot.lane.b32.xlu0 %v6242, 28
        %v6700 = vpop.permute.xlu0 %6699
        %6701 = vrot.lane.b32.xlu0 %v6243, 28
        %v6702 = vpop.permute.xlu0 %6701
        %6703 = vrot.lane.b32.xlu0 %v6244, 28
        %v6704 = vpop.permute.xlu0 %6703
        %6705 = vrot.lane.b32.xlu0 %v6245, 28
        %v6706 = vpop.permute.xlu0 %6705
        %6707 = vrot.lane.b32.xlu0 %v6246, 28
        %v6708 = vpop.permute.xlu0 %6707
        %6709 = vrot.lane.b32.xlu0 %v6247, 28
        %v6710 = vpop.permute.xlu0 %6709
        %6711 = vrot.lane.b32.xlu0 %v6248, 28
        %v6712 = vpop.permute.xlu0 %6711
        %6713 = vrot.lane.b32.xlu0 %v6249, 28
        %v6714 = vpop.permute.xlu0 %6713
        %vm6870 = vcmask 261344
        %6871 = vst.msk [vmem:[#allocation2] sm:$0xff] %vm6870, %v6406
        %6872 = vst.msk [vmem:[#allocation2 + $0x8] sm:$0xff] %vm6870, %v6408
        %6873 = vst.msk [vmem:[#allocation2 + $0x10] sm:$0xff] %vm6870, %v6410
        %6874 = vst.msk [vmem:[#allocation2 + $0x18] sm:$0xff] %vm6870, %v6412
        %6875 = vst.msk [vmem:[#allocation2 + $0x20] sm:$0xff] %vm6870, %v6414
        %6876 = vst.msk [vmem:[#allocation2 + $0x28] sm:$0xff] %vm6870, %v6416
        %6877 = vst.msk [vmem:[#allocation2 + $0x30] sm:$0xff] %vm6870, %v6418
        %6878 = vst.msk [vmem:[#allocation2 + $0x38] sm:$0xff] %vm6870, %v6420
        %6879 = vst.msk [vmem:[#allocation2 + $0x40] sm:$0xff] %vm6870, %v6422
        %6880 = vst.msk [vmem:[#allocation2 + $0x48] sm:$0xff] %vm6870, %v6424
        %6881 = vst.msk [vmem:[#allocation2 + $0x50] sm:$0xff] %vm6870, %v6426
        %6882 = vst.msk [vmem:[#allocation2 + $0x58] sm:$0xff] %vm6870, %v6428
        %6883 = vst.msk [vmem:[#allocation2 + $0x60] sm:$0xff] %vm6870, %v6430
        %6884 = vst.msk [vmem:[#allocation2 + $0x68] sm:$0xff] %vm6870, %v6432
        %6885 = vst.msk [vmem:[#allocation2 + $0x70] sm:$0xff] %vm6870, %v6434
        %6886 = vst.msk [vmem:[#allocation2 + $0x78] sm:$0xff] %vm6870, %v6436
        %6887 = vst.msk [vmem:[#allocation2 + $0x80] sm:$0xff] %vm6870, %v6438
        %6888 = vst.msk [vmem:[#allocation2 + $0x88] sm:$0xff] %vm6870, %v6440
        %6889 = vst.msk [vmem:[#allocation2 + $0x90] sm:$0xff] %vm6870, %v6442
        %6890 = vst.msk [vmem:[#allocation2 + $0x98] sm:$0xff] %vm6870, %v6444
        %6891 = vst.msk [vmem:[#allocation2 + $0xa0] sm:$0xff] %vm6870, %v6446
        %6892 = vst.msk [vmem:[#allocation2 + $0xa8] sm:$0xff] %vm6870, %v6448
        %6893 = vst.msk [vmem:[#allocation2 + $0xb0] sm:$0xff] %vm6870, %v6450
        %6894 = vst.msk [vmem:[#allocation2 + $0xb8] sm:$0xff] %vm6870, %v6452
        %6895 = vst.msk [vmem:[#allocation2 + $0xc0] sm:$0xff] %vm6870, %v6454
        %6896 = vst.msk [vmem:[#allocation2 + $0xc8] sm:$0xff] %vm6870, %v6456
        %6897 = vst.msk [vmem:[#allocation2 + $0xd0] sm:$0xff] %vm6870, %v6458
        %6898 = vst.msk [vmem:[#allocation2 + $0xd8] sm:$0xff] %vm6870, %v6460
        %6899 = vst.msk [vmem:[#allocation2 + $0xe0] sm:$0xff] %vm6870, %v6462
        %6900 = vst.msk [vmem:[#allocation2 + $0xe8] sm:$0xff] %vm6870, %v6464
        %6901 = vst.msk [vmem:[#allocation2 + $0xf0] sm:$0xff] %vm6870, %v6466
        %6902 = vst.msk [vmem:[#allocation2 + $0xf8] sm:$0xff] %vm6870, %v6468
        %6903 = vst.msk [vmem:[#allocation2 + $0x100] sm:$0xff] %vm6870, %v6470
        %6904 = vst.msk [vmem:[#allocation2 + $0x108] sm:$0xff] %vm6870, %v6472
        %6905 = vst.msk [vmem:[#allocation2 + $0x110] sm:$0xff] %vm6870, %v6474
        %6906 = vst.msk [vmem:[#allocation2 + $0x118] sm:$0xff] %vm6870, %v6476
        %6907 = vst.msk [vmem:[#allocation2 + $0x120] sm:$0xff] %vm6870, %v6478
        %6908 = vst.msk [vmem:[#allocation2 + $0x128] sm:$0xff] %vm6870, %v6480
        %6909 = vst.msk [vmem:[#allocation2 + $0x130] sm:$0xff] %vm6870, %v6482
        %6910 = vst.msk [vmem:[#allocation2 + $0x138] sm:$0xff] %vm6870, %v6484
        %6911 = vst.msk [vmem:[#allocation2 + $0x140] sm:$0xff] %vm6870, %v6486
        %6912 = vst.msk [vmem:[#allocation2 + $0x148] sm:$0xff] %vm6870, %v6488
        %6913 = vst.msk [vmem:[#allocation2 + $0x150] sm:$0xff] %vm6870, %v6490
        %6914 = vst.msk [vmem:[#allocation2 + $0x158] sm:$0xff] %vm6870, %v6492
        %6915 = vst.msk [vmem:[#allocation2 + $0x160] sm:$0xff] %vm6870, %v6494
        %6916 = vst.msk [vmem:[#allocation2 + $0x168] sm:$0xff] %vm6870, %v6496
        %6917 = vst.msk [vmem:[#allocation2 + $0x170] sm:$0xff] %vm6870, %v6498
        %6918 = vst.msk [vmem:[#allocation2 + $0x178] sm:$0xff] %vm6870, %v6500
        %6919 = vst.msk [vmem:[#allocation2 + $0x180] sm:$0xff] %vm6870, %v6502
        %6920 = vst.msk [vmem:[#allocation2 + $0x188] sm:$0xff] %vm6870, %v6504
        %6921 = vst.msk [vmem:[#allocation2 + $0x190] sm:$0xff] %vm6870, %v6506
        %6922 = vst.msk [vmem:[#allocation2 + $0x198] sm:$0xff] %vm6870, %v6508
        %6923 = vst.msk [vmem:[#allocation2 + $0x1a0] sm:$0xff] %vm6870, %v6510
        %6924 = vst.msk [vmem:[#allocation2 + $0x1a8] sm:$0xff] %vm6870, %v6512
        %6925 = vst.msk [vmem:[#allocation2 + $0x1b0] sm:$0xff] %vm6870, %v6514
        %6926 = vst.msk [vmem:[#allocation2 + $0x1b8] sm:$0xff] %vm6870, %v6516
        %6927 = vst.msk [vmem:[#allocation2 + $0x1c0] sm:$0xff] %vm6870, %v6518
        %6928 = vst.msk [vmem:[#allocation2 + $0x1c8] sm:$0xff] %vm6870, %v6520
        %6929 = vst.msk [vmem:[#allocation2 + $0x1d0] sm:$0xff] %vm6870, %v6522
        %6930 = vst.msk [vmem:[#allocation2 + $0x1d8] sm:$0xff] %vm6870, %v6524
        %6931 = vst.msk [vmem:[#allocation2 + $0x1e0] sm:$0xff] %vm6870, %v6526
        %6932 = vst.msk [vmem:[#allocation2 + $0x1e8] sm:$0xff] %vm6870, %v6528
        %6933 = vst.msk [vmem:[#allocation2 + $0x1f0] sm:$0xff] %vm6870, %v6530
        %6934 = vst.msk [vmem:[#allocation2 + $0x1f8] sm:$0xff] %vm6870, %v6532
        %6935 = vst.msk [vmem:[#allocation2 + $0x200] sm:$0xff] %vm6870, %v6534
        %6936 = vst.msk [vmem:[#allocation2 + $0x208] sm:$0xff] %vm6870, %v6536
        %6937 = vst.msk [vmem:[#allocation2 + $0x210] sm:$0xff] %vm6870, %v6538
        %6938 = vst.msk [vmem:[#allocation2 + $0x218] sm:$0xff] %vm6870, %v6540
        %6939 = vst.msk [vmem:[#allocation2 + $0x220] sm:$0xff] %vm6870, %v6542
        %6940 = vst.msk [vmem:[#allocation2 + $0x228] sm:$0xff] %vm6870, %v6544
        %6941 = vst.msk [vmem:[#allocation2 + $0x230] sm:$0xff] %vm6870, %v6546
        %6942 = vst.msk [vmem:[#allocation2 + $0x238] sm:$0xff] %vm6870, %v6548
        %6943 = vst.msk [vmem:[#allocation2 + $0x240] sm:$0xff] %vm6870, %v6550
        %6944 = vst.msk [vmem:[#allocation2 + $0x248] sm:$0xff] %vm6870, %v6552
        %6945 = vst.msk [vmem:[#allocation2 + $0x250] sm:$0xff] %vm6870, %v6554
        %6946 = vst.msk [vmem:[#allocation2 + $0x258] sm:$0xff] %vm6870, %v6556
        %6947 = vst.msk [vmem:[#allocation2 + $0x260] sm:$0xff] %vm6870, %v6558
        %6948 = vst.msk [vmem:[#allocation2 + $0x268] sm:$0xff] %vm6870, %v6560
        %6949 = vst.msk [vmem:[#allocation2 + $0x270] sm:$0xff] %vm6870, %v6562
        %6950 = vst.msk [vmem:[#allocation2 + $0x278] sm:$0xff] %vm6870, %v6564
        %6951 = vst.msk [vmem:[#allocation2 + $0x280] sm:$0xff] %vm6870, %v6566
        %6952 = vst.msk [vmem:[#allocation2 + $0x288] sm:$0xff] %vm6870, %v6568
        %6953 = vst.msk [vmem:[#allocation2 + $0x290] sm:$0xff] %vm6870, %v6570
        %6954 = vst.msk [vmem:[#allocation2 + $0x298] sm:$0xff] %vm6870, %v6572
        %6955 = vst.msk [vmem:[#allocation2 + $0x2a0] sm:$0xff] %vm6870, %v6574
        %6956 = vst.msk [vmem:[#allocation2 + $0x2a8] sm:$0xff] %vm6870, %v6576
        %6957 = vst.msk [vmem:[#allocation2 + $0x2b0] sm:$0xff] %vm6870, %v6578
        %6958 = vst.msk [vmem:[#allocation2 + $0x2b8] sm:$0xff] %vm6870, %v6580
        %6959 = vst.msk [vmem:[#allocation2 + $0x2c0] sm:$0xff] %vm6870, %v6582
        %6960 = vst.msk [vmem:[#allocation2 + $0x2c8] sm:$0xff] %vm6870, %v6584
        %6961 = vst.msk [vmem:[#allocation2 + $0x2d0] sm:$0xff] %vm6870, %v6586
        %6962 = vst.msk [vmem:[#allocation2 + $0x2d8] sm:$0xff] %vm6870, %v6588
        %6963 = vst.msk [vmem:[#allocation2 + $0x2e0] sm:$0xff] %vm6870, %v6590
        %6964 = vst.msk [vmem:[#allocation2 + $0x2e8] sm:$0xff] %vm6870, %v6592
        %6965 = vst.msk [vmem:[#allocation2 + $0x2f0] sm:$0xff] %vm6870, %v6594
        %6966 = vst.msk [vmem:[#allocation2 + $0x2f8] sm:$0xff] %vm6870, %v6596
        %6967 = vst.msk [vmem:[#allocation2 + $0x300] sm:$0xff] %vm6870, %v6598
        %6968 = vst.msk [vmem:[#allocation2 + $0x308] sm:$0xff] %vm6870, %v6600
        %6969 = vst.msk [vmem:[#allocation2 + $0x310] sm:$0xff] %vm6870, %v6602
        %6970 = vst.msk [vmem:[#allocation2 + $0x318] sm:$0xff] %vm6870, %v6604
        %6971 = vst.msk [vmem:[#allocation2 + $0x320] sm:$0xff] %vm6870, %v6606
        %6972 = vst.msk [vmem:[#allocation2 + $0x328] sm:$0xff] %vm6870, %v6608
        %6973 = vst.msk [vmem:[#allocation2 + $0x330] sm:$0xff] %vm6870, %v6610
        %6974 = vst.msk [vmem:[#allocation2 + $0x338] sm:$0xff] %vm6870, %v6612
        %6975 = vst.msk [vmem:[#allocation2 + $0x340] sm:$0xff] %vm6870, %v6614
        %6976 = vst.msk [vmem:[#allocation2 + $0x348] sm:$0xff] %vm6870, %v6616
        %6977 = vst.msk [vmem:[#allocation2 + $0x350] sm:$0xff] %vm6870, %v6618
        %6978 = vst.msk [vmem:[#allocation2 + $0x358] sm:$0xff] %vm6870, %v6620
        %6979 = vst.msk [vmem:[#allocation2 + $0x360] sm:$0xff] %vm6870, %v6622
        %6980 = vst.msk [vmem:[#allocation2 + $0x368] sm:$0xff] %vm6870, %v6624
        %6981 = vst.msk [vmem:[#allocation2 + $0x370] sm:$0xff] %vm6870, %v6626
        %6982 = vst.msk [vmem:[#allocation2 + $0x378] sm:$0xff] %vm6870, %v6628
        %6983 = vst.msk [vmem:[#allocation2 + $0x380] sm:$0xff] %vm6870, %v6630
        %6984 = vst.msk [vmem:[#allocation2 + $0x388] sm:$0xff] %vm6870, %v6632
        %6985 = vst.msk [vmem:[#allocation2 + $0x390] sm:$0xff] %vm6870, %v6634
        %6986 = vst.msk [vmem:[#allocation2 + $0x398] sm:$0xff] %vm6870, %v6636
        %6987 = vst.msk [vmem:[#allocation2 + $0x3a0] sm:$0xff] %vm6870, %v6638
        %6988 = vst.msk [vmem:[#allocation2 + $0x3a8] sm:$0xff] %vm6870, %v6640
        %6989 = vst.msk [vmem:[#allocation2 + $0x3b0] sm:$0xff] %vm6870, %v6642
        %6990 = vst.msk [vmem:[#allocation2 + $0x3b8] sm:$0xff] %vm6870, %v6644
        %6991 = vst.msk [vmem:[#allocation2 + $0x3c0] sm:$0xff] %vm6870, %v6646
        %6992 = vst.msk [vmem:[#allocation2 + $0x3c8] sm:$0xff] %vm6870, %v6648
        %6993 = vst.msk [vmem:[#allocation2 + $0x3d0] sm:$0xff] %vm6870, %v6650
        %6994 = vst.msk [vmem:[#allocation2 + $0x3d8] sm:$0xff] %vm6870, %v6652
        %6995 = vst.msk [vmem:[#allocation2 + $0x3e0] sm:$0xff] %vm6870, %v6654
        %6996 = vst.msk [vmem:[#allocation2 + $0x3e8] sm:$0xff] %vm6870, %v6656
        %6997 = vst.msk [vmem:[#allocation2 + $0x3f0] sm:$0xff] %vm6870, %v6658
        %6998 = vst.msk [vmem:[#allocation2 + $0x3f8] sm:$0xff] %vm6870, %v6660
        %6999 = vst.msk [vmem:[#allocation2 + $0x400] sm:$0xff] %vm6870, %v6662
        %7000 = vst.msk [vmem:[#allocation2 + $0x408] sm:$0xff] %vm6870, %v6664
        %7001 = vst.msk [vmem:[#allocation2 + $0x410] sm:$0xff] %vm6870, %v6666
        %7002 = vst.msk [vmem:[#allocation2 + $0x418] sm:$0xff] %vm6870, %v6668
        %7003 = vst.msk [vmem:[#allocation2 + $0x420] sm:$0xff] %vm6870, %v6670
        %7004 = vst.msk [vmem:[#allocation2 + $0x428] sm:$0xff] %vm6870, %v6672
        %7005 = vst.msk [vmem:[#allocation2 + $0x430] sm:$0xff] %vm6870, %v6674
        %7006 = vst.msk [vmem:[#allocation2 + $0x438] sm:$0xff] %vm6870, %v6676
        %7007 = vst.msk [vmem:[#allocation2 + $0x440] sm:$0xff] %vm6870, %v6678
        %7008 = vst.msk [vmem:[#allocation2 + $0x448] sm:$0xff] %vm6870, %v6680
        %7009 = vst.msk [vmem:[#allocation2 + $0x450] sm:$0xff] %vm6870, %v6682
        %7010 = vst.msk [vmem:[#allocation2 + $0x458] sm:$0xff] %vm6870, %v6684
        %7011 = vst.msk [vmem:[#allocation2 + $0x460] sm:$0xff] %vm6870, %v6686
        %7012 = vst.msk [vmem:[#allocation2 + $0x468] sm:$0xff] %vm6870, %v6688
        %7013 = vst.msk [vmem:[#allocation2 + $0x470] sm:$0xff] %vm6870, %v6690
        %7014 = vst.msk [vmem:[#allocation2 + $0x478] sm:$0xff] %vm6870, %v6692
        %7015 = vst.msk [vmem:[#allocation2 + $0x480] sm:$0xff] %vm6870, %v6694
        %7016 = vst.msk [vmem:[#allocation2 + $0x488] sm:$0xff] %vm6870, %v6696
        %7017 = vst.msk [vmem:[#allocation2 + $0x490] sm:$0xff] %vm6870, %v6698
        %7018 = vst.msk [vmem:[#allocation2 + $0x498] sm:$0xff] %vm6870, %v6700
        %7019 = vst.msk [vmem:[#allocation2 + $0x4a0] sm:$0xff] %vm6870, %v6702
        %7020 = vst.msk [vmem:[#allocation2 + $0x4a8] sm:$0xff] %vm6870, %v6704
        %7021 = vst.msk [vmem:[#allocation2 + $0x4b0] sm:$0xff] %vm6870, %v6706
        %7022 = vst.msk [vmem:[#allocation2 + $0x4b8] sm:$0xff] %vm6870, %v6708
        %7023 = vst.msk [vmem:[#allocation2 + $0x4c0] sm:$0xff] %vm6870, %v6710
        %7024 = vst.msk [vmem:[#allocation2 + $0x4c8] sm:$0xff] %vm6870, %v6712
        %7025 = vst.msk [vmem:[#allocation2 + $0x4d0] sm:$0xff] %vm6870, %v6714
        %v7026 = vld [vmem:[%s196 + $0x52] sm:$0xff]
        %v7027 = vld [vmem:[%s196 + $0x5a] sm:$0xff]
        %v7028 = vld [vmem:[%s196 + $0x62] sm:$0xff]
        %v7029 = vld [vmem:[%s196 + $0x6a] sm:$0xff]
        %v7030 = vld [vmem:[%s196 + $0x72] sm:$0xff]
        %v7031 = vld [vmem:[%s196 + $0x7a] sm:$0xff]
        %v7032 = vld [vmem:[%s196 + $0x82] sm:$0xff]
        %v7033 = vld [vmem:[%s196 + $0x8a] sm:$0xff]
        %v7034 = vld [vmem:[%s196 + $0x92] sm:$0xff]
        %v7035 = vld [vmem:[%s196 + $0x9a] sm:$0xff]
        %v7036 = vld [vmem:[%s196 + $0xa2] sm:$0xff]
        %v7037 = vld [vmem:[%s196 + $0xaa] sm:$0xff]
        %v7038 = vld [vmem:[%s196 + $0xb2] sm:$0xff]
        %v7039 = vld [vmem:[%s196 + $0xba] sm:$0xff]
        %v7040 = vld [vmem:[%s196 + $0xc2] sm:$0xff]
        %v7041 = vld [vmem:[%s196 + $0xca] sm:$0xff]
        %v7042 = vld [vmem:[%s196 + $0xd2] sm:$0xff]
        %v7043 = vld [vmem:[%s196 + $0xda] sm:$0xff]
        %v7044 = vld [vmem:[%s196 + $0xe2] sm:$0xff]
        %v7045 = vld [vmem:[%s196 + $0xea] sm:$0xff]
        %v7046 = vld [vmem:[%s196 + $0xf2] sm:$0xff]
        %v7047 = vld [vmem:[%s196 + $0xfa] sm:$0xff]
        %v7048 = vld [vmem:[%s196 + $0x102] sm:$0xff]
        %v7049 = vld [vmem:[%s196 + $0x10a] sm:$0xff]
        %v7050 = vld [vmem:[%s196 + $0x112] sm:$0xff]
        %v7051 = vld [vmem:[%s196 + $0x11a] sm:$0xff]
        %v7052 = vld [vmem:[%s196 + $0x122] sm:$0xff]
        %v7053 = vld [vmem:[%s196 + $0x12a] sm:$0xff]
        %v7054 = vld [vmem:[%s196 + $0x132] sm:$0xff]
        %v7055 = vld [vmem:[%s196 + $0x13a] sm:$0xff]
        %v7056 = vld [vmem:[%s196 + $0x142] sm:$0xff]
        %v7057 = vld [vmem:[%s196 + $0x14a] sm:$0xff]
        %v7058 = vld [vmem:[%s196 + $0x152] sm:$0xff]
        %v7059 = vld [vmem:[%s196 + $0x15a] sm:$0xff]
        %v7060 = vld [vmem:[%s196 + $0x162] sm:$0xff]
        %v7061 = vld [vmem:[%s196 + $0x16a] sm:$0xff]
        %v7062 = vld [vmem:[%s196 + $0x172] sm:$0xff]
        %v7063 = vld [vmem:[%s196 + $0x17a] sm:$0xff]
        %v7064 = vld [vmem:[%s196 + $0x182] sm:$0xff]
        %v7065 = vld [vmem:[%s196 + $0x18a] sm:$0xff]
        %v7066 = vld [vmem:[%s196 + $0x192] sm:$0xff]
        %v7067 = vld [vmem:[%s196 + $0x19a] sm:$0xff]
        %v7068 = vld [vmem:[%s196 + $0x1a2] sm:$0xff]
        %v7069 = vld [vmem:[%s196 + $0x1aa] sm:$0xff]
        %v7070 = vld [vmem:[%s196 + $0x1b2] sm:$0xff]
        %v7071 = vld [vmem:[%s196 + $0x1ba] sm:$0xff]
        %v7072 = vld [vmem:[%s196 + $0x1c2] sm:$0xff]
        %v7073 = vld [vmem:[%s196 + $0x1ca] sm:$0xff]
        %v7074 = vld [vmem:[%s196 + $0x1d2] sm:$0xff]
        %v7075 = vld [vmem:[%s196 + $0x1da] sm:$0xff]
        %v7076 = vld [vmem:[%s196 + $0x1e2] sm:$0xff]
        %v7077 = vld [vmem:[%s196 + $0x1ea] sm:$0xff]
        %v7078 = vld [vmem:[%s196 + $0x1f2] sm:$0xff]
        %v7079 = vld [vmem:[%s196 + $0x1fa] sm:$0xff]
        %v7080 = vld [vmem:[%s196 + $0x202] sm:$0xff]
        %v7081 = vld [vmem:[%s196 + $0x20a] sm:$0xff]
        %v7082 = vld [vmem:[%s196 + $0x212] sm:$0xff]
        %v7083 = vld [vmem:[%s196 + $0x21a] sm:$0xff]
        %v7084 = vld [vmem:[%s196 + $0x222] sm:$0xff]
        %v7085 = vld [vmem:[%s196 + $0x22a] sm:$0xff]
        %v7086 = vld [vmem:[%s196 + $0x232] sm:$0xff]
        %v7087 = vld [vmem:[%s196 + $0x23a] sm:$0xff]
        %v7088 = vld [vmem:[%s196 + $0x242] sm:$0xff]
        %v7089 = vld [vmem:[%s196 + $0x24a] sm:$0xff]
        %v7090 = vld [vmem:[%s196 + $0x252] sm:$0xff]
        %v7091 = vld [vmem:[%s196 + $0x25a] sm:$0xff]
        %v7092 = vld [vmem:[%s196 + $0x262] sm:$0xff]
        %v7093 = vld [vmem:[%s196 + $0x26a] sm:$0xff]
        %v7094 = vld [vmem:[%s196 + $0x272] sm:$0xff]
        %v7095 = vld [vmem:[%s196 + $0x27a] sm:$0xff]
        %v7096 = vld [vmem:[%s196 + $0x282] sm:$0xff]
        %v7097 = vld [vmem:[%s196 + $0x28a] sm:$0xff]
        %v7098 = vld [vmem:[%s196 + $0x292] sm:$0xff]
        %v7099 = vld [vmem:[%s196 + $0x29a] sm:$0xff]
        %v7100 = vld [vmem:[%s196 + $0x2a2] sm:$0xff]
        %v7101 = vld [vmem:[%s196 + $0x2aa] sm:$0xff]
        %v7102 = vld [vmem:[%s196 + $0x2b2] sm:$0xff]
        %v7103 = vld [vmem:[%s196 + $0x2ba] sm:$0xff]
        %v7104 = vld [vmem:[%s196 + $0x2c2] sm:$0xff]
        %v7105 = vld [vmem:[%s196 + $0x2ca] sm:$0xff]
        %v7106 = vld [vmem:[%s196 + $0x2d2] sm:$0xff]
        %v7107 = vld [vmem:[%s196 + $0x2da] sm:$0xff]
        %v7108 = vld [vmem:[%s196 + $0x2e2] sm:$0xff]
        %v7109 = vld [vmem:[%s196 + $0x2ea] sm:$0xff]
        %v7110 = vld [vmem:[%s196 + $0x2f2] sm:$0xff]
        %v7111 = vld [vmem:[%s196 + $0x2fa] sm:$0xff]
        %v7112 = vld [vmem:[%s196 + $0x302] sm:$0xff]
        %v7113 = vld [vmem:[%s196 + $0x30a] sm:$0xff]
        %v7114 = vld [vmem:[%s196 + $0x312] sm:$0xff]
        %v7115 = vld [vmem:[%s196 + $0x31a] sm:$0xff]
        %v7116 = vld [vmem:[%s196 + $0x322] sm:$0xff]
        %v7117 = vld [vmem:[%s196 + $0x32a] sm:$0xff]
        %v7118 = vld [vmem:[%s196 + $0x332] sm:$0xff]
        %v7119 = vld [vmem:[%s196 + $0x33a] sm:$0xff]
        %v7120 = vld [vmem:[%s196 + $0x342] sm:$0xff]
        %v7121 = vld [vmem:[%s196 + $0x34a] sm:$0xff]
        %v7122 = vld [vmem:[%s196 + $0x352] sm:$0xff]
        %v7123 = vld [vmem:[%s196 + $0x35a] sm:$0xff]
        %v7124 = vld [vmem:[%s196 + $0x362] sm:$0xff]
        %v7125 = vld [vmem:[%s196 + $0x36a] sm:$0xff]
        %v7126 = vld [vmem:[%s196 + $0x372] sm:$0xff]
        %v7127 = vld [vmem:[%s196 + $0x37a] sm:$0xff]
        %v7128 = vld [vmem:[%s196 + $0x382] sm:$0xff]
        %v7129 = vld [vmem:[%s196 + $0x38a] sm:$0xff]
        %v7130 = vld [vmem:[%s196 + $0x392] sm:$0xff]
        %v7131 = vld [vmem:[%s196 + $0x39a] sm:$0xff]
        %v7132 = vld [vmem:[%s196 + $0x3a2] sm:$0xff]
        %v7133 = vld [vmem:[%s196 + $0x3aa] sm:$0xff]
        %v7134 = vld [vmem:[%s196 + $0x3b2] sm:$0xff]
        %v7135 = vld [vmem:[%s196 + $0x3ba] sm:$0xff]
        %v7136 = vld [vmem:[%s196 + $0x3c2] sm:$0xff]
        %v7137 = vld [vmem:[%s196 + $0x3ca] sm:$0xff]
        %v7138 = vld [vmem:[%s196 + $0x3d2] sm:$0xff]
        %v7139 = vld [vmem:[%s196 + $0x3da] sm:$0xff]
        %v7140 = vld [vmem:[%s196 + $0x3e2] sm:$0xff]
        %v7141 = vld [vmem:[%s196 + $0x3ea] sm:$0xff]
        %v7142 = vld [vmem:[%s196 + $0x3f2] sm:$0xff]
        %v7143 = vld [vmem:[%s196 + $0x3fa] sm:$0xff]
        %v7144 = vld [vmem:[%s196 + $0x402] sm:$0xff]
        %v7145 = vld [vmem:[%s196 + $0x40a] sm:$0xff]
        %v7146 = vld [vmem:[%s196 + $0x412] sm:$0xff]
        %v7147 = vld [vmem:[%s196 + $0x41a] sm:$0xff]
        %v7148 = vld [vmem:[%s196 + $0x422] sm:$0xff]
        %v7149 = vld [vmem:[%s196 + $0x42a] sm:$0xff]
        %v7150 = vld [vmem:[%s196 + $0x432] sm:$0xff]
        %v7151 = vld [vmem:[%s196 + $0x43a] sm:$0xff]
        %v7152 = vld [vmem:[%s196 + $0x442] sm:$0xff]
        %v7153 = vld [vmem:[%s196 + $0x44a] sm:$0xff]
        %v7154 = vld [vmem:[%s196 + $0x452] sm:$0xff]
        %v7155 = vld [vmem:[%s196 + $0x45a] sm:$0xff]
        %v7156 = vld [vmem:[%s196 + $0x462] sm:$0xff]
        %v7157 = vld [vmem:[%s196 + $0x46a] sm:$0xff]
        %v7158 = vld [vmem:[%s196 + $0x472] sm:$0xff]
        %v7159 = vld [vmem:[%s196 + $0x47a] sm:$0xff]
        %v7160 = vld [vmem:[%s196 + $0x482] sm:$0xff]
        %v7161 = vld [vmem:[%s196 + $0x48a] sm:$0xff]
        %v7162 = vld [vmem:[%s196 + $0x492] sm:$0xff]
        %v7163 = vld [vmem:[%s196 + $0x49a] sm:$0xff]
        %v7164 = vld [vmem:[%s196 + $0x4a2] sm:$0xff]
        %v7165 = vld [vmem:[%s196 + $0x4aa] sm:$0xff]
        %v7166 = vld [vmem:[%s196 + $0x4b2] sm:$0xff]
        %v7167 = vld [vmem:[%s196 + $0x4ba] sm:$0xff]
        %v7168 = vld [vmem:[%s196 + $0x4c2] sm:$0xff]
        %v7169 = vld [vmem:[%s196 + $0x4ca] sm:$0xff]
        %v7170 = vld [vmem:[%s196 + $0x4d2] sm:$0xff]
        %v7171 = vld [vmem:[%s196 + $0x4da] sm:$0xff]
        %v7172 = vld [vmem:[%s196 + $0x4e2] sm:$0xff]
        %v7173 = vld [vmem:[%s196 + $0x4ea] sm:$0xff]
        %v7174 = vld [vmem:[%s196 + $0x4f2] sm:$0xff]
        %v7175 = vld [vmem:[%s196 + $0x4fa] sm:$0xff]
        %v7176 = vld [vmem:[%s196 + $0x502] sm:$0xff]
        %v7177 = vld [vmem:[%s196 + $0x50a] sm:$0xff]
        %v7178 = vld [vmem:[%s196 + $0x512] sm:$0xff]
        %v7179 = vld [vmem:[%s196 + $0x51a] sm:$0xff]
        %v7180 = vld [vmem:[%s196 + $0x522] sm:$0xff]
        %7336 = vrot.lane.b32.xlu0 %v7026, 32
        %v7337 = vpop.permute.xlu0 %7336
        %7338 = vrot.lane.b32.xlu0 %v7027, 32
        %v7339 = vpop.permute.xlu0 %7338
        %7340 = vrot.lane.b32.xlu0 %v7028, 32
        %v7341 = vpop.permute.xlu0 %7340
        %7342 = vrot.lane.b32.xlu0 %v7029, 32
        %v7343 = vpop.permute.xlu0 %7342
        %7344 = vrot.lane.b32.xlu0 %v7030, 32
        %v7345 = vpop.permute.xlu0 %7344
        %7346 = vrot.lane.b32.xlu0 %v7031, 32
        %v7347 = vpop.permute.xlu0 %7346
        %7348 = vrot.lane.b32.xlu0 %v7032, 32
        %v7349 = vpop.permute.xlu0 %7348
        %7350 = vrot.lane.b32.xlu0 %v7033, 32
        %v7351 = vpop.permute.xlu0 %7350
        %7352 = vrot.lane.b32.xlu0 %v7034, 32
        %v7353 = vpop.permute.xlu0 %7352
        %7354 = vrot.lane.b32.xlu0 %v7035, 32
        %v7355 = vpop.permute.xlu0 %7354
        %7356 = vrot.lane.b32.xlu0 %v7036, 32
        %v7357 = vpop.permute.xlu0 %7356
        %7358 = vrot.lane.b32.xlu0 %v7037, 32
        %v7359 = vpop.permute.xlu0 %7358
        %7360 = vrot.lane.b32.xlu0 %v7038, 32
        %v7361 = vpop.permute.xlu0 %7360
        %7362 = vrot.lane.b32.xlu0 %v7039, 32
        %v7363 = vpop.permute.xlu0 %7362
        %7364 = vrot.lane.b32.xlu0 %v7040, 32
        %v7365 = vpop.permute.xlu0 %7364
        %7366 = vrot.lane.b32.xlu0 %v7041, 32
        %v7367 = vpop.permute.xlu0 %7366
        %7368 = vrot.lane.b32.xlu0 %v7042, 32
        %v7369 = vpop.permute.xlu0 %7368
        %7370 = vrot.lane.b32.xlu0 %v7043, 32
        %v7371 = vpop.permute.xlu0 %7370
        %7372 = vrot.lane.b32.xlu0 %v7044, 32
        %v7373 = vpop.permute.xlu0 %7372
        %7374 = vrot.lane.b32.xlu0 %v7045, 32
        %v7375 = vpop.permute.xlu0 %7374
        %7376 = vrot.lane.b32.xlu0 %v7046, 32
        %v7377 = vpop.permute.xlu0 %7376
        %7378 = vrot.lane.b32.xlu0 %v7047, 32
        %v7379 = vpop.permute.xlu0 %7378
        %7380 = vrot.lane.b32.xlu0 %v7048, 32
        %v7381 = vpop.permute.xlu0 %7380
        %7382 = vrot.lane.b32.xlu0 %v7049, 32
        %v7383 = vpop.permute.xlu0 %7382
        %7384 = vrot.lane.b32.xlu0 %v7050, 32
        %v7385 = vpop.permute.xlu0 %7384
        %7386 = vrot.lane.b32.xlu0 %v7051, 32
        %v7387 = vpop.permute.xlu0 %7386
        %7388 = vrot.lane.b32.xlu0 %v7052, 32
        %v7389 = vpop.permute.xlu0 %7388
        %7390 = vrot.lane.b32.xlu0 %v7053, 32
        %v7391 = vpop.permute.xlu0 %7390
        %7392 = vrot.lane.b32.xlu0 %v7054, 32
        %v7393 = vpop.permute.xlu0 %7392
        %7394 = vrot.lane.b32.xlu0 %v7055, 32
        %v7395 = vpop.permute.xlu0 %7394
        %7396 = vrot.lane.b32.xlu0 %v7056, 32
        %v7397 = vpop.permute.xlu0 %7396
        %7398 = vrot.lane.b32.xlu0 %v7057, 32
        %v7399 = vpop.permute.xlu0 %7398
        %7400 = vrot.lane.b32.xlu0 %v7058, 32
        %v7401 = vpop.permute.xlu0 %7400
        %7402 = vrot.lane.b32.xlu0 %v7059, 32
        %v7403 = vpop.permute.xlu0 %7402
        %7404 = vrot.lane.b32.xlu0 %v7060, 32
        %v7405 = vpop.permute.xlu0 %7404
        %7406 = vrot.lane.b32.xlu0 %v7061, 32
        %v7407 = vpop.permute.xlu0 %7406
        %7408 = vrot.lane.b32.xlu0 %v7062, 32
        %v7409 = vpop.permute.xlu0 %7408
        %7410 = vrot.lane.b32.xlu0 %v7063, 32
        %v7411 = vpop.permute.xlu0 %7410
        %7412 = vrot.lane.b32.xlu0 %v7064, 32
        %v7413 = vpop.permute.xlu0 %7412
        %7414 = vrot.lane.b32.xlu0 %v7065, 32
        %v7415 = vpop.permute.xlu0 %7414
        %7416 = vrot.lane.b32.xlu0 %v7066, 32
        %v7417 = vpop.permute.xlu0 %7416
        %7418 = vrot.lane.b32.xlu0 %v7067, 32
        %v7419 = vpop.permute.xlu0 %7418
        %7420 = vrot.lane.b32.xlu0 %v7068, 32
        %v7421 = vpop.permute.xlu0 %7420
        %7422 = vrot.lane.b32.xlu0 %v7069, 32
        %v7423 = vpop.permute.xlu0 %7422
        %7424 = vrot.lane.b32.xlu0 %v7070, 32
        %v7425 = vpop.permute.xlu0 %7424
        %7426 = vrot.lane.b32.xlu0 %v7071, 32
        %v7427 = vpop.permute.xlu0 %7426
        %7428 = vrot.lane.b32.xlu0 %v7072, 32
        %v7429 = vpop.permute.xlu0 %7428
        %7430 = vrot.lane.b32.xlu0 %v7073, 32
        %v7431 = vpop.permute.xlu0 %7430
        %7432 = vrot.lane.b32.xlu0 %v7074, 32
        %v7433 = vpop.permute.xlu0 %7432
        %7434 = vrot.lane.b32.xlu0 %v7075, 32
        %v7435 = vpop.permute.xlu0 %7434
        %7436 = vrot.lane.b32.xlu0 %v7076, 32
        %v7437 = vpop.permute.xlu0 %7436
        %7438 = vrot.lane.b32.xlu0 %v7077, 32
        %v7439 = vpop.permute.xlu0 %7438
        %7440 = vrot.lane.b32.xlu0 %v7078, 32
        %v7441 = vpop.permute.xlu0 %7440
        %7442 = vrot.lane.b32.xlu0 %v7079, 32
        %v7443 = vpop.permute.xlu0 %7442
        %7444 = vrot.lane.b32.xlu0 %v7080, 32
        %v7445 = vpop.permute.xlu0 %7444
        %7446 = vrot.lane.b32.xlu0 %v7081, 32
        %v7447 = vpop.permute.xlu0 %7446
        %7448 = vrot.lane.b32.xlu0 %v7082, 32
        %v7449 = vpop.permute.xlu0 %7448
        %7450 = vrot.lane.b32.xlu0 %v7083, 32
        %v7451 = vpop.permute.xlu0 %7450
        %7452 = vrot.lane.b32.xlu0 %v7084, 32
        %v7453 = vpop.permute.xlu0 %7452
        %7454 = vrot.lane.b32.xlu0 %v7085, 32
        %v7455 = vpop.permute.xlu0 %7454
        %7456 = vrot.lane.b32.xlu0 %v7086, 32
        %v7457 = vpop.permute.xlu0 %7456
        %7458 = vrot.lane.b32.xlu0 %v7087, 32
        %v7459 = vpop.permute.xlu0 %7458
        %7460 = vrot.lane.b32.xlu0 %v7088, 32
        %v7461 = vpop.permute.xlu0 %7460
        %7462 = vrot.lane.b32.xlu0 %v7089, 32
        %v7463 = vpop.permute.xlu0 %7462
        %7464 = vrot.lane.b32.xlu0 %v7090, 32
        %v7465 = vpop.permute.xlu0 %7464
        %7466 = vrot.lane.b32.xlu0 %v7091, 32
        %v7467 = vpop.permute.xlu0 %7466
        %7468 = vrot.lane.b32.xlu0 %v7092, 32
        %v7469 = vpop.permute.xlu0 %7468
        %7470 = vrot.lane.b32.xlu0 %v7093, 32
        %v7471 = vpop.permute.xlu0 %7470
        %7472 = vrot.lane.b32.xlu0 %v7094, 32
        %v7473 = vpop.permute.xlu0 %7472
        %7474 = vrot.lane.b32.xlu0 %v7095, 32
        %v7475 = vpop.permute.xlu0 %7474
        %7476 = vrot.lane.b32.xlu0 %v7096, 32
        %v7477 = vpop.permute.xlu0 %7476
        %7478 = vrot.lane.b32.xlu0 %v7097, 32
        %v7479 = vpop.permute.xlu0 %7478
        %7480 = vrot.lane.b32.xlu0 %v7098, 32
        %v7481 = vpop.permute.xlu0 %7480
        %7482 = vrot.lane.b32.xlu0 %v7099, 32
        %v7483 = vpop.permute.xlu0 %7482
        %7484 = vrot.lane.b32.xlu0 %v7100, 32
        %v7485 = vpop.permute.xlu0 %7484
        %7486 = vrot.lane.b32.xlu0 %v7101, 32
        %v7487 = vpop.permute.xlu0 %7486
        %7488 = vrot.lane.b32.xlu0 %v7102, 32
        %v7489 = vpop.permute.xlu0 %7488
        %7490 = vrot.lane.b32.xlu0 %v7103, 32
        %v7491 = vpop.permute.xlu0 %7490
        %7492 = vrot.lane.b32.xlu0 %v7104, 32
        %v7493 = vpop.permute.xlu0 %7492
        %7494 = vrot.lane.b32.xlu0 %v7105, 32
        %v7495 = vpop.permute.xlu0 %7494
        %7496 = vrot.lane.b32.xlu0 %v7106, 32
        %v7497 = vpop.permute.xlu0 %7496
        %7498 = vrot.lane.b32.xlu0 %v7107, 32
        %v7499 = vpop.permute.xlu0 %7498
        %7500 = vrot.lane.b32.xlu0 %v7108, 32
        %v7501 = vpop.permute.xlu0 %7500
        %7502 = vrot.lane.b32.xlu0 %v7109, 32
        %v7503 = vpop.permute.xlu0 %7502
        %7504 = vrot.lane.b32.xlu0 %v7110, 32
        %v7505 = vpop.permute.xlu0 %7504
        %7506 = vrot.lane.b32.xlu0 %v7111, 32
        %v7507 = vpop.permute.xlu0 %7506
        %7508 = vrot.lane.b32.xlu0 %v7112, 32
        %v7509 = vpop.permute.xlu0 %7508
        %7510 = vrot.lane.b32.xlu0 %v7113, 32
        %v7511 = vpop.permute.xlu0 %7510
        %7512 = vrot.lane.b32.xlu0 %v7114, 32
        %v7513 = vpop.permute.xlu0 %7512
        %7514 = vrot.lane.b32.xlu0 %v7115, 32
        %v7515 = vpop.permute.xlu0 %7514
        %7516 = vrot.lane.b32.xlu0 %v7116, 32
        %v7517 = vpop.permute.xlu0 %7516
        %7518 = vrot.lane.b32.xlu0 %v7117, 32
        %v7519 = vpop.permute.xlu0 %7518
        %7520 = vrot.lane.b32.xlu0 %v7118, 32
        %v7521 = vpop.permute.xlu0 %7520
        %7522 = vrot.lane.b32.xlu0 %v7119, 32
        %v7523 = vpop.permute.xlu0 %7522
        %7524 = vrot.lane.b32.xlu0 %v7120, 32
        %v7525 = vpop.permute.xlu0 %7524
        %7526 = vrot.lane.b32.xlu0 %v7121, 32
        %v7527 = vpop.permute.xlu0 %7526
        %7528 = vrot.lane.b32.xlu0 %v7122, 32
        %v7529 = vpop.permute.xlu0 %7528
        %7530 = vrot.lane.b32.xlu0 %v7123, 32
        %v7531 = vpop.permute.xlu0 %7530
        %7532 = vrot.lane.b32.xlu0 %v7124, 32
        %v7533 = vpop.permute.xlu0 %7532
        %7534 = vrot.lane.b32.xlu0 %v7125, 32
        %v7535 = vpop.permute.xlu0 %7534
        %7536 = vrot.lane.b32.xlu0 %v7126, 32
        %v7537 = vpop.permute.xlu0 %7536
        %7538 = vrot.lane.b32.xlu0 %v7127, 32
        %v7539 = vpop.permute.xlu0 %7538
        %7540 = vrot.lane.b32.xlu0 %v7128, 32
        %v7541 = vpop.permute.xlu0 %7540
        %7542 = vrot.lane.b32.xlu0 %v7129, 32
        %v7543 = vpop.permute.xlu0 %7542
        %7544 = vrot.lane.b32.xlu0 %v7130, 32
        %v7545 = vpop.permute.xlu0 %7544
        %7546 = vrot.lane.b32.xlu0 %v7131, 32
        %v7547 = vpop.permute.xlu0 %7546
        %7548 = vrot.lane.b32.xlu0 %v7132, 32
        %v7549 = vpop.permute.xlu0 %7548
        %7550 = vrot.lane.b32.xlu0 %v7133, 32
        %v7551 = vpop.permute.xlu0 %7550
        %7552 = vrot.lane.b32.xlu0 %v7134, 32
        %v7553 = vpop.permute.xlu0 %7552
        %7554 = vrot.lane.b32.xlu0 %v7135, 32
        %v7555 = vpop.permute.xlu0 %7554
        %7556 = vrot.lane.b32.xlu0 %v7136, 32
        %v7557 = vpop.permute.xlu0 %7556
        %7558 = vrot.lane.b32.xlu0 %v7137, 32
        %v7559 = vpop.permute.xlu0 %7558
        %7560 = vrot.lane.b32.xlu0 %v7138, 32
        %v7561 = vpop.permute.xlu0 %7560
        %7562 = vrot.lane.b32.xlu0 %v7139, 32
        %v7563 = vpop.permute.xlu0 %7562
        %7564 = vrot.lane.b32.xlu0 %v7140, 32
        %v7565 = vpop.permute.xlu0 %7564
        %7566 = vrot.lane.b32.xlu0 %v7141, 32
        %v7567 = vpop.permute.xlu0 %7566
        %7568 = vrot.lane.b32.xlu0 %v7142, 32
        %v7569 = vpop.permute.xlu0 %7568
        %7570 = vrot.lane.b32.xlu0 %v7143, 32
        %v7571 = vpop.permute.xlu0 %7570
        %7572 = vrot.lane.b32.xlu0 %v7144, 32
        %v7573 = vpop.permute.xlu0 %7572
        %7574 = vrot.lane.b32.xlu0 %v7145, 32
        %v7575 = vpop.permute.xlu0 %7574
        %7576 = vrot.lane.b32.xlu0 %v7146, 32
        %v7577 = vpop.permute.xlu0 %7576
        %7578 = vrot.lane.b32.xlu0 %v7147, 32
        %v7579 = vpop.permute.xlu0 %7578
        %7580 = vrot.lane.b32.xlu0 %v7148, 32
        %v7581 = vpop.permute.xlu0 %7580
        %7582 = vrot.lane.b32.xlu0 %v7149, 32
        %v7583 = vpop.permute.xlu0 %7582
        %7584 = vrot.lane.b32.xlu0 %v7150, 32
        %v7585 = vpop.permute.xlu0 %7584
        %7586 = vrot.lane.b32.xlu0 %v7151, 32
        %v7587 = vpop.permute.xlu0 %7586
        %7588 = vrot.lane.b32.xlu0 %v7152, 32
        %v7589 = vpop.permute.xlu0 %7588
        %7590 = vrot.lane.b32.xlu0 %v7153, 32
        %v7591 = vpop.permute.xlu0 %7590
        %7592 = vrot.lane.b32.xlu0 %v7154, 32
        %v7593 = vpop.permute.xlu0 %7592
        %7594 = vrot.lane.b32.xlu0 %v7155, 32
        %v7595 = vpop.permute.xlu0 %7594
        %7596 = vrot.lane.b32.xlu0 %v7156, 32
        %v7597 = vpop.permute.xlu0 %7596
        %7598 = vrot.lane.b32.xlu0 %v7157, 32
        %v7599 = vpop.permute.xlu0 %7598
        %7600 = vrot.lane.b32.xlu0 %v7158, 32
        %v7601 = vpop.permute.xlu0 %7600
        %7602 = vrot.lane.b32.xlu0 %v7159, 32
        %v7603 = vpop.permute.xlu0 %7602
        %7604 = vrot.lane.b32.xlu0 %v7160, 32
        %v7605 = vpop.permute.xlu0 %7604
        %7606 = vrot.lane.b32.xlu0 %v7161, 32
        %v7607 = vpop.permute.xlu0 %7606
        %7608 = vrot.lane.b32.xlu0 %v7162, 32
        %v7609 = vpop.permute.xlu0 %7608
        %7610 = vrot.lane.b32.xlu0 %v7163, 32
        %v7611 = vpop.permute.xlu0 %7610
        %7612 = vrot.lane.b32.xlu0 %v7164, 32
        %v7613 = vpop.permute.xlu0 %7612
        %7614 = vrot.lane.b32.xlu0 %v7165, 32
        %v7615 = vpop.permute.xlu0 %7614
        %7616 = vrot.lane.b32.xlu0 %v7166, 32
        %v7617 = vpop.permute.xlu0 %7616
        %7618 = vrot.lane.b32.xlu0 %v7167, 32
        %v7619 = vpop.permute.xlu0 %7618
        %7620 = vrot.lane.b32.xlu0 %v7168, 32
        %v7621 = vpop.permute.xlu0 %7620
        %7622 = vrot.lane.b32.xlu0 %v7169, 32
        %v7623 = vpop.permute.xlu0 %7622
        %7624 = vrot.lane.b32.xlu0 %v7170, 32
        %v7625 = vpop.permute.xlu0 %7624
        %7626 = vrot.lane.b32.xlu0 %v7171, 32
        %v7627 = vpop.permute.xlu0 %7626
        %7628 = vrot.lane.b32.xlu0 %v7172, 32
        %v7629 = vpop.permute.xlu0 %7628
        %7630 = vrot.lane.b32.xlu0 %v7173, 32
        %v7631 = vpop.permute.xlu0 %7630
        %7632 = vrot.lane.b32.xlu0 %v7174, 32
        %v7633 = vpop.permute.xlu0 %7632
        %7634 = vrot.lane.b32.xlu0 %v7175, 32
        %v7635 = vpop.permute.xlu0 %7634
        %7636 = vrot.lane.b32.xlu0 %v7176, 32
        %v7637 = vpop.permute.xlu0 %7636
        %7638 = vrot.lane.b32.xlu0 %v7177, 32
        %v7639 = vpop.permute.xlu0 %7638
        %7640 = vrot.lane.b32.xlu0 %v7178, 32
        %v7641 = vpop.permute.xlu0 %7640
        %7642 = vrot.lane.b32.xlu0 %v7179, 32
        %v7643 = vpop.permute.xlu0 %7642
        %7644 = vrot.lane.b32.xlu0 %v7180, 32
        %v7645 = vpop.permute.xlu0 %7644
        %vm7801 = vcmask 294144
        %7802 = vst.msk [vmem:[#allocation2] sm:$0xff] %vm7801, %v7337
        %7803 = vst.msk [vmem:[#allocation2 + $0x8] sm:$0xff] %vm7801, %v7339
        %7804 = vst.msk [vmem:[#allocation2 + $0x10] sm:$0xff] %vm7801, %v7341
        %7805 = vst.msk [vmem:[#allocation2 + $0x18] sm:$0xff] %vm7801, %v7343
        %7806 = vst.msk [vmem:[#allocation2 + $0x20] sm:$0xff] %vm7801, %v7345
        %7807 = vst.msk [vmem:[#allocation2 + $0x28] sm:$0xff] %vm7801, %v7347
        %7808 = vst.msk [vmem:[#allocation2 + $0x30] sm:$0xff] %vm7801, %v7349
        %7809 = vst.msk [vmem:[#allocation2 + $0x38] sm:$0xff] %vm7801, %v7351
        %7810 = vst.msk [vmem:[#allocation2 + $0x40] sm:$0xff] %vm7801, %v7353
        %7811 = vst.msk [vmem:[#allocation2 + $0x48] sm:$0xff] %vm7801, %v7355
        %7812 = vst.msk [vmem:[#allocation2 + $0x50] sm:$0xff] %vm7801, %v7357
        %7813 = vst.msk [vmem:[#allocation2 + $0x58] sm:$0xff] %vm7801, %v7359
        %7814 = vst.msk [vmem:[#allocation2 + $0x60] sm:$0xff] %vm7801, %v7361
        %7815 = vst.msk [vmem:[#allocation2 + $0x68] sm:$0xff] %vm7801, %v7363
        %7816 = vst.msk [vmem:[#allocation2 + $0x70] sm:$0xff] %vm7801, %v7365
        %7817 = vst.msk [vmem:[#allocation2 + $0x78] sm:$0xff] %vm7801, %v7367
        %7818 = vst.msk [vmem:[#allocation2 + $0x80] sm:$0xff] %vm7801, %v7369
        %7819 = vst.msk [vmem:[#allocation2 + $0x88] sm:$0xff] %vm7801, %v7371
        %7820 = vst.msk [vmem:[#allocation2 + $0x90] sm:$0xff] %vm7801, %v7373
        %7821 = vst.msk [vmem:[#allocation2 + $0x98] sm:$0xff] %vm7801, %v7375
        %7822 = vst.msk [vmem:[#allocation2 + $0xa0] sm:$0xff] %vm7801, %v7377
        %7823 = vst.msk [vmem:[#allocation2 + $0xa8] sm:$0xff] %vm7801, %v7379
        %7824 = vst.msk [vmem:[#allocation2 + $0xb0] sm:$0xff] %vm7801, %v7381
        %7825 = vst.msk [vmem:[#allocation2 + $0xb8] sm:$0xff] %vm7801, %v7383
        %7826 = vst.msk [vmem:[#allocation2 + $0xc0] sm:$0xff] %vm7801, %v7385
        %7827 = vst.msk [vmem:[#allocation2 + $0xc8] sm:$0xff] %vm7801, %v7387
        %7828 = vst.msk [vmem:[#allocation2 + $0xd0] sm:$0xff] %vm7801, %v7389
        %7829 = vst.msk [vmem:[#allocation2 + $0xd8] sm:$0xff] %vm7801, %v7391
        %7830 = vst.msk [vmem:[#allocation2 + $0xe0] sm:$0xff] %vm7801, %v7393
        %7831 = vst.msk [vmem:[#allocation2 + $0xe8] sm:$0xff] %vm7801, %v7395
        %7832 = vst.msk [vmem:[#allocation2 + $0xf0] sm:$0xff] %vm7801, %v7397
        %7833 = vst.msk [vmem:[#allocation2 + $0xf8] sm:$0xff] %vm7801, %v7399
        %7834 = vst.msk [vmem:[#allocation2 + $0x100] sm:$0xff] %vm7801, %v7401
        %7835 = vst.msk [vmem:[#allocation2 + $0x108] sm:$0xff] %vm7801, %v7403
        %7836 = vst.msk [vmem:[#allocation2 + $0x110] sm:$0xff] %vm7801, %v7405
        %7837 = vst.msk [vmem:[#allocation2 + $0x118] sm:$0xff] %vm7801, %v7407
        %7838 = vst.msk [vmem:[#allocation2 + $0x120] sm:$0xff] %vm7801, %v7409
        %7839 = vst.msk [vmem:[#allocation2 + $0x128] sm:$0xff] %vm7801, %v7411
        %7840 = vst.msk [vmem:[#allocation2 + $0x130] sm:$0xff] %vm7801, %v7413
        %7841 = vst.msk [vmem:[#allocation2 + $0x138] sm:$0xff] %vm7801, %v7415
        %7842 = vst.msk [vmem:[#allocation2 + $0x140] sm:$0xff] %vm7801, %v7417
        %7843 = vst.msk [vmem:[#allocation2 + $0x148] sm:$0xff] %vm7801, %v7419
        %7844 = vst.msk [vmem:[#allocation2 + $0x150] sm:$0xff] %vm7801, %v7421
        %7845 = vst.msk [vmem:[#allocation2 + $0x158] sm:$0xff] %vm7801, %v7423
        %7846 = vst.msk [vmem:[#allocation2 + $0x160] sm:$0xff] %vm7801, %v7425
        %7847 = vst.msk [vmem:[#allocation2 + $0x168] sm:$0xff] %vm7801, %v7427
        %7848 = vst.msk [vmem:[#allocation2 + $0x170] sm:$0xff] %vm7801, %v7429
        %7849 = vst.msk [vmem:[#allocation2 + $0x178] sm:$0xff] %vm7801, %v7431
        %7850 = vst.msk [vmem:[#allocation2 + $0x180] sm:$0xff] %vm7801, %v7433
        %7851 = vst.msk [vmem:[#allocation2 + $0x188] sm:$0xff] %vm7801, %v7435
        %7852 = vst.msk [vmem:[#allocation2 + $0x190] sm:$0xff] %vm7801, %v7437
        %7853 = vst.msk [vmem:[#allocation2 + $0x198] sm:$0xff] %vm7801, %v7439
        %7854 = vst.msk [vmem:[#allocation2 + $0x1a0] sm:$0xff] %vm7801, %v7441
        %7855 = vst.msk [vmem:[#allocation2 + $0x1a8] sm:$0xff] %vm7801, %v7443
        %7856 = vst.msk [vmem:[#allocation2 + $0x1b0] sm:$0xff] %vm7801, %v7445
        %7857 = vst.msk [vmem:[#allocation2 + $0x1b8] sm:$0xff] %vm7801, %v7447
        %7858 = vst.msk [vmem:[#allocation2 + $0x1c0] sm:$0xff] %vm7801, %v7449
        %7859 = vst.msk [vmem:[#allocation2 + $0x1c8] sm:$0xff] %vm7801, %v7451
        %7860 = vst.msk [vmem:[#allocation2 + $0x1d0] sm:$0xff] %vm7801, %v7453
        %7861 = vst.msk [vmem:[#allocation2 + $0x1d8] sm:$0xff] %vm7801, %v7455
        %7862 = vst.msk [vmem:[#allocation2 + $0x1e0] sm:$0xff] %vm7801, %v7457
        %7863 = vst.msk [vmem:[#allocation2 + $0x1e8] sm:$0xff] %vm7801, %v7459
        %7864 = vst.msk [vmem:[#allocation2 + $0x1f0] sm:$0xff] %vm7801, %v7461
        %7865 = vst.msk [vmem:[#allocation2 + $0x1f8] sm:$0xff] %vm7801, %v7463
        %7866 = vst.msk [vmem:[#allocation2 + $0x200] sm:$0xff] %vm7801, %v7465
        %7867 = vst.msk [vmem:[#allocation2 + $0x208] sm:$0xff] %vm7801, %v7467
        %7868 = vst.msk [vmem:[#allocation2 + $0x210] sm:$0xff] %vm7801, %v7469
        %7869 = vst.msk [vmem:[#allocation2 + $0x218] sm:$0xff] %vm7801, %v7471
        %7870 = vst.msk [vmem:[#allocation2 + $0x220] sm:$0xff] %vm7801, %v7473
        %7871 = vst.msk [vmem:[#allocation2 + $0x228] sm:$0xff] %vm7801, %v7475
        %7872 = vst.msk [vmem:[#allocation2 + $0x230] sm:$0xff] %vm7801, %v7477
        %7873 = vst.msk [vmem:[#allocation2 + $0x238] sm:$0xff] %vm7801, %v7479
        %7874 = vst.msk [vmem:[#allocation2 + $0x240] sm:$0xff] %vm7801, %v7481
        %7875 = vst.msk [vmem:[#allocation2 + $0x248] sm:$0xff] %vm7801, %v7483
        %7876 = vst.msk [vmem:[#allocation2 + $0x250] sm:$0xff] %vm7801, %v7485
        %7877 = vst.msk [vmem:[#allocation2 + $0x258] sm:$0xff] %vm7801, %v7487
        %7878 = vst.msk [vmem:[#allocation2 + $0x260] sm:$0xff] %vm7801, %v7489
        %7879 = vst.msk [vmem:[#allocation2 + $0x268] sm:$0xff] %vm7801, %v7491
        %7880 = vst.msk [vmem:[#allocation2 + $0x270] sm:$0xff] %vm7801, %v7493
        %7881 = vst.msk [vmem:[#allocation2 + $0x278] sm:$0xff] %vm7801, %v7495
        %7882 = vst.msk [vmem:[#allocation2 + $0x280] sm:$0xff] %vm7801, %v7497
        %7883 = vst.msk [vmem:[#allocation2 + $0x288] sm:$0xff] %vm7801, %v7499
        %7884 = vst.msk [vmem:[#allocation2 + $0x290] sm:$0xff] %vm7801, %v7501
        %7885 = vst.msk [vmem:[#allocation2 + $0x298] sm:$0xff] %vm7801, %v7503
        %7886 = vst.msk [vmem:[#allocation2 + $0x2a0] sm:$0xff] %vm7801, %v7505
        %7887 = vst.msk [vmem:[#allocation2 + $0x2a8] sm:$0xff] %vm7801, %v7507
        %7888 = vst.msk [vmem:[#allocation2 + $0x2b0] sm:$0xff] %vm7801, %v7509
        %7889 = vst.msk [vmem:[#allocation2 + $0x2b8] sm:$0xff] %vm7801, %v7511
        %7890 = vst.msk [vmem:[#allocation2 + $0x2c0] sm:$0xff] %vm7801, %v7513
        %7891 = vst.msk [vmem:[#allocation2 + $0x2c8] sm:$0xff] %vm7801, %v7515
        %7892 = vst.msk [vmem:[#allocation2 + $0x2d0] sm:$0xff] %vm7801, %v7517
        %7893 = vst.msk [vmem:[#allocation2 + $0x2d8] sm:$0xff] %vm7801, %v7519
        %7894 = vst.msk [vmem:[#allocation2 + $0x2e0] sm:$0xff] %vm7801, %v7521
        %7895 = vst.msk [vmem:[#allocation2 + $0x2e8] sm:$0xff] %vm7801, %v7523
        %7896 = vst.msk [vmem:[#allocation2 + $0x2f0] sm:$0xff] %vm7801, %v7525
        %7897 = vst.msk [vmem:[#allocation2 + $0x2f8] sm:$0xff] %vm7801, %v7527
        %7898 = vst.msk [vmem:[#allocation2 + $0x300] sm:$0xff] %vm7801, %v7529
        %7899 = vst.msk [vmem:[#allocation2 + $0x308] sm:$0xff] %vm7801, %v7531
        %7900 = vst.msk [vmem:[#allocation2 + $0x310] sm:$0xff] %vm7801, %v7533
        %7901 = vst.msk [vmem:[#allocation2 + $0x318] sm:$0xff] %vm7801, %v7535
        %7902 = vst.msk [vmem:[#allocation2 + $0x320] sm:$0xff] %vm7801, %v7537
        %7903 = vst.msk [vmem:[#allocation2 + $0x328] sm:$0xff] %vm7801, %v7539
        %7904 = vst.msk [vmem:[#allocation2 + $0x330] sm:$0xff] %vm7801, %v7541
        %7905 = vst.msk [vmem:[#allocation2 + $0x338] sm:$0xff] %vm7801, %v7543
        %7906 = vst.msk [vmem:[#allocation2 + $0x340] sm:$0xff] %vm7801, %v7545
        %7907 = vst.msk [vmem:[#allocation2 + $0x348] sm:$0xff] %vm7801, %v7547
        %7908 = vst.msk [vmem:[#allocation2 + $0x350] sm:$0xff] %vm7801, %v7549
        %7909 = vst.msk [vmem:[#allocation2 + $0x358] sm:$0xff] %vm7801, %v7551
        %7910 = vst.msk [vmem:[#allocation2 + $0x360] sm:$0xff] %vm7801, %v7553
        %7911 = vst.msk [vmem:[#allocation2 + $0x368] sm:$0xff] %vm7801, %v7555
        %7912 = vst.msk [vmem:[#allocation2 + $0x370] sm:$0xff] %vm7801, %v7557
        %7913 = vst.msk [vmem:[#allocation2 + $0x378] sm:$0xff] %vm7801, %v7559
        %7914 = vst.msk [vmem:[#allocation2 + $0x380] sm:$0xff] %vm7801, %v7561
        %7915 = vst.msk [vmem:[#allocation2 + $0x388] sm:$0xff] %vm7801, %v7563
        %7916 = vst.msk [vmem:[#allocation2 + $0x390] sm:$0xff] %vm7801, %v7565
        %7917 = vst.msk [vmem:[#allocation2 + $0x398] sm:$0xff] %vm7801, %v7567
        %7918 = vst.msk [vmem:[#allocation2 + $0x3a0] sm:$0xff] %vm7801, %v7569
        %7919 = vst.msk [vmem:[#allocation2 + $0x3a8] sm:$0xff] %vm7801, %v7571
        %7920 = vst.msk [vmem:[#allocation2 + $0x3b0] sm:$0xff] %vm7801, %v7573
        %7921 = vst.msk [vmem:[#allocation2 + $0x3b8] sm:$0xff] %vm7801, %v7575
        %7922 = vst.msk [vmem:[#allocation2 + $0x3c0] sm:$0xff] %vm7801, %v7577
        %7923 = vst.msk [vmem:[#allocation2 + $0x3c8] sm:$0xff] %vm7801, %v7579
        %7924 = vst.msk [vmem:[#allocation2 + $0x3d0] sm:$0xff] %vm7801, %v7581
        %7925 = vst.msk [vmem:[#allocation2 + $0x3d8] sm:$0xff] %vm7801, %v7583
        %7926 = vst.msk [vmem:[#allocation2 + $0x3e0] sm:$0xff] %vm7801, %v7585
        %7927 = vst.msk [vmem:[#allocation2 + $0x3e8] sm:$0xff] %vm7801, %v7587
        %7928 = vst.msk [vmem:[#allocation2 + $0x3f0] sm:$0xff] %vm7801, %v7589
        %7929 = vst.msk [vmem:[#allocation2 + $0x3f8] sm:$0xff] %vm7801, %v7591
        %7930 = vst.msk [vmem:[#allocation2 + $0x400] sm:$0xff] %vm7801, %v7593
        %7931 = vst.msk [vmem:[#allocation2 + $0x408] sm:$0xff] %vm7801, %v7595
        %7932 = vst.msk [vmem:[#allocation2 + $0x410] sm:$0xff] %vm7801, %v7597
        %7933 = vst.msk [vmem:[#allocation2 + $0x418] sm:$0xff] %vm7801, %v7599
        %7934 = vst.msk [vmem:[#allocation2 + $0x420] sm:$0xff] %vm7801, %v7601
        %7935 = vst.msk [vmem:[#allocation2 + $0x428] sm:$0xff] %vm7801, %v7603
        %7936 = vst.msk [vmem:[#allocation2 + $0x430] sm:$0xff] %vm7801, %v7605
        %7937 = vst.msk [vmem:[#allocation2 + $0x438] sm:$0xff] %vm7801, %v7607
        %7938 = vst.msk [vmem:[#allocation2 + $0x440] sm:$0xff] %vm7801, %v7609
        %7939 = vst.msk [vmem:[#allocation2 + $0x448] sm:$0xff] %vm7801, %v7611
        %7940 = vst.msk [vmem:[#allocation2 + $0x450] sm:$0xff] %vm7801, %v7613
        %7941 = vst.msk [vmem:[#allocation2 + $0x458] sm:$0xff] %vm7801, %v7615
        %7942 = vst.msk [vmem:[#allocation2 + $0x460] sm:$0xff] %vm7801, %v7617
        %7943 = vst.msk [vmem:[#allocation2 + $0x468] sm:$0xff] %vm7801, %v7619
        %7944 = vst.msk [vmem:[#allocation2 + $0x470] sm:$0xff] %vm7801, %v7621
        %7945 = vst.msk [vmem:[#allocation2 + $0x478] sm:$0xff] %vm7801, %v7623
        %7946 = vst.msk [vmem:[#allocation2 + $0x480] sm:$0xff] %vm7801, %v7625
        %7947 = vst.msk [vmem:[#allocation2 + $0x488] sm:$0xff] %vm7801, %v7627
        %7948 = vst.msk [vmem:[#allocation2 + $0x490] sm:$0xff] %vm7801, %v7629
        %7949 = vst.msk [vmem:[#allocation2 + $0x498] sm:$0xff] %vm7801, %v7631
        %7950 = vst.msk [vmem:[#allocation2 + $0x4a0] sm:$0xff] %vm7801, %v7633
        %7951 = vst.msk [vmem:[#allocation2 + $0x4a8] sm:$0xff] %vm7801, %v7635
        %7952 = vst.msk [vmem:[#allocation2 + $0x4b0] sm:$0xff] %vm7801, %v7637
        %7953 = vst.msk [vmem:[#allocation2 + $0x4b8] sm:$0xff] %vm7801, %v7639
        %7954 = vst.msk [vmem:[#allocation2 + $0x4c0] sm:$0xff] %vm7801, %v7641
        %7955 = vst.msk [vmem:[#allocation2 + $0x4c8] sm:$0xff] %vm7801, %v7643
        %7956 = vst.msk [vmem:[#allocation2 + $0x4d0] sm:$0xff] %vm7801, %v7645
        %v7957 = vld [vmem:[#allocation2] sm:$0xff]
        %v7958 = vld [vmem:[#allocation2 + $0x8] sm:$0xff]
        %v7959 = vld [vmem:[#allocation2 + $0x10] sm:$0xff]
        %v7960 = vld [vmem:[#allocation2 + $0x18] sm:$0xff]
        %v7961 = vld [vmem:[#allocation2 + $0x20] sm:$0xff]
        %v7962 = vld [vmem:[#allocation2 + $0x28] sm:$0xff]
        %v7963 = vld [vmem:[#allocation2 + $0x30] sm:$0xff]
        %v7964 = vld [vmem:[#allocation2 + $0x38] sm:$0xff]
        %v7965 = vld [vmem:[#allocation2 + $0x40] sm:$0xff]
        %v7966 = vld [vmem:[#allocation2 + $0x48] sm:$0xff]
        %v7967 = vld [vmem:[#allocation2 + $0x50] sm:$0xff]
        %v7968 = vld [vmem:[#allocation2 + $0x58] sm:$0xff]
        %v7969 = vld [vmem:[#allocation2 + $0x60] sm:$0xff]
        %v7970 = vld [vmem:[#allocation2 + $0x68] sm:$0xff]
        %v7971 = vld [vmem:[#allocation2 + $0x70] sm:$0xff]
        %v7972 = vld [vmem:[#allocation2 + $0x78] sm:$0xff]
        %v7973 = vld [vmem:[#allocation2 + $0x80] sm:$0xff]
        %v7974 = vld [vmem:[#allocation2 + $0x88] sm:$0xff]
        %v7975 = vld [vmem:[#allocation2 + $0x90] sm:$0xff]
        %v7976 = vld [vmem:[#allocation2 + $0x98] sm:$0xff]
        %v7977 = vld [vmem:[#allocation2 + $0xa0] sm:$0xff]
        %v7978 = vld [vmem:[#allocation2 + $0xa8] sm:$0xff]
        %v7979 = vld [vmem:[#allocation2 + $0xb0] sm:$0xff]
        %v7980 = vld [vmem:[#allocation2 + $0xb8] sm:$0xff]
        %v7981 = vld [vmem:[#allocation2 + $0xc0] sm:$0xff]
        %v7982 = vld [vmem:[#allocation2 + $0xc8] sm:$0xff]
        %v7983 = vld [vmem:[#allocation2 + $0xd0] sm:$0xff]
        %v7984 = vld [vmem:[#allocation2 + $0xd8] sm:$0xff]
        %v7985 = vld [vmem:[#allocation2 + $0xe0] sm:$0xff]
        %v7986 = vld [vmem:[#allocation2 + $0xe8] sm:$0xff]
        %v7987 = vld [vmem:[#allocation2 + $0xf0] sm:$0xff]
        %v7988 = vld [vmem:[#allocation2 + $0xf8] sm:$0xff]
        %v7989 = vld [vmem:[#allocation2 + $0x100] sm:$0xff]
        %v7990 = vld [vmem:[#allocation2 + $0x108] sm:$0xff]
        %v7991 = vld [vmem:[#allocation2 + $0x110] sm:$0xff]
        %v7992 = vld [vmem:[#allocation2 + $0x118] sm:$0xff]
        %v7993 = vld [vmem:[#allocation2 + $0x120] sm:$0xff]
        %v7994 = vld [vmem:[#allocation2 + $0x128] sm:$0xff]
        %v7995 = vld [vmem:[#allocation2 + $0x130] sm:$0xff]
        %v7996 = vld [vmem:[#allocation2 + $0x138] sm:$0xff]
        %v7997 = vld [vmem:[#allocation2 + $0x140] sm:$0xff]
        %v7998 = vld [vmem:[#allocation2 + $0x148] sm:$0xff]
        %v7999 = vld [vmem:[#allocation2 + $0x150] sm:$0xff]
        %v8000 = vld [vmem:[#allocation2 + $0x158] sm:$0xff]
        %v8001 = vld [vmem:[#allocation2 + $0x160] sm:$0xff]
        %v8002 = vld [vmem:[#allocation2 + $0x168] sm:$0xff]
        %v8003 = vld [vmem:[#allocation2 + $0x170] sm:$0xff]
        %v8004 = vld [vmem:[#allocation2 + $0x178] sm:$0xff]
        %v8005 = vld [vmem:[#allocation2 + $0x180] sm:$0xff]
        %v8006 = vld [vmem:[#allocation2 + $0x188] sm:$0xff]
        %v8007 = vld [vmem:[#allocation2 + $0x190] sm:$0xff]
        %v8008 = vld [vmem:[#allocation2 + $0x198] sm:$0xff]
        %v8009 = vld [vmem:[#allocation2 + $0x1a0] sm:$0xff]
        %v8010 = vld [vmem:[#allocation2 + $0x1a8] sm:$0xff]
        %v8011 = vld [vmem:[#allocation2 + $0x1b0] sm:$0xff]
        %v8012 = vld [vmem:[#allocation2 + $0x1b8] sm:$0xff]
        %v8013 = vld [vmem:[#allocation2 + $0x1c0] sm:$0xff]
        %v8014 = vld [vmem:[#allocation2 + $0x1c8] sm:$0xff]
        %v8015 = vld [vmem:[#allocation2 + $0x1d0] sm:$0xff]
        %v8016 = vld [vmem:[#allocation2 + $0x1d8] sm:$0xff]
        %v8017 = vld [vmem:[#allocation2 + $0x1e0] sm:$0xff]
        %v8018 = vld [vmem:[#allocation2 + $0x1e8] sm:$0xff]
        %v8019 = vld [vmem:[#allocation2 + $0x1f0] sm:$0xff]
        %v8020 = vld [vmem:[#allocation2 + $0x1f8] sm:$0xff]
        %v8021 = vld [vmem:[#allocation2 + $0x200] sm:$0xff]
        %v8022 = vld [vmem:[#allocation2 + $0x208] sm:$0xff]
        %v8023 = vld [vmem:[#allocation2 + $0x210] sm:$0xff]
        %v8024 = vld [vmem:[#allocation2 + $0x218] sm:$0xff]
        %v8025 = vld [vmem:[#allocation2 + $0x220] sm:$0xff]
        %v8026 = vld [vmem:[#allocation2 + $0x228] sm:$0xff]
        %v8027 = vld [vmem:[#allocation2 + $0x230] sm:$0xff]
        %v8028 = vld [vmem:[#allocation2 + $0x238] sm:$0xff]
        %v8029 = vld [vmem:[#allocation2 + $0x240] sm:$0xff]
        %v8030 = vld [vmem:[#allocation2 + $0x248] sm:$0xff]
        %v8031 = vld [vmem:[#allocation2 + $0x250] sm:$0xff]
        %v8032 = vld [vmem:[#allocation2 + $0x258] sm:$0xff]
        %v8033 = vld [vmem:[#allocation2 + $0x260] sm:$0xff]
        %v8034 = vld [vmem:[#allocation2 + $0x268] sm:$0xff]
        %v8035 = vld [vmem:[#allocation2 + $0x270] sm:$0xff]
        %v8036 = vld [vmem:[#allocation2 + $0x278] sm:$0xff]
        %v8037 = vld [vmem:[#allocation2 + $0x280] sm:$0xff]
        %v8038 = vld [vmem:[#allocation2 + $0x288] sm:$0xff]
        %v8039 = vld [vmem:[#allocation2 + $0x290] sm:$0xff]
        %v8040 = vld [vmem:[#allocation2 + $0x298] sm:$0xff]
        %v8041 = vld [vmem:[#allocation2 + $0x2a0] sm:$0xff]
        %v8042 = vld [vmem:[#allocation2 + $0x2a8] sm:$0xff]
        %v8043 = vld [vmem:[#allocation2 + $0x2b0] sm:$0xff]
        %v8044 = vld [vmem:[#allocation2 + $0x2b8] sm:$0xff]
        %v8045 = vld [vmem:[#allocation2 + $0x2c0] sm:$0xff]
        %v8046 = vld [vmem:[#allocation2 + $0x2c8] sm:$0xff]
        %v8047 = vld [vmem:[#allocation2 + $0x2d0] sm:$0xff]
        %v8048 = vld [vmem:[#allocation2 + $0x2d8] sm:$0xff]
        %v8049 = vld [vmem:[#allocation2 + $0x2e0] sm:$0xff]
        %v8050 = vld [vmem:[#allocation2 + $0x2e8] sm:$0xff]
        %v8051 = vld [vmem:[#allocation2 + $0x2f0] sm:$0xff]
        %v8052 = vld [vmem:[#allocation2 + $0x2f8] sm:$0xff]
        %v8053 = vld [vmem:[#allocation2 + $0x300] sm:$0xff]
        %v8054 = vld [vmem:[#allocation2 + $0x308] sm:$0xff]
        %v8055 = vld [vmem:[#allocation2 + $0x310] sm:$0xff]
        %v8056 = vld [vmem:[#allocation2 + $0x318] sm:$0xff]
        %v8057 = vld [vmem:[#allocation2 + $0x320] sm:$0xff]
        %v8058 = vld [vmem:[#allocation2 + $0x328] sm:$0xff]
        %v8059 = vld [vmem:[#allocation2 + $0x330] sm:$0xff]
        %v8060 = vld [vmem:[#allocation2 + $0x338] sm:$0xff]
        %v8061 = vld [vmem:[#allocation2 + $0x340] sm:$0xff]
        %v8062 = vld [vmem:[#allocation2 + $0x348] sm:$0xff]
        %v8063 = vld [vmem:[#allocation2 + $0x350] sm:$0xff]
        %v8064 = vld [vmem:[#allocation2 + $0x358] sm:$0xff]
        %v8065 = vld [vmem:[#allocation2 + $0x360] sm:$0xff]
        %v8066 = vld [vmem:[#allocation2 + $0x368] sm:$0xff]
        %v8067 = vld [vmem:[#allocation2 + $0x370] sm:$0xff]
        %v8068 = vld [vmem:[#allocation2 + $0x378] sm:$0xff]
        %v8069 = vld [vmem:[#allocation2 + $0x380] sm:$0xff]
        %v8070 = vld [vmem:[#allocation2 + $0x388] sm:$0xff]
        %v8071 = vld [vmem:[#allocation2 + $0x390] sm:$0xff]
        %v8072 = vld [vmem:[#allocation2 + $0x398] sm:$0xff]
        %v8073 = vld [vmem:[#allocation2 + $0x3a0] sm:$0xff]
        %v8074 = vld [vmem:[#allocation2 + $0x3a8] sm:$0xff]
        %v8075 = vld [vmem:[#allocation2 + $0x3b0] sm:$0xff]
        %v8076 = vld [vmem:[#allocation2 + $0x3b8] sm:$0xff]
        %v8077 = vld [vmem:[#allocation2 + $0x3c0] sm:$0xff]
        %v8078 = vld [vmem:[#allocation2 + $0x3c8] sm:$0xff]
        %v8079 = vld [vmem:[#allocation2 + $0x3d0] sm:$0xff]
        %v8080 = vld [vmem:[#allocation2 + $0x3d8] sm:$0xff]
        %v8081 = vld [vmem:[#allocation2 + $0x3e0] sm:$0xff]
        %v8082 = vld [vmem:[#allocation2 + $0x3e8] sm:$0xff]
        %v8083 = vld [vmem:[#allocation2 + $0x3f0] sm:$0xff]
        %v8084 = vld [vmem:[#allocation2 + $0x3f8] sm:$0xff]
        %v8085 = vld [vmem:[#allocation2 + $0x400] sm:$0xff]
        %v8086 = vld [vmem:[#allocation2 + $0x408] sm:$0xff]
        %v8087 = vld [vmem:[#allocation2 + $0x410] sm:$0xff]
        %v8088 = vld [vmem:[#allocation2 + $0x418] sm:$0xff]
        %v8089 = vld [vmem:[#allocation2 + $0x420] sm:$0xff]
        %v8090 = vld [vmem:[#allocation2 + $0x428] sm:$0xff]
        %v8091 = vld [vmem:[#allocation2 + $0x430] sm:$0xff]
        %v8092 = vld [vmem:[#allocation2 + $0x438] sm:$0xff]
        %v8093 = vld [vmem:[#allocation2 + $0x440] sm:$0xff]
        %v8094 = vld [vmem:[#allocation2 + $0x448] sm:$0xff]
        %v8095 = vld [vmem:[#allocation2 + $0x450] sm:$0xff]
        %v8096 = vld [vmem:[#allocation2 + $0x458] sm:$0xff]
        %v8097 = vld [vmem:[#allocation2 + $0x460] sm:$0xff]
        %v8098 = vld [vmem:[#allocation2 + $0x468] sm:$0xff]
        %v8099 = vld [vmem:[#allocation2 + $0x470] sm:$0xff]
        %v8100 = vld [vmem:[#allocation2 + $0x478] sm:$0xff]
        %v8101 = vld [vmem:[#allocation2 + $0x480] sm:$0xff]
        %v8102 = vld [vmem:[#allocation2 + $0x488] sm:$0xff]
        %v8103 = vld [vmem:[#allocation2 + $0x490] sm:$0xff]
        %v8104 = vld [vmem:[#allocation2 + $0x498] sm:$0xff]
        %v8105 = vld [vmem:[#allocation2 + $0x4a0] sm:$0xff]
        %v8106 = vld [vmem:[#allocation2 + $0x4a8] sm:$0xff]
        %v8107 = vld [vmem:[#allocation2 + $0x4b0] sm:$0xff]
        %v8108 = vld [vmem:[#allocation2 + $0x4b8] sm:$0xff]
        %v8109 = vld [vmem:[#allocation2 + $0x4c0] sm:$0xff]
        %v8110 = vld [vmem:[#allocation2 + $0x4c8] sm:$0xff]
        %v8111 = vld [vmem:[#allocation2 + $0x4d0] sm:$0xff]
        %v8112 = vld [vmem:[%s1] sm:$0xff]
        %v8113 = vld [vmem:[%s1 + $0x8] sm:$0xff]
        %v8114 = vld [vmem:[%s1 + $0x10] sm:$0xff]
        %v8115 = vld [vmem:[%s1 + $0x18] sm:$0xff]
        %v8116 = vld [vmem:[%s1 + $0x20] sm:$0xf]
        %v8117 = vld [vmem:[%s2] sm:$0x1]
        %v8119 = vlaneseq
        %v8120 = vshrl.u32 %v8119, 7
        %v8121 = vsub.s32 0, %v8120
        %v8122 = vrot.slane %v8117, %v8121
        %vm8124 = vcmask 293888
        %v8126 = vsel %vm8124, %v7957, 0
        %v8129 = vsel %vm8124, %v7958, 0
        %v8132 = vsel %vm8124, %v7959, 0
        %v8135 = vsel %vm8124, %v7960, 0
        %v8138 = vsel %vm8124, %v7961, 0
        %v8141 = vsel %vm8124, %v7962, 0
        %v8144 = vsel %vm8124, %v7963, 0
        %v8147 = vsel %vm8124, %v7964, 0
        %v8150 = vsel %vm8124, %v7965, 0
        %v8153 = vsel %vm8124, %v7966, 0
        %v8156 = vsel %vm8124, %v7967, 0
        %v8159 = vsel %vm8124, %v7968, 0
        %v8162 = vsel %vm8124, %v7969, 0
        %v8165 = vsel %vm8124, %v7970, 0
        %v8168 = vsel %vm8124, %v7971, 0
        %v8171 = vsel %vm8124, %v7972, 0
        %v8174 = vsel %vm8124, %v7973, 0
        %v8177 = vsel %vm8124, %v7974, 0
        %v8180 = vsel %vm8124, %v7975, 0
        %v8183 = vsel %vm8124, %v7976, 0
        %v8186 = vsel %vm8124, %v7977, 0
        %v8189 = vsel %vm8124, %v7978, 0
        %v8192 = vsel %vm8124, %v7979, 0
        %v8195 = vsel %vm8124, %v7980, 0
        %v8198 = vsel %vm8124, %v7981, 0
        %v8201 = vsel %vm8124, %v7982, 0
        %v8204 = vsel %vm8124, %v7983, 0
        %v8207 = vsel %vm8124, %v7984, 0
        %v8210 = vsel %vm8124, %v7985, 0
        %v8213 = vsel %vm8124, %v7986, 0
        %v8216 = vsel %vm8124, %v7987, 0
        %v8219 = vsel %vm8124, %v7988, 0
        %v8222 = vsel %vm8124, %v7989, 0
        %v8225 = vsel %vm8124, %v7990, 0
        %v8228 = vsel %vm8124, %v7991, 0
        %v8231 = vsel %vm8124, %v7992, 0
        %v8234 = vsel %vm8124, %v7993, 0
        %v8237 = vsel %vm8124, %v7994, 0
        %v8240 = vsel %vm8124, %v7995, 0
        %v8243 = vsel %vm8124, %v7996, 0
        %v8246 = vsel %vm8124, %v7997, 0
        %v8249 = vsel %vm8124, %v7998, 0
        %v8252 = vsel %vm8124, %v7999, 0
        %v8255 = vsel %vm8124, %v8000, 0
        %v8258 = vsel %vm8124, %v8001, 0
        %v8261 = vsel %vm8124, %v8002, 0
        %v8264 = vsel %vm8124, %v8003, 0
        %v8267 = vsel %vm8124, %v8004, 0
        %v8270 = vsel %vm8124, %v8005, 0
        %v8273 = vsel %vm8124, %v8006, 0
        %v8276 = vsel %vm8124, %v8007, 0
        %v8279 = vsel %vm8124, %v8008, 0
        %v8282 = vsel %vm8124, %v8009, 0
        %v8285 = vsel %vm8124, %v8010, 0
        %v8288 = vsel %vm8124, %v8011, 0
        %v8291 = vsel %vm8124, %v8012, 0
        %v8294 = vsel %vm8124, %v8013, 0
        %v8297 = vsel %vm8124, %v8014, 0
        %v8300 = vsel %vm8124, %v8015, 0
        %v8303 = vsel %vm8124, %v8016, 0
        %v8306 = vsel %vm8124, %v8017, 0
        %v8309 = vsel %vm8124, %v8018, 0
        %v8312 = vsel %vm8124, %v8019, 0
        %v8315 = vsel %vm8124, %v8020, 0
        %v8318 = vsel %vm8124, %v8021, 0
        %v8321 = vsel %vm8124, %v8022, 0
        %v8324 = vsel %vm8124, %v8023, 0
        %v8327 = vsel %vm8124, %v8024, 0
        %v8330 = vsel %vm8124, %v8025, 0
        %v8333 = vsel %vm8124, %v8026, 0
        %v8336 = vsel %vm8124, %v8027, 0
        %v8339 = vsel %vm8124, %v8028, 0
        %v8342 = vsel %vm8124, %v8029, 0
        %v8345 = vsel %vm8124, %v8030, 0
        %v8348 = vsel %vm8124, %v8031, 0
        %v8351 = vsel %vm8124, %v8032, 0
        %v8354 = vsel %vm8124, %v8033, 0
        %v8357 = vsel %vm8124, %v8034, 0
        %v8360 = vsel %vm8124, %v8035, 0
        %v8363 = vsel %vm8124, %v8036, 0
        %v8366 = vsel %vm8124, %v8037, 0
        %v8369 = vsel %vm8124, %v8038, 0
        %v8372 = vsel %vm8124, %v8039, 0
        %v8375 = vsel %vm8124, %v8040, 0
        %v8378 = vsel %vm8124, %v8041, 0
        %v8381 = vsel %vm8124, %v8042, 0
        %v8384 = vsel %vm8124, %v8043, 0
        %v8387 = vsel %vm8124, %v8044, 0
        %v8390 = vsel %vm8124, %v8045, 0
        %v8393 = vsel %vm8124, %v8046, 0
        %v8396 = vsel %vm8124, %v8047, 0
        %v8399 = vsel %vm8124, %v8048, 0
        %v8402 = vsel %vm8124, %v8049, 0
        %v8405 = vsel %vm8124, %v8050, 0
        %v8408 = vsel %vm8124, %v8051, 0
        %v8411 = vsel %vm8124, %v8052, 0
        %v8414 = vsel %vm8124, %v8053, 0
        %v8417 = vsel %vm8124, %v8054, 0
        %v8420 = vsel %vm8124, %v8055, 0
        %v8423 = vsel %vm8124, %v8056, 0
        %v8426 = vsel %vm8124, %v8057, 0
        %v8429 = vsel %vm8124, %v8058, 0
        %v8432 = vsel %vm8124, %v8059, 0
        %v8435 = vsel %vm8124, %v8060, 0
        %v8438 = vsel %vm8124, %v8061, 0
        %v8441 = vsel %vm8124, %v8062, 0
        %v8444 = vsel %vm8124, %v8063, 0
        %v8447 = vsel %vm8124, %v8064, 0
        %v8450 = vsel %vm8124, %v8065, 0
        %v8453 = vsel %vm8124, %v8066, 0
        %v8456 = vsel %vm8124, %v8067, 0
        %v8459 = vsel %vm8124, %v8068, 0
        %v8462 = vsel %vm8124, %v8069, 0
        %v8465 = vsel %vm8124, %v8070, 0
        %v8468 = vsel %vm8124, %v8071, 0
        %v8471 = vsel %vm8124, %v8072, 0
        %v8474 = vsel %vm8124, %v8073, 0
        %v8477 = vsel %vm8124, %v8074, 0
        %v8480 = vsel %vm8124, %v8075, 0
        %v8483 = vsel %vm8124, %v8076, 0
        %v8486 = vsel %vm8124, %v8077, 0
        %v8489 = vsel %vm8124, %v8078, 0
        %v8492 = vsel %vm8124, %v8079, 0
        %v8495 = vsel %vm8124, %v8080, 0
        %v8498 = vsel %vm8124, %v8081, 0
        %v8501 = vsel %vm8124, %v8082, 0
        %v8504 = vsel %vm8124, %v8083, 0
        %v8507 = vsel %vm8124, %v8084, 0
        %v8510 = vsel %vm8124, %v8085, 0
        %v8513 = vsel %vm8124, %v8086, 0
        %v8516 = vsel %vm8124, %v8087, 0
        %v8519 = vsel %vm8124, %v8088, 0
        %v8522 = vsel %vm8124, %v8089, 0
        %v8525 = vsel %vm8124, %v8090, 0
        %v8528 = vsel %vm8124, %v8091, 0
        %v8531 = vsel %vm8124, %v8092, 0
        %v8534 = vsel %vm8124, %v8093, 0
        %v8537 = vsel %vm8124, %v8094, 0
        %v8540 = vsel %vm8124, %v8095, 0
        %v8543 = vsel %vm8124, %v8096, 0
        %v8546 = vsel %vm8124, %v8097, 0
        %v8549 = vsel %vm8124, %v8098, 0
        %v8552 = vsel %vm8124, %v8099, 0
        %v8555 = vsel %vm8124, %v8100, 0
        %v8558 = vsel %vm8124, %v8101, 0
        %v8561 = vsel %vm8124, %v8102, 0
        %v8564 = vsel %vm8124, %v8103, 0
        %v8567 = vsel %vm8124, %v8104, 0
        %v8570 = vsel %vm8124, %v8105, 0
        %v8573 = vsel %vm8124, %v8106, 0
        %v8576 = vsel %vm8124, %v8107, 0
        %v8579 = vsel %vm8124, %v8108, 0
        %v8582 = vsel %vm8124, %v8109, 0
        %v8585 = vsel %vm8124, %v8110, 0
        %v8588 = vsel %vm8124, %v8111, 0
        %vm8590 = vcmask 1043456
        %v8592 = vsel %vm8590, %v8116, 0
        %8594 = vmatprep.subr.mxu0 0.0
        %8595 = vmatpush1.msra.mxu0 %v8112
        %8596 = vmatprep.subr.mxu0 0.0
        %8597 = vmatpush1.msra.mxu0 %v8113
        %8598 = vmatprep.subr.mxu0 0.0
        %8599 = vmatpush1.msra.mxu0 %v8114
        %8600 = vmatprep.subr.mxu0 0.0
        %8601 = vmatpush1.msra.mxu0 %v8115
        %8602 = vmatprep.subr.mxu0 0.0
        %8603 = vmatpush1.msra.mxu0 %v8592
        %8604 = vmatprep.subr.mxu0 0.0
        %8605 = vmatpush1.msra.mxu0 0.0
        %8606 = vmatprep.subr.mxu0 0.0
        %8607 = vmatpush1.msra.mxu0 0.0
        %8608 = vmatprep.subr.mxu0 0.0
        %8609 = vmatpush1.msra.mxu0 0.0
        %8610 = vmatprep.subr.mxu0 0.0
        %8611 = vmatpush1.msra.mxu0 0.0
        %8612 = vmatprep.subr.mxu0 0.0
        %8613 = vmatpush1.msra.mxu0 0.0
        %8614 = vmatprep.subr.mxu0 0.0
        %8615 = vmatpush1.msra.mxu0 0.0
        %8616 = vmatprep.subr.mxu0 0.0
        %8617 = vmatpush1.msra.mxu0 0.0
        %8618 = vmatprep.subr.mxu0 0.0
        %8619 = vmatpush1.msra.mxu0 0.0
        %8620 = vmatprep.subr.mxu0 0.0
        %8621 = vmatpush1.msra.mxu0 0.0
        %8622 = vmatprep.subr.mxu0 0.0
        %8623 = vmatpush1.msra.mxu0 0.0
        %8624 = vmatprep.subr.mxu0 0.0
        %8625 = vmatpush1.msra.mxu0 0.0
        %8626 = vmatprep.subr.mxu0 0.0
        %8627 = vmatpush1.msra.mxu0 0.0
        %8628 = vmatprep.subr.mxu0 0.0
        %8629 = vmatpush1.msra.mxu0 0.0
        %8630 = vmatprep.subr.mxu0 0.0
        %8631 = vmatpush1.msra.mxu0 0.0
        %8632 = vmatprep.subr.mxu0 0.0
        %8633 = vmatpush1.msra.mxu0 0.0
        %8634 = vmatprep.subr.mxu0 0.0
        %8635 = vmatpush1.msra.mxu0 0.0
        %8636 = vmatprep.subr.mxu0 0.0
        %8637 = vmatpush1.msra.mxu0 0.0
        %8638 = vmatprep.subr.mxu0 0.0
        %8639 = vmatpush1.msra.mxu0 0.0
        %8640 = vmatprep.subr.mxu0 0.0
        %8641 = vmatpush1.msra.mxu0 0.0
        %8642 = vmatprep.subr.mxu0 0.0
        %8643 = vmatpush1.msra.mxu0 0.0
        %8644 = vmatprep.subr.mxu0 0.0
        %8645 = vmatpush1.msra.mxu0 0.0
        %8646 = vmatprep.subr.mxu0 0.0
        %8647 = vmatpush1.msra.mxu0 0.0
        %8648 = vmatprep.subr.mxu0 0.0
        %8649 = vmatpush1.msra.mxu0 0.0
        %8650 = vmatprep.subr.mxu0 0.0
        %8651 = vmatpush1.msra.mxu0 0.0
        %8652 = vmatprep.subr.mxu0 0.0
        %8653 = vmatpush1.msra.mxu0 0.0
        %8654 = vmatprep.subr.mxu0 0.0
        %8655 = vmatpush1.msra.mxu0 0.0
        %8656 = vmatprep.subr.mxu0 0.0
        %8657 = vmatpush1.msra.mxu0 0.0
        %8658 = vmatprep.mubr.f32.mxu0 0.0
        %8659 = vmatmul.mubr.f32.gmra.mrb[0].mxu0 %v8126
        %v8660 = vpop.f32.mrb[0].mxu0
        %v8661 = vadd.f32 %v8122, %v8660
        %v8662 = vpop.f32.mrb[0].mxu0
        %8663 = vmatprep.mubr.f32.mxu0 0.0
        %8664 = vmatmul.mubr.f32.gmra.mrb[0].mxu0 %v8129
        %v8665 = vpop.f32.mrb[0].mxu0
        %v8666 = vadd.f32 %v8122, %v8665
        %v8667 = vpop.f32.mrb[0].mxu0
        %8668 = vmatprep.mubr.f32.mxu0 0.0
        %8669 = vmatmul.mubr.f32.gmra.mrb[0].mxu0 %v8132
        %v8670 = vpop.f32.mrb[0].mxu0
        %v8671 = vadd.f32 %v8122, %v8670
        %v8672 = vpop.f32.mrb[0].mxu0
        %8673 = vmatprep.mubr.f32.mxu0 0.0
        %8674 = vmatmul.mubr.f32.gmra.mrb[0].mxu0 %v8135
        %v8675 = vpop.f32.mrb[0].mxu0
        %v8676 = vadd.f32 %v8122, %v8675
        %v8677 = vpop.f32.mrb[0].mxu0
        %8678 = vmatprep.mubr.f32.mxu0 0.0
        %8679 = vmatmul.mubr.f32.gmra.mrb[0].mxu0 %v8138
        %v8680 = vpop.f32.mrb[0].mxu0
        %v8681 = vadd.f32 %v8122, %v8680
        %v8682 = vpop.f32.mrb[0].mxu0
        %8683 = vmatprep.mubr.f32.mxu0 0.0
        %8684 = vmatmul.mubr.f32.gmra.mrb[0].mxu0 %v8141
        %v8685 = vpop.f32.mrb[0].mxu0
        %v8686 = vadd.f32 %v8122, %v8685
        %v8687 = vpop.f32.mrb[0].mxu0
        %8688 = vmatprep.mubr.f32.mxu0 0.0
        %8689 = vmatmul.mubr.f32.gmra.mrb[0].mxu0 %v8144
        %v8690 = vpop.f32.mrb[0].mxu0
        %v8691 = vadd.f32 %v8122, %v8690
        %v8692 = vpop.f32.mrb[0].mxu0
        %8693 = vmatprep.mubr.f32.mxu0 0.0
        %8694 = vmatmul.mubr.f32.gmra.mrb[0].mxu0 %v8147
        %v8695 = vpop.f32.mrb[0].mxu0
        %v8696 = vadd.f32 %v8122, %v8695
        %v8697 = vpop.f32.mrb[0].mxu0
        %8698 = vmatprep.mubr.f32.mxu0 0.0
        %8699 = vmatmul.mubr.f32.gmra.mrb[0].mxu0 %v8150
        %v8700 = vpop.f32.mrb[0].mxu0
        %v8701 = vadd.f32 %v8122, %v8700
        %v8702 = vpop.f32.mrb[0].mxu0
        %8703 = vmatprep.mubr.f32.mxu0 0.0
        %8704 = vmatmul.mubr.f32.gmra.mrb[0].mxu0 %v8153
        %v8705 = vpop.f32.mrb[0].mxu0
        %v8706 = vadd.f32 %v8122, %v8705
        %v8707 = vpop.f32.mrb[0].mxu0
        %8708 = vmatprep.mubr.f32.mxu0 0.0
        %8709 = vmatmul.mubr.f32.gmra.mrb[0].mxu0 %v8156
        %v8710 = vpop.f32.mrb[0].mxu0
        %v8711 = vadd.f32 %v8122, %v8710
        %v8712 = vpop.f32.mrb[0].mxu0
        %8713 = vmatprep.mubr.f32.mxu0 0.0
        %8714 = vmatmul.mubr.f32.gmra.mrb[0].mxu0 %v8159
        %v8715 = vpop.f32.mrb[0].mxu0
        %v8716 = vadd.f32 %v8122, %v8715
        %v8717 = vpop.f32.mrb[0].mxu0
        %8718 = vmatprep.mubr.f32.mxu0 0.0
        %8719 = vmatmul.mubr.f32.gmra.mrb[0].mxu0 %v8162
        %v8720 = vpop.f32.mrb[0].mxu0
        %v8721 = vadd.f32 %v8122, %v8720
        %v8722 = vpop.f32.mrb[0].mxu0
        %8723 = vmatprep.mubr.f32.mxu0 0.0
        %8724 = vmatmul.mubr.f32.gmra.mrb[0].mxu0 %v8165
        %v8725 = vpop.f32.mrb[0].mxu0
        %v8726 = vadd.f32 %v8122, %v8725
        %v8727 = vpop.f32.mrb[0].mxu0
        %8728 = vmatprep.mubr.f32.mxu0 0.0
        %8729 = vmatmul.mubr.f32.gmra.mrb[0].mxu0 %v8168
        %v8730 = vpop.f32.mrb[0].mxu0
        %v8731 = vadd.f32 %v8122, %v8730
        %v8732 = vpop.f32.mrb[0].mxu0
        %8733 = vmatprep.mubr.f32.mxu0 0.0
        %8734 = vmatmul.mubr.f32.gmra.mrb[0].mxu0 %v8171
        %v8735 = vpop.f32.mrb[0].mxu0
        %v8736 = vadd.f32 %v8122, %v8735
        %v8737 = vpop.f32.mrb[0].mxu0
        %8738 = vmatprep.mubr.f32.mxu0 0.0
        %8739 = vmatmul.mubr.f32.gmra.mrb[0].mxu0 %v8174
        %v8740 = vpop.f32.mrb[0].mxu0
        %v8741 = vadd.f32 %v8122, %v8740
        %v8742 = vpop.f32.mrb[0].mxu0
        %8743 = vmatprep.mubr.f32.mxu0 0.0
        %8744 = vmatmul.mubr.f32.gmra.mrb[0].mxu0 %v8177
        %v8745 = vpop.f32.mrb[0].mxu0
        %v8746 = vadd.f32 %v8122, %v8745
        %v8747 = vpop.f32.mrb[0].mxu0
        %8748 = vmatprep.mubr.f32.mxu0 0.0
        %8749 = vmatmul.mubr.f32.gmra.mrb[0].mxu0 %v8180
        %v8750 = vpop.f32.mrb[0].mxu0
        %v8751 = vadd.f32 %v8122, %v8750
        %v8752 = vpop.f32.mrb[0].mxu0
        %8753 = vmatprep.mubr.f32.mxu0 0.0
        %8754 = vmatmul.mubr.f32.gmra.mrb[0].mxu0 %v8183
        %v8755 = vpop.f32.mrb[0].mxu0
        %v8756 = vadd.f32 %v8122, %v8755
        %v8757 = vpop.f32.mrb[0].mxu0
        %8758 = vmatprep.mubr.f32.mxu0 0.0
        %8759 = vmatmul.mubr.f32.gmra.mrb[0].mxu0 %v8186
        %v8760 = vpop.f32.mrb[0].mxu0
        %v8761 = vadd.f32 %v8122, %v8760
        %v8762 = vpop.f32.mrb[0].mxu0
        %8763 = vmatprep.mubr.f32.mxu0 0.0
        %8764 = vmatmul.mubr.f32.gmra.mrb[0].mxu0 %v8189
        %v8765 = vpop.f32.mrb[0].mxu0
        %v8766 = vadd.f32 %v8122, %v8765
        %v8767 = vpop.f32.mrb[0].mxu0
        %8768 = vmatprep.mubr.f32.mxu0 0.0
        %8769 = vmatmul.mubr.f32.gmra.mrb[0].mxu0 %v8192
        %v8770 = vpop.f32.mrb[0].mxu0
        %v8771 = vadd.f32 %v8122, %v8770
        %v8772 = vpop.f32.mrb[0].mxu0
        %8773 = vmatprep.mubr.f32.mxu0 0.0
        %8774 = vmatmul.mubr.f32.gmra.mrb[0].mxu0 %v8195
        %v8775 = vpop.f32.mrb[0].mxu0
        %v8776 = vadd.f32 %v8122, %v8775
        %v8777 = vpop.f32.mrb[0].mxu0
        %8778 = vmatprep.mubr.f32.mxu0 0.0
        %8779 = vmatmul.mubr.f32.gmra.mrb[0].mxu0 %v8198
        %v8780 = vpop.f32.mrb[0].mxu0
        %v8781 = vadd.f32 %v8122, %v8780
        %v8782 = vpop.f32.mrb[0].mxu0
        %8783 = vmatprep.mubr.f32.mxu0 0.0
        %8784 = vmatmul.mubr.f32.gmra.mrb[0].mxu0 %v8201
        %v8785 = vpop.f32.mrb[0].mxu0
        %v8786 = vadd.f32 %v8122, %v8785
        %v8787 = vpop.f32.mrb[0].mxu0
        %8788 = vmatprep.mubr.f32.mxu0 0.0
        %8789 = vmatmul.mubr.f32.gmra.mrb[0].mxu0 %v8204
        %v8790 = vpop.f32.mrb[0].mxu0
        %v8791 = vadd.f32 %v8122, %v8790
        %v8792 = vpop.f32.mrb[0].mxu0
        %8793 = vmatprep.mubr.f32.mxu0 0.0
        %8794 = vmatmul.mubr.f32.gmra.mrb[0].mxu0 %v8207
        %v8795 = vpop.f32.mrb[0].mxu0
        %v8796 = vadd.f32 %v8122, %v8795
        %v8797 = vpop.f32.mrb[0].mxu0
        %8798 = vmatprep.mubr.f32.mxu0 0.0
        %8799 = vmatmul.mubr.f32.gmra.mrb[0].mxu0 %v8210
        %v8800 = vpop.f32.mrb[0].mxu0
        %v8801 = vadd.f32 %v8122, %v8800
        %v8802 = vpop.f32.mrb[0].mxu0
        %8803 = vmatprep.mubr.f32.mxu0 0.0
        %8804 = vmatmul.mubr.f32.gmra.mrb[0].mxu0 %v8213
        %v8805 = vpop.f32.mrb[0].mxu0
        %v8806 = vadd.f32 %v8122, %v8805
        %v8807 = vpop.f32.mrb[0].mxu0
        %8808 = vmatprep.mubr.f32.mxu0 0.0
        %8809 = vmatmul.mubr.f32.gmra.mrb[0].mxu0 %v8216
        %v8810 = vpop.f32.mrb[0].mxu0
        %v8811 = vadd.f32 %v8122, %v8810
        %v8812 = vpop.f32.mrb[0].mxu0
        %8813 = vmatprep.mubr.f32.mxu0 0.0
        %8814 = vmatmul.mubr.f32.gmra.mrb[0].mxu0 %v8219
        %v8815 = vpop.f32.mrb[0].mxu0
        %v8816 = vadd.f32 %v8122, %v8815
        %v8817 = vpop.f32.mrb[0].mxu0
        %8818 = vmatprep.mubr.f32.mxu0 0.0
        %8819 = vmatmul.mubr.f32.gmra.mrb[0].mxu0 %v8222
        %v8820 = vpop.f32.mrb[0].mxu0
        %v8821 = vadd.f32 %v8122, %v8820
        %v8822 = vpop.f32.mrb[0].mxu0
        %8823 = vmatprep.mubr.f32.mxu0 0.0
        %8824 = vmatmul.mubr.f32.gmra.mrb[0].mxu0 %v8225
        %v8825 = vpop.f32.mrb[0].mxu0
        %v8826 = vadd.f32 %v8122, %v8825
        %v8827 = vpop.f32.mrb[0].mxu0
        %8828 = vmatprep.mubr.f32.mxu0 0.0
        %8829 = vmatmul.mubr.f32.gmra.mrb[0].mxu0 %v8228
        %v8830 = vpop.f32.mrb[0].mxu0
        %v8831 = vadd.f32 %v8122, %v8830
        %v8832 = vpop.f32.mrb[0].mxu0
        %8833 = vmatprep.mubr.f32.mxu0 0.0
        %8834 = vmatmul.mubr.f32.gmra.mrb[0].mxu0 %v8231
        %v8835 = vpop.f32.mrb[0].mxu0
        %v8836 = vadd.f32 %v8122, %v8835
        %v8837 = vpop.f32.mrb[0].mxu0
        %8838 = vmatprep.mubr.f32.mxu0 0.0
        %8839 = vmatmul.mubr.f32.gmra.mrb[0].mxu0 %v8234
        %v8840 = vpop.f32.mrb[0].mxu0
        %v8841 = vadd.f32 %v8122, %v8840
        %v8842 = vpop.f32.mrb[0].mxu0
        %8843 = vmatprep.mubr.f32.mxu0 0.0
        %8844 = vmatmul.mubr.f32.gmra.mrb[0].mxu0 %v8237
        %v8845 = vpop.f32.mrb[0].mxu0
        %v8846 = vadd.f32 %v8122, %v8845
        %v8847 = vpop.f32.mrb[0].mxu0
        %8848 = vmatprep.mubr.f32.mxu0 0.0
        %8849 = vmatmul.mubr.f32.gmra.mrb[0].mxu0 %v8240
        %v8850 = vpop.f32.mrb[0].mxu0
        %v8851 = vadd.f32 %v8122, %v8850
        %v8852 = vpop.f32.mrb[0].mxu0
        %8853 = vmatprep.mubr.f32.mxu0 0.0
        %8854 = vmatmul.mubr.f32.gmra.mrb[0].mxu0 %v8243
        %v8855 = vpop.f32.mrb[0].mxu0
        %v8856 = vadd.f32 %v8122, %v8855
        %v8857 = vpop.f32.mrb[0].mxu0
        %8858 = vmatprep.mubr.f32.mxu0 0.0
        %8859 = vmatmul.mubr.f32.gmra.mrb[0].mxu0 %v8246
        %v8860 = vpop.f32.mrb[0].mxu0
        %v8861 = vadd.f32 %v8122, %v8860
        %v8862 = vpop.f32.mrb[0].mxu0
        %8863 = vmatprep.mubr.f32.mxu0 0.0
        %8864 = vmatmul.mubr.f32.gmra.mrb[0].mxu0 %v8249
        %v8865 = vpop.f32.mrb[0].mxu0
        %v8866 = vadd.f32 %v8122, %v8865
        %v8867 = vpop.f32.mrb[0].mxu0
        %8868 = vmatprep.mubr.f32.mxu0 0.0
        %8869 = vmatmul.mubr.f32.gmra.mrb[0].mxu0 %v8252
        %v8870 = vpop.f32.mrb[0].mxu0
        %v8871 = vadd.f32 %v8122, %v8870
        %v8872 = vpop.f32.mrb[0].mxu0
        %8873 = vmatprep.mubr.f32.mxu0 0.0
        %8874 = vmatmul.mubr.f32.gmra.mrb[0].mxu0 %v8255
        %v8875 = vpop.f32.mrb[0].mxu0
        %v8876 = vadd.f32 %v8122, %v8875
        %v8877 = vpop.f32.mrb[0].mxu0
        %8878 = vmatprep.mubr.f32.mxu0 0.0
        %8879 = vmatmul.mubr.f32.gmra.mrb[0].mxu0 %v8258
        %v8880 = vpop.f32.mrb[0].mxu0
        %v8881 = vadd.f32 %v8122, %v8880
        %v8882 = vpop.f32.mrb[0].mxu0
        %8883 = vmatprep.mubr.f32.mxu0 0.0
        %8884 = vmatmul.mubr.f32.gmra.mrb[0].mxu0 %v8261
        %v8885 = vpop.f32.mrb[0].mxu0
        %v8886 = vadd.f32 %v8122, %v8885
        %v8887 = vpop.f32.mrb[0].mxu0
        %8888 = vmatprep.mubr.f32.mxu0 0.0
        %8889 = vmatmul.mubr.f32.gmra.mrb[0].mxu0 %v8264
        %v8890 = vpop.f32.mrb[0].mxu0
        %v8891 = vadd.f32 %v8122, %v8890
        %v8892 = vpop.f32.mrb[0].mxu0
        %8893 = vmatprep.mubr.f32.mxu0 0.0
        %8894 = vmatmul.mubr.f32.gmra.mrb[0].mxu0 %v8267
        %v8895 = vpop.f32.mrb[0].mxu0
        %v8896 = vadd.f32 %v8122, %v8895
        %v8897 = vpop.f32.mrb[0].mxu0
        %8898 = vmatprep.mubr.f32.mxu0 0.0
        %8899 = vmatmul.mubr.f32.gmra.mrb[0].mxu0 %v8270
        %v8900 = vpop.f32.mrb[0].mxu0
        %v8901 = vadd.f32 %v8122, %v8900
        %v8902 = vpop.f32.mrb[0].mxu0
        %8903 = vmatprep.mubr.f32.mxu0 0.0
        %8904 = vmatmul.mubr.f32.gmra.mrb[0].mxu0 %v8273
        %v8905 = vpop.f32.mrb[0].mxu0
        %v8906 = vadd.f32 %v8122, %v8905
        %v8907 = vpop.f32.mrb[0].mxu0
        %8908 = vmatprep.mubr.f32.mxu0 0.0
        %8909 = vmatmul.mubr.f32.gmra.mrb[0].mxu0 %v8276
        %v8910 = vpop.f32.mrb[0].mxu0
        %v8911 = vadd.f32 %v8122, %v8910
        %v8912 = vpop.f32.mrb[0].mxu0
        %8913 = vmatprep.mubr.f32.mxu0 0.0
        %8914 = vmatmul.mubr.f32.gmra.mrb[0].mxu0 %v8279
        %v8915 = vpop.f32.mrb[0].mxu0
        %v8916 = vadd.f32 %v8122, %v8915
        %v8917 = vpop.f32.mrb[0].mxu0
        %8918 = vmatprep.mubr.f32.mxu0 0.0
        %8919 = vmatmul.mubr.f32.gmra.mrb[0].mxu0 %v8282
        %v8920 = vpop.f32.mrb[0].mxu0
        %v8921 = vadd.f32 %v8122, %v8920
        %v8922 = vpop.f32.mrb[0].mxu0
        %8923 = vmatprep.mubr.f32.mxu0 0.0
        %8924 = vmatmul.mubr.f32.gmra.mrb[0].mxu0 %v8285
        %v8925 = vpop.f32.mrb[0].mxu0
        %v8926 = vadd.f32 %v8122, %v8925
        %v8927 = vpop.f32.mrb[0].mxu0
        %8928 = vmatprep.mubr.f32.mxu0 0.0
        %8929 = vmatmul.mubr.f32.gmra.mrb[0].mxu0 %v8288
        %v8930 = vpop.f32.mrb[0].mxu0
        %v8931 = vadd.f32 %v8122, %v8930
        %v8932 = vpop.f32.mrb[0].mxu0
        %8933 = vmatprep.mubr.f32.mxu0 0.0
        %8934 = vmatmul.mubr.f32.gmra.mrb[0].mxu0 %v8291
        %v8935 = vpop.f32.mrb[0].mxu0
        %v8936 = vadd.f32 %v8122, %v8935
        %v8937 = vpop.f32.mrb[0].mxu0
        %8938 = vmatprep.mubr.f32.mxu0 0.0
        %8939 = vmatmul.mubr.f32.gmra.mrb[0].mxu0 %v8294
        %v8940 = vpop.f32.mrb[0].mxu0
        %v8941 = vadd.f32 %v8122, %v8940
        %v8942 = vpop.f32.mrb[0].mxu0
        %8943 = vmatprep.mubr.f32.mxu0 0.0
        %8944 = vmatmul.mubr.f32.gmra.mrb[0].mxu0 %v8297
        %v8945 = vpop.f32.mrb[0].mxu0
        %v8946 = vadd.f32 %v8122, %v8945
        %v8947 = vpop.f32.mrb[0].mxu0
        %8948 = vmatprep.mubr.f32.mxu0 0.0
        %8949 = vmatmul.mubr.f32.gmra.mrb[0].mxu0 %v8300
        %v8950 = vpop.f32.mrb[0].mxu0
        %v8951 = vadd.f32 %v8122, %v8950
        %v8952 = vpop.f32.mrb[0].mxu0
        %8953 = vmatprep.mubr.f32.mxu0 0.0
        %8954 = vmatmul.mubr.f32.gmra.mrb[0].mxu0 %v8303
        %v8955 = vpop.f32.mrb[0].mxu0
        %v8956 = vadd.f32 %v8122, %v8955
        %v8957 = vpop.f32.mrb[0].mxu0
        %8958 = vmatprep.mubr.f32.mxu0 0.0
        %8959 = vmatmul.mubr.f32.gmra.mrb[0].mxu0 %v8306
        %v8960 = vpop.f32.mrb[0].mxu0
        %v8961 = vadd.f32 %v8122, %v8960
        %v8962 = vpop.f32.mrb[0].mxu0
        %8963 = vmatprep.mubr.f32.mxu0 0.0
        %8964 = vmatmul.mubr.f32.gmra.mrb[0].mxu0 %v8309
        %v8965 = vpop.f32.mrb[0].mxu0
        %v8966 = vadd.f32 %v8122, %v8965
        %v8967 = vpop.f32.mrb[0].mxu0
        %8968 = vmatprep.mubr.f32.mxu0 0.0
        %8969 = vmatmul.mubr.f32.gmra.mrb[0].mxu0 %v8312
        %v8970 = vpop.f32.mrb[0].mxu0
        %v8971 = vadd.f32 %v8122, %v8970
        %v8972 = vpop.f32.mrb[0].mxu0
        %8973 = vmatprep.mubr.f32.mxu0 0.0
        %8974 = vmatmul.mubr.f32.gmra.mrb[0].mxu0 %v8315
        %v8975 = vpop.f32.mrb[0].mxu0
        %v8976 = vadd.f32 %v8122, %v8975
        %v8977 = vpop.f32.mrb[0].mxu0
        %8978 = vmatprep.mubr.f32.mxu0 0.0
        %8979 = vmatmul.mubr.f32.gmra.mrb[0].mxu0 %v8318
        %v8980 = vpop.f32.mrb[0].mxu0
        %v8981 = vadd.f32 %v8122, %v8980
        %v8982 = vpop.f32.mrb[0].mxu0
        %8983 = vmatprep.mubr.f32.mxu0 0.0
        %8984 = vmatmul.mubr.f32.gmra.mrb[0].mxu0 %v8321
        %v8985 = vpop.f32.mrb[0].mxu0
        %v8986 = vadd.f32 %v8122, %v8985
        %v8987 = vpop.f32.mrb[0].mxu0
        %8988 = vmatprep.mubr.f32.mxu0 0.0
        %8989 = vmatmul.mubr.f32.gmra.mrb[0].mxu0 %v8324
        %v8990 = vpop.f32.mrb[0].mxu0
        %v8991 = vadd.f32 %v8122, %v8990
        %v8992 = vpop.f32.mrb[0].mxu0
        %8993 = vmatprep.mubr.f32.mxu0 0.0
        %8994 = vmatmul.mubr.f32.gmra.mrb[0].mxu0 %v8327
        %v8995 = vpop.f32.mrb[0].mxu0
        %v8996 = vadd.f32 %v8122, %v8995
        %v8997 = vpop.f32.mrb[0].mxu0
        %8998 = vmatprep.mubr.f32.mxu0 0.0
        %8999 = vmatmul.mubr.f32.gmra.mrb[0].mxu0 %v8330
        %v9000 = vpop.f32.mrb[0].mxu0
        %v9001 = vadd.f32 %v8122, %v9000
        %v9002 = vpop.f32.mrb[0].mxu0
        %9003 = vmatprep.mubr.f32.mxu0 0.0
        %9004 = vmatmul.mubr.f32.gmra.mrb[0].mxu0 %v8333
        %v9005 = vpop.f32.mrb[0].mxu0
        %v9006 = vadd.f32 %v8122, %v9005
        %v9007 = vpop.f32.mrb[0].mxu0
        %9008 = vmatprep.mubr.f32.mxu0 0.0
        %9009 = vmatmul.mubr.f32.gmra.mrb[0].mxu0 %v8336
        %v9010 = vpop.f32.mrb[0].mxu0
        %v9011 = vadd.f32 %v8122, %v9010
        %v9012 = vpop.f32.mrb[0].mxu0
        %9013 = vmatprep.mubr.f32.mxu0 0.0
        %9014 = vmatmul.mubr.f32.gmra.mrb[0].mxu0 %v8339
        %v9015 = vpop.f32.mrb[0].mxu0
        %v9016 = vadd.f32 %v8122, %v9015
        %v9017 = vpop.f32.mrb[0].mxu0
        %9018 = vmatprep.mubr.f32.mxu0 0.0
        %9019 = vmatmul.mubr.f32.gmra.mrb[0].mxu0 %v8342
        %v9020 = vpop.f32.mrb[0].mxu0
        %v9021 = vadd.f32 %v8122, %v9020
        %v9022 = vpop.f32.mrb[0].mxu0
        %9023 = vmatprep.mubr.f32.mxu0 0.0
        %9024 = vmatmul.mubr.f32.gmra.mrb[0].mxu0 %v8345
        %v9025 = vpop.f32.mrb[0].mxu0
        %v9026 = vadd.f32 %v8122, %v9025
        %v9027 = vpop.f32.mrb[0].mxu0
        %9028 = vmatprep.mubr.f32.mxu0 0.0
        %9029 = vmatmul.mubr.f32.gmra.mrb[0].mxu0 %v8348
        %v9030 = vpop.f32.mrb[0].mxu0
        %v9031 = vadd.f32 %v8122, %v9030
        %v9032 = vpop.f32.mrb[0].mxu0
        %9033 = vmatprep.mubr.f32.mxu0 0.0
        %9034 = vmatmul.mubr.f32.gmra.mrb[0].mxu0 %v8351
        %v9035 = vpop.f32.mrb[0].mxu0
        %v9036 = vadd.f32 %v8122, %v9035
        %v9037 = vpop.f32.mrb[0].mxu0
        %9038 = vmatprep.mubr.f32.mxu0 0.0
        %9039 = vmatmul.mubr.f32.gmra.mrb[0].mxu0 %v8354
        %v9040 = vpop.f32.mrb[0].mxu0
        %v9041 = vadd.f32 %v8122, %v9040
        %v9042 = vpop.f32.mrb[0].mxu0
        %9043 = vmatprep.mubr.f32.mxu0 0.0
        %9044 = vmatmul.mubr.f32.gmra.mrb[0].mxu0 %v8357
        %v9045 = vpop.f32.mrb[0].mxu0
        %v9046 = vadd.f32 %v8122, %v9045
        %v9047 = vpop.f32.mrb[0].mxu0
        %9048 = vmatprep.mubr.f32.mxu0 0.0
        %9049 = vmatmul.mubr.f32.gmra.mrb[0].mxu0 %v8360
        %v9050 = vpop.f32.mrb[0].mxu0
        %v9051 = vadd.f32 %v8122, %v9050
        %v9052 = vpop.f32.mrb[0].mxu0
        %9053 = vmatprep.mubr.f32.mxu0 0.0
        %9054 = vmatmul.mubr.f32.gmra.mrb[0].mxu0 %v8363
        %v9055 = vpop.f32.mrb[0].mxu0
        %v9056 = vadd.f32 %v8122, %v9055
        %v9057 = vpop.f32.mrb[0].mxu0
        %9058 = vmatprep.mubr.f32.mxu0 0.0
        %9059 = vmatmul.mubr.f32.gmra.mrb[0].mxu0 %v8366
        %v9060 = vpop.f32.mrb[0].mxu0
        %v9061 = vadd.f32 %v8122, %v9060
        %v9062 = vpop.f32.mrb[0].mxu0
        %9063 = vmatprep.mubr.f32.mxu0 0.0
        %9064 = vmatmul.mubr.f32.gmra.mrb[0].mxu0 %v8369
        %v9065 = vpop.f32.mrb[0].mxu0
        %v9066 = vadd.f32 %v8122, %v9065
        %v9067 = vpop.f32.mrb[0].mxu0
        %9068 = vmatprep.mubr.f32.mxu0 0.0
        %9069 = vmatmul.mubr.f32.gmra.mrb[0].mxu0 %v8372
        %v9070 = vpop.f32.mrb[0].mxu0
        %v9071 = vadd.f32 %v8122, %v9070
        %v9072 = vpop.f32.mrb[0].mxu0
        %9073 = vmatprep.mubr.f32.mxu0 0.0
        %9074 = vmatmul.mubr.f32.gmra.mrb[0].mxu0 %v8375
        %v9075 = vpop.f32.mrb[0].mxu0
        %v9076 = vadd.f32 %v8122, %v9075
        %v9077 = vpop.f32.mrb[0].mxu0
        %9078 = vmatprep.mubr.f32.mxu0 0.0
        %9079 = vmatmul.mubr.f32.gmra.mrb[0].mxu0 %v8378
        %v9080 = vpop.f32.mrb[0].mxu0
        %v9081 = vadd.f32 %v8122, %v9080
        %v9082 = vpop.f32.mrb[0].mxu0
        %9083 = vmatprep.mubr.f32.mxu0 0.0
        %9084 = vmatmul.mubr.f32.gmra.mrb[0].mxu0 %v8381
        %v9085 = vpop.f32.mrb[0].mxu0
        %v9086 = vadd.f32 %v8122, %v9085
        %v9087 = vpop.f32.mrb[0].mxu0
        %9088 = vmatprep.mubr.f32.mxu0 0.0
        %9089 = vmatmul.mubr.f32.gmra.mrb[0].mxu0 %v8384
        %v9090 = vpop.f32.mrb[0].mxu0
        %v9091 = vadd.f32 %v8122, %v9090
        %v9092 = vpop.f32.mrb[0].mxu0
        %9093 = vmatprep.mubr.f32.mxu0 0.0
        %9094 = vmatmul.mubr.f32.gmra.mrb[0].mxu0 %v8387
        %v9095 = vpop.f32.mrb[0].mxu0
        %v9096 = vadd.f32 %v8122, %v9095
        %v9097 = vpop.f32.mrb[0].mxu0
        %9098 = vmatprep.mubr.f32.mxu0 0.0
        %9099 = vmatmul.mubr.f32.gmra.mrb[0].mxu0 %v8390
        %v9100 = vpop.f32.mrb[0].mxu0
        %v9101 = vadd.f32 %v8122, %v9100
        %v9102 = vpop.f32.mrb[0].mxu0
        %9103 = vmatprep.mubr.f32.mxu0 0.0
        %9104 = vmatmul.mubr.f32.gmra.mrb[0].mxu0 %v8393
        %v9105 = vpop.f32.mrb[0].mxu0
        %v9106 = vadd.f32 %v8122, %v9105
        %v9107 = vpop.f32.mrb[0].mxu0
        %9108 = vmatprep.mubr.f32.mxu0 0.0
        %9109 = vmatmul.mubr.f32.gmra.mrb[0].mxu0 %v8396
        %v9110 = vpop.f32.mrb[0].mxu0
        %v9111 = vadd.f32 %v8122, %v9110
        %v9112 = vpop.f32.mrb[0].mxu0
        %9113 = vmatprep.mubr.f32.mxu0 0.0
        %9114 = vmatmul.mubr.f32.gmra.mrb[0].mxu0 %v8399
        %v9115 = vpop.f32.mrb[0].mxu0
        %v9116 = vadd.f32 %v8122, %v9115
        %v9117 = vpop.f32.mrb[0].mxu0
        %9118 = vmatprep.mubr.f32.mxu0 0.0
        %9119 = vmatmul.mubr.f32.gmra.mrb[0].mxu0 %v8402
        %v9120 = vpop.f32.mrb[0].mxu0
        %v9121 = vadd.f32 %v8122, %v9120
        %v9122 = vpop.f32.mrb[0].mxu0
        %9123 = vmatprep.mubr.f32.mxu0 0.0
        %9124 = vmatmul.mubr.f32.gmra.mrb[0].mxu0 %v8405
        %v9125 = vpop.f32.mrb[0].mxu0
        %v9126 = vadd.f32 %v8122, %v9125
        %v9127 = vpop.f32.mrb[0].mxu0
        %9128 = vmatprep.mubr.f32.mxu0 0.0
        %9129 = vmatmul.mubr.f32.gmra.mrb[0].mxu0 %v8408
        %v9130 = vpop.f32.mrb[0].mxu0
        %v9131 = vadd.f32 %v8122, %v9130
        %v9132 = vpop.f32.mrb[0].mxu0
        %9133 = vmatprep.mubr.f32.mxu0 0.0
        %9134 = vmatmul.mubr.f32.gmra.mrb[0].mxu0 %v8411
        %v9135 = vpop.f32.mrb[0].mxu0
        %v9136 = vadd.f32 %v8122, %v9135
        %v9137 = vpop.f32.mrb[0].mxu0
        %9138 = vmatprep.mubr.f32.mxu0 0.0
        %9139 = vmatmul.mubr.f32.gmra.mrb[0].mxu0 %v8414
        %v9140 = vpop.f32.mrb[0].mxu0
        %v9141 = vadd.f32 %v8122, %v9140
        %v9142 = vpop.f32.mrb[0].mxu0
        %9143 = vmatprep.mubr.f32.mxu0 0.0
        %9144 = vmatmul.mubr.f32.gmra.mrb[0].mxu0 %v8417
        %v9145 = vpop.f32.mrb[0].mxu0
        %v9146 = vadd.f32 %v8122, %v9145
        %v9147 = vpop.f32.mrb[0].mxu0
        %9148 = vmatprep.mubr.f32.mxu0 0.0
        %9149 = vmatmul.mubr.f32.gmra.mrb[0].mxu0 %v8420
        %v9150 = vpop.f32.mrb[0].mxu0
        %v9151 = vadd.f32 %v8122, %v9150
        %v9152 = vpop.f32.mrb[0].mxu0
        %9153 = vmatprep.mubr.f32.mxu0 0.0
        %9154 = vmatmul.mubr.f32.gmra.mrb[0].mxu0 %v8423
        %v9155 = vpop.f32.mrb[0].mxu0
        %v9156 = vadd.f32 %v8122, %v9155
        %v9157 = vpop.f32.mrb[0].mxu0
        %9158 = vmatprep.mubr.f32.mxu0 0.0
        %9159 = vmatmul.mubr.f32.gmra.mrb[0].mxu0 %v8426
        %v9160 = vpop.f32.mrb[0].mxu0
        %v9161 = vadd.f32 %v8122, %v9160
        %v9162 = vpop.f32.mrb[0].mxu0
        %9163 = vmatprep.mubr.f32.mxu0 0.0
        %9164 = vmatmul.mubr.f32.gmra.mrb[0].mxu0 %v8429
        %v9165 = vpop.f32.mrb[0].mxu0
        %v9166 = vadd.f32 %v8122, %v9165
        %v9167 = vpop.f32.mrb[0].mxu0
        %9168 = vmatprep.mubr.f32.mxu0 0.0
        %9169 = vmatmul.mubr.f32.gmra.mrb[0].mxu0 %v8432
        %v9170 = vpop.f32.mrb[0].mxu0
        %v9171 = vadd.f32 %v8122, %v9170
        %v9172 = vpop.f32.mrb[0].mxu0
        %9173 = vmatprep.mubr.f32.mxu0 0.0
        %9174 = vmatmul.mubr.f32.gmra.mrb[0].mxu0 %v8435
        %v9175 = vpop.f32.mrb[0].mxu0
        %v9176 = vadd.f32 %v8122, %v9175
        %v9177 = vpop.f32.mrb[0].mxu0
        %9178 = vmatprep.mubr.f32.mxu0 0.0
        %9179 = vmatmul.mubr.f32.gmra.mrb[0].mxu0 %v8438
        %v9180 = vpop.f32.mrb[0].mxu0
        %v9181 = vadd.f32 %v8122, %v9180
        %v9182 = vpop.f32.mrb[0].mxu0
        %9183 = vmatprep.mubr.f32.mxu0 0.0
        %9184 = vmatmul.mubr.f32.gmra.mrb[0].mxu0 %v8441
        %v9185 = vpop.f32.mrb[0].mxu0
        %v9186 = vadd.f32 %v8122, %v9185
        %v9187 = vpop.f32.mrb[0].mxu0
        %9188 = vmatprep.mubr.f32.mxu0 0.0
        %9189 = vmatmul.mubr.f32.gmra.mrb[0].mxu0 %v8444
        %v9190 = vpop.f32.mrb[0].mxu0
        %v9191 = vadd.f32 %v8122, %v9190
        %v9192 = vpop.f32.mrb[0].mxu0
        %9193 = vmatprep.mubr.f32.mxu0 0.0
        %9194 = vmatmul.mubr.f32.gmra.mrb[0].mxu0 %v8447
        %v9195 = vpop.f32.mrb[0].mxu0
        %v9196 = vadd.f32 %v8122, %v9195
        %v9197 = vpop.f32.mrb[0].mxu0
        %9198 = vmatprep.mubr.f32.mxu0 0.0
        %9199 = vmatmul.mubr.f32.gmra.mrb[0].mxu0 %v8450
        %v9200 = vpop.f32.mrb[0].mxu0
        %v9201 = vadd.f32 %v8122, %v9200
        %v9202 = vpop.f32.mrb[0].mxu0
        %9203 = vmatprep.mubr.f32.mxu0 0.0
        %9204 = vmatmul.mubr.f32.gmra.mrb[0].mxu0 %v8453
        %v9205 = vpop.f32.mrb[0].mxu0
        %v9206 = vadd.f32 %v8122, %v9205
        %v9207 = vpop.f32.mrb[0].mxu0
        %9208 = vmatprep.mubr.f32.mxu0 0.0
        %9209 = vmatmul.mubr.f32.gmra.mrb[0].mxu0 %v8456
        %v9210 = vpop.f32.mrb[0].mxu0
        %v9211 = vadd.f32 %v8122, %v9210
        %v9212 = vpop.f32.mrb[0].mxu0
        %9213 = vmatprep.mubr.f32.mxu0 0.0
        %9214 = vmatmul.mubr.f32.gmra.mrb[0].mxu0 %v8459
        %v9215 = vpop.f32.mrb[0].mxu0
        %v9216 = vadd.f32 %v8122, %v9215
        %v9217 = vpop.f32.mrb[0].mxu0
        %9218 = vmatprep.mubr.f32.mxu0 0.0
        %9219 = vmatmul.mubr.f32.gmra.mrb[0].mxu0 %v8462
        %v9220 = vpop.f32.mrb[0].mxu0
        %v9221 = vadd.f32 %v8122, %v9220
        %v9222 = vpop.f32.mrb[0].mxu0
        %9223 = vmatprep.mubr.f32.mxu0 0.0
        %9224 = vmatmul.mubr.f32.gmra.mrb[0].mxu0 %v8465
        %v9225 = vpop.f32.mrb[0].mxu0
        %v9226 = vadd.f32 %v8122, %v9225
        %v9227 = vpop.f32.mrb[0].mxu0
        %9228 = vmatprep.mubr.f32.mxu0 0.0
        %9229 = vmatmul.mubr.f32.gmra.mrb[0].mxu0 %v8468
        %v9230 = vpop.f32.mrb[0].mxu0
        %v9231 = vadd.f32 %v8122, %v9230
        %v9232 = vpop.f32.mrb[0].mxu0
        %9233 = vmatprep.mubr.f32.mxu0 0.0
        %9234 = vmatmul.mubr.f32.gmra.mrb[0].mxu0 %v8471
        %v9235 = vpop.f32.mrb[0].mxu0
        %v9236 = vadd.f32 %v8122, %v9235
        %v9237 = vpop.f32.mrb[0].mxu0
        %9238 = vmatprep.mubr.f32.mxu0 0.0
        %9239 = vmatmul.mubr.f32.gmra.mrb[0].mxu0 %v8474
        %v9240 = vpop.f32.mrb[0].mxu0
        %v9241 = vadd.f32 %v8122, %v9240
        %v9242 = vpop.f32.mrb[0].mxu0
        %9243 = vmatprep.mubr.f32.mxu0 0.0
        %9244 = vmatmul.mubr.f32.gmra.mrb[0].mxu0 %v8477
        %v9245 = vpop.f32.mrb[0].mxu0
        %v9246 = vadd.f32 %v8122, %v9245
        %v9247 = vpop.f32.mrb[0].mxu0
        %9248 = vmatprep.mubr.f32.mxu0 0.0
        %9249 = vmatmul.mubr.f32.gmra.mrb[0].mxu0 %v8480
        %v9250 = vpop.f32.mrb[0].mxu0
        %v9251 = vadd.f32 %v8122, %v9250
        %v9252 = vpop.f32.mrb[0].mxu0
        %9253 = vmatprep.mubr.f32.mxu0 0.0
        %9254 = vmatmul.mubr.f32.gmra.mrb[0].mxu0 %v8483
        %v9255 = vpop.f32.mrb[0].mxu0
        %v9256 = vadd.f32 %v8122, %v9255
        %v9257 = vpop.f32.mrb[0].mxu0
        %9258 = vmatprep.mubr.f32.mxu0 0.0
        %9259 = vmatmul.mubr.f32.gmra.mrb[0].mxu0 %v8486
        %v9260 = vpop.f32.mrb[0].mxu0
        %v9261 = vadd.f32 %v8122, %v9260
        %v9262 = vpop.f32.mrb[0].mxu0
        %9263 = vmatprep.mubr.f32.mxu0 0.0
        %9264 = vmatmul.mubr.f32.gmra.mrb[0].mxu0 %v8489
        %v9265 = vpop.f32.mrb[0].mxu0
        %v9266 = vadd.f32 %v8122, %v9265
        %v9267 = vpop.f32.mrb[0].mxu0
        %9268 = vmatprep.mubr.f32.mxu0 0.0
        %9269 = vmatmul.mubr.f32.gmra.mrb[0].mxu0 %v8492
        %v9270 = vpop.f32.mrb[0].mxu0
        %v9271 = vadd.f32 %v8122, %v9270
        %v9272 = vpop.f32.mrb[0].mxu0
        %9273 = vmatprep.mubr.f32.mxu0 0.0
        %9274 = vmatmul.mubr.f32.gmra.mrb[0].mxu0 %v8495
        %v9275 = vpop.f32.mrb[0].mxu0
        %v9276 = vadd.f32 %v8122, %v9275
        %v9277 = vpop.f32.mrb[0].mxu0
        %9278 = vmatprep.mubr.f32.mxu0 0.0
        %9279 = vmatmul.mubr.f32.gmra.mrb[0].mxu0 %v8498
        %v9280 = vpop.f32.mrb[0].mxu0
        %v9281 = vadd.f32 %v8122, %v9280
        %v9282 = vpop.f32.mrb[0].mxu0
        %9283 = vmatprep.mubr.f32.mxu0 0.0
        %9284 = vmatmul.mubr.f32.gmra.mrb[0].mxu0 %v8501
        %v9285 = vpop.f32.mrb[0].mxu0
        %v9286 = vadd.f32 %v8122, %v9285
        %v9287 = vpop.f32.mrb[0].mxu0
        %9288 = vmatprep.mubr.f32.mxu0 0.0
        %9289 = vmatmul.mubr.f32.gmra.mrb[0].mxu0 %v8504
        %v9290 = vpop.f32.mrb[0].mxu0
        %v9291 = vadd.f32 %v8122, %v9290
        %v9292 = vpop.f32.mrb[0].mxu0
        %9293 = vmatprep.mubr.f32.mxu0 0.0
        %9294 = vmatmul.mubr.f32.gmra.mrb[0].mxu0 %v8507
        %v9295 = vpop.f32.mrb[0].mxu0
        %v9296 = vadd.f32 %v8122, %v9295
        %v9297 = vpop.f32.mrb[0].mxu0
        %9298 = vmatprep.mubr.f32.mxu0 0.0
        %9299 = vmatmul.mubr.f32.gmra.mrb[0].mxu0 %v8510
        %v9300 = vpop.f32.mrb[0].mxu0
        %v9301 = vadd.f32 %v8122, %v9300
        %v9302 = vpop.f32.mrb[0].mxu0
        %9303 = vmatprep.mubr.f32.mxu0 0.0
        %9304 = vmatmul.mubr.f32.gmra.mrb[0].mxu0 %v8513
        %v9305 = vpop.f32.mrb[0].mxu0
        %v9306 = vadd.f32 %v8122, %v9305
        %v9307 = vpop.f32.mrb[0].mxu0
        %9308 = vmatprep.mubr.f32.mxu0 0.0
        %9309 = vmatmul.mubr.f32.gmra.mrb[0].mxu0 %v8516
        %v9310 = vpop.f32.mrb[0].mxu0
        %v9311 = vadd.f32 %v8122, %v9310
        %v9312 = vpop.f32.mrb[0].mxu0
        %9313 = vmatprep.mubr.f32.mxu0 0.0
        %9314 = vmatmul.mubr.f32.gmra.mrb[0].mxu0 %v8519
        %v9315 = vpop.f32.mrb[0].mxu0
        %v9316 = vadd.f32 %v8122, %v9315
        %v9317 = vpop.f32.mrb[0].mxu0
        %9318 = vmatprep.mubr.f32.mxu0 0.0
        %9319 = vmatmul.mubr.f32.gmra.mrb[0].mxu0 %v8522
        %v9320 = vpop.f32.mrb[0].mxu0
        %v9321 = vadd.f32 %v8122, %v9320
        %v9322 = vpop.f32.mrb[0].mxu0
        %9323 = vmatprep.mubr.f32.mxu0 0.0
        %9324 = vmatmul.mubr.f32.gmra.mrb[0].mxu0 %v8525
        %v9325 = vpop.f32.mrb[0].mxu0
        %v9326 = vadd.f32 %v8122, %v9325
        %v9327 = vpop.f32.mrb[0].mxu0
        %9328 = vmatprep.mubr.f32.mxu0 0.0
        %9329 = vmatmul.mubr.f32.gmra.mrb[0].mxu0 %v8528
        %v9330 = vpop.f32.mrb[0].mxu0
        %v9331 = vadd.f32 %v8122, %v9330
        %v9332 = vpop.f32.mrb[0].mxu0
        %9333 = vmatprep.mubr.f32.mxu0 0.0
        %9334 = vmatmul.mubr.f32.gmra.mrb[0].mxu0 %v8531
        %v9335 = vpop.f32.mrb[0].mxu0
        %v9336 = vadd.f32 %v8122, %v9335
        %v9337 = vpop.f32.mrb[0].mxu0
        %9338 = vmatprep.mubr.f32.mxu0 0.0
        %9339 = vmatmul.mubr.f32.gmra.mrb[0].mxu0 %v8534
        %v9340 = vpop.f32.mrb[0].mxu0
        %v9341 = vadd.f32 %v8122, %v9340
        %v9342 = vpop.f32.mrb[0].mxu0
        %9343 = vmatprep.mubr.f32.mxu0 0.0
        %9344 = vmatmul.mubr.f32.gmra.mrb[0].mxu0 %v8537
        %v9345 = vpop.f32.mrb[0].mxu0
        %v9346 = vadd.f32 %v8122, %v9345
        %v9347 = vpop.f32.mrb[0].mxu0
        %9348 = vmatprep.mubr.f32.mxu0 0.0
        %9349 = vmatmul.mubr.f32.gmra.mrb[0].mxu0 %v8540
        %v9350 = vpop.f32.mrb[0].mxu0
        %v9351 = vadd.f32 %v8122, %v9350
        %v9352 = vpop.f32.mrb[0].mxu0
        %9353 = vmatprep.mubr.f32.mxu0 0.0
        %9354 = vmatmul.mubr.f32.gmra.mrb[0].mxu0 %v8543
        %v9355 = vpop.f32.mrb[0].mxu0
        %v9356 = vadd.f32 %v8122, %v9355
        %v9357 = vpop.f32.mrb[0].mxu0
        %9358 = vmatprep.mubr.f32.mxu0 0.0
        %9359 = vmatmul.mubr.f32.gmra.mrb[0].mxu0 %v8546
        %v9360 = vpop.f32.mrb[0].mxu0
        %v9361 = vadd.f32 %v8122, %v9360
        %v9362 = vpop.f32.mrb[0].mxu0
        %9363 = vmatprep.mubr.f32.mxu0 0.0
        %9364 = vmatmul.mubr.f32.gmra.mrb[0].mxu0 %v8549
        %v9365 = vpop.f32.mrb[0].mxu0
        %v9366 = vadd.f32 %v8122, %v9365
        %v9367 = vpop.f32.mrb[0].mxu0
        %9368 = vmatprep.mubr.f32.mxu0 0.0
        %9369 = vmatmul.mubr.f32.gmra.mrb[0].mxu0 %v8552
        %v9370 = vpop.f32.mrb[0].mxu0
        %v9371 = vadd.f32 %v8122, %v9370
        %v9372 = vpop.f32.mrb[0].mxu0
        %9373 = vmatprep.mubr.f32.mxu0 0.0
        %9374 = vmatmul.mubr.f32.gmra.mrb[0].mxu0 %v8555
        %v9375 = vpop.f32.mrb[0].mxu0
        %v9376 = vadd.f32 %v8122, %v9375
        %v9377 = vpop.f32.mrb[0].mxu0
        %9378 = vmatprep.mubr.f32.mxu0 0.0
        %9379 = vmatmul.mubr.f32.gmra.mrb[0].mxu0 %v8558
        %v9380 = vpop.f32.mrb[0].mxu0
        %v9381 = vadd.f32 %v8122, %v9380
        %v9382 = vpop.f32.mrb[0].mxu0
        %9383 = vmatprep.mubr.f32.mxu0 0.0
        %9384 = vmatmul.mubr.f32.gmra.mrb[0].mxu0 %v8561
        %v9385 = vpop.f32.mrb[0].mxu0
        %v9386 = vadd.f32 %v8122, %v9385
        %v9387 = vpop.f32.mrb[0].mxu0
        %9388 = vmatprep.mubr.f32.mxu0 0.0
        %9389 = vmatmul.mubr.f32.gmra.mrb[0].mxu0 %v8564
        %v9390 = vpop.f32.mrb[0].mxu0
        %v9391 = vadd.f32 %v8122, %v9390
        %v9392 = vpop.f32.mrb[0].mxu0
        %9393 = vmatprep.mubr.f32.mxu0 0.0
        %9394 = vmatmul.mubr.f32.gmra.mrb[0].mxu0 %v8567
        %v9395 = vpop.f32.mrb[0].mxu0
        %v9396 = vadd.f32 %v8122, %v9395
        %v9397 = vpop.f32.mrb[0].mxu0
        %9398 = vmatprep.mubr.f32.mxu0 0.0
        %9399 = vmatmul.mubr.f32.gmra.mrb[0].mxu0 %v8570
        %v9400 = vpop.f32.mrb[0].mxu0
        %v9401 = vadd.f32 %v8122, %v9400
        %v9402 = vpop.f32.mrb[0].mxu0
        %9403 = vmatprep.mubr.f32.mxu0 0.0
        %9404 = vmatmul.mubr.f32.gmra.mrb[0].mxu0 %v8573
        %v9405 = vpop.f32.mrb[0].mxu0
        %v9406 = vadd.f32 %v8122, %v9405
        %v9407 = vpop.f32.mrb[0].mxu0
        %9408 = vmatprep.mubr.f32.mxu0 0.0
        %9409 = vmatmul.mubr.f32.gmra.mrb[0].mxu0 %v8576
        %v9410 = vpop.f32.mrb[0].mxu0
        %v9411 = vadd.f32 %v8122, %v9410
        %v9412 = vpop.f32.mrb[0].mxu0
        %9413 = vmatprep.mubr.f32.mxu0 0.0
        %9414 = vmatmul.mubr.f32.gmra.mrb[0].mxu0 %v8579
        %v9415 = vpop.f32.mrb[0].mxu0
        %v9416 = vadd.f32 %v8122, %v9415
        %v9417 = vpop.f32.mrb[0].mxu0
        %9418 = vmatprep.mubr.f32.mxu0 0.0
        %9419 = vmatmul.mubr.f32.gmra.mrb[0].mxu0 %v8582
        %v9420 = vpop.f32.mrb[0].mxu0
        %v9421 = vadd.f32 %v8122, %v9420
        %v9422 = vpop.f32.mrb[0].mxu0
        %9423 = vmatprep.mubr.f32.mxu0 0.0
        %9424 = vmatmul.mubr.f32.gmra.mrb[0].mxu0 %v8585
        %v9425 = vpop.f32.mrb[0].mxu0
        %v9426 = vadd.f32 %v8122, %v9425
        %v9427 = vpop.f32.mrb[0].mxu0
        %9428 = vmatprep.mubr.f32.mxu0 0.0
        %9429 = vmatmul.mubr.f32.gmra.mrb[0].mxu0 %v8588
        %v9430 = vpop.f32.mrb[0].mxu0
        %v9431 = vadd.f32 %v8122, %v9430
        %v9432 = vpop.f32.mrb[0].mxu0
        %9433 = vdwg.mxu0
        %9434 = vst [vmem:[%s187] sm:$0xff] %v8661
        %9435 = vst [vmem:[%s187 + $0x8] sm:$0xff] %v8666
        %9436 = vst [vmem:[%s187 + $0x10] sm:$0xff] %v8671
        %9437 = vst [vmem:[%s187 + $0x18] sm:$0xff] %v8676
        %9438 = vst [vmem:[%s187 + $0x20] sm:$0xff] %v8681
        %9439 = vst [vmem:[%s187 + $0x28] sm:$0xff] %v8686
        %9440 = vst [vmem:[%s187 + $0x30] sm:$0xff] %v8691
        %9441 = vst [vmem:[%s187 + $0x38] sm:$0xff] %v8696
        %9442 = vst [vmem:[%s187 + $0x40] sm:$0xff] %v8701
        %9443 = vst [vmem:[%s187 + $0x48] sm:$0xff] %v8706
        %9444 = vst [vmem:[%s187 + $0x50] sm:$0xff] %v8711
        %9445 = vst [vmem:[%s187 + $0x58] sm:$0xff] %v8716
        %9446 = vst [vmem:[%s187 + $0x60] sm:$0xff] %v8721
        %9447 = vst [vmem:[%s187 + $0x68] sm:$0xff] %v8726
        %9448 = vst [vmem:[%s187 + $0x70] sm:$0xff] %v8731
        %9449 = vst [vmem:[%s187 + $0x78] sm:$0xff] %v8736
        %9450 = vst [vmem:[%s187 + $0x80] sm:$0xff] %v8741
        %9451 = vst [vmem:[%s187 + $0x88] sm:$0xff] %v8746
        %9452 = vst [vmem:[%s187 + $0x90] sm:$0xff] %v8751
        %9453 = vst [vmem:[%s187 + $0x98] sm:$0xff] %v8756
        %9454 = vst [vmem:[%s187 + $0xa0] sm:$0xff] %v8761
        %9455 = vst [vmem:[%s187 + $0xa8] sm:$0xff] %v8766
        %9456 = vst [vmem:[%s187 + $0xb0] sm:$0xff] %v8771
        %9457 = vst [vmem:[%s187 + $0xb8] sm:$0xff] %v8776
        %9458 = vst [vmem:[%s187 + $0xc0] sm:$0xff] %v8781
        %9459 = vst [vmem:[%s187 + $0xc8] sm:$0xff] %v8786
        %9460 = vst [vmem:[%s187 + $0xd0] sm:$0xff] %v8791
        %9461 = vst [vmem:[%s187 + $0xd8] sm:$0xff] %v8796
        %9462 = vst [vmem:[%s187 + $0xe0] sm:$0xff] %v8801
        %9463 = vst [vmem:[%s187 + $0xe8] sm:$0xff] %v8806
        %9464 = vst [vmem:[%s187 + $0xf0] sm:$0xff] %v8811
        %9465 = vst [vmem:[%s187 + $0xf8] sm:$0xff] %v8816
        %9466 = vst [vmem:[%s187 + $0x100] sm:$0xff] %v8821
        %9467 = vst [vmem:[%s187 + $0x108] sm:$0xff] %v8826
        %9468 = vst [vmem:[%s187 + $0x110] sm:$0xff] %v8831
        %9469 = vst [vmem:[%s187 + $0x118] sm:$0xff] %v8836
        %9470 = vst [vmem:[%s187 + $0x120] sm:$0xff] %v8841
        %9471 = vst [vmem:[%s187 + $0x128] sm:$0xff] %v8846
        %9472 = vst [vmem:[%s187 + $0x130] sm:$0xff] %v8851
        %9473 = vst [vmem:[%s187 + $0x138] sm:$0xff] %v8856
        %9474 = vst [vmem:[%s187 + $0x140] sm:$0xff] %v8861
        %9475 = vst [vmem:[%s187 + $0x148] sm:$0xff] %v8866
        %9476 = vst [vmem:[%s187 + $0x150] sm:$0xff] %v8871
        %9477 = vst [vmem:[%s187 + $0x158] sm:$0xff] %v8876
        %9478 = vst [vmem:[%s187 + $0x160] sm:$0xff] %v8881
        %9479 = vst [vmem:[%s187 + $0x168] sm:$0xff] %v8886
        %9480 = vst [vmem:[%s187 + $0x170] sm:$0xff] %v8891
        %9481 = vst [vmem:[%s187 + $0x178] sm:$0xff] %v8896
        %9482 = vst [vmem:[%s187 + $0x180] sm:$0xff] %v8901
        %9483 = vst [vmem:[%s187 + $0x188] sm:$0xff] %v8906
        %9484 = vst [vmem:[%s187 + $0x190] sm:$0xff] %v8911
        %9485 = vst [vmem:[%s187 + $0x198] sm:$0xff] %v8916
        %9486 = vst [vmem:[%s187 + $0x1a0] sm:$0xff] %v8921
        %9487 = vst [vmem:[%s187 + $0x1a8] sm:$0xff] %v8926
        %9488 = vst [vmem:[%s187 + $0x1b0] sm:$0xff] %v8931
        %9489 = vst [vmem:[%s187 + $0x1b8] sm:$0xff] %v8936
        %9490 = vst [vmem:[%s187 + $0x1c0] sm:$0xff] %v8941
        %9491 = vst [vmem:[%s187 + $0x1c8] sm:$0xff] %v8946
        %9492 = vst [vmem:[%s187 + $0x1d0] sm:$0xff] %v8951
        %9493 = vst [vmem:[%s187 + $0x1d8] sm:$0xff] %v8956
        %9494 = vst [vmem:[%s187 + $0x1e0] sm:$0xff] %v8961
        %9495 = vst [vmem:[%s187 + $0x1e8] sm:$0xff] %v8966
        %9496 = vst [vmem:[%s187 + $0x1f0] sm:$0xff] %v8971
        %9497 = vst [vmem:[%s187 + $0x1f8] sm:$0xff] %v8976
        %9498 = vst [vmem:[%s187 + $0x200] sm:$0xff] %v8981
        %9499 = vst [vmem:[%s187 + $0x208] sm:$0xff] %v8986
        %9500 = vst [vmem:[%s187 + $0x210] sm:$0xff] %v8991
        %9501 = vst [vmem:[%s187 + $0x218] sm:$0xff] %v8996
        %9502 = vst [vmem:[%s187 + $0x220] sm:$0xff] %v9001
        %9503 = vst [vmem:[%s187 + $0x228] sm:$0xff] %v9006
        %9504 = vst [vmem:[%s187 + $0x230] sm:$0xff] %v9011
        %9505 = vst [vmem:[%s187 + $0x238] sm:$0xff] %v9016
        %9506 = vst [vmem:[%s187 + $0x240] sm:$0xff] %v9021
        %9507 = vst [vmem:[%s187 + $0x248] sm:$0xff] %v9026
        %9508 = vst [vmem:[%s187 + $0x250] sm:$0xff] %v9031
        %9509 = vst [vmem:[%s187 + $0x258] sm:$0xff] %v9036
        %9510 = vst [vmem:[%s187 + $0x260] sm:$0xff] %v9041
        %9511 = vst [vmem:[%s187 + $0x268] sm:$0xff] %v9046
        %9512 = vst [vmem:[%s187 + $0x270] sm:$0xff] %v9051
        %9513 = vst [vmem:[%s187 + $0x278] sm:$0xff] %v9056
        %9514 = vst [vmem:[%s187 + $0x280] sm:$0xff] %v9061
        %9515 = vst [vmem:[%s187 + $0x288] sm:$0xff] %v9066
        %9516 = vst [vmem:[%s187 + $0x290] sm:$0xff] %v9071
        %9517 = vst [vmem:[%s187 + $0x298] sm:$0xff] %v9076
        %9518 = vst [vmem:[%s187 + $0x2a0] sm:$0xff] %v9081
        %9519 = vst [vmem:[%s187 + $0x2a8] sm:$0xff] %v9086
        %9520 = vst [vmem:[%s187 + $0x2b0] sm:$0xff] %v9091
        %9521 = vst [vmem:[%s187 + $0x2b8] sm:$0xff] %v9096
        %9522 = vst [vmem:[%s187 + $0x2c0] sm:$0xff] %v9101
        %9523 = vst [vmem:[%s187 + $0x2c8] sm:$0xff] %v9106
        %9524 = vst [vmem:[%s187 + $0x2d0] sm:$0xff] %v9111
        %9525 = vst [vmem:[%s187 + $0x2d8] sm:$0xff] %v9116
        %9526 = vst [vmem:[%s187 + $0x2e0] sm:$0xff] %v9121
        %9527 = vst [vmem:[%s187 + $0x2e8] sm:$0xff] %v9126
        %9528 = vst [vmem:[%s187 + $0x2f0] sm:$0xff] %v9131
        %9529 = vst [vmem:[%s187 + $0x2f8] sm:$0xff] %v9136
        %9530 = vst [vmem:[%s187 + $0x300] sm:$0xff] %v9141
        %9531 = vst [vmem:[%s187 + $0x308] sm:$0xff] %v9146
        %9532 = vst [vmem:[%s187 + $0x310] sm:$0xff] %v9151
        %9533 = vst [vmem:[%s187 + $0x318] sm:$0xff] %v9156
        %9534 = vst [vmem:[%s187 + $0x320] sm:$0xff] %v9161
        %9535 = vst [vmem:[%s187 + $0x328] sm:$0xff] %v9166
        %9536 = vst [vmem:[%s187 + $0x330] sm:$0xff] %v9171
        %9537 = vst [vmem:[%s187 + $0x338] sm:$0xff] %v9176
        %9538 = vst [vmem:[%s187 + $0x340] sm:$0xff] %v9181
        %9539 = vst [vmem:[%s187 + $0x348] sm:$0xff] %v9186
        %9540 = vst [vmem:[%s187 + $0x350] sm:$0xff] %v9191
        %9541 = vst [vmem:[%s187 + $0x358] sm:$0xff] %v9196
        %9542 = vst [vmem:[%s187 + $0x360] sm:$0xff] %v9201
        %9543 = vst [vmem:[%s187 + $0x368] sm:$0xff] %v9206
        %9544 = vst [vmem:[%s187 + $0x370] sm:$0xff] %v9211
        %9545 = vst [vmem:[%s187 + $0x378] sm:$0xff] %v9216
        %9546 = vst [vmem:[%s187 + $0x380] sm:$0xff] %v9221
        %9547 = vst [vmem:[%s187 + $0x388] sm:$0xff] %v9226
        %9548 = vst [vmem:[%s187 + $0x390] sm:$0xff] %v9231
        %9549 = vst [vmem:[%s187 + $0x398] sm:$0xff] %v9236
        %9550 = vst [vmem:[%s187 + $0x3a0] sm:$0xff] %v9241
        %9551 = vst [vmem:[%s187 + $0x3a8] sm:$0xff] %v9246
        %9552 = vst [vmem:[%s187 + $0x3b0] sm:$0xff] %v9251
        %9553 = vst [vmem:[%s187 + $0x3b8] sm:$0xff] %v9256
        %9554 = vst [vmem:[%s187 + $0x3c0] sm:$0xff] %v9261
        %9555 = vst [vmem:[%s187 + $0x3c8] sm:$0xff] %v9266
        %9556 = vst [vmem:[%s187 + $0x3d0] sm:$0xff] %v9271
        %9557 = vst [vmem:[%s187 + $0x3d8] sm:$0xff] %v9276
        %9558 = vst [vmem:[%s187 + $0x3e0] sm:$0xff] %v9281
        %9559 = vst [vmem:[%s187 + $0x3e8] sm:$0xff] %v9286
        %9560 = vst [vmem:[%s187 + $0x3f0] sm:$0xff] %v9291
        %9561 = vst [vmem:[%s187 + $0x3f8] sm:$0xff] %v9296
        %9562 = vst [vmem:[%s187 + $0x400] sm:$0xff] %v9301
        %9563 = vst [vmem:[%s187 + $0x408] sm:$0xff] %v9306
        %9564 = vst [vmem:[%s187 + $0x410] sm:$0xff] %v9311
        %9565 = vst [vmem:[%s187 + $0x418] sm:$0xff] %v9316
        %9566 = vst [vmem:[%s187 + $0x420] sm:$0xff] %v9321
        %9567 = vst [vmem:[%s187 + $0x428] sm:$0xff] %v9326
        %9568 = vst [vmem:[%s187 + $0x430] sm:$0xff] %v9331
        %9569 = vst [vmem:[%s187 + $0x438] sm:$0xff] %v9336
        %9570 = vst [vmem:[%s187 + $0x440] sm:$0xff] %v9341
        %9571 = vst [vmem:[%s187 + $0x448] sm:$0xff] %v9346
        %9572 = vst [vmem:[%s187 + $0x450] sm:$0xff] %v9351
        %9573 = vst [vmem:[%s187 + $0x458] sm:$0xff] %v9356
        %9574 = vst [vmem:[%s187 + $0x460] sm:$0xff] %v9361
        %9575 = vst [vmem:[%s187 + $0x468] sm:$0xff] %v9366
        %9576 = vst [vmem:[%s187 + $0x470] sm:$0xff] %v9371
        %9577 = vst [vmem:[%s187 + $0x478] sm:$0xff] %v9376
        %9578 = vst [vmem:[%s187 + $0x480] sm:$0xff] %v9381
        %9579 = vst [vmem:[%s187 + $0x488] sm:$0xff] %v9386
        %9580 = vst [vmem:[%s187 + $0x490] sm:$0xff] %v9391
        %9581 = vst [vmem:[%s187 + $0x498] sm:$0xff] %v9396
        %9582 = vst [vmem:[%s187 + $0x4a0] sm:$0xff] %v9401
        %9583 = vst [vmem:[%s187 + $0x4a8] sm:$0xff] %v9406
        %9584 = vst [vmem:[%s187 + $0x4b0] sm:$0xff] %v9411
        %9585 = vst [vmem:[%s187 + $0x4b8] sm:$0xff] %v9416
        %9586 = vst [vmem:[%s187 + $0x4c0] sm:$0xff] %v9421
        %9587 = vst [vmem:[%s187 + $0x4c8] sm:$0xff] %v9426
        %9588 = vst [vmem:[%s187 + $0x4d0] sm:$0xff] %v9431
        %s9589 = sand.u32 %s109, 1
        %s9590 = scalar_lea.sflag [#allocation4], %s9589
        %s9591 = sand.u32 %s109, 1
        %s9592 = smul.addr %s9591, 1240
        %s9593 = scalar_lea.vmem [#allocation3], %s9592
        // Predicated region
        $region33: #{tpu_custom_call.1} parent=31 // pred_check
          %p9594 = pneg %p119
        $region34: #{tpu_custom_call.1} parent=31 // pred_check_branch
          %9596 = sbr.rel (%p9594) target = $region36
        $region35: #{tpu_custom_call.1} parent=31 // pred_region
          %s9597 = smul.u32 155, %s22
          %s9599 = ssub.s32 19840, 19840
          %9600 = vsyncadd %s9590, %s9599
          %s9601 = smul.addr %s21, 155
          %s9602 = sadd.s32 %s9597, %s9601
          %s9603 = smul.addr %s9602, 128
          %s9604 = scalar_lea.hbm %s3, %s9603
          %s9605 = sshll.u32 %s9593, 4
          %s9606 = int_to_ptr.vmem [resolvable:$true] %s9605
          %9611 = dma.vmem_to_hbm [thread:$0]  %s9606, 19840, %s9604, %s9590, 128, 128, 8
        $region36: #{tpu_custom_call.1} parent=31 // pred_fallthru
          _
      $region32: #{tpu_custom_call.1} parent=5 // pred_fallthru
        _
      %p9612 = scmp.le.s32.totalorder 2, %s12
      // Predicated region
      $region37: #{tpu_custom_call.1} parent=5 // pred_check
        %p9613 = pneg %p9612
      $region38: #{tpu_custom_call.1} parent=5 // pred_check_branch
        %9615 = sbr.rel (%p9613) target = $region40
      $region39: #{tpu_custom_call.1} parent=5 // pred_region
        %s9616 = ssub.s32 %s12, 2
        // Predicated region
        $region41: #{tpu_custom_call.1} parent=39 // pred_check
          %p9617 = pneg %p125
        $region42: #{tpu_custom_call.1} parent=39 // pred_check_branch
          %9619 = sbr.rel (%p9617) target = $region44
        $region43: #{tpu_custom_call.1} parent=39 // pred_region
          %s9620 = sand.u32 %s110, 1
          %s9621 = scalar_lea.sflag [#allocation4], %s9620
          %s9622 = sand.u32 %s110, 1
          %s9623 = smul.addr %s9622, 1240
          %s9624 = scalar_lea.vmem [#allocation3], %s9623
          %9625 = dma.done %s9621, 19840
        $region44: #{tpu_custom_call.1} parent=39 // pred_fallthru
          _
      $region40: #{tpu_custom_call.1} parent=5 // pred_fallthru
        _
    $region6: #{tpu_custom_call.1} parent=1 // loop_footer
      %s16 = sadd.s32 1, %s12
    $region7: #{tpu_custom_call.1} parent=1 // loop_footer_branch
      %11 = sbr.rel target = $region3
    $region8: #{tpu_custom_call.1} parent=1 // loop_exit
      _
    %9626 = vsyncpa [#allocation4], 1
    %s9627 = scalar_lea.sflag [#allocation4], 1
    %9628 = vsyncpa %s9627, 1

</llo_original>
